<compile_context>
chip_gen: v6e
topology: v6e:2x2x1
jax: 0.10.0
libtpu: 0.0.40
codegen_flags: <defaults>
</compile_context>

<pallas_src>
import math

import numpy as np
import jax
import jax.numpy as jnp
from jax import lax
from jax.experimental import pallas as pl
from jax.experimental.pallas import tpu as pltpu

IMG_C = 1
BASE = 8
TIME_DIM = 16
H_IMG = 16
W_IMG = 16
BATCH = 2

BLOCKS = ("down1", "down2", "down3", "mid", "up3", "up2", "up1")
# name -> (Cin, Cout, H, W) at the resolution the block runs at.
BLOCK_CFG = {
    "down1": (IMG_C,    BASE,     H_IMG,      W_IMG),
    "down2": (BASE,     BASE * 2, H_IMG // 2, W_IMG // 2),
    "down3": (BASE * 2, BASE * 4, H_IMG // 4, W_IMG // 4),
    "mid":   (BASE * 4, BASE * 4, H_IMG // 8, W_IMG // 8),
    "up3":   (BASE * 4, BASE * 2, H_IMG // 4, W_IMG // 4),
    "up2":   (BASE * 2, BASE,     H_IMG // 2, W_IMG // 2),
    "up1":   (BASE,     BASE,     H_IMG,      W_IMG),
}


# ----------------------------- helpers (glue) --------------------------------
def _silu(x):
    return x * jax.nn.sigmoid(x)


def sinusoidal_embedding(t, dim):
    half = dim // 2
    freqs = jnp.exp(-math.log(10000.0) * jnp.arange(half, dtype=jnp.float32) / (half - 1))
    args = t[:, None].astype(jnp.float32) * freqs[None, :]
    return jnp.concatenate([jnp.sin(args), jnp.cos(args)], axis=-1)


def _m_pad(n, h, w):
    """Lane-padded flattened spatial size (multiple of 128, >= 128)."""
    m = n * h * w
    return 128 * ((m + 127) // 128)


# ------------------------------ fused kernel ----------------------------------
def make_ddpm_kernel(n_batch, skip_flags):
    """Whole-network kernel, channel-major activations (C, M).

    Input ref order:
      x_cm (IMG_C, M16), t_embT (TIME_DIM, N),
      then per block in BLOCKS:
        wtT (Cout, TIME_DIM), btT (Cout, 1), w1f (Cout, 9*Cin), b1T (Cout, 1),
        w2f (Cout, 9*Cout), b2T (Cout, 1) [, wsT (Cout, Cin), bsT (Cout, 1)],
      then w_outT (IMG_C, BASE), b_outT (IMG_C, 1).
    Followed by 1 output ref (IMG_C, M16) and 3 VMEM scratch refs (skip stash).
    """

    def cdot(a, b):
        # K == 1 degenerates to a broadcast outer product (VPU); else MXU.
        if a.shape[1] == 1:
            return a * b
        return jnp.dot(a, b, preferred_element_type=jnp.float32)

    def res_context(h, w):
        """Per-resolution constants: boundary masks (1, M), batch one-hot (N, M)."""
        m_valid = n_batch * h * w
        m_pad = _m_pad(n_batch, h, w)
        lw = int(math.log2(w))
        lhw = int(math.log2(h * w))
        r = lax.broadcasted_iota(jnp.int32, (1, m_pad), 1)
        xq = r & (w - 1)
        yq = (r >> lw) & (h - 1)
        bq = r >> lhw
        masks = []
        for oy in (-1, 0, 1):
            for ox in (-1, 0, 1):
                conds = []
                if oy == -1:
                    conds.append(yq >= 1)
                elif oy == 1:
                    conds.append(yq <= h - 2)
                if ox == -1:
                    conds.append(xq >= 1)
                elif ox == 1:
                    conds.append(xq <= w - 2)
                if not conds:
                    masks.append(None)
                else:
                    v = conds[0]
                    for c in conds[1:]:
                        v = v & c
                    masks.append(v.astype(jnp.float32))
        onehot = (lax.broadcasted_iota(jnp.int32, (n_batch, m_pad), 0) == bq
                  ).astype(jnp.float32)
        return dict(h=h, w=w, m_valid=m_valid, m_pad=m_pad, masks=masks, onehot=onehot)

    def pool_up_mats(cb, cs):
        """Generate AvgPool2d(2) / nearest-x2 matrices from iota (no HBM reads).

        pool:     act_big (C, Mb) @ pool_t (Mb, Ms) -> (C, Ms)
        upsample: act_sml (C, Ms) @ up_t  (Ms, Mb) -> (C, Mb)
        """
        hb, wb = cb["h"], cb["w"]
        hs, ws = cs["h"], cs["w"]
        lw, lhw = int(math.log2(wb)), int(math.log2(hb * wb))

        def parent(i):                        # big flat index -> small flat index
            xi = i & (wb - 1)
            yi = (i >> lw) & (hb - 1)
            bi = i >> lhw
            return (bi * hs + (yi >> 1)) * ws + (xi >> 1)

        ii = lax.broadcasted_iota(jnp.int32, (cb["m_pad"], cs["m_pad"]), 0)
        oo = lax.broadcasted_iota(jnp.int32, (cb["m_pad"], cs["m_pad"]), 1)
        pool_t = jnp.where((oo == parent(ii)) & (ii < cb["m_valid"]),
                           0.25, 0.0).astype(jnp.float32)

        ss = lax.broadcasted_iota(jnp.int32, (cs["m_pad"], cb["m_pad"]), 0)
        bb = lax.broadcasted_iota(jnp.int32, (cs["m_pad"], cb["m_pad"]), 1)
        up_t = jnp.where((ss == parent(bb)) & (bb < cb["m_valid"]),
                         1.0, 0.0).astype(jnp.float32)
        return pool_t, up_t

    def conv3x3(x, w_ref, bias, ctx):
        """3x3 'SAME' conv on channel-major (Cin, M); one fused MXU matmul."""
        cin = x.shape[0]
        w_img, m_pad = ctx["w"], ctx["m_pad"]
        taps = []
        k = 0
        for oy in (-1, 0, 1):
            for ox in (-1, 0, 1):
                s = oy * w_img + ox
                # out[:, r] needs in[:, r + s]; circular roll, wrap killed by masks.
                t = x if s == 0 else pltpu.roll(x, (-s) % m_pad, axis=1)
                mk = ctx["masks"][k]
                if mk is not None:
                    t = t * mk
                taps.append(t)
                k += 1
        if cin % 8 == 0:
            # (Cout, 9*Cin) @ (9*Cin, M): one MXU issue per conv.
            return cdot(w_ref[...], jnp.concatenate(taps, axis=0)) + bias
        # Tiny-Cin path (down1.conv1, Cin=1): cheap VPU weighted sum; avoids a
        # 1-row sublane concatenate.
        w_full = w_ref[...]
        acc = bias
        for j in range(9):
            acc = acc + cdot(w_full[:, j * cin:(j + 1) * cin], taps[j])
        return acc

    def res_block(x, t_embT, ctx, it, has_skip):
        wtT = next(it)[...]                      # (Cout, TIME_DIM)
        btT = next(it)[...]                      # (Cout, 1)
        w1_ref = next(it)                        # (Cout, 9*Cin)
        b1T = next(it)[...]
        w2_ref = next(it)                        # (Cout, 9*Cout)
        b2T = next(it)[...]
        wsT = next(it)[...] if has_skip else None
        bsT = next(it)[...] if has_skip else None

        # nn.Linear time projection; broadcast per image via one-hot matmul.
        tp = cdot(wtT, t_embT) + btT             # (Cout, N)
        tb = cdot(tp, ctx["onehot"])             # (Cout, M)

        hh = _silu(conv3x3(x, w1_ref, b1T, ctx))
        hh = _silu(hh + tb)
        hh = conv3x3(hh, w2_ref, b2T, ctx)
        skip = (cdot(wsT, x) + bsT) if has_skip else x
        return hh + skip

    def kernel(*refs):
        d1_scr, d2_scr, d3_scr = refs[-3:]
        o_ref = refs[-4]
        it = iter(refs[:-4])

        x_cm = next(it)[...]                     # (IMG_C, M16)
        t_embT = next(it)[...]                   # (TIME_DIM, N)

        # Hoisted per-resolution constants (shared by the down/up pairs).
        ctx16 = res_context(H_IMG, W_IMG)
        ctx8 = res_context(H_IMG // 2, W_IMG // 2)
        ctx4 = res_context(H_IMG // 4, W_IMG // 4)
        ctx2 = res_context(H_IMG // 8, W_IMG // 8)
        p16, u16 = pool_up_mats(ctx16, ctx8)
        p8, u8 = pool_up_mats(ctx8, ctx4)
        p4, u4 = pool_up_mats(ctx4, ctx2)

        d1 = res_block(x_cm, t_embT, ctx16, it, skip_flags["down1"])
        d1_scr[...] = d1
        d2 = res_block(cdot(d1, p16), t_embT, ctx8, it, skip_flags["down2"])
        d2_scr[...] = d2
        d3 = res_block(cdot(d2, p8), t_embT, ctx4, it, skip_flags["down3"])
        d3_scr[...] = d3
        mm = res_block(cdot(d3, p4), t_embT, ctx2, it, skip_flags["mid"])
        u3 = res_block(cdot(mm, u4) + d3_scr[...], t_embT, ctx4, it, skip_flags["up3"])
        u2 = res_block(cdot(u3, u8) + d2_scr[...], t_embT, ctx8, it, skip_flags["up2"])
        u1 = res_block(cdot(u2, u16) + d1_scr[...], t_embT, ctx16, it, skip_flags["up1"])

        w_outT = next(it)[...]                   # (IMG_C, BASE)
        b_outT = next(it)[...]                   # (IMG_C, 1)
        o_ref[...] = cdot(w_outT, u1) + b_outT   # lane-dense (IMG_C, M16) store

    return kernel


# ------------------------------ model (Pallas) --------------------------------
def ddpm_forward(params, x_nchw, t):
    n, c, h, w = x_nchw.shape
    assert (h, w, c) == (H_IMG, W_IMG, IMG_C)
    # NCHW -> channel-major (C, N*H*W); lane index m = (b*H + y)*W + x.
    x_cm = jnp.transpose(x_nchw, (1, 0, 2, 3)).astype(jnp.float32).reshape(IMG_C, n * h * w)
    t_embT = sinusoidal_embedding(t, TIME_DIM).T                      # (TIME_DIM, N)

    skip_flags = {name: ("ws" in params[name]) for name in BLOCKS}

    inputs = [x_cm, t_embT]
    for name in BLOCKS:
        p = params[name]
        cin, cout, _, _ = BLOCK_CFG[name]
        # (3,3,Cin,Cout) -> (Cout, 9*Cin) with tap-major row blocks.
        w1f = jnp.transpose(p["w1"].reshape(9, cin, cout), (2, 0, 1)).reshape(cout, 9 * cin)
        w2f = jnp.transpose(p["w2"].reshape(9, cout, cout), (2, 0, 1)).reshape(cout, 9 * cout)
        inputs += [p["wt"].T, p["bt"].T, w1f, p["b1"].T, w2f, p["b2"].T]
        if skip_flags[name]:
            inputs += [p["ws"].T, p["bs"].T]
    inputs += [params["out"]["w"].T, params["out"]["b"].T]

    m16 = n * h * w
    out2d = pl.pallas_call(
        make_ddpm_kernel(n, skip_flags),
        out_shape=jax.ShapeDtypeStruct((IMG_C, m16), jnp.float32),
        scratch_shapes=[
            pltpu.VMEM((BASE, _m_pad(n, 16, 16)), jnp.float32),
            pltpu.VMEM((BASE * 2, _m_pad(n, 8, 8)), jnp.float32),
            pltpu.VMEM((BASE * 4, _m_pad(n, 4, 4)), jnp.float32),
        ],
    )(*inputs)

    out = out2d.reshape(IMG_C, n, h, w)
    return jnp.transpose(out, (1, 0, 2, 3))                           # -> NCHW


# ------------------------------ pure-JAX reference ----------------------------
def _ref_conv3x3(x, w, b):
    y = jax.lax.conv_general_dilated(
        x, w, (1, 1), "SAME",
        dimension_numbers=("NHWC", "HWIO", "NHWC"),
        precision=jax.lax.Precision.HIGHEST)
    return y + b.reshape(1, 1, 1, -1)


def _ref_resblock(x, t_emb, p):
    tproj = t_emb @ p["wt"] + p["bt"]
    h = _silu(_ref_conv3x3(x, p["w1"], p["b1"]))
    h = h + tproj[:, None, None, :]
    h = _silu(h)
    h = _ref_conv3x3(h, p["w2"], p["b2"])
    if "ws" in p:
        skip = jnp.einsum("nhwc,co->nhwo", x, p["ws"],
                          precision=jax.lax.Precision.HIGHEST) + p["bs"].reshape(1, 1, 1, -1)
    else:
        skip = x
    return h + skip


def ref_forward(params, x_nchw, t):
    x = jnp.transpose(x_nchw, (0, 2, 3, 1)).astype(jnp.float32)
    t_emb = sinusoidal_embedding(t, TIME_DIM)
    pool = lambda z: z.reshape(z.shape[0], z.shape[1] // 2, 2,
                               z.shape[2] // 2, 2, z.shape[3]).mean(axis=(2, 4))
    up = lambda z: jnp.repeat(jnp.repeat(z, 2, axis=1), 2, axis=2)
    d1 = _ref_resblock(x, t_emb, params["down1"])
    d2 = _ref_resblock(pool(d1), t_emb, params["down2"])
    d3 = _ref_resblock(pool(d2), t_emb, params["down3"])
    m = _ref_resblock(pool(d3), t_emb, params["mid"])
    u3 = _ref_resblock(up(m) + d3, t_emb, params["up3"])
    u2 = _ref_resblock(up(u3) + d2, t_emb, params["up2"])
    u1 = _ref_resblock(up(u2) + d1, t_emb, params["up1"])
    out = jnp.einsum("nhwc,co->nhwo", u1, params["out"]["w"],
                     precision=jax.lax.Precision.HIGHEST) + params["out"]["b"].reshape(1, 1, 1, -1)
    return jnp.transpose(out, (0, 3, 1, 2))


# ------------------------------ parameter init --------------------------------
def init_params(key):
    keys = iter(jax.random.split(key, 64))

    def w(shape, fan_in):
        return (jax.random.normal(next(keys), shape, jnp.float32) / np.sqrt(fan_in)).astype(jnp.float32)

    def block(cin, cout):
        p = {
            "w1": w((3, 3, cin, cout), 9 * cin),
            "b1": w((1, cout), cout),
            "w2": w((3, 3, cout, cout), 9 * cout),
            "b2": w((1, cout), cout),
            "wt": w((TIME_DIM, cout), TIME_DIM),
            "bt": w((1, cout), cout),
        }
        if cin != cout:
            p["ws"] = w((cin, cout), cin)
            p["bs"] = w((1, cout), cout)
        return p

    return {
        "down1": block(IMG_C, BASE),
        "down2": block(BASE, BASE * 2),
        "down3": block(BASE * 2, BASE * 4),
        "mid": block(BASE * 4, BASE * 4),
        "up3": block(BASE * 4, BASE * 2),
        "up2": block(BASE * 2, BASE),
        "up1": block(BASE, BASE),
        "out": {"w": w((BASE, IMG_C), BASE), "b": w((1, IMG_C), 1)},
    }


if __name__ == "__main__":
    key = jax.random.PRNGKey(0)
    pkey, xkey = jax.random.split(key)
    params = init_params(pkey)

    x = jax.random.normal(xkey, (BATCH, IMG_C, H_IMG, W_IMG), jnp.float32)
    t = jnp.array([3, 47], dtype=jnp.int32)

    out = jax.jit(ddpm_forward)(params, x, t)
    out = jax.block_until_ready(out)
    assert out.shape == (BATCH, IMG_C, H_IMG, W_IMG)

    ref = ref_forward(params, x, t)
    np.testing.assert_allclose(np.asarray(out), np.asarray(ref), rtol=5e-3, atol=5e-3)

    print("KERNEL_OK")
</pallas_src>

<mosaic_0001>
module attributes {stable_mosaic.version = 11 : i64} {
  func.func @kernel(%arg0: memref<1x512xf32, #tpu.memory_space<vmem>>, %arg1: memref<16x2xf32, #tpu.memory_space<vmem>>, %arg2: memref<8x16xf32, #tpu.memory_space<vmem>>, %arg3: memref<8x1xf32, #tpu.memory_space<vmem>>, %arg4: memref<8x9xf32, #tpu.memory_space<vmem>>, %arg5: memref<8x1xf32, #tpu.memory_space<vmem>>, %arg6: memref<8x72xf32, #tpu.memory_space<vmem>>, %arg7: memref<8x1xf32, #tpu.memory_space<vmem>>, %arg8: memref<8x1xf32, #tpu.memory_space<vmem>>, %arg9: memref<8x1xf32, #tpu.memory_space<vmem>>, %arg10: memref<16x16xf32, #tpu.memory_space<vmem>>, %arg11: memref<16x1xf32, #tpu.memory_space<vmem>>, %arg12: memref<16x72xf32, #tpu.memory_space<vmem>>, %arg13: memref<16x1xf32, #tpu.memory_space<vmem>>, %arg14: memref<16x144xf32, #tpu.memory_space<vmem>>, %arg15: memref<16x1xf32, #tpu.memory_space<vmem>>, %arg16: memref<16x8xf32, #tpu.memory_space<vmem>>, %arg17: memref<16x1xf32, #tpu.memory_space<vmem>>, %arg18: memref<32x16xf32, #tpu.memory_space<vmem>>, %arg19: memref<32x1xf32, #tpu.memory_space<vmem>>, %arg20: memref<32x144xf32, #tpu.memory_space<vmem>>, %arg21: memref<32x1xf32, #tpu.memory_space<vmem>>, %arg22: memref<32x288xf32, #tpu.memory_space<vmem>>, %arg23: memref<32x1xf32, #tpu.memory_space<vmem>>, %arg24: memref<32x16xf32, #tpu.memory_space<vmem>>, %arg25: memref<32x1xf32, #tpu.memory_space<vmem>>, %arg26: memref<32x16xf32, #tpu.memory_space<vmem>>, %arg27: memref<32x1xf32, #tpu.memory_space<vmem>>, %arg28: memref<32x288xf32, #tpu.memory_space<vmem>>, %arg29: memref<32x1xf32, #tpu.memory_space<vmem>>, %arg30: memref<32x288xf32, #tpu.memory_space<vmem>>, %arg31: memref<32x1xf32, #tpu.memory_space<vmem>>, %arg32: memref<16x16xf32, #tpu.memory_space<vmem>>, %arg33: memref<16x1xf32, #tpu.memory_space<vmem>>, %arg34: memref<16x288xf32, #tpu.memory_space<vmem>>, %arg35: memref<16x1xf32, #tpu.memory_space<vmem>>, %arg36: memref<16x144xf32, #tpu.memory_space<vmem>>, %arg37: memref<16x1xf32, #tpu.memory_space<vmem>>, %arg38: memref<16x32xf32, #tpu.memory_space<vmem>>, %arg39: memref<16x1xf32, #tpu.memory_space<vmem>>, %arg40: memref<8x16xf32, #tpu.memory_space<vmem>>, %arg41: memref<8x1xf32, #tpu.memory_space<vmem>>, %arg42: memref<8x144xf32, #tpu.memory_space<vmem>>, %arg43: memref<8x1xf32, #tpu.memory_space<vmem>>, %arg44: memref<8x72xf32, #tpu.memory_space<vmem>>, %arg45: memref<8x1xf32, #tpu.memory_space<vmem>>, %arg46: memref<8x16xf32, #tpu.memory_space<vmem>>, %arg47: memref<8x1xf32, #tpu.memory_space<vmem>>, %arg48: memref<8x16xf32, #tpu.memory_space<vmem>>, %arg49: memref<8x1xf32, #tpu.memory_space<vmem>>, %arg50: memref<8x72xf32, #tpu.memory_space<vmem>>, %arg51: memref<8x1xf32, #tpu.memory_space<vmem>>, %arg52: memref<8x72xf32, #tpu.memory_space<vmem>>, %arg53: memref<8x1xf32, #tpu.memory_space<vmem>>, %arg54: memref<1x8xf32, #tpu.memory_space<vmem>>, %arg55: memref<1x1xf32, #tpu.memory_space<vmem>>, %arg56: memref<1x512xf32, #tpu.memory_space<vmem>>, %arg57: memref<8x512xf32, #tpu.memory_space<vmem>>, %arg58: memref<16x128xf32, #tpu.memory_space<vmem>>, %arg59: memref<32x128xf32, #tpu.memory_space<vmem>>) attributes {dimension_semantics = [], scalar_prefetch = 0 : i64, scratch_operands = 3 : i64, tpu.core_type = #tpu.core_type<tc>} {
    %c0 = arith.constant 0 : index
    %c0_0 = arith.constant 0 : index
    %0 = vector.load %arg0[%c0, %c0_0] : memref<1x512xf32, #tpu.memory_space<vmem>>, vector<1x512xf32>
    %c0_1 = arith.constant 0 : index
    %c0_2 = arith.constant 0 : index
    %1 = vector.load %arg1[%c0_1, %c0_2] : memref<16x2xf32, #tpu.memory_space<vmem>>, vector<16x2xf32>
    %2 = tpu.iota {dimensions = array<i32: 1>} : vector<1x512xi32>
    %c15_i32 = arith.constant 15 : i32
    %3 = vector.broadcast %c15_i32 : i32 to vector<1x512xi32>
    %4 = arith.andi %2, %3 : vector<1x512xi32>
    %c4_i32 = arith.constant 4 : i32
    %5 = vector.broadcast %c4_i32 : i32 to vector<1x512xi32>
    %6 = arith.shrsi %2, %5 : vector<1x512xi32>
    %c15_i32_3 = arith.constant 15 : i32
    %7 = vector.broadcast %c15_i32_3 : i32 to vector<1x512xi32>
    %8 = arith.andi %6, %7 : vector<1x512xi32>
    %c8_i32 = arith.constant 8 : i32
    %9 = vector.broadcast %c8_i32 : i32 to vector<1x512xi32>
    %10 = arith.shrsi %2, %9 : vector<1x512xi32>
    %c1_i32 = arith.constant 1 : i32
    %11 = vector.broadcast %c1_i32 : i32 to vector<1x512xi32>
    %12 = arith.cmpi sge, %8, %11 : vector<1x512xi32>
    %c1_i32_4 = arith.constant 1 : i32
    %13 = vector.broadcast %c1_i32_4 : i32 to vector<1x512xi32>
    %14 = arith.cmpi sge, %4, %13 : vector<1x512xi32>
    %15 = arith.andi %12, %14 : vector<1x512xi1>
    %16 = arith.extui %15 : vector<1x512xi1> to vector<1x512xi32>
    %17 = arith.sitofp %16 : vector<1x512xi32> to vector<1x512xf32>
    %c1_i32_5 = arith.constant 1 : i32
    %18 = vector.broadcast %c1_i32_5 : i32 to vector<1x512xi32>
    %19 = arith.cmpi sge, %8, %18 : vector<1x512xi32>
    %20 = arith.extui %19 : vector<1x512xi1> to vector<1x512xi32>
    %21 = arith.sitofp %20 : vector<1x512xi32> to vector<1x512xf32>
    %c1_i32_6 = arith.constant 1 : i32
    %22 = vector.broadcast %c1_i32_6 : i32 to vector<1x512xi32>
    %23 = arith.cmpi sge, %8, %22 : vector<1x512xi32>
    %c14_i32 = arith.constant 14 : i32
    %24 = vector.broadcast %c14_i32 : i32 to vector<1x512xi32>
    %25 = arith.cmpi sle, %4, %24 : vector<1x512xi32>
    %26 = arith.andi %23, %25 : vector<1x512xi1>
    %27 = arith.extui %26 : vector<1x512xi1> to vector<1x512xi32>
    %28 = arith.sitofp %27 : vector<1x512xi32> to vector<1x512xf32>
    %c1_i32_7 = arith.constant 1 : i32
    %29 = vector.broadcast %c1_i32_7 : i32 to vector<1x512xi32>
    %30 = arith.cmpi sge, %4, %29 : vector<1x512xi32>
    %31 = arith.extui %30 : vector<1x512xi1> to vector<1x512xi32>
    %32 = arith.sitofp %31 : vector<1x512xi32> to vector<1x512xf32>
    %c14_i32_8 = arith.constant 14 : i32
    %33 = vector.broadcast %c14_i32_8 : i32 to vector<1x512xi32>
    %34 = arith.cmpi sle, %4, %33 : vector<1x512xi32>
    %35 = arith.extui %34 : vector<1x512xi1> to vector<1x512xi32>
    %36 = arith.sitofp %35 : vector<1x512xi32> to vector<1x512xf32>
    %c14_i32_9 = arith.constant 14 : i32
    %37 = vector.broadcast %c14_i32_9 : i32 to vector<1x512xi32>
    %38 = arith.cmpi sle, %8, %37 : vector<1x512xi32>
    %c1_i32_10 = arith.constant 1 : i32
    %39 = vector.broadcast %c1_i32_10 : i32 to vector<1x512xi32>
    %40 = arith.cmpi sge, %4, %39 : vector<1x512xi32>
    %41 = arith.andi %38, %40 : vector<1x512xi1>
    %42 = arith.extui %41 : vector<1x512xi1> to vector<1x512xi32>
    %43 = arith.sitofp %42 : vector<1x512xi32> to vector<1x512xf32>
    %c14_i32_11 = arith.constant 14 : i32
    %44 = vector.broadcast %c14_i32_11 : i32 to vector<1x512xi32>
    %45 = arith.cmpi sle, %8, %44 : vector<1x512xi32>
    %46 = arith.extui %45 : vector<1x512xi1> to vector<1x512xi32>
    %47 = arith.sitofp %46 : vector<1x512xi32> to vector<1x512xf32>
    %c14_i32_12 = arith.constant 14 : i32
    %48 = vector.broadcast %c14_i32_12 : i32 to vector<1x512xi32>
    %49 = arith.cmpi sle, %8, %48 : vector<1x512xi32>
    %c14_i32_13 = arith.constant 14 : i32
    %50 = vector.broadcast %c14_i32_13 : i32 to vector<1x512xi32>
    %51 = arith.cmpi sle, %4, %50 : vector<1x512xi32>
    %52 = arith.andi %49, %51 : vector<1x512xi1>
    %53 = arith.extui %52 : vector<1x512xi1> to vector<1x512xi32>
    %54 = arith.sitofp %53 : vector<1x512xi32> to vector<1x512xf32>
    %55 = tpu.iota {dimensions = array<i32: 0>} : vector<2x512xi32>
    %56 = vector.broadcast %10 : vector<1x512xi32> to vector<2x512xi32>
    %57 = arith.cmpi eq, %55, %56 : vector<2x512xi32>
    %58 = arith.extui %57 : vector<2x512xi1> to vector<2x512xi32>
    %59 = arith.sitofp %58 : vector<2x512xi32> to vector<2x512xf32>
    %60 = tpu.iota {dimensions = array<i32: 1>} : vector<1x128xi32>
    %c7_i32 = arith.constant 7 : i32
    %61 = vector.broadcast %c7_i32 : i32 to vector<1x128xi32>
    %62 = arith.andi %60, %61 : vector<1x128xi32>
    %c3_i32 = arith.constant 3 : i32
    %63 = vector.broadcast %c3_i32 : i32 to vector<1x128xi32>
    %64 = arith.shrsi %60, %63 : vector<1x128xi32>
    %c7_i32_14 = arith.constant 7 : i32
    %65 = vector.broadcast %c7_i32_14 : i32 to vector<1x128xi32>
    %66 = arith.andi %64, %65 : vector<1x128xi32>
    %c6_i32 = arith.constant 6 : i32
    %67 = vector.broadcast %c6_i32 : i32 to vector<1x128xi32>
    %68 = arith.shrsi %60, %67 : vector<1x128xi32>
    %c1_i32_15 = arith.constant 1 : i32
    %69 = vector.broadcast %c1_i32_15 : i32 to vector<1x128xi32>
    %70 = arith.cmpi sge, %66, %69 : vector<1x128xi32>
    %c1_i32_16 = arith.constant 1 : i32
    %71 = vector.broadcast %c1_i32_16 : i32 to vector<1x128xi32>
    %72 = arith.cmpi sge, %62, %71 : vector<1x128xi32>
    %73 = arith.andi %70, %72 : vector<1x128xi1>
    %74 = arith.extui %73 : vector<1x128xi1> to vector<1x128xi32>
    %75 = arith.sitofp %74 : vector<1x128xi32> to vector<1x128xf32>
    %c1_i32_17 = arith.constant 1 : i32
    %76 = vector.broadcast %c1_i32_17 : i32 to vector<1x128xi32>
    %77 = arith.cmpi sge, %66, %76 : vector<1x128xi32>
    %78 = arith.extui %77 : vector<1x128xi1> to vector<1x128xi32>
    %79 = arith.sitofp %78 : vector<1x128xi32> to vector<1x128xf32>
    %c1_i32_18 = arith.constant 1 : i32
    %80 = vector.broadcast %c1_i32_18 : i32 to vector<1x128xi32>
    %81 = arith.cmpi sge, %66, %80 : vector<1x128xi32>
    %c6_i32_19 = arith.constant 6 : i32
    %82 = vector.broadcast %c6_i32_19 : i32 to vector<1x128xi32>
    %83 = arith.cmpi sle, %62, %82 : vector<1x128xi32>
    %84 = arith.andi %81, %83 : vector<1x128xi1>
    %85 = arith.extui %84 : vector<1x128xi1> to vector<1x128xi32>
    %86 = arith.sitofp %85 : vector<1x128xi32> to vector<1x128xf32>
    %c1_i32_20 = arith.constant 1 : i32
    %87 = vector.broadcast %c1_i32_20 : i32 to vector<1x128xi32>
    %88 = arith.cmpi sge, %62, %87 : vector<1x128xi32>
    %89 = arith.extui %88 : vector<1x128xi1> to vector<1x128xi32>
    %90 = arith.sitofp %89 : vector<1x128xi32> to vector<1x128xf32>
    %c6_i32_21 = arith.constant 6 : i32
    %91 = vector.broadcast %c6_i32_21 : i32 to vector<1x128xi32>
    %92 = arith.cmpi sle, %62, %91 : vector<1x128xi32>
    %93 = arith.extui %92 : vector<1x128xi1> to vector<1x128xi32>
    %94 = arith.sitofp %93 : vector<1x128xi32> to vector<1x128xf32>
    %c6_i32_22 = arith.constant 6 : i32
    %95 = vector.broadcast %c6_i32_22 : i32 to vector<1x128xi32>
    %96 = arith.cmpi sle, %66, %95 : vector<1x128xi32>
    %c1_i32_23 = arith.constant 1 : i32
    %97 = vector.broadcast %c1_i32_23 : i32 to vector<1x128xi32>
    %98 = arith.cmpi sge, %62, %97 : vector<1x128xi32>
    %99 = arith.andi %96, %98 : vector<1x128xi1>
    %100 = arith.extui %99 : vector<1x128xi1> to vector<1x128xi32>
    %101 = arith.sitofp %100 : vector<1x128xi32> to vector<1x128xf32>
    %c6_i32_24 = arith.constant 6 : i32
    %102 = vector.broadcast %c6_i32_24 : i32 to vector<1x128xi32>
    %103 = arith.cmpi sle, %66, %102 : vector<1x128xi32>
    %104 = arith.extui %103 : vector<1x128xi1> to vector<1x128xi32>
    %105 = arith.sitofp %104 : vector<1x128xi32> to vector<1x128xf32>
    %c6_i32_25 = arith.constant 6 : i32
    %106 = vector.broadcast %c6_i32_25 : i32 to vector<1x128xi32>
    %107 = arith.cmpi sle, %66, %106 : vector<1x128xi32>
    %c6_i32_26 = arith.constant 6 : i32
    %108 = vector.broadcast %c6_i32_26 : i32 to vector<1x128xi32>
    %109 = arith.cmpi sle, %62, %108 : vector<1x128xi32>
    %110 = arith.andi %107, %109 : vector<1x128xi1>
    %111 = arith.extui %110 : vector<1x128xi1> to vector<1x128xi32>
    %112 = arith.sitofp %111 : vector<1x128xi32> to vector<1x128xf32>
    %113 = tpu.iota {dimensions = array<i32: 0>} : vector<2x128xi32>
    %114 = vector.broadcast %68 : vector<1x128xi32> to vector<2x128xi32>
    %115 = arith.cmpi eq, %113, %114 : vector<2x128xi32>
    %116 = arith.extui %115 : vector<2x128xi1> to vector<2x128xi32>
    %117 = arith.sitofp %116 : vector<2x128xi32> to vector<2x128xf32>
    %118 = tpu.iota {dimensions = array<i32: 1>} : vector<1x128xi32>
    %c3_i32_27 = arith.constant 3 : i32
    %119 = vector.broadcast %c3_i32_27 : i32 to vector<1x128xi32>
    %120 = arith.andi %118, %119 : vector<1x128xi32>
    %c2_i32 = arith.constant 2 : i32
    %121 = vector.broadcast %c2_i32 : i32 to vector<1x128xi32>
    %122 = arith.shrsi %118, %121 : vector<1x128xi32>
    %c3_i32_28 = arith.constant 3 : i32
    %123 = vector.broadcast %c3_i32_28 : i32 to vector<1x128xi32>
    %124 = arith.andi %122, %123 : vector<1x128xi32>
    %c4_i32_29 = arith.constant 4 : i32
    %125 = vector.broadcast %c4_i32_29 : i32 to vector<1x128xi32>
    %126 = arith.shrsi %118, %125 : vector<1x128xi32>
    %c1_i32_30 = arith.constant 1 : i32
    %127 = vector.broadcast %c1_i32_30 : i32 to vector<1x128xi32>
    %128 = arith.cmpi sge, %124, %127 : vector<1x128xi32>
    %c1_i32_31 = arith.constant 1 : i32
    %129 = vector.broadcast %c1_i32_31 : i32 to vector<1x128xi32>
    %130 = arith.cmpi sge, %120, %129 : vector<1x128xi32>
    %131 = arith.andi %128, %130 : vector<1x128xi1>
    %132 = arith.extui %131 : vector<1x128xi1> to vector<1x128xi32>
    %133 = arith.sitofp %132 : vector<1x128xi32> to vector<1x128xf32>
    %c1_i32_32 = arith.constant 1 : i32
    %134 = vector.broadcast %c1_i32_32 : i32 to vector<1x128xi32>
    %135 = arith.cmpi sge, %124, %134 : vector<1x128xi32>
    %136 = arith.extui %135 : vector<1x128xi1> to vector<1x128xi32>
    %137 = arith.sitofp %136 : vector<1x128xi32> to vector<1x128xf32>
    %c1_i32_33 = arith.constant 1 : i32
    %138 = vector.broadcast %c1_i32_33 : i32 to vector<1x128xi32>
    %139 = arith.cmpi sge, %124, %138 : vector<1x128xi32>
    %c2_i32_34 = arith.constant 2 : i32
    %140 = vector.broadcast %c2_i32_34 : i32 to vector<1x128xi32>
    %141 = arith.cmpi sle, %120, %140 : vector<1x128xi32>
    %142 = arith.andi %139, %141 : vector<1x128xi1>
    %143 = arith.extui %142 : vector<1x128xi1> to vector<1x128xi32>
    %144 = arith.sitofp %143 : vector<1x128xi32> to vector<1x128xf32>
    %c1_i32_35 = arith.constant 1 : i32
    %145 = vector.broadcast %c1_i32_35 : i32 to vector<1x128xi32>
    %146 = arith.cmpi sge, %120, %145 : vector<1x128xi32>
    %147 = arith.extui %146 : vector<1x128xi1> to vector<1x128xi32>
    %148 = arith.sitofp %147 : vector<1x128xi32> to vector<1x128xf32>
    %c2_i32_36 = arith.constant 2 : i32
    %149 = vector.broadcast %c2_i32_36 : i32 to vector<1x128xi32>
    %150 = arith.cmpi sle, %120, %149 : vector<1x128xi32>
    %151 = arith.extui %150 : vector<1x128xi1> to vector<1x128xi32>
    %152 = arith.sitofp %151 : vector<1x128xi32> to vector<1x128xf32>
    %c2_i32_37 = arith.constant 2 : i32
    %153 = vector.broadcast %c2_i32_37 : i32 to vector<1x128xi32>
    %154 = arith.cmpi sle, %124, %153 : vector<1x128xi32>
    %c1_i32_38 = arith.constant 1 : i32
    %155 = vector.broadcast %c1_i32_38 : i32 to vector<1x128xi32>
    %156 = arith.cmpi sge, %120, %155 : vector<1x128xi32>
    %157 = arith.andi %154, %156 : vector<1x128xi1>
    %158 = arith.extui %157 : vector<1x128xi1> to vector<1x128xi32>
    %159 = arith.sitofp %158 : vector<1x128xi32> to vector<1x128xf32>
    %c2_i32_39 = arith.constant 2 : i32
    %160 = vector.broadcast %c2_i32_39 : i32 to vector<1x128xi32>
    %161 = arith.cmpi sle, %124, %160 : vector<1x128xi32>
    %162 = arith.extui %161 : vector<1x128xi1> to vector<1x128xi32>
    %163 = arith.sitofp %162 : vector<1x128xi32> to vector<1x128xf32>
    %c2_i32_40 = arith.constant 2 : i32
    %164 = vector.broadcast %c2_i32_40 : i32 to vector<1x128xi32>
    %165 = arith.cmpi sle, %124, %164 : vector<1x128xi32>
    %c2_i32_41 = arith.constant 2 : i32
    %166 = vector.broadcast %c2_i32_41 : i32 to vector<1x128xi32>
    %167 = arith.cmpi sle, %120, %166 : vector<1x128xi32>
    %168 = arith.andi %165, %167 : vector<1x128xi1>
    %169 = arith.extui %168 : vector<1x128xi1> to vector<1x128xi32>
    %170 = arith.sitofp %169 : vector<1x128xi32> to vector<1x128xf32>
    %171 = tpu.iota {dimensions = array<i32: 0>} : vector<2x128xi32>
    %172 = vector.broadcast %126 : vector<1x128xi32> to vector<2x128xi32>
    %173 = arith.cmpi eq, %171, %172 : vector<2x128xi32>
    %174 = arith.extui %173 : vector<2x128xi1> to vector<2x128xi32>
    %175 = arith.sitofp %174 : vector<2x128xi32> to vector<2x128xf32>
    %176 = tpu.iota {dimensions = array<i32: 1>} : vector<1x128xi32>
    %c1_i32_42 = arith.constant 1 : i32
    %177 = vector.broadcast %c1_i32_42 : i32 to vector<1x128xi32>
    %178 = arith.andi %176, %177 : vector<1x128xi32>
    %c1_i32_43 = arith.constant 1 : i32
    %179 = vector.broadcast %c1_i32_43 : i32 to vector<1x128xi32>
    %180 = arith.shrsi %176, %179 : vector<1x128xi32>
    %c1_i32_44 = arith.constant 1 : i32
    %181 = vector.broadcast %c1_i32_44 : i32 to vector<1x128xi32>
    %182 = arith.andi %180, %181 : vector<1x128xi32>
    %c2_i32_45 = arith.constant 2 : i32
    %183 = vector.broadcast %c2_i32_45 : i32 to vector<1x128xi32>
    %184 = arith.shrsi %176, %183 : vector<1x128xi32>
    %c1_i32_46 = arith.constant 1 : i32
    %185 = vector.broadcast %c1_i32_46 : i32 to vector<1x128xi32>
    %186 = arith.cmpi sge, %182, %185 : vector<1x128xi32>
    %c1_i32_47 = arith.constant 1 : i32
    %187 = vector.broadcast %c1_i32_47 : i32 to vector<1x128xi32>
    %188 = arith.cmpi sge, %178, %187 : vector<1x128xi32>
    %189 = arith.andi %186, %188 : vector<1x128xi1>
    %190 = arith.extui %189 : vector<1x128xi1> to vector<1x128xi32>
    %191 = arith.sitofp %190 : vector<1x128xi32> to vector<1x128xf32>
    %c1_i32_48 = arith.constant 1 : i32
    %192 = vector.broadcast %c1_i32_48 : i32 to vector<1x128xi32>
    %193 = arith.cmpi sge, %182, %192 : vector<1x128xi32>
    %194 = arith.extui %193 : vector<1x128xi1> to vector<1x128xi32>
    %195 = arith.sitofp %194 : vector<1x128xi32> to vector<1x128xf32>
    %c1_i32_49 = arith.constant 1 : i32
    %196 = vector.broadcast %c1_i32_49 : i32 to vector<1x128xi32>
    %197 = arith.cmpi sge, %182, %196 : vector<1x128xi32>
    %c0_i32 = arith.constant 0 : i32
    %198 = vector.broadcast %c0_i32 : i32 to vector<1x128xi32>
    %199 = arith.cmpi sle, %178, %198 : vector<1x128xi32>
    %200 = arith.andi %197, %199 : vector<1x128xi1>
    %201 = arith.extui %200 : vector<1x128xi1> to vector<1x128xi32>
    %202 = arith.sitofp %201 : vector<1x128xi32> to vector<1x128xf32>
    %c1_i32_50 = arith.constant 1 : i32
    %203 = vector.broadcast %c1_i32_50 : i32 to vector<1x128xi32>
    %204 = arith.cmpi sge, %178, %203 : vector<1x128xi32>
    %205 = arith.extui %204 : vector<1x128xi1> to vector<1x128xi32>
    %206 = arith.sitofp %205 : vector<1x128xi32> to vector<1x128xf32>
    %c0_i32_51 = arith.constant 0 : i32
    %207 = vector.broadcast %c0_i32_51 : i32 to vector<1x128xi32>
    %208 = arith.cmpi sle, %178, %207 : vector<1x128xi32>
    %209 = arith.extui %208 : vector<1x128xi1> to vector<1x128xi32>
    %210 = arith.sitofp %209 : vector<1x128xi32> to vector<1x128xf32>
    %c0_i32_52 = arith.constant 0 : i32
    %211 = vector.broadcast %c0_i32_52 : i32 to vector<1x128xi32>
    %212 = arith.cmpi sle, %182, %211 : vector<1x128xi32>
    %c1_i32_53 = arith.constant 1 : i32
    %213 = vector.broadcast %c1_i32_53 : i32 to vector<1x128xi32>
    %214 = arith.cmpi sge, %178, %213 : vector<1x128xi32>
    %215 = arith.andi %212, %214 : vector<1x128xi1>
    %216 = arith.extui %215 : vector<1x128xi1> to vector<1x128xi32>
    %217 = arith.sitofp %216 : vector<1x128xi32> to vector<1x128xf32>
    %c0_i32_54 = arith.constant 0 : i32
    %218 = vector.broadcast %c0_i32_54 : i32 to vector<1x128xi32>
    %219 = arith.cmpi sle, %182, %218 : vector<1x128xi32>
    %220 = arith.extui %219 : vector<1x128xi1> to vector<1x128xi32>
    %221 = arith.sitofp %220 : vector<1x128xi32> to vector<1x128xf32>
    %c0_i32_55 = arith.constant 0 : i32
    %222 = vector.broadcast %c0_i32_55 : i32 to vector<1x128xi32>
    %223 = arith.cmpi sle, %182, %222 : vector<1x128xi32>
    %c0_i32_56 = arith.constant 0 : i32
    %224 = vector.broadcast %c0_i32_56 : i32 to vector<1x128xi32>
    %225 = arith.cmpi sle, %178, %224 : vector<1x128xi32>
    %226 = arith.andi %223, %225 : vector<1x128xi1>
    %227 = arith.extui %226 : vector<1x128xi1> to vector<1x128xi32>
    %228 = arith.sitofp %227 : vector<1x128xi32> to vector<1x128xf32>
    %229 = tpu.iota {dimensions = array<i32: 0>} : vector<2x128xi32>
    %230 = vector.broadcast %184 : vector<1x128xi32> to vector<2x128xi32>
    %231 = arith.cmpi eq, %229, %230 : vector<2x128xi32>
    %232 = arith.extui %231 : vector<2x128xi1> to vector<2x128xi32>
    %233 = arith.sitofp %232 : vector<2x128xi32> to vector<2x128xf32>
    %234 = tpu.iota {dimensions = array<i32: 0>} : vector<512x128xi32>
    %235 = tpu.iota {dimensions = array<i32: 1>} : vector<512x128xi32>
    %c15_i32_57 = arith.constant 15 : i32
    %236 = vector.broadcast %c15_i32_57 : i32 to vector<512x128xi32>
    %237 = arith.andi %234, %236 : vector<512x128xi32>
    %c4_i32_58 = arith.constant 4 : i32
    %238 = vector.broadcast %c4_i32_58 : i32 to vector<512x128xi32>
    %239 = arith.shrsi %234, %238 : vector<512x128xi32>
    %c15_i32_59 = arith.constant 15 : i32
    %240 = vector.broadcast %c15_i32_59 : i32 to vector<512x128xi32>
    %241 = arith.andi %239, %240 : vector<512x128xi32>
    %c8_i32_60 = arith.constant 8 : i32
    %242 = vector.broadcast %c8_i32_60 : i32 to vector<512x128xi32>
    %243 = arith.shrsi %234, %242 : vector<512x128xi32>
    %c8_i32_61 = arith.constant 8 : i32
    %244 = vector.broadcast %c8_i32_61 : i32 to vector<512x128xi32>
    %245 = arith.muli %243, %244 : vector<512x128xi32>
    %c1_i32_62 = arith.constant 1 : i32
    %246 = vector.broadcast %c1_i32_62 : i32 to vector<512x128xi32>
    %247 = arith.shrsi %241, %246 : vector<512x128xi32>
    %248 = arith.addi %245, %247 : vector<512x128xi32>
    %c8_i32_63 = arith.constant 8 : i32
    %249 = vector.broadcast %c8_i32_63 : i32 to vector<512x128xi32>
    %250 = arith.muli %248, %249 : vector<512x128xi32>
    %c1_i32_64 = arith.constant 1 : i32
    %251 = vector.broadcast %c1_i32_64 : i32 to vector<512x128xi32>
    %252 = arith.shrsi %237, %251 : vector<512x128xi32>
    %253 = arith.addi %250, %252 : vector<512x128xi32>
    %254 = arith.cmpi eq, %235, %253 : vector<512x128xi32>
    %c512_i32 = arith.constant 512 : i32
    %255 = vector.broadcast %c512_i32 : i32 to vector<512x128xi32>
    %256 = arith.cmpi slt, %234, %255 : vector<512x128xi32>
    %257 = arith.andi %254, %256 : vector<512x128xi1>
    %cst = arith.constant 2.500000e-01 : f32
    %cst_65 = arith.constant 0.000000e+00 : f32
    %258 = vector.broadcast %cst : f32 to vector<512x128xf32>
    %259 = vector.broadcast %cst_65 : f32 to vector<512x128xf32>
    %260 = arith.select %257, %258, %259 : vector<512x128xi1>, vector<512x128xf32>
    %261 = tpu.iota {dimensions = array<i32: 0>} : vector<128x512xi32>
    %262 = tpu.iota {dimensions = array<i32: 1>} : vector<128x512xi32>
    %c15_i32_66 = arith.constant 15 : i32
    %263 = vector.broadcast %c15_i32_66 : i32 to vector<128x512xi32>
    %264 = arith.andi %262, %263 : vector<128x512xi32>
    %c4_i32_67 = arith.constant 4 : i32
    %265 = vector.broadcast %c4_i32_67 : i32 to vector<128x512xi32>
    %266 = arith.shrsi %262, %265 : vector<128x512xi32>
    %c15_i32_68 = arith.constant 15 : i32
    %267 = vector.broadcast %c15_i32_68 : i32 to vector<128x512xi32>
    %268 = arith.andi %266, %267 : vector<128x512xi32>
    %c8_i32_69 = arith.constant 8 : i32
    %269 = vector.broadcast %c8_i32_69 : i32 to vector<128x512xi32>
    %270 = arith.shrsi %262, %269 : vector<128x512xi32>
    %c8_i32_70 = arith.constant 8 : i32
    %271 = vector.broadcast %c8_i32_70 : i32 to vector<128x512xi32>
    %272 = arith.muli %270, %271 : vector<128x512xi32>
    %c1_i32_71 = arith.constant 1 : i32
    %273 = vector.broadcast %c1_i32_71 : i32 to vector<128x512xi32>
    %274 = arith.shrsi %268, %273 : vector<128x512xi32>
    %275 = arith.addi %272, %274 : vector<128x512xi32>
    %c8_i32_72 = arith.constant 8 : i32
    %276 = vector.broadcast %c8_i32_72 : i32 to vector<128x512xi32>
    %277 = arith.muli %275, %276 : vector<128x512xi32>
    %c1_i32_73 = arith.constant 1 : i32
    %278 = vector.broadcast %c1_i32_73 : i32 to vector<128x512xi32>
    %279 = arith.shrsi %264, %278 : vector<128x512xi32>
    %280 = arith.addi %277, %279 : vector<128x512xi32>
    %281 = arith.cmpi eq, %261, %280 : vector<128x512xi32>
    %c512_i32_74 = arith.constant 512 : i32
    %282 = vector.broadcast %c512_i32_74 : i32 to vector<128x512xi32>
    %283 = arith.cmpi slt, %262, %282 : vector<128x512xi32>
    %284 = arith.andi %281, %283 : vector<128x512xi1>
    %cst_75 = arith.constant 1.000000e+00 : f32
    %cst_76 = arith.constant 0.000000e+00 : f32
    %285 = vector.broadcast %cst_75 : f32 to vector<128x512xf32>
    %286 = vector.broadcast %cst_76 : f32 to vector<128x512xf32>
    %287 = arith.select %284, %285, %286 : vector<128x512xi1>, vector<128x512xf32>
    %288 = tpu.iota {dimensions = array<i32: 0>} : vector<128x128xi32>
    %289 = tpu.iota {dimensions = array<i32: 1>} : vector<128x128xi32>
    %c7_i32_77 = arith.constant 7 : i32
    %290 = vector.broadcast %c7_i32_77 : i32 to vector<128x128xi32>
    %291 = arith.andi %288, %290 : vector<128x128xi32>
    %c3_i32_78 = arith.constant 3 : i32
    %292 = vector.broadcast %c3_i32_78 : i32 to vector<128x128xi32>
    %293 = arith.shrsi %288, %292 : vector<128x128xi32>
    %c7_i32_79 = arith.constant 7 : i32
    %294 = vector.broadcast %c7_i32_79 : i32 to vector<128x128xi32>
    %295 = arith.andi %293, %294 : vector<128x128xi32>
    %c6_i32_80 = arith.constant 6 : i32
    %296 = vector.broadcast %c6_i32_80 : i32 to vector<128x128xi32>
    %297 = arith.shrsi %288, %296 : vector<128x128xi32>
    %c4_i32_81 = arith.constant 4 : i32
    %298 = vector.broadcast %c4_i32_81 : i32 to vector<128x128xi32>
    %299 = arith.muli %297, %298 : vector<128x128xi32>
    %c1_i32_82 = arith.constant 1 : i32
    %300 = vector.broadcast %c1_i32_82 : i32 to vector<128x128xi32>
    %301 = arith.shrsi %295, %300 : vector<128x128xi32>
    %302 = arith.addi %299, %301 : vector<128x128xi32>
    %c4_i32_83 = arith.constant 4 : i32
    %303 = vector.broadcast %c4_i32_83 : i32 to vector<128x128xi32>
    %304 = arith.muli %302, %303 : vector<128x128xi32>
    %c1_i32_84 = arith.constant 1 : i32
    %305 = vector.broadcast %c1_i32_84 : i32 to vector<128x128xi32>
    %306 = arith.shrsi %291, %305 : vector<128x128xi32>
    %307 = arith.addi %304, %306 : vector<128x128xi32>
    %308 = arith.cmpi eq, %289, %307 : vector<128x128xi32>
    %c128_i32 = arith.constant 128 : i32
    %309 = vector.broadcast %c128_i32 : i32 to vector<128x128xi32>
    %310 = arith.cmpi slt, %288, %309 : vector<128x128xi32>
    %311 = arith.andi %308, %310 : vector<128x128xi1>
    %cst_85 = arith.constant 2.500000e-01 : f32
    %cst_86 = arith.constant 0.000000e+00 : f32
    %312 = vector.broadcast %cst_85 : f32 to vector<128x128xf32>
    %313 = vector.broadcast %cst_86 : f32 to vector<128x128xf32>
    %314 = arith.select %311, %312, %313 : vector<128x128xi1>, vector<128x128xf32>
    %315 = tpu.iota {dimensions = array<i32: 0>} : vector<128x128xi32>
    %316 = tpu.iota {dimensions = array<i32: 1>} : vector<128x128xi32>
    %c7_i32_87 = arith.constant 7 : i32
    %317 = vector.broadcast %c7_i32_87 : i32 to vector<128x128xi32>
    %318 = arith.andi %316, %317 : vector<128x128xi32>
    %c3_i32_88 = arith.constant 3 : i32
    %319 = vector.broadcast %c3_i32_88 : i32 to vector<128x128xi32>
    %320 = arith.shrsi %316, %319 : vector<128x128xi32>
    %c7_i32_89 = arith.constant 7 : i32
    %321 = vector.broadcast %c7_i32_89 : i32 to vector<128x128xi32>
    %322 = arith.andi %320, %321 : vector<128x128xi32>
    %c6_i32_90 = arith.constant 6 : i32
    %323 = vector.broadcast %c6_i32_90 : i32 to vector<128x128xi32>
    %324 = arith.shrsi %316, %323 : vector<128x128xi32>
    %c4_i32_91 = arith.constant 4 : i32
    %325 = vector.broadcast %c4_i32_91 : i32 to vector<128x128xi32>
    %326 = arith.muli %324, %325 : vector<128x128xi32>
    %c1_i32_92 = arith.constant 1 : i32
    %327 = vector.broadcast %c1_i32_92 : i32 to vector<128x128xi32>
    %328 = arith.shrsi %322, %327 : vector<128x128xi32>
    %329 = arith.addi %326, %328 : vector<128x128xi32>
    %c4_i32_93 = arith.constant 4 : i32
    %330 = vector.broadcast %c4_i32_93 : i32 to vector<128x128xi32>
    %331 = arith.muli %329, %330 : vector<128x128xi32>
    %c1_i32_94 = arith.constant 1 : i32
    %332 = vector.broadcast %c1_i32_94 : i32 to vector<128x128xi32>
    %333 = arith.shrsi %318, %332 : vector<128x128xi32>
    %334 = arith.addi %331, %333 : vector<128x128xi32>
    %335 = arith.cmpi eq, %315, %334 : vector<128x128xi32>
    %c128_i32_95 = arith.constant 128 : i32
    %336 = vector.broadcast %c128_i32_95 : i32 to vector<128x128xi32>
    %337 = arith.cmpi slt, %316, %336 : vector<128x128xi32>
    %338 = arith.andi %335, %337 : vector<128x128xi1>
    %cst_96 = arith.constant 1.000000e+00 : f32
    %cst_97 = arith.constant 0.000000e+00 : f32
    %339 = vector.broadcast %cst_96 : f32 to vector<128x128xf32>
    %340 = vector.broadcast %cst_97 : f32 to vector<128x128xf32>
    %341 = arith.select %338, %339, %340 : vector<128x128xi1>, vector<128x128xf32>
    %342 = tpu.iota {dimensions = array<i32: 0>} : vector<128x128xi32>
    %343 = tpu.iota {dimensions = array<i32: 1>} : vector<128x128xi32>
    %c3_i32_98 = arith.constant 3 : i32
    %344 = vector.broadcast %c3_i32_98 : i32 to vector<128x128xi32>
    %345 = arith.andi %342, %344 : vector<128x128xi32>
    %c2_i32_99 = arith.constant 2 : i32
    %346 = vector.broadcast %c2_i32_99 : i32 to vector<128x128xi32>
    %347 = arith.shrsi %342, %346 : vector<128x128xi32>
    %c3_i32_100 = arith.constant 3 : i32
    %348 = vector.broadcast %c3_i32_100 : i32 to vector<128x128xi32>
    %349 = arith.andi %347, %348 : vector<128x128xi32>
    %c4_i32_101 = arith.constant 4 : i32
    %350 = vector.broadcast %c4_i32_101 : i32 to vector<128x128xi32>
    %351 = arith.shrsi %342, %350 : vector<128x128xi32>
    %c2_i32_102 = arith.constant 2 : i32
    %352 = vector.broadcast %c2_i32_102 : i32 to vector<128x128xi32>
    %353 = arith.muli %351, %352 : vector<128x128xi32>
    %c1_i32_103 = arith.constant 1 : i32
    %354 = vector.broadcast %c1_i32_103 : i32 to vector<128x128xi32>
    %355 = arith.shrsi %349, %354 : vector<128x128xi32>
    %356 = arith.addi %353, %355 : vector<128x128xi32>
    %c2_i32_104 = arith.constant 2 : i32
    %357 = vector.broadcast %c2_i32_104 : i32 to vector<128x128xi32>
    %358 = arith.muli %356, %357 : vector<128x128xi32>
    %c1_i32_105 = arith.constant 1 : i32
    %359 = vector.broadcast %c1_i32_105 : i32 to vector<128x128xi32>
    %360 = arith.shrsi %345, %359 : vector<128x128xi32>
    %361 = arith.addi %358, %360 : vector<128x128xi32>
    %362 = arith.cmpi eq, %343, %361 : vector<128x128xi32>
    %c32_i32 = arith.constant 32 : i32
    %363 = vector.broadcast %c32_i32 : i32 to vector<128x128xi32>
    %364 = arith.cmpi slt, %342, %363 : vector<128x128xi32>
    %365 = arith.andi %362, %364 : vector<128x128xi1>
    %cst_106 = arith.constant 2.500000e-01 : f32
    %cst_107 = arith.constant 0.000000e+00 : f32
    %366 = vector.broadcast %cst_106 : f32 to vector<128x128xf32>
    %367 = vector.broadcast %cst_107 : f32 to vector<128x128xf32>
    %368 = arith.select %365, %366, %367 : vector<128x128xi1>, vector<128x128xf32>
    %369 = tpu.iota {dimensions = array<i32: 0>} : vector<128x128xi32>
    %370 = tpu.iota {dimensions = array<i32: 1>} : vector<128x128xi32>
    %c3_i32_108 = arith.constant 3 : i32
    %371 = vector.broadcast %c3_i32_108 : i32 to vector<128x128xi32>
    %372 = arith.andi %370, %371 : vector<128x128xi32>
    %c2_i32_109 = arith.constant 2 : i32
    %373 = vector.broadcast %c2_i32_109 : i32 to vector<128x128xi32>
    %374 = arith.shrsi %370, %373 : vector<128x128xi32>
    %c3_i32_110 = arith.constant 3 : i32
    %375 = vector.broadcast %c3_i32_110 : i32 to vector<128x128xi32>
    %376 = arith.andi %374, %375 : vector<128x128xi32>
    %c4_i32_111 = arith.constant 4 : i32
    %377 = vector.broadcast %c4_i32_111 : i32 to vector<128x128xi32>
    %378 = arith.shrsi %370, %377 : vector<128x128xi32>
    %c2_i32_112 = arith.constant 2 : i32
    %379 = vector.broadcast %c2_i32_112 : i32 to vector<128x128xi32>
    %380 = arith.muli %378, %379 : vector<128x128xi32>
    %c1_i32_113 = arith.constant 1 : i32
    %381 = vector.broadcast %c1_i32_113 : i32 to vector<128x128xi32>
    %382 = arith.shrsi %376, %381 : vector<128x128xi32>
    %383 = arith.addi %380, %382 : vector<128x128xi32>
    %c2_i32_114 = arith.constant 2 : i32
    %384 = vector.broadcast %c2_i32_114 : i32 to vector<128x128xi32>
    %385 = arith.muli %383, %384 : vector<128x128xi32>
    %c1_i32_115 = arith.constant 1 : i32
    %386 = vector.broadcast %c1_i32_115 : i32 to vector<128x128xi32>
    %387 = arith.shrsi %372, %386 : vector<128x128xi32>
    %388 = arith.addi %385, %387 : vector<128x128xi32>
    %389 = arith.cmpi eq, %369, %388 : vector<128x128xi32>
    %c32_i32_116 = arith.constant 32 : i32
    %390 = vector.broadcast %c32_i32_116 : i32 to vector<128x128xi32>
    %391 = arith.cmpi slt, %370, %390 : vector<128x128xi32>
    %392 = arith.andi %389, %391 : vector<128x128xi1>
    %cst_117 = arith.constant 1.000000e+00 : f32
    %cst_118 = arith.constant 0.000000e+00 : f32
    %393 = vector.broadcast %cst_117 : f32 to vector<128x128xf32>
    %394 = vector.broadcast %cst_118 : f32 to vector<128x128xf32>
    %395 = arith.select %392, %393, %394 : vector<128x128xi1>, vector<128x128xf32>
    %c0_119 = arith.constant 0 : index
    %c0_120 = arith.constant 0 : index
    %396 = vector.load %arg2[%c0_119, %c0_120] : memref<8x16xf32, #tpu.memory_space<vmem>>, vector<8x16xf32>
    %c0_121 = arith.constant 0 : index
    %c0_122 = arith.constant 0 : index
    %397 = vector.load %arg3[%c0_121, %c0_122] : memref<8x1xf32, #tpu.memory_space<vmem>>, vector<8x1xf32>
    %c0_123 = arith.constant 0 : index
    %c0_124 = arith.constant 0 : index
    %398 = vector.load %arg5[%c0_123, %c0_124] : memref<8x1xf32, #tpu.memory_space<vmem>>, vector<8x1xf32>
    %c0_125 = arith.constant 0 : index
    %c0_126 = arith.constant 0 : index
    %399 = vector.load %arg7[%c0_125, %c0_126] : memref<8x1xf32, #tpu.memory_space<vmem>>, vector<8x1xf32>
    %c0_127 = arith.constant 0 : index
    %c0_128 = arith.constant 0 : index
    %400 = vector.load %arg8[%c0_127, %c0_128] : memref<8x1xf32, #tpu.memory_space<vmem>>, vector<8x1xf32>
    %c0_129 = arith.constant 0 : index
    %c0_130 = arith.constant 0 : index
    %401 = vector.load %arg9[%c0_129, %c0_130] : memref<8x1xf32, #tpu.memory_space<vmem>>, vector<8x1xf32>
    %cst_131 = arith.constant dense<0.000000e+00> : vector<8x2xf32>
    %402 = tpu.matmul %396, %1, %cst_131 {dimension_numbers = #tpu.dot_dimension_numbers<[1], [0], [0], [1], [0, 0, 1, 1], [], []>} : vector<8x16xf32>, vector<16x2xf32>, vector<8x2xf32> -> vector<8x2xf32>
    %403 = vector.broadcast %397 : vector<8x1xf32> to vector<8x2xf32>
    %404 = arith.addf %402, %403 : vector<8x2xf32>
    %cst_132 = arith.constant dense<0.000000e+00> : vector<8x512xf32>
    %405 = tpu.matmul %404, %59, %cst_132 {dimension_numbers = #tpu.dot_dimension_numbers<[1], [0], [0], [1], [0, 0, 1, 1], [], []>} : vector<8x2xf32>, vector<2x512xf32>, vector<8x512xf32> -> vector<8x512xf32>
    %c17_i32 = arith.constant 17 : i32
    %406 = tpu.dynamic_rotate %0 by %c17_i32 dim 1 : vector<1x512xf32>, i32 -> vector<1x512xf32>
    %407 = arith.mulf %406, %17 : vector<1x512xf32>
    %c16_i32 = arith.constant 16 : i32
    %408 = tpu.dynamic_rotate %0 by %c16_i32 dim 1 : vector<1x512xf32>, i32 -> vector<1x512xf32>
    %409 = arith.mulf %408, %21 : vector<1x512xf32>
    %c15_i32_133 = arith.constant 15 : i32
    %410 = tpu.dynamic_rotate %0 by %c15_i32_133 dim 1 : vector<1x512xf32>, i32 -> vector<1x512xf32>
    %411 = arith.mulf %410, %28 : vector<1x512xf32>
    %c1_i32_134 = arith.constant 1 : i32
    %412 = tpu.dynamic_rotate %0 by %c1_i32_134 dim 1 : vector<1x512xf32>, i32 -> vector<1x512xf32>
    %413 = arith.mulf %412, %32 : vector<1x512xf32>
    %c511_i32 = arith.constant 511 : i32
    %414 = tpu.dynamic_rotate %0 by %c511_i32 dim 1 : vector<1x512xf32>, i32 -> vector<1x512xf32>
    %415 = arith.mulf %414, %36 : vector<1x512xf32>
    %c497_i32 = arith.constant 497 : i32
    %416 = tpu.dynamic_rotate %0 by %c497_i32 dim 1 : vector<1x512xf32>, i32 -> vector<1x512xf32>
    %417 = arith.mulf %416, %43 : vector<1x512xf32>
    %c496_i32 = arith.constant 496 : i32
    %418 = tpu.dynamic_rotate %0 by %c496_i32 dim 1 : vector<1x512xf32>, i32 -> vector<1x512xf32>
    %419 = arith.mulf %418, %47 : vector<1x512xf32>
    %c495_i32 = arith.constant 495 : i32
    %420 = tpu.dynamic_rotate %0 by %c495_i32 dim 1 : vector<1x512xf32>, i32 -> vector<1x512xf32>
    %421 = arith.mulf %420, %54 : vector<1x512xf32>
    %c0_135 = arith.constant 0 : index
    %c0_136 = arith.constant 0 : index
    %422 = vector.load %arg4[%c0_135, %c0_136] : memref<8x9xf32, #tpu.memory_space<vmem>>, vector<8x9xf32>
    %423 = vector.extract_strided_slice %422 {offsets = [0, 0], sizes = [8, 1], strides = [1, 1]} : vector<8x9xf32> to vector<8x1xf32>
    %424 = vector.broadcast %423 : vector<8x1xf32> to vector<8x512xf32>
    %425 = vector.broadcast %407 : vector<1x512xf32> to vector<8x512xf32>
    %426 = arith.mulf %424, %425 : vector<8x512xf32>
    %427 = vector.broadcast %398 : vector<8x1xf32> to vector<8x512xf32>
    %428 = arith.addf %427, %426 : vector<8x512xf32>
    %429 = vector.extract_strided_slice %422 {offsets = [0, 1], sizes = [8, 1], strides = [1, 1]} : vector<8x9xf32> to vector<8x1xf32>
    %430 = vector.broadcast %429 : vector<8x1xf32> to vector<8x512xf32>
    %431 = vector.broadcast %409 : vector<1x512xf32> to vector<8x512xf32>
    %432 = arith.mulf %430, %431 : vector<8x512xf32>
    %433 = arith.addf %428, %432 : vector<8x512xf32>
    %434 = vector.extract_strided_slice %422 {offsets = [0, 2], sizes = [8, 1], strides = [1, 1]} : vector<8x9xf32> to vector<8x1xf32>
    %435 = vector.broadcast %434 : vector<8x1xf32> to vector<8x512xf32>
    %436 = vector.broadcast %411 : vector<1x512xf32> to vector<8x512xf32>
    %437 = arith.mulf %435, %436 : vector<8x512xf32>
    %438 = arith.addf %433, %437 : vector<8x512xf32>
    %439 = vector.extract_strided_slice %422 {offsets = [0, 3], sizes = [8, 1], strides = [1, 1]} : vector<8x9xf32> to vector<8x1xf32>
    %440 = vector.broadcast %439 : vector<8x1xf32> to vector<8x512xf32>
    %441 = vector.broadcast %413 : vector<1x512xf32> to vector<8x512xf32>
    %442 = arith.mulf %440, %441 : vector<8x512xf32>
    %443 = arith.addf %438, %442 : vector<8x512xf32>
    %444 = vector.extract_strided_slice %422 {offsets = [0, 4], sizes = [8, 1], strides = [1, 1]} : vector<8x9xf32> to vector<8x1xf32>
    %445 = vector.broadcast %444 : vector<8x1xf32> to vector<8x512xf32>
    %446 = vector.broadcast %0 : vector<1x512xf32> to vector<8x512xf32>
    %447 = arith.mulf %445, %446 : vector<8x512xf32>
    %448 = arith.addf %443, %447 : vector<8x512xf32>
    %449 = vector.extract_strided_slice %422 {offsets = [0, 5], sizes = [8, 1], strides = [1, 1]} : vector<8x9xf32> to vector<8x1xf32>
    %450 = vector.broadcast %449 : vector<8x1xf32> to vector<8x512xf32>
    %451 = vector.broadcast %415 : vector<1x512xf32> to vector<8x512xf32>
    %452 = arith.mulf %450, %451 : vector<8x512xf32>
    %453 = arith.addf %448, %452 : vector<8x512xf32>
    %454 = vector.extract_strided_slice %422 {offsets = [0, 6], sizes = [8, 1], strides = [1, 1]} : vector<8x9xf32> to vector<8x1xf32>
    %455 = vector.broadcast %454 : vector<8x1xf32> to vector<8x512xf32>
    %456 = vector.broadcast %417 : vector<1x512xf32> to vector<8x512xf32>
    %457 = arith.mulf %455, %456 : vector<8x512xf32>
    %458 = arith.addf %453, %457 : vector<8x512xf32>
    %459 = vector.extract_strided_slice %422 {offsets = [0, 7], sizes = [8, 1], strides = [1, 1]} : vector<8x9xf32> to vector<8x1xf32>
    %460 = vector.broadcast %459 : vector<8x1xf32> to vector<8x512xf32>
    %461 = vector.broadcast %419 : vector<1x512xf32> to vector<8x512xf32>
    %462 = arith.mulf %460, %461 : vector<8x512xf32>
    %463 = arith.addf %458, %462 : vector<8x512xf32>
    %464 = vector.extract_strided_slice %422 {offsets = [0, 8], sizes = [8, 1], strides = [1, 1]} : vector<8x9xf32> to vector<8x1xf32>
    %465 = vector.broadcast %464 : vector<8x1xf32> to vector<8x512xf32>
    %466 = vector.broadcast %421 : vector<1x512xf32> to vector<8x512xf32>
    %467 = arith.mulf %465, %466 : vector<8x512xf32>
    %468 = arith.addf %463, %467 : vector<8x512xf32>
    %469 = arith.negf %468 : vector<8x512xf32>
    %470 = math.exp %469 : vector<8x512xf32>
    %cst_137 = arith.constant 1.000000e+00 : f32
    %471 = vector.broadcast %cst_137 : f32 to vector<8x512xf32>
    %472 = arith.addf %471, %470 : vector<8x512xf32>
    %473 = arith.divf %471, %472 : vector<8x512xf32>
    %474 = arith.mulf %468, %473 : vector<8x512xf32>
    %475 = arith.addf %474, %405 : vector<8x512xf32>
    %476 = arith.negf %475 : vector<8x512xf32>
    %477 = math.exp %476 : vector<8x512xf32>
    %cst_138 = arith.constant 1.000000e+00 : f32
    %478 = vector.broadcast %cst_138 : f32 to vector<8x512xf32>
    %479 = arith.addf %478, %477 : vector<8x512xf32>
    %480 = arith.divf %478, %479 : vector<8x512xf32>
    %481 = arith.mulf %475, %480 : vector<8x512xf32>
    %c17_i32_139 = arith.constant 17 : i32
    %482 = tpu.dynamic_rotate %481 by %c17_i32_139 dim 1 : vector<8x512xf32>, i32 -> vector<8x512xf32>
    %483 = vector.broadcast %17 : vector<1x512xf32> to vector<8x512xf32>
    %484 = arith.mulf %482, %483 : vector<8x512xf32>
    %c16_i32_140 = arith.constant 16 : i32
    %485 = tpu.dynamic_rotate %481 by %c16_i32_140 dim 1 : vector<8x512xf32>, i32 -> vector<8x512xf32>
    %486 = vector.broadcast %21 : vector<1x512xf32> to vector<8x512xf32>
    %487 = arith.mulf %485, %486 : vector<8x512xf32>
    %c15_i32_141 = arith.constant 15 : i32
    %488 = tpu.dynamic_rotate %481 by %c15_i32_141 dim 1 : vector<8x512xf32>, i32 -> vector<8x512xf32>
    %489 = vector.broadcast %28 : vector<1x512xf32> to vector<8x512xf32>
    %490 = arith.mulf %488, %489 : vector<8x512xf32>
    %c1_i32_142 = arith.constant 1 : i32
    %491 = tpu.dynamic_rotate %481 by %c1_i32_142 dim 1 : vector<8x512xf32>, i32 -> vector<8x512xf32>
    %492 = vector.broadcast %32 : vector<1x512xf32> to vector<8x512xf32>
    %493 = arith.mulf %491, %492 : vector<8x512xf32>
    %c511_i32_143 = arith.constant 511 : i32
    %494 = tpu.dynamic_rotate %481 by %c511_i32_143 dim 1 : vector<8x512xf32>, i32 -> vector<8x512xf32>
    %495 = vector.broadcast %36 : vector<1x512xf32> to vector<8x512xf32>
    %496 = arith.mulf %494, %495 : vector<8x512xf32>
    %c497_i32_144 = arith.constant 497 : i32
    %497 = tpu.dynamic_rotate %481 by %c497_i32_144 dim 1 : vector<8x512xf32>, i32 -> vector<8x512xf32>
    %498 = vector.broadcast %43 : vector<1x512xf32> to vector<8x512xf32>
    %499 = arith.mulf %497, %498 : vector<8x512xf32>
    %c496_i32_145 = arith.constant 496 : i32
    %500 = tpu.dynamic_rotate %481 by %c496_i32_145 dim 1 : vector<8x512xf32>, i32 -> vector<8x512xf32>
    %501 = vector.broadcast %47 : vector<1x512xf32> to vector<8x512xf32>
    %502 = arith.mulf %500, %501 : vector<8x512xf32>
    %c495_i32_146 = arith.constant 495 : i32
    %503 = tpu.dynamic_rotate %481 by %c495_i32_146 dim 1 : vector<8x512xf32>, i32 -> vector<8x512xf32>
    %504 = vector.broadcast %54 : vector<1x512xf32> to vector<8x512xf32>
    %505 = arith.mulf %503, %504 : vector<8x512xf32>
    %c0_147 = arith.constant 0 : index
    %c0_148 = arith.constant 0 : index
    %506 = vector.load %arg6[%c0_147, %c0_148] : memref<8x72xf32, #tpu.memory_space<vmem>>, vector<8x72xf32>
    %507 = tpu.concatenate %484, %487, %490, %493, %481, %496, %499, %502, %505 in 0 : vector<8x512xf32>, vector<8x512xf32>, vector<8x512xf32>, vector<8x512xf32>, vector<8x512xf32>, vector<8x512xf32>, vector<8x512xf32>, vector<8x512xf32>, vector<8x512xf32> -> vector<72x512xf32>
    %cst_149 = arith.constant dense<0.000000e+00> : vector<8x512xf32>
    %508 = tpu.matmul %506, %507, %cst_149 {dimension_numbers = #tpu.dot_dimension_numbers<[1], [0], [0], [1], [0, 0, 1, 1], [], []>} : vector<8x72xf32>, vector<72x512xf32>, vector<8x512xf32> -> vector<8x512xf32>
    %509 = vector.broadcast %399 : vector<8x1xf32> to vector<8x512xf32>
    %510 = arith.addf %508, %509 : vector<8x512xf32>
    %511 = vector.broadcast %400 : vector<8x1xf32> to vector<8x512xf32>
    %512 = vector.broadcast %0 : vector<1x512xf32> to vector<8x512xf32>
    %513 = arith.mulf %511, %512 : vector<8x512xf32>
    %514 = vector.broadcast %401 : vector<8x1xf32> to vector<8x512xf32>
    %515 = arith.addf %513, %514 : vector<8x512xf32>
    %516 = arith.addf %510, %515 : vector<8x512xf32>
    %c0_150 = arith.constant 0 : index
    %c0_151 = arith.constant 0 : index
    %517 = vector.load %arg57[%c0_150, %c0_151] : memref<8x512xf32, #tpu.memory_space<vmem>>, vector<8x512xf32>
    tpu.vector_store %arg57[%c0_150, %c0_151], %516 {strides = array<i32>} : memref<8x512xf32, #tpu.memory_space<vmem>>, vector<8x512xf32>,
    %cst_152 = arith.constant dense<0.000000e+00> : vector<8x128xf32>
    %518 = tpu.matmul %516, %260, %cst_152 {dimension_numbers = #tpu.dot_dimension_numbers<[1], [0], [0], [1], [0, 0, 1, 1], [], []>} : vector<8x512xf32>, vector<512x128xf32>, vector<8x128xf32> -> vector<8x128xf32>
    %c0_153 = arith.constant 0 : index
    %c0_154 = arith.constant 0 : index
    %519 = vector.load %arg10[%c0_153, %c0_154] : memref<16x16xf32, #tpu.memory_space<vmem>>, vector<16x16xf32>
    %c0_155 = arith.constant 0 : index
    %c0_156 = arith.constant 0 : index
    %520 = vector.load %arg11[%c0_155, %c0_156] : memref<16x1xf32, #tpu.memory_space<vmem>>, vector<16x1xf32>
    %c0_157 = arith.constant 0 : index
    %c0_158 = arith.constant 0 : index
    %521 = vector.load %arg13[%c0_157, %c0_158] : memref<16x1xf32, #tpu.memory_space<vmem>>, vector<16x1xf32>
    %c0_159 = arith.constant 0 : index
    %c0_160 = arith.constant 0 : index
    %522 = vector.load %arg15[%c0_159, %c0_160] : memref<16x1xf32, #tpu.memory_space<vmem>>, vector<16x1xf32>
    %c0_161 = arith.constant 0 : index
    %c0_162 = arith.constant 0 : index
    %523 = vector.load %arg16[%c0_161, %c0_162] : memref<16x8xf32, #tpu.memory_space<vmem>>, vector<16x8xf32>
    %c0_163 = arith.constant 0 : index
    %c0_164 = arith.constant 0 : index
    %524 = vector.load %arg17[%c0_163, %c0_164] : memref<16x1xf32, #tpu.memory_space<vmem>>, vector<16x1xf32>
    %cst_165 = arith.constant dense<0.000000e+00> : vector<16x2xf32>
    %525 = tpu.matmul %519, %1, %cst_165 {dimension_numbers = #tpu.dot_dimension_numbers<[1], [0], [0], [1], [0, 0, 1, 1], [], []>} : vector<16x16xf32>, vector<16x2xf32>, vector<16x2xf32> -> vector<16x2xf32>
    %526 = vector.broadcast %520 : vector<16x1xf32> to vector<16x2xf32>
    %527 = arith.addf %525, %526 : vector<16x2xf32>
    %cst_166 = arith.constant dense<0.000000e+00> : vector<16x128xf32>
    %528 = tpu.matmul %527, %117, %cst_166 {dimension_numbers = #tpu.dot_dimension_numbers<[1], [0], [0], [1], [0, 0, 1, 1], [], []>} : vector<16x2xf32>, vector<2x128xf32>, vector<16x128xf32> -> vector<16x128xf32>
    %c9_i32 = arith.constant 9 : i32
    %529 = tpu.dynamic_rotate %518 by %c9_i32 dim 1 : vector<8x128xf32>, i32 -> vector<8x128xf32>
    %530 = vector.broadcast %75 : vector<1x128xf32> to vector<8x128xf32>
    %531 = arith.mulf %529, %530 : vector<8x128xf32>
    %c8_i32_167 = arith.constant 8 : i32
    %532 = tpu.dynamic_rotate %518 by %c8_i32_167 dim 1 : vector<8x128xf32>, i32 -> vector<8x128xf32>
    %533 = vector.broadcast %79 : vector<1x128xf32> to vector<8x128xf32>
    %534 = arith.mulf %532, %533 : vector<8x128xf32>
    %c7_i32_168 = arith.constant 7 : i32
    %535 = tpu.dynamic_rotate %518 by %c7_i32_168 dim 1 : vector<8x128xf32>, i32 -> vector<8x128xf32>
    %536 = vector.broadcast %86 : vector<1x128xf32> to vector<8x128xf32>
    %537 = arith.mulf %535, %536 : vector<8x128xf32>
    %c1_i32_169 = arith.constant 1 : i32
    %538 = tpu.dynamic_rotate %518 by %c1_i32_169 dim 1 : vector<8x128xf32>, i32 -> vector<8x128xf32>
    %539 = vector.broadcast %90 : vector<1x128xf32> to vector<8x128xf32>
    %540 = arith.mulf %538, %539 : vector<8x128xf32>
    %c127_i32 = arith.constant 127 : i32
    %541 = tpu.dynamic_rotate %518 by %c127_i32 dim 1 : vector<8x128xf32>, i32 -> vector<8x128xf32>
    %542 = vector.broadcast %94 : vector<1x128xf32> to vector<8x128xf32>
    %543 = arith.mulf %541, %542 : vector<8x128xf32>
    %c121_i32 = arith.constant 121 : i32
    %544 = tpu.dynamic_rotate %518 by %c121_i32 dim 1 : vector<8x128xf32>, i32 -> vector<8x128xf32>
    %545 = vector.broadcast %101 : vector<1x128xf32> to vector<8x128xf32>
    %546 = arith.mulf %544, %545 : vector<8x128xf32>
    %c120_i32 = arith.constant 120 : i32
    %547 = tpu.dynamic_rotate %518 by %c120_i32 dim 1 : vector<8x128xf32>, i32 -> vector<8x128xf32>
    %548 = vector.broadcast %105 : vector<1x128xf32> to vector<8x128xf32>
    %549 = arith.mulf %547, %548 : vector<8x128xf32>
    %c119_i32 = arith.constant 119 : i32
    %550 = tpu.dynamic_rotate %518 by %c119_i32 dim 1 : vector<8x128xf32>, i32 -> vector<8x128xf32>
    %551 = vector.broadcast %112 : vector<1x128xf32> to vector<8x128xf32>
    %552 = arith.mulf %550, %551 : vector<8x128xf32>
    %c0_170 = arith.constant 0 : index
    %c0_171 = arith.constant 0 : index
    %553 = vector.load %arg12[%c0_170, %c0_171] : memref<16x72xf32, #tpu.memory_space<vmem>>, vector<16x72xf32>
    %554 = tpu.concatenate %531, %534, %537, %540, %518, %543, %546, %549, %552 in 0 : vector<8x128xf32>, vector<8x128xf32>, vector<8x128xf32>, vector<8x128xf32>, vector<8x128xf32>, vector<8x128xf32>, vector<8x128xf32>, vector<8x128xf32>, vector<8x128xf32> -> vector<72x128xf32>
    %cst_172 = arith.constant dense<0.000000e+00> : vector<16x128xf32>
    %555 = tpu.matmul %553, %554, %cst_172 {dimension_numbers = #tpu.dot_dimension_numbers<[1], [0], [0], [1], [0, 0, 1, 1], [], []>} : vector<16x72xf32>, vector<72x128xf32>, vector<16x128xf32> -> vector<16x128xf32>
    %556 = vector.broadcast %521 : vector<16x1xf32> to vector<16x128xf32>
    %557 = arith.addf %555, %556 : vector<16x128xf32>
    %558 = arith.negf %557 : vector<16x128xf32>
    %559 = math.exp %558 : vector<16x128xf32>
    %cst_173 = arith.constant 1.000000e+00 : f32
    %560 = vector.broadcast %cst_173 : f32 to vector<16x128xf32>
    %561 = arith.addf %560, %559 : vector<16x128xf32>
    %562 = arith.divf %560, %561 : vector<16x128xf32>
    %563 = arith.mulf %557, %562 : vector<16x128xf32>
    %564 = arith.addf %563, %528 : vector<16x128xf32>
    %565 = arith.negf %564 : vector<16x128xf32>
    %566 = math.exp %565 : vector<16x128xf32>
    %cst_174 = arith.constant 1.000000e+00 : f32
    %567 = vector.broadcast %cst_174 : f32 to vector<16x128xf32>
    %568 = arith.addf %567, %566 : vector<16x128xf32>
    %569 = arith.divf %567, %568 : vector<16x128xf32>
    %570 = arith.mulf %564, %569 : vector<16x128xf32>
    %c9_i32_175 = arith.constant 9 : i32
    %571 = tpu.dynamic_rotate %570 by %c9_i32_175 dim 1 : vector<16x128xf32>, i32 -> vector<16x128xf32>
    %572 = vector.broadcast %75 : vector<1x128xf32> to vector<16x128xf32>
    %573 = arith.mulf %571, %572 : vector<16x128xf32>
    %c8_i32_176 = arith.constant 8 : i32
    %574 = tpu.dynamic_rotate %570 by %c8_i32_176 dim 1 : vector<16x128xf32>, i32 -> vector<16x128xf32>
    %575 = vector.broadcast %79 : vector<1x128xf32> to vector<16x128xf32>
    %576 = arith.mulf %574, %575 : vector<16x128xf32>
    %c7_i32_177 = arith.constant 7 : i32
    %577 = tpu.dynamic_rotate %570 by %c7_i32_177 dim 1 : vector<16x128xf32>, i32 -> vector<16x128xf32>
    %578 = vector.broadcast %86 : vector<1x128xf32> to vector<16x128xf32>
    %579 = arith.mulf %577, %578 : vector<16x128xf32>
    %c1_i32_178 = arith.constant 1 : i32
    %580 = tpu.dynamic_rotate %570 by %c1_i32_178 dim 1 : vector<16x128xf32>, i32 -> vector<16x128xf32>
    %581 = vector.broadcast %90 : vector<1x128xf32> to vector<16x128xf32>
    %582 = arith.mulf %580, %581 : vector<16x128xf32>
    %c127_i32_179 = arith.constant 127 : i32
    %583 = tpu.dynamic_rotate %570 by %c127_i32_179 dim 1 : vector<16x128xf32>, i32 -> vector<16x128xf32>
    %584 = vector.broadcast %94 : vector<1x128xf32> to vector<16x128xf32>
    %585 = arith.mulf %583, %584 : vector<16x128xf32>
    %c121_i32_180 = arith.constant 121 : i32
    %586 = tpu.dynamic_rotate %570 by %c121_i32_180 dim 1 : vector<16x128xf32>, i32 -> vector<16x128xf32>
    %587 = vector.broadcast %101 : vector<1x128xf32> to vector<16x128xf32>
    %588 = arith.mulf %586, %587 : vector<16x128xf32>
    %c120_i32_181 = arith.constant 120 : i32
    %589 = tpu.dynamic_rotate %570 by %c120_i32_181 dim 1 : vector<16x128xf32>, i32 -> vector<16x128xf32>
    %590 = vector.broadcast %105 : vector<1x128xf32> to vector<16x128xf32>
    %591 = arith.mulf %589, %590 : vector<16x128xf32>
    %c119_i32_182 = arith.constant 119 : i32
    %592 = tpu.dynamic_rotate %570 by %c119_i32_182 dim 1 : vector<16x128xf32>, i32 -> vector<16x128xf32>
    %593 = vector.broadcast %112 : vector<1x128xf32> to vector<16x128xf32>
    %594 = arith.mulf %592, %593 : vector<16x128xf32>
    %c0_183 = arith.constant 0 : index
    %c0_184 = arith.constant 0 : index
    %595 = vector.load %arg14[%c0_183, %c0_184] : memref<16x144xf32, #tpu.memory_space<vmem>>, vector<16x144xf32>
    %596 = tpu.concatenate %573, %576, %579, %582, %570, %585, %588, %591, %594 in 0 : vector<16x128xf32>, vector<16x128xf32>, vector<16x128xf32>, vector<16x128xf32>, vector<16x128xf32>, vector<16x128xf32>, vector<16x128xf32>, vector<16x128xf32>, vector<16x128xf32> -> vector<144x128xf32>
    %cst_185 = arith.constant dense<0.000000e+00> : vector<16x128xf32>
    %597 = tpu.matmul %595, %596, %cst_185 {dimension_numbers = #tpu.dot_dimension_numbers<[1], [0], [0], [1], [0, 0, 1, 1], [], []>} : vector<16x144xf32>, vector<144x128xf32>, vector<16x128xf32> -> vector<16x128xf32>
    %598 = vector.broadcast %522 : vector<16x1xf32> to vector<16x128xf32>
    %599 = arith.addf %597, %598 : vector<16x128xf32>
    %cst_186 = arith.constant dense<0.000000e+00> : vector<16x128xf32>
    %600 = tpu.matmul %523, %518, %cst_186 {dimension_numbers = #tpu.dot_dimension_numbers<[1], [0], [0], [1], [0, 0, 1, 1], [], []>} : vector<16x8xf32>, vector<8x128xf32>, vector<16x128xf32> -> vector<16x128xf32>
    %601 = vector.broadcast %524 : vector<16x1xf32> to vector<16x128xf32>
    %602 = arith.addf %600, %601 : vector<16x128xf32>
    %603 = arith.addf %599, %602 : vector<16x128xf32>
    %c0_187 = arith.constant 0 : index
    %c0_188 = arith.constant 0 : index
    %604 = vector.load %arg58[%c0_187, %c0_188] : memref<16x128xf32, #tpu.memory_space<vmem>>, vector<16x128xf32>
    tpu.vector_store %arg58[%c0_187, %c0_188], %603 {strides = array<i32>} : memref<16x128xf32, #tpu.memory_space<vmem>>, vector<16x128xf32>,
    %cst_189 = arith.constant dense<0.000000e+00> : vector<16x128xf32>
    %605 = tpu.matmul %603, %314, %cst_189 {dimension_numbers = #tpu.dot_dimension_numbers<[1], [0], [0], [1], [0, 0, 1, 1], [], []>} : vector<16x128xf32>, vector<128x128xf32>, vector<16x128xf32> -> vector<16x128xf32>
    %c0_190 = arith.constant 0 : index
    %c0_191 = arith.constant 0 : index
    %606 = vector.load %arg18[%c0_190, %c0_191] : memref<32x16xf32, #tpu.memory_space<vmem>>, vector<32x16xf32>
    %c0_192 = arith.constant 0 : index
    %c0_193 = arith.constant 0 : index
    %607 = vector.load %arg19[%c0_192, %c0_193] : memref<32x1xf32, #tpu.memory_space<vmem>>, vector<32x1xf32>
    %c0_194 = arith.constant 0 : index
    %c0_195 = arith.constant 0 : index
    %608 = vector.load %arg21[%c0_194, %c0_195] : memref<32x1xf32, #tpu.memory_space<vmem>>, vector<32x1xf32>
    %c0_196 = arith.constant 0 : index
    %c0_197 = arith.constant 0 : index
    %609 = vector.load %arg23[%c0_196, %c0_197] : memref<32x1xf32, #tpu.memory_space<vmem>>, vector<32x1xf32>
    %c0_198 = arith.constant 0 : index
    %c0_199 = arith.constant 0 : index
    %610 = vector.load %arg24[%c0_198, %c0_199] : memref<32x16xf32, #tpu.memory_space<vmem>>, vector<32x16xf32>
    %c0_200 = arith.constant 0 : index
    %c0_201 = arith.constant 0 : index
    %611 = vector.load %arg25[%c0_200, %c0_201] : memref<32x1xf32, #tpu.memory_space<vmem>>, vector<32x1xf32>
    %cst_202 = arith.constant dense<0.000000e+00> : vector<32x2xf32>
    %612 = tpu.matmul %606, %1, %cst_202 {dimension_numbers = #tpu.dot_dimension_numbers<[1], [0], [0], [1], [0, 0, 1, 1], [], []>} : vector<32x16xf32>, vector<16x2xf32>, vector<32x2xf32> -> vector<32x2xf32>
    %613 = vector.broadcast %607 : vector<32x1xf32> to vector<32x2xf32>
    %614 = arith.addf %612, %613 : vector<32x2xf32>
    %cst_203 = arith.constant dense<0.000000e+00> : vector<32x128xf32>
    %615 = tpu.matmul %614, %175, %cst_203 {dimension_numbers = #tpu.dot_dimension_numbers<[1], [0], [0], [1], [0, 0, 1, 1], [], []>} : vector<32x2xf32>, vector<2x128xf32>, vector<32x128xf32> -> vector<32x128xf32>
    %c5_i32 = arith.constant 5 : i32
    %616 = tpu.dynamic_rotate %605 by %c5_i32 dim 1 : vector<16x128xf32>, i32 -> vector<16x128xf32>
    %617 = vector.broadcast %133 : vector<1x128xf32> to vector<16x128xf32>
    %618 = arith.mulf %616, %617 : vector<16x128xf32>
    %c4_i32_204 = arith.constant 4 : i32
    %619 = tpu.dynamic_rotate %605 by %c4_i32_204 dim 1 : vector<16x128xf32>, i32 -> vector<16x128xf32>
    %620 = vector.broadcast %137 : vector<1x128xf32> to vector<16x128xf32>
    %621 = arith.mulf %619, %620 : vector<16x128xf32>
    %c3_i32_205 = arith.constant 3 : i32
    %622 = tpu.dynamic_rotate %605 by %c3_i32_205 dim 1 : vector<16x128xf32>, i32 -> vector<16x128xf32>
    %623 = vector.broadcast %144 : vector<1x128xf32> to vector<16x128xf32>
    %624 = arith.mulf %622, %623 : vector<16x128xf32>
    %c1_i32_206 = arith.constant 1 : i32
    %625 = tpu.dynamic_rotate %605 by %c1_i32_206 dim 1 : vector<16x128xf32>, i32 -> vector<16x128xf32>
    %626 = vector.broadcast %148 : vector<1x128xf32> to vector<16x128xf32>
    %627 = arith.mulf %625, %626 : vector<16x128xf32>
    %c127_i32_207 = arith.constant 127 : i32
    %628 = tpu.dynamic_rotate %605 by %c127_i32_207 dim 1 : vector<16x128xf32>, i32 -> vector<16x128xf32>
    %629 = vector.broadcast %152 : vector<1x128xf32> to vector<16x128xf32>
    %630 = arith.mulf %628, %629 : vector<16x128xf32>
    %c125_i32 = arith.constant 125 : i32
    %631 = tpu.dynamic_rotate %605 by %c125_i32 dim 1 : vector<16x128xf32>, i32 -> vector<16x128xf32>
    %632 = vector.broadcast %159 : vector<1x128xf32> to vector<16x128xf32>
    %633 = arith.mulf %631, %632 : vector<16x128xf32>
    %c124_i32 = arith.constant 124 : i32
    %634 = tpu.dynamic_rotate %605 by %c124_i32 dim 1 : vector<16x128xf32>, i32 -> vector<16x128xf32>
    %635 = vector.broadcast %163 : vector<1x128xf32> to vector<16x128xf32>
    %636 = arith.mulf %634, %635 : vector<16x128xf32>
    %c123_i32 = arith.constant 123 : i32
    %637 = tpu.dynamic_rotate %605 by %c123_i32 dim 1 : vector<16x128xf32>, i32 -> vector<16x128xf32>
    %638 = vector.broadcast %170 : vector<1x128xf32> to vector<16x128xf32>
    %639 = arith.mulf %637, %638 : vector<16x128xf32>
    %c0_208 = arith.constant 0 : index
    %c0_209 = arith.constant 0 : index
    %640 = vector.load %arg20[%c0_208, %c0_209] : memref<32x144xf32, #tpu.memory_space<vmem>>, vector<32x144xf32>
    %641 = tpu.concatenate %618, %621, %624, %627, %605, %630, %633, %636, %639 in 0 : vector<16x128xf32>, vector<16x128xf32>, vector<16x128xf32>, vector<16x128xf32>, vector<16x128xf32>, vector<16x128xf32>, vector<16x128xf32>, vector<16x128xf32>, vector<16x128xf32> -> vector<144x128xf32>
    %cst_210 = arith.constant dense<0.000000e+00> : vector<32x128xf32>
    %642 = tpu.matmul %640, %641, %cst_210 {dimension_numbers = #tpu.dot_dimension_numbers<[1], [0], [0], [1], [0, 0, 1, 1], [], []>} : vector<32x144xf32>, vector<144x128xf32>, vector<32x128xf32> -> vector<32x128xf32>
    %643 = vector.broadcast %608 : vector<32x1xf32> to vector<32x128xf32>
    %644 = arith.addf %642, %643 : vector<32x128xf32>
    %645 = arith.negf %644 : vector<32x128xf32>
    %646 = math.exp %645 : vector<32x128xf32>
    %cst_211 = arith.constant 1.000000e+00 : f32
    %647 = vector.broadcast %cst_211 : f32 to vector<32x128xf32>
    %648 = arith.addf %647, %646 : vector<32x128xf32>
    %649 = arith.divf %647, %648 : vector<32x128xf32>
    %650 = arith.mulf %644, %649 : vector<32x128xf32>
    %651 = arith.addf %650, %615 : vector<32x128xf32>
    %652 = arith.negf %651 : vector<32x128xf32>
    %653 = math.exp %652 : vector<32x128xf32>
    %cst_212 = arith.constant 1.000000e+00 : f32
    %654 = vector.broadcast %cst_212 : f32 to vector<32x128xf32>
    %655 = arith.addf %654, %653 : vector<32x128xf32>
    %656 = arith.divf %654, %655 : vector<32x128xf32>
    %657 = arith.mulf %651, %656 : vector<32x128xf32>
    %c5_i32_213 = arith.constant 5 : i32
    %658 = tpu.dynamic_rotate %657 by %c5_i32_213 dim 1 : vector<32x128xf32>, i32 -> vector<32x128xf32>
    %659 = vector.broadcast %133 : vector<1x128xf32> to vector<32x128xf32>
    %660 = arith.mulf %658, %659 : vector<32x128xf32>
    %c4_i32_214 = arith.constant 4 : i32
    %661 = tpu.dynamic_rotate %657 by %c4_i32_214 dim 1 : vector<32x128xf32>, i32 -> vector<32x128xf32>
    %662 = vector.broadcast %137 : vector<1x128xf32> to vector<32x128xf32>
    %663 = arith.mulf %661, %662 : vector<32x128xf32>
    %c3_i32_215 = arith.constant 3 : i32
    %664 = tpu.dynamic_rotate %657 by %c3_i32_215 dim 1 : vector<32x128xf32>, i32 -> vector<32x128xf32>
    %665 = vector.broadcast %144 : vector<1x128xf32> to vector<32x128xf32>
    %666 = arith.mulf %664, %665 : vector<32x128xf32>
    %c1_i32_216 = arith.constant 1 : i32
    %667 = tpu.dynamic_rotate %657 by %c1_i32_216 dim 1 : vector<32x128xf32>, i32 -> vector<32x128xf32>
    %668 = vector.broadcast %148 : vector<1x128xf32> to vector<32x128xf32>
    %669 = arith.mulf %667, %668 : vector<32x128xf32>
    %c127_i32_217 = arith.constant 127 : i32
    %670 = tpu.dynamic_rotate %657 by %c127_i32_217 dim 1 : vector<32x128xf32>, i32 -> vector<32x128xf32>
    %671 = vector.broadcast %152 : vector<1x128xf32> to vector<32x128xf32>
    %672 = arith.mulf %670, %671 : vector<32x128xf32>
    %c125_i32_218 = arith.constant 125 : i32
    %673 = tpu.dynamic_rotate %657 by %c125_i32_218 dim 1 : vector<32x128xf32>, i32 -> vector<32x128xf32>
    %674 = vector.broadcast %159 : vector<1x128xf32> to vector<32x128xf32>
    %675 = arith.mulf %673, %674 : vector<32x128xf32>
    %c124_i32_219 = arith.constant 124 : i32
    %676 = tpu.dynamic_rotate %657 by %c124_i32_219 dim 1 : vector<32x128xf32>, i32 -> vector<32x128xf32>
    %677 = vector.broadcast %163 : vector<1x128xf32> to vector<32x128xf32>
    %678 = arith.mulf %676, %677 : vector<32x128xf32>
    %c123_i32_220 = arith.constant 123 : i32
    %679 = tpu.dynamic_rotate %657 by %c123_i32_220 dim 1 : vector<32x128xf32>, i32 -> vector<32x128xf32>
    %680 = vector.broadcast %170 : vector<1x128xf32> to vector<32x128xf32>
    %681 = arith.mulf %679, %680 : vector<32x128xf32>
    %c0_221 = arith.constant 0 : index
    %c0_222 = arith.constant 0 : index
    %682 = vector.load %arg22[%c0_221, %c0_222] : memref<32x288xf32, #tpu.memory_space<vmem>>, vector<32x288xf32>
    %683 = tpu.concatenate %660, %663, %666, %669, %657, %672, %675, %678, %681 in 0 : vector<32x128xf32>, vector<32x128xf32>, vector<32x128xf32>, vector<32x128xf32>, vector<32x128xf32>, vector<32x128xf32>, vector<32x128xf32>, vector<32x128xf32>, vector<32x128xf32> -> vector<288x128xf32>
    %cst_223 = arith.constant dense<0.000000e+00> : vector<32x128xf32>
    %684 = tpu.matmul %682, %683, %cst_223 {dimension_numbers = #tpu.dot_dimension_numbers<[1], [0], [0], [1], [0, 0, 1, 1], [], []>} : vector<32x288xf32>, vector<288x128xf32>, vector<32x128xf32> -> vector<32x128xf32>
    %685 = vector.broadcast %609 : vector<32x1xf32> to vector<32x128xf32>
    %686 = arith.addf %684, %685 : vector<32x128xf32>
    %cst_224 = arith.constant dense<0.000000e+00> : vector<32x128xf32>
    %687 = tpu.matmul %610, %605, %cst_224 {dimension_numbers = #tpu.dot_dimension_numbers<[1], [0], [0], [1], [0, 0, 1, 1], [], []>} : vector<32x16xf32>, vector<16x128xf32>, vector<32x128xf32> -> vector<32x128xf32>
    %688 = vector.broadcast %611 : vector<32x1xf32> to vector<32x128xf32>
    %689 = arith.addf %687, %688 : vector<32x128xf32>
    %690 = arith.addf %686, %689 : vector<32x128xf32>
    %c0_225 = arith.constant 0 : index
    %c0_226 = arith.constant 0 : index
    %691 = vector.load %arg59[%c0_225, %c0_226] : memref<32x128xf32, #tpu.memory_space<vmem>>, vector<32x128xf32>
    tpu.vector_store %arg59[%c0_225, %c0_226], %690 {strides = array<i32>} : memref<32x128xf32, #tpu.memory_space<vmem>>, vector<32x128xf32>,
    %cst_227 = arith.constant dense<0.000000e+00> : vector<32x128xf32>
    %692 = tpu.matmul %690, %368, %cst_227 {dimension_numbers = #tpu.dot_dimension_numbers<[1], [0], [0], [1], [0, 0, 1, 1], [], []>} : vector<32x128xf32>, vector<128x128xf32>, vector<32x128xf32> -> vector<32x128xf32>
    %c0_228 = arith.constant 0 : index
    %c0_229 = arith.constant 0 : index
    %693 = vector.load %arg26[%c0_228, %c0_229] : memref<32x16xf32, #tpu.memory_space<vmem>>, vector<32x16xf32>
    %c0_230 = arith.constant 0 : index
    %c0_231 = arith.constant 0 : index
    %694 = vector.load %arg27[%c0_230, %c0_231] : memref<32x1xf32, #tpu.memory_space<vmem>>, vector<32x1xf32>
    %c0_232 = arith.constant 0 : index
    %c0_233 = arith.constant 0 : index
    %695 = vector.load %arg29[%c0_232, %c0_233] : memref<32x1xf32, #tpu.memory_space<vmem>>, vector<32x1xf32>
    %c0_234 = arith.constant 0 : index
    %c0_235 = arith.constant 0 : index
    %696 = vector.load %arg31[%c0_234, %c0_235] : memref<32x1xf32, #tpu.memory_space<vmem>>, vector<32x1xf32>
    %cst_236 = arith.constant dense<0.000000e+00> : vector<32x2xf32>
    %697 = tpu.matmul %693, %1, %cst_236 {dimension_numbers = #tpu.dot_dimension_numbers<[1], [0], [0], [1], [0, 0, 1, 1], [], []>} : vector<32x16xf32>, vector<16x2xf32>, vector<32x2xf32> -> vector<32x2xf32>
    %698 = vector.broadcast %694 : vector<32x1xf32> to vector<32x2xf32>
    %699 = arith.addf %697, %698 : vector<32x2xf32>
    %cst_237 = arith.constant dense<0.000000e+00> : vector<32x128xf32>
    %700 = tpu.matmul %699, %233, %cst_237 {dimension_numbers = #tpu.dot_dimension_numbers<[1], [0], [0], [1], [0, 0, 1, 1], [], []>} : vector<32x2xf32>, vector<2x128xf32>, vector<32x128xf32> -> vector<32x128xf32>
    %c3_i32_238 = arith.constant 3 : i32
    %701 = tpu.dynamic_rotate %692 by %c3_i32_238 dim 1 : vector<32x128xf32>, i32 -> vector<32x128xf32>
    %702 = vector.broadcast %191 : vector<1x128xf32> to vector<32x128xf32>
    %703 = arith.mulf %701, %702 : vector<32x128xf32>
    %c2_i32_239 = arith.constant 2 : i32
    %704 = tpu.dynamic_rotate %692 by %c2_i32_239 dim 1 : vector<32x128xf32>, i32 -> vector<32x128xf32>
    %705 = vector.broadcast %195 : vector<1x128xf32> to vector<32x128xf32>
    %706 = arith.mulf %704, %705 : vector<32x128xf32>
    %c1_i32_240 = arith.constant 1 : i32
    %707 = tpu.dynamic_rotate %692 by %c1_i32_240 dim 1 : vector<32x128xf32>, i32 -> vector<32x128xf32>
    %708 = vector.broadcast %202 : vector<1x128xf32> to vector<32x128xf32>
    %709 = arith.mulf %707, %708 : vector<32x128xf32>
    %c1_i32_241 = arith.constant 1 : i32
    %710 = tpu.dynamic_rotate %692 by %c1_i32_241 dim 1 : vector<32x128xf32>, i32 -> vector<32x128xf32>
    %711 = vector.broadcast %206 : vector<1x128xf32> to vector<32x128xf32>
    %712 = arith.mulf %710, %711 : vector<32x128xf32>
    %c127_i32_242 = arith.constant 127 : i32
    %713 = tpu.dynamic_rotate %692 by %c127_i32_242 dim 1 : vector<32x128xf32>, i32 -> vector<32x128xf32>
    %714 = vector.broadcast %210 : vector<1x128xf32> to vector<32x128xf32>
    %715 = arith.mulf %713, %714 : vector<32x128xf32>
    %c127_i32_243 = arith.constant 127 : i32
    %716 = tpu.dynamic_rotate %692 by %c127_i32_243 dim 1 : vector<32x128xf32>, i32 -> vector<32x128xf32>
    %717 = vector.broadcast %217 : vector<1x128xf32> to vector<32x128xf32>
    %718 = arith.mulf %716, %717 : vector<32x128xf32>
    %c126_i32 = arith.constant 126 : i32
    %719 = tpu.dynamic_rotate %692 by %c126_i32 dim 1 : vector<32x128xf32>, i32 -> vector<32x128xf32>
    %720 = vector.broadcast %221 : vector<1x128xf32> to vector<32x128xf32>
    %721 = arith.mulf %719, %720 : vector<32x128xf32>
    %c125_i32_244 = arith.constant 125 : i32
    %722 = tpu.dynamic_rotate %692 by %c125_i32_244 dim 1 : vector<32x128xf32>, i32 -> vector<32x128xf32>
    %723 = vector.broadcast %228 : vector<1x128xf32> to vector<32x128xf32>
    %724 = arith.mulf %722, %723 : vector<32x128xf32>
    %c0_245 = arith.constant 0 : index
    %c0_246 = arith.constant 0 : index
    %725 = vector.load %arg28[%c0_245, %c0_246] : memref<32x288xf32, #tpu.memory_space<vmem>>, vector<32x288xf32>
    %726 = tpu.concatenate %703, %706, %709, %712, %692, %715, %718, %721, %724 in 0 : vector<32x128xf32>, vector<32x128xf32>, vector<32x128xf32>, vector<32x128xf32>, vector<32x128xf32>, vector<32x128xf32>, vector<32x128xf32>, vector<32x128xf32>, vector<32x128xf32> -> vector<288x128xf32>
    %cst_247 = arith.constant dense<0.000000e+00> : vector<32x128xf32>
    %727 = tpu.matmul %725, %726, %cst_247 {dimension_numbers = #tpu.dot_dimension_numbers<[1], [0], [0], [1], [0, 0, 1, 1], [], []>} : vector<32x288xf32>, vector<288x128xf32>, vector<32x128xf32> -> vector<32x128xf32>
    %728 = vector.broadcast %695 : vector<32x1xf32> to vector<32x128xf32>
    %729 = arith.addf %727, %728 : vector<32x128xf32>
    %730 = arith.negf %729 : vector<32x128xf32>
    %731 = math.exp %730 : vector<32x128xf32>
    %cst_248 = arith.constant 1.000000e+00 : f32
    %732 = vector.broadcast %cst_248 : f32 to vector<32x128xf32>
    %733 = arith.addf %732, %731 : vector<32x128xf32>
    %734 = arith.divf %732, %733 : vector<32x128xf32>
    %735 = arith.mulf %729, %734 : vector<32x128xf32>
    %736 = arith.addf %735, %700 : vector<32x128xf32>
    %737 = arith.negf %736 : vector<32x128xf32>
    %738 = math.exp %737 : vector<32x128xf32>
    %cst_249 = arith.constant 1.000000e+00 : f32
    %739 = vector.broadcast %cst_249 : f32 to vector<32x128xf32>
    %740 = arith.addf %739, %738 : vector<32x128xf32>
    %741 = arith.divf %739, %740 : vector<32x128xf32>
    %742 = arith.mulf %736, %741 : vector<32x128xf32>
    %c3_i32_250 = arith.constant 3 : i32
    %743 = tpu.dynamic_rotate %742 by %c3_i32_250 dim 1 : vector<32x128xf32>, i32 -> vector<32x128xf32>
    %744 = vector.broadcast %191 : vector<1x128xf32> to vector<32x128xf32>
    %745 = arith.mulf %743, %744 : vector<32x128xf32>
    %c2_i32_251 = arith.constant 2 : i32
    %746 = tpu.dynamic_rotate %742 by %c2_i32_251 dim 1 : vector<32x128xf32>, i32 -> vector<32x128xf32>
    %747 = vector.broadcast %195 : vector<1x128xf32> to vector<32x128xf32>
    %748 = arith.mulf %746, %747 : vector<32x128xf32>
    %c1_i32_252 = arith.constant 1 : i32
    %749 = tpu.dynamic_rotate %742 by %c1_i32_252 dim 1 : vector<32x128xf32>, i32 -> vector<32x128xf32>
    %750 = vector.broadcast %202 : vector<1x128xf32> to vector<32x128xf32>
    %751 = arith.mulf %749, %750 : vector<32x128xf32>
    %c1_i32_253 = arith.constant 1 : i32
    %752 = tpu.dynamic_rotate %742 by %c1_i32_253 dim 1 : vector<32x128xf32>, i32 -> vector<32x128xf32>
    %753 = vector.broadcast %206 : vector<1x128xf32> to vector<32x128xf32>
    %754 = arith.mulf %752, %753 : vector<32x128xf32>
    %c127_i32_254 = arith.constant 127 : i32
    %755 = tpu.dynamic_rotate %742 by %c127_i32_254 dim 1 : vector<32x128xf32>, i32 -> vector<32x128xf32>
    %756 = vector.broadcast %210 : vector<1x128xf32> to vector<32x128xf32>
    %757 = arith.mulf %755, %756 : vector<32x128xf32>
    %c127_i32_255 = arith.constant 127 : i32
    %758 = tpu.dynamic_rotate %742 by %c127_i32_255 dim 1 : vector<32x128xf32>, i32 -> vector<32x128xf32>
    %759 = vector.broadcast %217 : vector<1x128xf32> to vector<32x128xf32>
    %760 = arith.mulf %758, %759 : vector<32x128xf32>
    %c126_i32_256 = arith.constant 126 : i32
    %761 = tpu.dynamic_rotate %742 by %c126_i32_256 dim 1 : vector<32x128xf32>, i32 -> vector<32x128xf32>
    %762 = vector.broadcast %221 : vector<1x128xf32> to vector<32x128xf32>
    %763 = arith.mulf %761, %762 : vector<32x128xf32>
    %c125_i32_257 = arith.constant 125 : i32
    %764 = tpu.dynamic_rotate %742 by %c125_i32_257 dim 1 : vector<32x128xf32>, i32 -> vector<32x128xf32>
    %765 = vector.broadcast %228 : vector<1x128xf32> to vector<32x128xf32>
    %766 = arith.mulf %764, %765 : vector<32x128xf32>
    %c0_258 = arith.constant 0 : index
    %c0_259 = arith.constant 0 : index
    %767 = vector.load %arg30[%c0_258, %c0_259] : memref<32x288xf32, #tpu.memory_space<vmem>>, vector<32x288xf32>
    %768 = tpu.concatenate %745, %748, %751, %754, %742, %757, %760, %763, %766 in 0 : vector<32x128xf32>, vector<32x128xf32>, vector<32x128xf32>, vector<32x128xf32>, vector<32x128xf32>, vector<32x128xf32>, vector<32x128xf32>, vector<32x128xf32>, vector<32x128xf32> -> vector<288x128xf32>
    %cst_260 = arith.constant dense<0.000000e+00> : vector<32x128xf32>
    %769 = tpu.matmul %767, %768, %cst_260 {dimension_numbers = #tpu.dot_dimension_numbers<[1], [0], [0], [1], [0, 0, 1, 1], [], []>} : vector<32x288xf32>, vector<288x128xf32>, vector<32x128xf32> -> vector<32x128xf32>
    %770 = vector.broadcast %696 : vector<32x1xf32> to vector<32x128xf32>
    %771 = arith.addf %769, %770 : vector<32x128xf32>
    %772 = arith.addf %771, %692 : vector<32x128xf32>
    %cst_261 = arith.constant dense<0.000000e+00> : vector<32x128xf32>
    %773 = tpu.matmul %772, %395, %cst_261 {dimension_numbers = #tpu.dot_dimension_numbers<[1], [0], [0], [1], [0, 0, 1, 1], [], []>} : vector<32x128xf32>, vector<128x128xf32>, vector<32x128xf32> -> vector<32x128xf32>
    %c0_262 = arith.constant 0 : index
    %c0_263 = arith.constant 0 : index
    %774 = vector.load %arg59[%c0_262, %c0_263] : memref<32x128xf32, #tpu.memory_space<vmem>>, vector<32x128xf32>
    %775 = arith.addf %773, %774 : vector<32x128xf32>
    %c0_264 = arith.constant 0 : index
    %c0_265 = arith.constant 0 : index
    %776 = vector.load %arg32[%c0_264, %c0_265] : memref<16x16xf32, #tpu.memory_space<vmem>>, vector<16x16xf32>
    %c0_266 = arith.constant 0 : index
    %c0_267 = arith.constant 0 : index
    %777 = vector.load %arg33[%c0_266, %c0_267] : memref<16x1xf32, #tpu.memory_space<vmem>>, vector<16x1xf32>
    %c0_268 = arith.constant 0 : index
    %c0_269 = arith.constant 0 : index
    %778 = vector.load %arg35[%c0_268, %c0_269] : memref<16x1xf32, #tpu.memory_space<vmem>>, vector<16x1xf32>
    %c0_270 = arith.constant 0 : index
    %c0_271 = arith.constant 0 : index
    %779 = vector.load %arg37[%c0_270, %c0_271] : memref<16x1xf32, #tpu.memory_space<vmem>>, vector<16x1xf32>
    %c0_272 = arith.constant 0 : index
    %c0_273 = arith.constant 0 : index
    %780 = vector.load %arg38[%c0_272, %c0_273] : memref<16x32xf32, #tpu.memory_space<vmem>>, vector<16x32xf32>
    %c0_274 = arith.constant 0 : index
    %c0_275 = arith.constant 0 : index
    %781 = vector.load %arg39[%c0_274, %c0_275] : memref<16x1xf32, #tpu.memory_space<vmem>>, vector<16x1xf32>
    %cst_276 = arith.constant dense<0.000000e+00> : vector<16x2xf32>
    %782 = tpu.matmul %776, %1, %cst_276 {dimension_numbers = #tpu.dot_dimension_numbers<[1], [0], [0], [1], [0, 0, 1, 1], [], []>} : vector<16x16xf32>, vector<16x2xf32>, vector<16x2xf32> -> vector<16x2xf32>
    %783 = vector.broadcast %777 : vector<16x1xf32> to vector<16x2xf32>
    %784 = arith.addf %782, %783 : vector<16x2xf32>
    %cst_277 = arith.constant dense<0.000000e+00> : vector<16x128xf32>
    %785 = tpu.matmul %784, %175, %cst_277 {dimension_numbers = #tpu.dot_dimension_numbers<[1], [0], [0], [1], [0, 0, 1, 1], [], []>} : vector<16x2xf32>, vector<2x128xf32>, vector<16x128xf32> -> vector<16x128xf32>
    %c5_i32_278 = arith.constant 5 : i32
    %786 = tpu.dynamic_rotate %775 by %c5_i32_278 dim 1 : vector<32x128xf32>, i32 -> vector<32x128xf32>
    %787 = vector.broadcast %133 : vector<1x128xf32> to vector<32x128xf32>
    %788 = arith.mulf %786, %787 : vector<32x128xf32>
    %c4_i32_279 = arith.constant 4 : i32
    %789 = tpu.dynamic_rotate %775 by %c4_i32_279 dim 1 : vector<32x128xf32>, i32 -> vector<32x128xf32>
    %790 = vector.broadcast %137 : vector<1x128xf32> to vector<32x128xf32>
    %791 = arith.mulf %789, %790 : vector<32x128xf32>
    %c3_i32_280 = arith.constant 3 : i32
    %792 = tpu.dynamic_rotate %775 by %c3_i32_280 dim 1 : vector<32x128xf32>, i32 -> vector<32x128xf32>
    %793 = vector.broadcast %144 : vector<1x128xf32> to vector<32x128xf32>
    %794 = arith.mulf %792, %793 : vector<32x128xf32>
    %c1_i32_281 = arith.constant 1 : i32
    %795 = tpu.dynamic_rotate %775 by %c1_i32_281 dim 1 : vector<32x128xf32>, i32 -> vector<32x128xf32>
    %796 = vector.broadcast %148 : vector<1x128xf32> to vector<32x128xf32>
    %797 = arith.mulf %795, %796 : vector<32x128xf32>
    %c127_i32_282 = arith.constant 127 : i32
    %798 = tpu.dynamic_rotate %775 by %c127_i32_282 dim 1 : vector<32x128xf32>, i32 -> vector<32x128xf32>
    %799 = vector.broadcast %152 : vector<1x128xf32> to vector<32x128xf32>
    %800 = arith.mulf %798, %799 : vector<32x128xf32>
    %c125_i32_283 = arith.constant 125 : i32
    %801 = tpu.dynamic_rotate %775 by %c125_i32_283 dim 1 : vector<32x128xf32>, i32 -> vector<32x128xf32>
    %802 = vector.broadcast %159 : vector<1x128xf32> to vector<32x128xf32>
    %803 = arith.mulf %801, %802 : vector<32x128xf32>
    %c124_i32_284 = arith.constant 124 : i32
    %804 = tpu.dynamic_rotate %775 by %c124_i32_284 dim 1 : vector<32x128xf32>, i32 -> vector<32x128xf32>
    %805 = vector.broadcast %163 : vector<1x128xf32> to vector<32x128xf32>
    %806 = arith.mulf %804, %805 : vector<32x128xf32>
    %c123_i32_285 = arith.constant 123 : i32
    %807 = tpu.dynamic_rotate %775 by %c123_i32_285 dim 1 : vector<32x128xf32>, i32 -> vector<32x128xf32>
    %808 = vector.broadcast %170 : vector<1x128xf32> to vector<32x128xf32>
    %809 = arith.mulf %807, %808 : vector<32x128xf32>
    %c0_286 = arith.constant 0 : index
    %c0_287 = arith.constant 0 : index
    %810 = vector.load %arg34[%c0_286, %c0_287] : memref<16x288xf32, #tpu.memory_space<vmem>>, vector<16x288xf32>
    %811 = tpu.concatenate %788, %791, %794, %797, %775, %800, %803, %806, %809 in 0 : vector<32x128xf32>, vector<32x128xf32>, vector<32x128xf32>, vector<32x128xf32>, vector<32x128xf32>, vector<32x128xf32>, vector<32x128xf32>, vector<32x128xf32>, vector<32x128xf32> -> vector<288x128xf32>
    %cst_288 = arith.constant dense<0.000000e+00> : vector<16x128xf32>
    %812 = tpu.matmul %810, %811, %cst_288 {dimension_numbers = #tpu.dot_dimension_numbers<[1], [0], [0], [1], [0, 0, 1, 1], [], []>} : vector<16x288xf32>, vector<288x128xf32>, vector<16x128xf32> -> vector<16x128xf32>
    %813 = vector.broadcast %778 : vector<16x1xf32> to vector<16x128xf32>
    %814 = arith.addf %812, %813 : vector<16x128xf32>
    %815 = arith.negf %814 : vector<16x128xf32>
    %816 = math.exp %815 : vector<16x128xf32>
    %cst_289 = arith.constant 1.000000e+00 : f32
    %817 = vector.broadcast %cst_289 : f32 to vector<16x128xf32>
    %818 = arith.addf %817, %816 : vector<16x128xf32>
    %819 = arith.divf %817, %818 : vector<16x128xf32>
    %820 = arith.mulf %814, %819 : vector<16x128xf32>
    %821 = arith.addf %820, %785 : vector<16x128xf32>
    %822 = arith.negf %821 : vector<16x128xf32>
    %823 = math.exp %822 : vector<16x128xf32>
    %cst_290 = arith.constant 1.000000e+00 : f32
    %824 = vector.broadcast %cst_290 : f32 to vector<16x128xf32>
    %825 = arith.addf %824, %823 : vector<16x128xf32>
    %826 = arith.divf %824, %825 : vector<16x128xf32>
    %827 = arith.mulf %821, %826 : vector<16x128xf32>
    %c5_i32_291 = arith.constant 5 : i32
    %828 = tpu.dynamic_rotate %827 by %c5_i32_291 dim 1 : vector<16x128xf32>, i32 -> vector<16x128xf32>
    %829 = vector.broadcast %133 : vector<1x128xf32> to vector<16x128xf32>
    %830 = arith.mulf %828, %829 : vector<16x128xf32>
    %c4_i32_292 = arith.constant 4 : i32
    %831 = tpu.dynamic_rotate %827 by %c4_i32_292 dim 1 : vector<16x128xf32>, i32 -> vector<16x128xf32>
    %832 = vector.broadcast %137 : vector<1x128xf32> to vector<16x128xf32>
    %833 = arith.mulf %831, %832 : vector<16x128xf32>
    %c3_i32_293 = arith.constant 3 : i32
    %834 = tpu.dynamic_rotate %827 by %c3_i32_293 dim 1 : vector<16x128xf32>, i32 -> vector<16x128xf32>
    %835 = vector.broadcast %144 : vector<1x128xf32> to vector<16x128xf32>
    %836 = arith.mulf %834, %835 : vector<16x128xf32>
    %c1_i32_294 = arith.constant 1 : i32
    %837 = tpu.dynamic_rotate %827 by %c1_i32_294 dim 1 : vector<16x128xf32>, i32 -> vector<16x128xf32>
    %838 = vector.broadcast %148 : vector<1x128xf32> to vector<16x128xf32>
    %839 = arith.mulf %837, %838 : vector<16x128xf32>
    %c127_i32_295 = arith.constant 127 : i32
    %840 = tpu.dynamic_rotate %827 by %c127_i32_295 dim 1 : vector<16x128xf32>, i32 -> vector<16x128xf32>
    %841 = vector.broadcast %152 : vector<1x128xf32> to vector<16x128xf32>
    %842 = arith.mulf %840, %841 : vector<16x128xf32>
    %c125_i32_296 = arith.constant 125 : i32
    %843 = tpu.dynamic_rotate %827 by %c125_i32_296 dim 1 : vector<16x128xf32>, i32 -> vector<16x128xf32>
    %844 = vector.broadcast %159 : vector<1x128xf32> to vector<16x128xf32>
    %845 = arith.mulf %843, %844 : vector<16x128xf32>
    %c124_i32_297 = arith.constant 124 : i32
    %846 = tpu.dynamic_rotate %827 by %c124_i32_297 dim 1 : vector<16x128xf32>, i32 -> vector<16x128xf32>
    %847 = vector.broadcast %163 : vector<1x128xf32> to vector<16x128xf32>
    %848 = arith.mulf %846, %847 : vector<16x128xf32>
    %c123_i32_298 = arith.constant 123 : i32
    %849 = tpu.dynamic_rotate %827 by %c123_i32_298 dim 1 : vector<16x128xf32>, i32 -> vector<16x128xf32>
    %850 = vector.broadcast %170 : vector<1x128xf32> to vector<16x128xf32>
    %851 = arith.mulf %849, %850 : vector<16x128xf32>
    %c0_299 = arith.constant 0 : index
    %c0_300 = arith.constant 0 : index
    %852 = vector.load %arg36[%c0_299, %c0_300] : memref<16x144xf32, #tpu.memory_space<vmem>>, vector<16x144xf32>
    %853 = tpu.concatenate %830, %833, %836, %839, %827, %842, %845, %848, %851 in 0 : vector<16x128xf32>, vector<16x128xf32>, vector<16x128xf32>, vector<16x128xf32>, vector<16x128xf32>, vector<16x128xf32>, vector<16x128xf32>, vector<16x128xf32>, vector<16x128xf32> -> vector<144x128xf32>
    %cst_301 = arith.constant dense<0.000000e+00> : vector<16x128xf32>
    %854 = tpu.matmul %852, %853, %cst_301 {dimension_numbers = #tpu.dot_dimension_numbers<[1], [0], [0], [1], [0, 0, 1, 1], [], []>} : vector<16x144xf32>, vector<144x128xf32>, vector<16x128xf32> -> vector<16x128xf32>
    %855 = vector.broadcast %779 : vector<16x1xf32> to vector<16x128xf32>
    %856 = arith.addf %854, %855 : vector<16x128xf32>
    %cst_302 = arith.constant dense<0.000000e+00> : vector<16x128xf32>
    %857 = tpu.matmul %780, %775, %cst_302 {dimension_numbers = #tpu.dot_dimension_numbers<[1], [0], [0], [1], [0, 0, 1, 1], [], []>} : vector<16x32xf32>, vector<32x128xf32>, vector<16x128xf32> -> vector<16x128xf32>
    %858 = vector.broadcast %781 : vector<16x1xf32> to vector<16x128xf32>
    %859 = arith.addf %857, %858 : vector<16x128xf32>
    %860 = arith.addf %856, %859 : vector<16x128xf32>
    %cst_303 = arith.constant dense<0.000000e+00> : vector<16x128xf32>
    %861 = tpu.matmul %860, %341, %cst_303 {dimension_numbers = #tpu.dot_dimension_numbers<[1], [0], [0], [1], [0, 0, 1, 1], [], []>} : vector<16x128xf32>, vector<128x128xf32>, vector<16x128xf32> -> vector<16x128xf32>
    %c0_304 = arith.constant 0 : index
    %c0_305 = arith.constant 0 : index
    %862 = vector.load %arg58[%c0_304, %c0_305] : memref<16x128xf32, #tpu.memory_space<vmem>>, vector<16x128xf32>
    %863 = arith.addf %861, %862 : vector<16x128xf32>
    %c0_306 = arith.constant 0 : index
    %c0_307 = arith.constant 0 : index
    %864 = vector.load %arg40[%c0_306, %c0_307] : memref<8x16xf32, #tpu.memory_space<vmem>>, vector<8x16xf32>
    %c0_308 = arith.constant 0 : index
    %c0_309 = arith.constant 0 : index
    %865 = vector.load %arg41[%c0_308, %c0_309] : memref<8x1xf32, #tpu.memory_space<vmem>>, vector<8x1xf32>
    %c0_310 = arith.constant 0 : index
    %c0_311 = arith.constant 0 : index
    %866 = vector.load %arg43[%c0_310, %c0_311] : memref<8x1xf32, #tpu.memory_space<vmem>>, vector<8x1xf32>
    %c0_312 = arith.constant 0 : index
    %c0_313 = arith.constant 0 : index
    %867 = vector.load %arg45[%c0_312, %c0_313] : memref<8x1xf32, #tpu.memory_space<vmem>>, vector<8x1xf32>
    %c0_314 = arith.constant 0 : index
    %c0_315 = arith.constant 0 : index
    %868 = vector.load %arg46[%c0_314, %c0_315] : memref<8x16xf32, #tpu.memory_space<vmem>>, vector<8x16xf32>
    %c0_316 = arith.constant 0 : index
    %c0_317 = arith.constant 0 : index
    %869 = vector.load %arg47[%c0_316, %c0_317] : memref<8x1xf32, #tpu.memory_space<vmem>>, vector<8x1xf32>
    %cst_318 = arith.constant dense<0.000000e+00> : vector<8x2xf32>
    %870 = tpu.matmul %864, %1, %cst_318 {dimension_numbers = #tpu.dot_dimension_numbers<[1], [0], [0], [1], [0, 0, 1, 1], [], []>} : vector<8x16xf32>, vector<16x2xf32>, vector<8x2xf32> -> vector<8x2xf32>
    %871 = vector.broadcast %865 : vector<8x1xf32> to vector<8x2xf32>
    %872 = arith.addf %870, %871 : vector<8x2xf32>
    %cst_319 = arith.constant dense<0.000000e+00> : vector<8x128xf32>
    %873 = tpu.matmul %872, %117, %cst_319 {dimension_numbers = #tpu.dot_dimension_numbers<[1], [0], [0], [1], [0, 0, 1, 1], [], []>} : vector<8x2xf32>, vector<2x128xf32>, vector<8x128xf32> -> vector<8x128xf32>
    %c9_i32_320 = arith.constant 9 : i32
    %874 = tpu.dynamic_rotate %863 by %c9_i32_320 dim 1 : vector<16x128xf32>, i32 -> vector<16x128xf32>
    %875 = vector.broadcast %75 : vector<1x128xf32> to vector<16x128xf32>
    %876 = arith.mulf %874, %875 : vector<16x128xf32>
    %c8_i32_321 = arith.constant 8 : i32
    %877 = tpu.dynamic_rotate %863 by %c8_i32_321 dim 1 : vector<16x128xf32>, i32 -> vector<16x128xf32>
    %878 = vector.broadcast %79 : vector<1x128xf32> to vector<16x128xf32>
    %879 = arith.mulf %877, %878 : vector<16x128xf32>
    %c7_i32_322 = arith.constant 7 : i32
    %880 = tpu.dynamic_rotate %863 by %c7_i32_322 dim 1 : vector<16x128xf32>, i32 -> vector<16x128xf32>
    %881 = vector.broadcast %86 : vector<1x128xf32> to vector<16x128xf32>
    %882 = arith.mulf %880, %881 : vector<16x128xf32>
    %c1_i32_323 = arith.constant 1 : i32
    %883 = tpu.dynamic_rotate %863 by %c1_i32_323 dim 1 : vector<16x128xf32>, i32 -> vector<16x128xf32>
    %884 = vector.broadcast %90 : vector<1x128xf32> to vector<16x128xf32>
    %885 = arith.mulf %883, %884 : vector<16x128xf32>
    %c127_i32_324 = arith.constant 127 : i32
    %886 = tpu.dynamic_rotate %863 by %c127_i32_324 dim 1 : vector<16x128xf32>, i32 -> vector<16x128xf32>
    %887 = vector.broadcast %94 : vector<1x128xf32> to vector<16x128xf32>
    %888 = arith.mulf %886, %887 : vector<16x128xf32>
    %c121_i32_325 = arith.constant 121 : i32
    %889 = tpu.dynamic_rotate %863 by %c121_i32_325 dim 1 : vector<16x128xf32>, i32 -> vector<16x128xf32>
    %890 = vector.broadcast %101 : vector<1x128xf32> to vector<16x128xf32>
    %891 = arith.mulf %889, %890 : vector<16x128xf32>
    %c120_i32_326 = arith.constant 120 : i32
    %892 = tpu.dynamic_rotate %863 by %c120_i32_326 dim 1 : vector<16x128xf32>, i32 -> vector<16x128xf32>
    %893 = vector.broadcast %105 : vector<1x128xf32> to vector<16x128xf32>
    %894 = arith.mulf %892, %893 : vector<16x128xf32>
    %c119_i32_327 = arith.constant 119 : i32
    %895 = tpu.dynamic_rotate %863 by %c119_i32_327 dim 1 : vector<16x128xf32>, i32 -> vector<16x128xf32>
    %896 = vector.broadcast %112 : vector<1x128xf32> to vector<16x128xf32>
    %897 = arith.mulf %895, %896 : vector<16x128xf32>
    %c0_328 = arith.constant 0 : index
    %c0_329 = arith.constant 0 : index
    %898 = vector.load %arg42[%c0_328, %c0_329] : memref<8x144xf32, #tpu.memory_space<vmem>>, vector<8x144xf32>
    %899 = tpu.concatenate %876, %879, %882, %885, %863, %888, %891, %894, %897 in 0 : vector<16x128xf32>, vector<16x128xf32>, vector<16x128xf32>, vector<16x128xf32>, vector<16x128xf32>, vector<16x128xf32>, vector<16x128xf32>, vector<16x128xf32>, vector<16x128xf32> -> vector<144x128xf32>
    %cst_330 = arith.constant dense<0.000000e+00> : vector<8x128xf32>
    %900 = tpu.matmul %898, %899, %cst_330 {dimension_numbers = #tpu.dot_dimension_numbers<[1], [0], [0], [1], [0, 0, 1, 1], [], []>} : vector<8x144xf32>, vector<144x128xf32>, vector<8x128xf32> -> vector<8x128xf32>
    %901 = vector.broadcast %866 : vector<8x1xf32> to vector<8x128xf32>
    %902 = arith.addf %900, %901 : vector<8x128xf32>
    %903 = arith.negf %902 : vector<8x128xf32>
    %904 = math.exp %903 : vector<8x128xf32>
    %cst_331 = arith.constant 1.000000e+00 : f32
    %905 = vector.broadcast %cst_331 : f32 to vector<8x128xf32>
    %906 = arith.addf %905, %904 : vector<8x128xf32>
    %907 = arith.divf %905, %906 : vector<8x128xf32>
    %908 = arith.mulf %902, %907 : vector<8x128xf32>
    %909 = arith.addf %908, %873 : vector<8x128xf32>
    %910 = arith.negf %909 : vector<8x128xf32>
    %911 = math.exp %910 : vector<8x128xf32>
    %cst_332 = arith.constant 1.000000e+00 : f32
    %912 = vector.broadcast %cst_332 : f32 to vector<8x128xf32>
    %913 = arith.addf %912, %911 : vector<8x128xf32>
    %914 = arith.divf %912, %913 : vector<8x128xf32>
    %915 = arith.mulf %909, %914 : vector<8x128xf32>
    %c9_i32_333 = arith.constant 9 : i32
    %916 = tpu.dynamic_rotate %915 by %c9_i32_333 dim 1 : vector<8x128xf32>, i32 -> vector<8x128xf32>
    %917 = vector.broadcast %75 : vector<1x128xf32> to vector<8x128xf32>
    %918 = arith.mulf %916, %917 : vector<8x128xf32>
    %c8_i32_334 = arith.constant 8 : i32
    %919 = tpu.dynamic_rotate %915 by %c8_i32_334 dim 1 : vector<8x128xf32>, i32 -> vector<8x128xf32>
    %920 = vector.broadcast %79 : vector<1x128xf32> to vector<8x128xf32>
    %921 = arith.mulf %919, %920 : vector<8x128xf32>
    %c7_i32_335 = arith.constant 7 : i32
    %922 = tpu.dynamic_rotate %915 by %c7_i32_335 dim 1 : vector<8x128xf32>, i32 -> vector<8x128xf32>
    %923 = vector.broadcast %86 : vector<1x128xf32> to vector<8x128xf32>
    %924 = arith.mulf %922, %923 : vector<8x128xf32>
    %c1_i32_336 = arith.constant 1 : i32
    %925 = tpu.dynamic_rotate %915 by %c1_i32_336 dim 1 : vector<8x128xf32>, i32 -> vector<8x128xf32>
    %926 = vector.broadcast %90 : vector<1x128xf32> to vector<8x128xf32>
    %927 = arith.mulf %925, %926 : vector<8x128xf32>
    %c127_i32_337 = arith.constant 127 : i32
    %928 = tpu.dynamic_rotate %915 by %c127_i32_337 dim 1 : vector<8x128xf32>, i32 -> vector<8x128xf32>
    %929 = vector.broadcast %94 : vector<1x128xf32> to vector<8x128xf32>
    %930 = arith.mulf %928, %929 : vector<8x128xf32>
    %c121_i32_338 = arith.constant 121 : i32
    %931 = tpu.dynamic_rotate %915 by %c121_i32_338 dim 1 : vector<8x128xf32>, i32 -> vector<8x128xf32>
    %932 = vector.broadcast %101 : vector<1x128xf32> to vector<8x128xf32>
    %933 = arith.mulf %931, %932 : vector<8x128xf32>
    %c120_i32_339 = arith.constant 120 : i32
    %934 = tpu.dynamic_rotate %915 by %c120_i32_339 dim 1 : vector<8x128xf32>, i32 -> vector<8x128xf32>
    %935 = vector.broadcast %105 : vector<1x128xf32> to vector<8x128xf32>
    %936 = arith.mulf %934, %935 : vector<8x128xf32>
    %c119_i32_340 = arith.constant 119 : i32
    %937 = tpu.dynamic_rotate %915 by %c119_i32_340 dim 1 : vector<8x128xf32>, i32 -> vector<8x128xf32>
    %938 = vector.broadcast %112 : vector<1x128xf32> to vector<8x128xf32>
    %939 = arith.mulf %937, %938 : vector<8x128xf32>
    %c0_341 = arith.constant 0 : index
    %c0_342 = arith.constant 0 : index
    %940 = vector.load %arg44[%c0_341, %c0_342] : memref<8x72xf32, #tpu.memory_space<vmem>>, vector<8x72xf32>
    %941 = tpu.concatenate %918, %921, %924, %927, %915, %930, %933, %936, %939 in 0 : vector<8x128xf32>, vector<8x128xf32>, vector<8x128xf32>, vector<8x128xf32>, vector<8x128xf32>, vector<8x128xf32>, vector<8x128xf32>, vector<8x128xf32>, vector<8x128xf32> -> vector<72x128xf32>
    %cst_343 = arith.constant dense<0.000000e+00> : vector<8x128xf32>
    %942 = tpu.matmul %940, %941, %cst_343 {dimension_numbers = #tpu.dot_dimension_numbers<[1], [0], [0], [1], [0, 0, 1, 1], [], []>} : vector<8x72xf32>, vector<72x128xf32>, vector<8x128xf32> -> vector<8x128xf32>
    %943 = vector.broadcast %867 : vector<8x1xf32> to vector<8x128xf32>
    %944 = arith.addf %942, %943 : vector<8x128xf32>
    %cst_344 = arith.constant dense<0.000000e+00> : vector<8x128xf32>
    %945 = tpu.matmul %868, %863, %cst_344 {dimension_numbers = #tpu.dot_dimension_numbers<[1], [0], [0], [1], [0, 0, 1, 1], [], []>} : vector<8x16xf32>, vector<16x128xf32>, vector<8x128xf32> -> vector<8x128xf32>
    %946 = vector.broadcast %869 : vector<8x1xf32> to vector<8x128xf32>
    %947 = arith.addf %945, %946 : vector<8x128xf32>
    %948 = arith.addf %944, %947 : vector<8x128xf32>
    %cst_345 = arith.constant dense<0.000000e+00> : vector<8x512xf32>
    %949 = tpu.matmul %948, %287, %cst_345 {dimension_numbers = #tpu.dot_dimension_numbers<[1], [0], [0], [1], [0, 0, 1, 1], [], []>} : vector<8x128xf32>, vector<128x512xf32>, vector<8x512xf32> -> vector<8x512xf32>
    %c0_346 = arith.constant 0 : index
    %c0_347 = arith.constant 0 : index
    %950 = vector.load %arg57[%c0_346, %c0_347] : memref<8x512xf32, #tpu.memory_space<vmem>>, vector<8x512xf32>
    %951 = arith.addf %949, %950 : vector<8x512xf32>
    %c0_348 = arith.constant 0 : index
    %c0_349 = arith.constant 0 : index
    %952 = vector.load %arg48[%c0_348, %c0_349] : memref<8x16xf32, #tpu.memory_space<vmem>>, vector<8x16xf32>
    %c0_350 = arith.constant 0 : index
    %c0_351 = arith.constant 0 : index
    %953 = vector.load %arg49[%c0_350, %c0_351] : memref<8x1xf32, #tpu.memory_space<vmem>>, vector<8x1xf32>
    %c0_352 = arith.constant 0 : index
    %c0_353 = arith.constant 0 : index
    %954 = vector.load %arg51[%c0_352, %c0_353] : memref<8x1xf32, #tpu.memory_space<vmem>>, vector<8x1xf32>
    %c0_354 = arith.constant 0 : index
    %c0_355 = arith.constant 0 : index
    %955 = vector.load %arg53[%c0_354, %c0_355] : memref<8x1xf32, #tpu.memory_space<vmem>>, vector<8x1xf32>
    %cst_356 = arith.constant dense<0.000000e+00> : vector<8x2xf32>
    %956 = tpu.matmul %952, %1, %cst_356 {dimension_numbers = #tpu.dot_dimension_numbers<[1], [0], [0], [1], [0, 0, 1, 1], [], []>} : vector<8x16xf32>, vector<16x2xf32>, vector<8x2xf32> -> vector<8x2xf32>
    %957 = vector.broadcast %953 : vector<8x1xf32> to vector<8x2xf32>
    %958 = arith.addf %956, %957 : vector<8x2xf32>
    %cst_357 = arith.constant dense<0.000000e+00> : vector<8x512xf32>
    %959 = tpu.matmul %958, %59, %cst_357 {dimension_numbers = #tpu.dot_dimension_numbers<[1], [0], [0], [1], [0, 0, 1, 1], [], []>} : vector<8x2xf32>, vector<2x512xf32>, vector<8x512xf32> -> vector<8x512xf32>
    %c17_i32_358 = arith.constant 17 : i32
    %960 = tpu.dynamic_rotate %951 by %c17_i32_358 dim 1 : vector<8x512xf32>, i32 -> vector<8x512xf32>
    %961 = vector.broadcast %17 : vector<1x512xf32> to vector<8x512xf32>
    %962 = arith.mulf %960, %961 : vector<8x512xf32>
    %c16_i32_359 = arith.constant 16 : i32
    %963 = tpu.dynamic_rotate %951 by %c16_i32_359 dim 1 : vector<8x512xf32>, i32 -> vector<8x512xf32>
    %964 = vector.broadcast %21 : vector<1x512xf32> to vector<8x512xf32>
    %965 = arith.mulf %963, %964 : vector<8x512xf32>
    %c15_i32_360 = arith.constant 15 : i32
    %966 = tpu.dynamic_rotate %951 by %c15_i32_360 dim 1 : vector<8x512xf32>, i32 -> vector<8x512xf32>
    %967 = vector.broadcast %28 : vector<1x512xf32> to vector<8x512xf32>
    %968 = arith.mulf %966, %967 : vector<8x512xf32>
    %c1_i32_361 = arith.constant 1 : i32
    %969 = tpu.dynamic_rotate %951 by %c1_i32_361 dim 1 : vector<8x512xf32>, i32 -> vector<8x512xf32>
    %970 = vector.broadcast %32 : vector<1x512xf32> to vector<8x512xf32>
    %971 = arith.mulf %969, %970 : vector<8x512xf32>
    %c511_i32_362 = arith.constant 511 : i32
    %972 = tpu.dynamic_rotate %951 by %c511_i32_362 dim 1 : vector<8x512xf32>, i32 -> vector<8x512xf32>
    %973 = vector.broadcast %36 : vector<1x512xf32> to vector<8x512xf32>
    %974 = arith.mulf %972, %973 : vector<8x512xf32>
    %c497_i32_363 = arith.constant 497 : i32
    %975 = tpu.dynamic_rotate %951 by %c497_i32_363 dim 1 : vector<8x512xf32>, i32 -> vector<8x512xf32>
    %976 = vector.broadcast %43 : vector<1x512xf32> to vector<8x512xf32>
    %977 = arith.mulf %975, %976 : vector<8x512xf32>
    %c496_i32_364 = arith.constant 496 : i32
    %978 = tpu.dynamic_rotate %951 by %c496_i32_364 dim 1 : vector<8x512xf32>, i32 -> vector<8x512xf32>
    %979 = vector.broadcast %47 : vector<1x512xf32> to vector<8x512xf32>
    %980 = arith.mulf %978, %979 : vector<8x512xf32>
    %c495_i32_365 = arith.constant 495 : i32
    %981 = tpu.dynamic_rotate %951 by %c495_i32_365 dim 1 : vector<8x512xf32>, i32 -> vector<8x512xf32>
    %982 = vector.broadcast %54 : vector<1x512xf32> to vector<8x512xf32>
    %983 = arith.mulf %981, %982 : vector<8x512xf32>
    %c0_366 = arith.constant 0 : index
    %c0_367 = arith.constant 0 : index
    %984 = vector.load %arg50[%c0_366, %c0_367] : memref<8x72xf32, #tpu.memory_space<vmem>>, vector<8x72xf32>
    %985 = tpu.concatenate %962, %965, %968, %971, %951, %974, %977, %980, %983 in 0 : vector<8x512xf32>, vector<8x512xf32>, vector<8x512xf32>, vector<8x512xf32>, vector<8x512xf32>, vector<8x512xf32>, vector<8x512xf32>, vector<8x512xf32>, vector<8x512xf32> -> vector<72x512xf32>
    %cst_368 = arith.constant dense<0.000000e+00> : vector<8x512xf32>
    %986 = tpu.matmul %984, %985, %cst_368 {dimension_numbers = #tpu.dot_dimension_numbers<[1], [0], [0], [1], [0, 0, 1, 1], [], []>} : vector<8x72xf32>, vector<72x512xf32>, vector<8x512xf32> -> vector<8x512xf32>
    %987 = vector.broadcast %954 : vector<8x1xf32> to vector<8x512xf32>
    %988 = arith.addf %986, %987 : vector<8x512xf32>
    %989 = arith.negf %988 : vector<8x512xf32>
    %990 = math.exp %989 : vector<8x512xf32>
    %cst_369 = arith.constant 1.000000e+00 : f32
    %991 = vector.broadcast %cst_369 : f32 to vector<8x512xf32>
    %992 = arith.addf %991, %990 : vector<8x512xf32>
    %993 = arith.divf %991, %992 : vector<8x512xf32>
    %994 = arith.mulf %988, %993 : vector<8x512xf32>
    %995 = arith.addf %994, %959 : vector<8x512xf32>
    %996 = arith.negf %995 : vector<8x512xf32>
    %997 = math.exp %996 : vector<8x512xf32>
    %cst_370 = arith.constant 1.000000e+00 : f32
    %998 = vector.broadcast %cst_370 : f32 to vector<8x512xf32>
    %999 = arith.addf %998, %997 : vector<8x512xf32>
    %1000 = arith.divf %998, %999 : vector<8x512xf32>
    %1001 = arith.mulf %995, %1000 : vector<8x512xf32>
    %c17_i32_371 = arith.constant 17 : i32
    %1002 = tpu.dynamic_rotate %1001 by %c17_i32_371 dim 1 : vector<8x512xf32>, i32 -> vector<8x512xf32>
    %1003 = vector.broadcast %17 : vector<1x512xf32> to vector<8x512xf32>
    %1004 = arith.mulf %1002, %1003 : vector<8x512xf32>
    %c16_i32_372 = arith.constant 16 : i32
    %1005 = tpu.dynamic_rotate %1001 by %c16_i32_372 dim 1 : vector<8x512xf32>, i32 -> vector<8x512xf32>
    %1006 = vector.broadcast %21 : vector<1x512xf32> to vector<8x512xf32>
    %1007 = arith.mulf %1005, %1006 : vector<8x512xf32>
    %c15_i32_373 = arith.constant 15 : i32
    %1008 = tpu.dynamic_rotate %1001 by %c15_i32_373 dim 1 : vector<8x512xf32>, i32 -> vector<8x512xf32>
    %1009 = vector.broadcast %28 : vector<1x512xf32> to vector<8x512xf32>
    %1010 = arith.mulf %1008, %1009 : vector<8x512xf32>
    %c1_i32_374 = arith.constant 1 : i32
    %1011 = tpu.dynamic_rotate %1001 by %c1_i32_374 dim 1 : vector<8x512xf32>, i32 -> vector<8x512xf32>
    %1012 = vector.broadcast %32 : vector<1x512xf32> to vector<8x512xf32>
    %1013 = arith.mulf %1011, %1012 : vector<8x512xf32>
    %c511_i32_375 = arith.constant 511 : i32
    %1014 = tpu.dynamic_rotate %1001 by %c511_i32_375 dim 1 : vector<8x512xf32>, i32 -> vector<8x512xf32>
    %1015 = vector.broadcast %36 : vector<1x512xf32> to vector<8x512xf32>
    %1016 = arith.mulf %1014, %1015 : vector<8x512xf32>
    %c497_i32_376 = arith.constant 497 : i32
    %1017 = tpu.dynamic_rotate %1001 by %c497_i32_376 dim 1 : vector<8x512xf32>, i32 -> vector<8x512xf32>
    %1018 = vector.broadcast %43 : vector<1x512xf32> to vector<8x512xf32>
    %1019 = arith.mulf %1017, %1018 : vector<8x512xf32>
    %c496_i32_377 = arith.constant 496 : i32
    %1020 = tpu.dynamic_rotate %1001 by %c496_i32_377 dim 1 : vector<8x512xf32>, i32 -> vector<8x512xf32>
    %1021 = vector.broadcast %47 : vector<1x512xf32> to vector<8x512xf32>
    %1022 = arith.mulf %1020, %1021 : vector<8x512xf32>
    %c495_i32_378 = arith.constant 495 : i32
    %1023 = tpu.dynamic_rotate %1001 by %c495_i32_378 dim 1 : vector<8x512xf32>, i32 -> vector<8x512xf32>
    %1024 = vector.broadcast %54 : vector<1x512xf32> to vector<8x512xf32>
    %1025 = arith.mulf %1023, %1024 : vector<8x512xf32>
    %c0_379 = arith.constant 0 : index
    %c0_380 = arith.constant 0 : index
    %1026 = vector.load %arg52[%c0_379, %c0_380] : memref<8x72xf32, #tpu.memory_space<vmem>>, vector<8x72xf32>
    %1027 = tpu.concatenate %1004, %1007, %1010, %1013, %1001, %1016, %1019, %1022, %1025 in 0 : vector<8x512xf32>, vector<8x512xf32>, vector<8x512xf32>, vector<8x512xf32>, vector<8x512xf32>, vector<8x512xf32>, vector<8x512xf32>, vector<8x512xf32>, vector<8x512xf32> -> vector<72x512xf32>
    %cst_381 = arith.constant dense<0.000000e+00> : vector<8x512xf32>
    %1028 = tpu.matmul %1026, %1027, %cst_381 {dimension_numbers = #tpu.dot_dimension_numbers<[1], [0], [0], [1], [0, 0, 1, 1], [], []>} : vector<8x72xf32>, vector<72x512xf32>, vector<8x512xf32> -> vector<8x512xf32>
    %1029 = vector.broadcast %955 : vector<8x1xf32> to vector<8x512xf32>
    %1030 = arith.addf %1028, %1029 : vector<8x512xf32>
    %1031 = arith.addf %1030, %951 : vector<8x512xf32>
    %c0_382 = arith.constant 0 : index
    %c0_383 = arith.constant 0 : index
    %1032 = vector.load %arg54[%c0_382, %c0_383] : memref<1x8xf32, #tpu.memory_space<vmem>>, vector<1x8xf32>
    %c0_384 = arith.constant 0 : index
    %c0_385 = arith.constant 0 : index
    %1033 = vector.load %arg55[%c0_384, %c0_385] : memref<1x1xf32, #tpu.memory_space<vmem>>, vector<1x1xf32>
    %cst_386 = arith.constant dense<0.000000e+00> : vector<1x512xf32>
    %1034 = tpu.matmul %1032, %1031, %cst_386 {dimension_numbers = #tpu.dot_dimension_numbers<[1], [0], [0], [1], [0, 0, 1, 1], [], []>} : vector<1x8xf32>, vector<8x512xf32>, vector<1x512xf32> -> vector<1x512xf32>
    %1035 = vector.broadcast %1033 : vector<1x1xf32> to vector<1x512xf32>
    %1036 = arith.addf %1034, %1035 : vector<1x512xf32>
    %c0_387 = arith.constant 0 : index
    %c0_388 = arith.constant 0 : index
    %1037 = vector.load %arg56[%c0_387, %c0_388] : memref<1x512xf32, #tpu.memory_space<vmem>>, vector<1x512xf32>
    tpu.vector_store %arg56[%c0_387, %c0_388], %1036 {strides = array<i32>} : memref<1x512xf32, #tpu.memory_space<vmem>>, vector<1x512xf32>,
    return
  }
}

</mosaic_0001>

<llo_original>
// kernel: ddpm_forward.1
$region0: #{ddpm_forward.1}
  #allocation0 [shape = 'u32[]', space=smem, size = 0x4, offset = 0x4, fixed_abs, tag = 'smem constant byte address 0x4 - core index']
  #allocation1 [shape = 'u32[144,128]{1,0:T(1,128)}', space=vmem, size = 0x12000, scoped, tag = 'internal scratch']
  #allocation2 [shape = 'f32[8,512]{1,0:T(8,128)}', space=vmem, size = 0x4000, scoped, tag = 'scratch operand']
  #allocation3 [shape = 'f32[16,128]{1,0:T(8,128)}', space=vmem, size = 0x2000, scoped, tag = 'scratch operand']
  #allocation4 [shape = 'f32[32,128]{1,0:T(8,128)}', space=vmem, size = 0x4000, scoped, tag = 'scratch operand']
  #allocation5 [shape = 'f32[1,1]{1,0:T(1,128)S(1)}', space=vmem, size = 0x200, scoped, tag = 'scoped memory for ddpm_forward.1']
  %s0 = inlined_call_operand.smem [shape: u32[57], index: -1, kind: input, shape index: {}]
  %s1 = sld [smem:[%s0]]
  %s2 = scalar_lea.smem %s0, 1
  %s3 = sld [smem:[%s2]]
  %s4 = scalar_lea.smem %s0, 2
  %s5 = sld [smem:[%s4]]
  %s6 = scalar_lea.smem %s0, 3
  %s7 = sld [smem:[%s6]]
  %s8 = scalar_lea.smem %s0, 4
  %s9 = sld [smem:[%s8]]
  %s10 = scalar_lea.smem %s0, 5
  %s11 = sld [smem:[%s10]]
  %s12 = scalar_lea.smem %s0, 6
  %s13 = sld [smem:[%s12]]
  %s14 = scalar_lea.smem %s0, 7
  %s15 = sld [smem:[%s14]]
  %s16 = scalar_lea.smem %s0, 8
  %s17 = sld [smem:[%s16]]
  %s18 = scalar_lea.smem %s0, 9
  %s19 = sld [smem:[%s18]]
  %s20 = scalar_lea.smem %s0, 10
  %s21 = sld [smem:[%s20]]
  %s22 = scalar_lea.smem %s0, 11
  %s23 = sld [smem:[%s22]]
  %s24 = scalar_lea.smem %s0, 12
  %s25 = sld [smem:[%s24]]
  %s26 = scalar_lea.smem %s0, 13
  %s27 = sld [smem:[%s26]]
  %s28 = scalar_lea.smem %s0, 14
  %s29 = sld [smem:[%s28]]
  %s30 = scalar_lea.smem %s0, 15
  %s31 = sld [smem:[%s30]]
  %s32 = scalar_lea.smem %s0, 16
  %s33 = sld [smem:[%s32]]
  %s34 = scalar_lea.smem %s0, 17
  %s35 = sld [smem:[%s34]]
  %s36 = scalar_lea.smem %s0, 18
  %s37 = sld [smem:[%s36]]
  %s38 = scalar_lea.smem %s0, 19
  %s39 = sld [smem:[%s38]]
  %s40 = scalar_lea.smem %s0, 20
  %s41 = sld [smem:[%s40]]
  %s42 = scalar_lea.smem %s0, 21
  %s43 = sld [smem:[%s42]]
  %s44 = scalar_lea.smem %s0, 22
  %s45 = sld [smem:[%s44]]
  %s46 = scalar_lea.smem %s0, 23
  %s47 = sld [smem:[%s46]]
  %s48 = scalar_lea.smem %s0, 24
  %s49 = sld [smem:[%s48]]
  %s50 = scalar_lea.smem %s0, 25
  %s51 = sld [smem:[%s50]]
  %s52 = scalar_lea.smem %s0, 26
  %s53 = sld [smem:[%s52]]
  %s54 = scalar_lea.smem %s0, 27
  %s55 = sld [smem:[%s54]]
  %s56 = scalar_lea.smem %s0, 28
  %s57 = sld [smem:[%s56]]
  %s58 = scalar_lea.smem %s0, 29
  %s59 = sld [smem:[%s58]]
  %s60 = scalar_lea.smem %s0, 30
  %s61 = sld [smem:[%s60]]
  %s62 = scalar_lea.smem %s0, 31
  %s63 = sld [smem:[%s62]]
  %s64 = scalar_lea.smem %s0, 32
  %s65 = sld [smem:[%s64]]
  %s66 = scalar_lea.smem %s0, 33
  %s67 = sld [smem:[%s66]]
  %s68 = scalar_lea.smem %s0, 34
  %s69 = sld [smem:[%s68]]
  %s70 = scalar_lea.smem %s0, 35
  %s71 = sld [smem:[%s70]]
  %s72 = scalar_lea.smem %s0, 36
  %s73 = sld [smem:[%s72]]
  %s74 = scalar_lea.smem %s0, 37
  %s75 = sld [smem:[%s74]]
  %s76 = scalar_lea.smem %s0, 38
  %s77 = sld [smem:[%s76]]
  %s78 = scalar_lea.smem %s0, 39
  %s79 = sld [smem:[%s78]]
  %s80 = scalar_lea.smem %s0, 40
  %s81 = sld [smem:[%s80]]
  %s82 = scalar_lea.smem %s0, 41
  %s83 = sld [smem:[%s82]]
  %s84 = scalar_lea.smem %s0, 42
  %s85 = sld [smem:[%s84]]
  %s86 = scalar_lea.smem %s0, 43
  %s87 = sld [smem:[%s86]]
  %s88 = scalar_lea.smem %s0, 44
  %s89 = sld [smem:[%s88]]
  %s90 = scalar_lea.smem %s0, 45
  %s91 = sld [smem:[%s90]]
  %s92 = scalar_lea.smem %s0, 46
  %s93 = sld [smem:[%s92]]
  %s94 = scalar_lea.smem %s0, 47
  %s95 = sld [smem:[%s94]]
  %s96 = scalar_lea.smem %s0, 48
  %s97 = sld [smem:[%s96]]
  %s98 = scalar_lea.smem %s0, 49
  %s99 = sld [smem:[%s98]]
  %s100 = scalar_lea.smem %s0, 50
  %s101 = sld [smem:[%s100]]
  %s102 = scalar_lea.smem %s0, 51
  %s103 = sld [smem:[%s102]]
  %s104 = scalar_lea.smem %s0, 52
  %s105 = sld [smem:[%s104]]
  %s106 = scalar_lea.smem %s0, 53
  %s107 = sld [smem:[%s106]]
  %s108 = scalar_lea.smem %s0, 54
  %s109 = sld [smem:[%s108]]
  %s110 = scalar_lea.smem %s0, 55
  %s111 = sld [smem:[%s110]]
  %s112 = scalar_lea.smem %s0, 56
  %s113 = sld [smem:[%s112]]
  %s114 = sld [smem:[#allocation0]]
  $region234: #{ddpm_forward.1} parent=0
    _
  %s116 = ssub.s32 1, %s114
  %s117 = scalar_select 0, %s116, %s114
  %v118 = vstv %s111
  %119 = vst [vmem:[#allocation5] sm:$0x1] %v118
  // Predicated region
  $region2: #{ddpm_forward.1} parent=0 // pred_check
    _
  $region3: #{ddpm_forward.1} parent=0 // pred_check_branch
    %121 = sbr.rel (0) target = $region5
  $region4: #{ddpm_forward.1} parent=0 // pred_region
    _
  $region5: #{ddpm_forward.1} parent=0 // pred_fallthru
    _
  // Predicated region
  $region6: #{ddpm_forward.1} parent=0 // pred_check
    _
  $region7: #{ddpm_forward.1} parent=0 // pred_check_branch
    %123 = sbr.rel (0) target = $region9
  $region8: #{ddpm_forward.1} parent=0 // pred_region
    _
  $region9: #{ddpm_forward.1} parent=0 // pred_fallthru
    _
  // Predicated region
  $region10: #{ddpm_forward.1} parent=0 // pred_check
    _
  $region11: #{ddpm_forward.1} parent=0 // pred_check_branch
    %125 = sbr.rel (0) target = $region13
  $region12: #{ddpm_forward.1} parent=0 // pred_region
    _
  $region13: #{ddpm_forward.1} parent=0 // pred_fallthru
    _
  // Predicated region
  $region14: #{ddpm_forward.1} parent=0 // pred_check
    _
  $region15: #{ddpm_forward.1} parent=0 // pred_check_branch
    %127 = sbr.rel (0) target = $region17
  $region16: #{ddpm_forward.1} parent=0 // pred_region
    _
  $region17: #{ddpm_forward.1} parent=0 // pred_fallthru
    _
  // Predicated region
  $region18: #{ddpm_forward.1} parent=0 // pred_check
    _
  $region19: #{ddpm_forward.1} parent=0 // pred_check_branch
    %129 = sbr.rel (0) target = $region21
  $region20: #{ddpm_forward.1} parent=0 // pred_region
    _
  $region21: #{ddpm_forward.1} parent=0 // pred_fallthru
    _
  // Predicated region
  $region22: #{ddpm_forward.1} parent=0 // pred_check
    _
  $region23: #{ddpm_forward.1} parent=0 // pred_check_branch
    %131 = sbr.rel (0) target = $region25
  $region24: #{ddpm_forward.1} parent=0 // pred_region
    _
  $region25: #{ddpm_forward.1} parent=0 // pred_fallthru
    _
  // Predicated region
  $region26: #{ddpm_forward.1} parent=0 // pred_check
    _
  $region27: #{ddpm_forward.1} parent=0 // pred_check_branch
    %133 = sbr.rel (0) target = $region29
  $region28: #{ddpm_forward.1} parent=0 // pred_region
    _
  $region29: #{ddpm_forward.1} parent=0 // pred_fallthru
    _
  // Predicated region
  $region30: #{ddpm_forward.1} parent=0 // pred_check
    _
  $region31: #{ddpm_forward.1} parent=0 // pred_check_branch
    %135 = sbr.rel (0) target = $region33
  $region32: #{ddpm_forward.1} parent=0 // pred_region
    _
  $region33: #{ddpm_forward.1} parent=0 // pred_fallthru
    _
  // Predicated region
  $region34: #{ddpm_forward.1} parent=0 // pred_check
    _
  $region35: #{ddpm_forward.1} parent=0 // pred_check_branch
    %137 = sbr.rel (0) target = $region37
  $region36: #{ddpm_forward.1} parent=0 // pred_region
    _
  $region37: #{ddpm_forward.1} parent=0 // pred_fallthru
    _
  // Predicated region
  $region38: #{ddpm_forward.1} parent=0 // pred_check
    _
  $region39: #{ddpm_forward.1} parent=0 // pred_check_branch
    %139 = sbr.rel (0) target = $region41
  $region40: #{ddpm_forward.1} parent=0 // pred_region
    _
  $region41: #{ddpm_forward.1} parent=0 // pred_fallthru
    _
  // Predicated region
  $region42: #{ddpm_forward.1} parent=0 // pred_check
    _
  $region43: #{ddpm_forward.1} parent=0 // pred_check_branch
    %141 = sbr.rel (0) target = $region45
  $region44: #{ddpm_forward.1} parent=0 // pred_region
    _
  $region45: #{ddpm_forward.1} parent=0 // pred_fallthru
    _
  // Predicated region
  $region46: #{ddpm_forward.1} parent=0 // pred_check
    _
  $region47: #{ddpm_forward.1} parent=0 // pred_check_branch
    %143 = sbr.rel (0) target = $region49
  $region48: #{ddpm_forward.1} parent=0 // pred_region
    _
  $region49: #{ddpm_forward.1} parent=0 // pred_fallthru
    _
  // Predicated region
  $region50: #{ddpm_forward.1} parent=0 // pred_check
    _
  $region51: #{ddpm_forward.1} parent=0 // pred_check_branch
    %145 = sbr.rel (0) target = $region53
  $region52: #{ddpm_forward.1} parent=0 // pred_region
    _
  $region53: #{ddpm_forward.1} parent=0 // pred_fallthru
    _
  // Predicated region
  $region54: #{ddpm_forward.1} parent=0 // pred_check
    _
  $region55: #{ddpm_forward.1} parent=0 // pred_check_branch
    %147 = sbr.rel (0) target = $region57
  $region56: #{ddpm_forward.1} parent=0 // pred_region
    _
  $region57: #{ddpm_forward.1} parent=0 // pred_fallthru
    _
  // Predicated region
  $region58: #{ddpm_forward.1} parent=0 // pred_check
    _
  $region59: #{ddpm_forward.1} parent=0 // pred_check_branch
    %149 = sbr.rel (0) target = $region61
  $region60: #{ddpm_forward.1} parent=0 // pred_region
    _
  $region61: #{ddpm_forward.1} parent=0 // pred_fallthru
    _
  // Predicated region
  $region62: #{ddpm_forward.1} parent=0 // pred_check
    _
  $region63: #{ddpm_forward.1} parent=0 // pred_check_branch
    %151 = sbr.rel (0) target = $region65
  $region64: #{ddpm_forward.1} parent=0 // pred_region
    _
  $region65: #{ddpm_forward.1} parent=0 // pred_fallthru
    _
  // Predicated region
  $region66: #{ddpm_forward.1} parent=0 // pred_check
    _
  $region67: #{ddpm_forward.1} parent=0 // pred_check_branch
    %153 = sbr.rel (0) target = $region69
  $region68: #{ddpm_forward.1} parent=0 // pred_region
    _
  $region69: #{ddpm_forward.1} parent=0 // pred_fallthru
    _
  // Predicated region
  $region70: #{ddpm_forward.1} parent=0 // pred_check
    _
  $region71: #{ddpm_forward.1} parent=0 // pred_check_branch
    %155 = sbr.rel (0) target = $region73
  $region72: #{ddpm_forward.1} parent=0 // pred_region
    _
  $region73: #{ddpm_forward.1} parent=0 // pred_fallthru
    _
  // Predicated region
  $region74: #{ddpm_forward.1} parent=0 // pred_check
    _
  $region75: #{ddpm_forward.1} parent=0 // pred_check_branch
    %157 = sbr.rel (0) target = $region77
  $region76: #{ddpm_forward.1} parent=0 // pred_region
    _
  $region77: #{ddpm_forward.1} parent=0 // pred_fallthru
    _
  // Predicated region
  $region78: #{ddpm_forward.1} parent=0 // pred_check
    _
  $region79: #{ddpm_forward.1} parent=0 // pred_check_branch
    %159 = sbr.rel (0) target = $region81
  $region80: #{ddpm_forward.1} parent=0 // pred_region
    _
  $region81: #{ddpm_forward.1} parent=0 // pred_fallthru
    _
  // Predicated region
  $region82: #{ddpm_forward.1} parent=0 // pred_check
    _
  $region83: #{ddpm_forward.1} parent=0 // pred_check_branch
    %161 = sbr.rel (0) target = $region85
  $region84: #{ddpm_forward.1} parent=0 // pred_region
    _
  $region85: #{ddpm_forward.1} parent=0 // pred_fallthru
    _
  // Predicated region
  $region86: #{ddpm_forward.1} parent=0 // pred_check
    _
  $region87: #{ddpm_forward.1} parent=0 // pred_check_branch
    %163 = sbr.rel (0) target = $region89
  $region88: #{ddpm_forward.1} parent=0 // pred_region
    _
  $region89: #{ddpm_forward.1} parent=0 // pred_fallthru
    _
  // Predicated region
  $region90: #{ddpm_forward.1} parent=0 // pred_check
    _
  $region91: #{ddpm_forward.1} parent=0 // pred_check_branch
    %165 = sbr.rel (0) target = $region93
  $region92: #{ddpm_forward.1} parent=0 // pred_region
    _
  $region93: #{ddpm_forward.1} parent=0 // pred_fallthru
    _
  // Predicated region
  $region94: #{ddpm_forward.1} parent=0 // pred_check
    _
  $region95: #{ddpm_forward.1} parent=0 // pred_check_branch
    %167 = sbr.rel (0) target = $region97
  $region96: #{ddpm_forward.1} parent=0 // pred_region
    _
  $region97: #{ddpm_forward.1} parent=0 // pred_fallthru
    _
  // Predicated region
  $region98: #{ddpm_forward.1} parent=0 // pred_check
    _
  $region99: #{ddpm_forward.1} parent=0 // pred_check_branch
    %169 = sbr.rel (0) target = $region101
  $region100: #{ddpm_forward.1} parent=0 // pred_region
    _
  $region101: #{ddpm_forward.1} parent=0 // pred_fallthru
    _
  // Predicated region
  $region102: #{ddpm_forward.1} parent=0 // pred_check
    _
  $region103: #{ddpm_forward.1} parent=0 // pred_check_branch
    %171 = sbr.rel (0) target = $region105
  $region104: #{ddpm_forward.1} parent=0 // pred_region
    _
  $region105: #{ddpm_forward.1} parent=0 // pred_fallthru
    _
  // Predicated region
  $region106: #{ddpm_forward.1} parent=0 // pred_check
    _
  $region107: #{ddpm_forward.1} parent=0 // pred_check_branch
    %173 = sbr.rel (0) target = $region109
  $region108: #{ddpm_forward.1} parent=0 // pred_region
    _
  $region109: #{ddpm_forward.1} parent=0 // pred_fallthru
    _
  // Predicated region
  $region110: #{ddpm_forward.1} parent=0 // pred_check
    _
  $region111: #{ddpm_forward.1} parent=0 // pred_check_branch
    %175 = sbr.rel (0) target = $region113
  $region112: #{ddpm_forward.1} parent=0 // pred_region
    _
  $region113: #{ddpm_forward.1} parent=0 // pred_fallthru
    _
  // Predicated region
  $region114: #{ddpm_forward.1} parent=0 // pred_check
    _
  $region115: #{ddpm_forward.1} parent=0 // pred_check_branch
    %177 = sbr.rel (0) target = $region117
  $region116: #{ddpm_forward.1} parent=0 // pred_region
    _
  $region117: #{ddpm_forward.1} parent=0 // pred_fallthru
    _
  // Predicated region
  $region118: #{ddpm_forward.1} parent=0 // pred_check
    _
  $region119: #{ddpm_forward.1} parent=0 // pred_check_branch
    %179 = sbr.rel (0) target = $region121
  $region120: #{ddpm_forward.1} parent=0 // pred_region
    _
  $region121: #{ddpm_forward.1} parent=0 // pred_fallthru
    _
  // Predicated region
  $region122: #{ddpm_forward.1} parent=0 // pred_check
    _
  $region123: #{ddpm_forward.1} parent=0 // pred_check_branch
    %181 = sbr.rel (0) target = $region125
  $region124: #{ddpm_forward.1} parent=0 // pred_region
    _
  $region125: #{ddpm_forward.1} parent=0 // pred_fallthru
    _
  // Predicated region
  $region126: #{ddpm_forward.1} parent=0 // pred_check
    _
  $region127: #{ddpm_forward.1} parent=0 // pred_check_branch
    %183 = sbr.rel (0) target = $region129
  $region128: #{ddpm_forward.1} parent=0 // pred_region
    _
  $region129: #{ddpm_forward.1} parent=0 // pred_fallthru
    _
  // Predicated region
  $region130: #{ddpm_forward.1} parent=0 // pred_check
    _
  $region131: #{ddpm_forward.1} parent=0 // pred_check_branch
    %185 = sbr.rel (0) target = $region133
  $region132: #{ddpm_forward.1} parent=0 // pred_region
    _
  $region133: #{ddpm_forward.1} parent=0 // pred_fallthru
    _
  // Predicated region
  $region134: #{ddpm_forward.1} parent=0 // pred_check
    _
  $region135: #{ddpm_forward.1} parent=0 // pred_check_branch
    %187 = sbr.rel (0) target = $region137
  $region136: #{ddpm_forward.1} parent=0 // pred_region
    _
  $region137: #{ddpm_forward.1} parent=0 // pred_fallthru
    _
  // Predicated region
  $region138: #{ddpm_forward.1} parent=0 // pred_check
    _
  $region139: #{ddpm_forward.1} parent=0 // pred_check_branch
    %189 = sbr.rel (0) target = $region141
  $region140: #{ddpm_forward.1} parent=0 // pred_region
    _
  $region141: #{ddpm_forward.1} parent=0 // pred_fallthru
    _
  // Predicated region
  $region142: #{ddpm_forward.1} parent=0 // pred_check
    _
  $region143: #{ddpm_forward.1} parent=0 // pred_check_branch
    %191 = sbr.rel (0) target = $region145
  $region144: #{ddpm_forward.1} parent=0 // pred_region
    _
  $region145: #{ddpm_forward.1} parent=0 // pred_fallthru
    _
  // Predicated region
  $region146: #{ddpm_forward.1} parent=0 // pred_check
    _
  $region147: #{ddpm_forward.1} parent=0 // pred_check_branch
    %193 = sbr.rel (0) target = $region149
  $region148: #{ddpm_forward.1} parent=0 // pred_region
    _
  $region149: #{ddpm_forward.1} parent=0 // pred_fallthru
    _
  // Predicated region
  $region150: #{ddpm_forward.1} parent=0 // pred_check
    _
  $region151: #{ddpm_forward.1} parent=0 // pred_check_branch
    %195 = sbr.rel (0) target = $region153
  $region152: #{ddpm_forward.1} parent=0 // pred_region
    _
  $region153: #{ddpm_forward.1} parent=0 // pred_fallthru
    _
  // Predicated region
  $region154: #{ddpm_forward.1} parent=0 // pred_check
    _
  $region155: #{ddpm_forward.1} parent=0 // pred_check_branch
    %197 = sbr.rel (0) target = $region157
  $region156: #{ddpm_forward.1} parent=0 // pred_region
    _
  $region157: #{ddpm_forward.1} parent=0 // pred_fallthru
    _
  // Predicated region
  $region158: #{ddpm_forward.1} parent=0 // pred_check
    _
  $region159: #{ddpm_forward.1} parent=0 // pred_check_branch
    %199 = sbr.rel (0) target = $region161
  $region160: #{ddpm_forward.1} parent=0 // pred_region
    _
  $region161: #{ddpm_forward.1} parent=0 // pred_fallthru
    _
  // Predicated region
  $region162: #{ddpm_forward.1} parent=0 // pred_check
    _
  $region163: #{ddpm_forward.1} parent=0 // pred_check_branch
    %201 = sbr.rel (0) target = $region165
  $region164: #{ddpm_forward.1} parent=0 // pred_region
    _
  $region165: #{ddpm_forward.1} parent=0 // pred_fallthru
    _
  // Predicated region
  $region166: #{ddpm_forward.1} parent=0 // pred_check
    _
  $region167: #{ddpm_forward.1} parent=0 // pred_check_branch
    %203 = sbr.rel (0) target = $region169
  $region168: #{ddpm_forward.1} parent=0 // pred_region
    _
  $region169: #{ddpm_forward.1} parent=0 // pred_fallthru
    _
  // Predicated region
  $region170: #{ddpm_forward.1} parent=0 // pred_check
    _
  $region171: #{ddpm_forward.1} parent=0 // pred_check_branch
    %205 = sbr.rel (0) target = $region173
  $region172: #{ddpm_forward.1} parent=0 // pred_region
    _
  $region173: #{ddpm_forward.1} parent=0 // pred_fallthru
    _
  // Predicated region
  $region174: #{ddpm_forward.1} parent=0 // pred_check
    _
  $region175: #{ddpm_forward.1} parent=0 // pred_check_branch
    %207 = sbr.rel (0) target = $region177
  $region176: #{ddpm_forward.1} parent=0 // pred_region
    _
  $region177: #{ddpm_forward.1} parent=0 // pred_fallthru
    _
  // Predicated region
  $region178: #{ddpm_forward.1} parent=0 // pred_check
    _
  $region179: #{ddpm_forward.1} parent=0 // pred_check_branch
    %209 = sbr.rel (0) target = $region181
  $region180: #{ddpm_forward.1} parent=0 // pred_region
    _
  $region181: #{ddpm_forward.1} parent=0 // pred_fallthru
    _
  // Predicated region
  $region182: #{ddpm_forward.1} parent=0 // pred_check
    _
  $region183: #{ddpm_forward.1} parent=0 // pred_check_branch
    %211 = sbr.rel (0) target = $region185
  $region184: #{ddpm_forward.1} parent=0 // pred_region
    _
  $region185: #{ddpm_forward.1} parent=0 // pred_fallthru
    _
  // Predicated region
  $region186: #{ddpm_forward.1} parent=0 // pred_check
    _
  $region187: #{ddpm_forward.1} parent=0 // pred_check_branch
    %213 = sbr.rel (0) target = $region189
  $region188: #{ddpm_forward.1} parent=0 // pred_region
    _
  $region189: #{ddpm_forward.1} parent=0 // pred_fallthru
    _
  // Predicated region
  $region190: #{ddpm_forward.1} parent=0 // pred_check
    _
  $region191: #{ddpm_forward.1} parent=0 // pred_check_branch
    %215 = sbr.rel (0) target = $region193
  $region192: #{ddpm_forward.1} parent=0 // pred_region
    _
  $region193: #{ddpm_forward.1} parent=0 // pred_fallthru
    _
  // Predicated region
  $region194: #{ddpm_forward.1} parent=0 // pred_check
    _
  $region195: #{ddpm_forward.1} parent=0 // pred_check_branch
    %217 = sbr.rel (0) target = $region197
  $region196: #{ddpm_forward.1} parent=0 // pred_region
    _
  $region197: #{ddpm_forward.1} parent=0 // pred_fallthru
    _
  // Predicated region
  $region198: #{ddpm_forward.1} parent=0 // pred_check
    _
  $region199: #{ddpm_forward.1} parent=0 // pred_check_branch
    %219 = sbr.rel (0) target = $region201
  $region200: #{ddpm_forward.1} parent=0 // pred_region
    _
  $region201: #{ddpm_forward.1} parent=0 // pred_fallthru
    _
  // Predicated region
  $region202: #{ddpm_forward.1} parent=0 // pred_check
    _
  $region203: #{ddpm_forward.1} parent=0 // pred_check_branch
    %221 = sbr.rel (0) target = $region205
  $region204: #{ddpm_forward.1} parent=0 // pred_region
    _
  $region205: #{ddpm_forward.1} parent=0 // pred_fallthru
    _
  // Predicated region
  $region206: #{ddpm_forward.1} parent=0 // pred_check
    _
  $region207: #{ddpm_forward.1} parent=0 // pred_check_branch
    %223 = sbr.rel (0) target = $region209
  $region208: #{ddpm_forward.1} parent=0 // pred_region
    _
  $region209: #{ddpm_forward.1} parent=0 // pred_fallthru
    _
  // Predicated region
  $region210: #{ddpm_forward.1} parent=0 // pred_check
    _
  $region211: #{ddpm_forward.1} parent=0 // pred_check_branch
    %225 = sbr.rel (0) target = $region213
  $region212: #{ddpm_forward.1} parent=0 // pred_region
    _
  $region213: #{ddpm_forward.1} parent=0 // pred_fallthru
    _
  // Predicated region
  $region214: #{ddpm_forward.1} parent=0 // pred_check
    _
  $region215: #{ddpm_forward.1} parent=0 // pred_check_branch
    %227 = sbr.rel (0) target = $region217
  $region216: #{ddpm_forward.1} parent=0 // pred_region
    _
  $region217: #{ddpm_forward.1} parent=0 // pred_fallthru
    _
  // Predicated region
  $region218: #{ddpm_forward.1} parent=0 // pred_check
    _
  $region219: #{ddpm_forward.1} parent=0 // pred_check_branch
    %229 = sbr.rel (0) target = $region221
  $region220: #{ddpm_forward.1} parent=0 // pred_region
    _
  $region221: #{ddpm_forward.1} parent=0 // pred_fallthru
    _
  // Predicated region
  $region222: #{ddpm_forward.1} parent=0 // pred_check
    _
  $region223: #{ddpm_forward.1} parent=0 // pred_check_branch
    %231 = sbr.rel (0) target = $region225
  $region224: #{ddpm_forward.1} parent=0 // pred_region
    _
  $region225: #{ddpm_forward.1} parent=0 // pred_fallthru
    _
  %v232 = vld [vmem:[%s1] sm:$0xf]
  %v233 = vld [vmem:[%s3] sm:$0xff]
  %v234 = vld [vmem:[%s3 + $0x8] sm:$0xff]
  %v235 = vlaneseq
  %v236 = vand.u32 %v235, 127
  %v237 = vadd.s32 %v236, 128
  %v238 = vadd.s32 %v236, 256
  %v239 = vadd.s32 %v236, 384
  %v240 = vand.u32 %v236, 15
  %v241 = vand.u32 %v237, 15
  %v242 = vand.u32 %v238, 15
  %v243 = vand.u32 %v239, 15
  %v244 = vshra.s32 %v236, 4
  %v245 = vshra.s32 %v237, 4
  %v246 = vshra.s32 %v238, 4
  %v247 = vshra.s32 %v239, 4
  %v248 = vand.u32 %v244, 15
  %v249 = vand.u32 %v245, 15
  %v250 = vand.u32 %v246, 15
  %v251 = vand.u32 %v247, 15
  %v252 = vshra.s32 %v236, 8
  %v253 = vshra.s32 %v237, 8
  %v254 = vshra.s32 %v238, 8
  %v255 = vshra.s32 %v239, 8
  %vm256 = vcmp.ge.s32.totalorder %v248, 1
  %vm257 = vcmp.ge.s32.totalorder %v249, 1
  %vm258 = vcmp.ge.s32.totalorder %v250, 1
  %vm259 = vcmp.ge.s32.totalorder %v251, 1
  %vm260 = vcmp.ge.s32.totalorder %v240, 1
  %vm261 = vcmp.ge.s32.totalorder %v241, 1
  %vm262 = vcmp.ge.s32.totalorder %v242, 1
  %vm263 = vcmp.ge.s32.totalorder %v243, 1
  %vm264 = vmand %vm256, %vm260
  %vm265 = vmand %vm257, %vm261
  %vm266 = vmand %vm258, %vm262
  %vm267 = vmand %vm259, %vm263
  %v268 = vsel %vm264, 1, 0
  %v269 = vsel %vm265, 1, 0
  %v270 = vsel %vm266, 1, 0
  %v271 = vsel %vm267, 1, 0
  %v272 = vcvt.s32.f32 %v268
  %v273 = vcvt.s32.f32 %v269
  %v274 = vcvt.s32.f32 %v270
  %v275 = vcvt.s32.f32 %v271
  %v276 = vsel %vm256, 1, 0
  %v277 = vsel %vm257, 1, 0
  %v278 = vsel %vm258, 1, 0
  %v279 = vsel %vm259, 1, 0
  %v280 = vcvt.s32.f32 %v276
  %v281 = vcvt.s32.f32 %v277
  %v282 = vcvt.s32.f32 %v278
  %v283 = vcvt.s32.f32 %v279
  %vm284 = vcmp.le.s32.totalorder %v240, 14
  %vm285 = vcmp.le.s32.totalorder %v241, 14
  %vm286 = vcmp.le.s32.totalorder %v242, 14
  %vm287 = vcmp.le.s32.totalorder %v243, 14
  %vm288 = vmand %vm256, %vm284
  %vm289 = vmand %vm257, %vm285
  %vm290 = vmand %vm258, %vm286
  %vm291 = vmand %vm259, %vm287
  %v292 = vsel %vm288, 1, 0
  %v293 = vsel %vm289, 1, 0
  %v294 = vsel %vm290, 1, 0
  %v295 = vsel %vm291, 1, 0
  %v296 = vcvt.s32.f32 %v292
  %v297 = vcvt.s32.f32 %v293
  %v298 = vcvt.s32.f32 %v294
  %v299 = vcvt.s32.f32 %v295
  %v300 = vsel %vm260, 1, 0
  %v301 = vsel %vm261, 1, 0
  %v302 = vsel %vm262, 1, 0
  %v303 = vsel %vm263, 1, 0
  %v304 = vcvt.s32.f32 %v300
  %v305 = vcvt.s32.f32 %v301
  %v306 = vcvt.s32.f32 %v302
  %v307 = vcvt.s32.f32 %v303
  %v308 = vsel %vm284, 1, 0
  %v309 = vsel %vm285, 1, 0
  %v310 = vsel %vm286, 1, 0
  %v311 = vsel %vm287, 1, 0
  %v312 = vcvt.s32.f32 %v308
  %v313 = vcvt.s32.f32 %v309
  %v314 = vcvt.s32.f32 %v310
  %v315 = vcvt.s32.f32 %v311
  %vm316 = vcmp.le.s32.totalorder %v248, 14
  %vm317 = vcmp.le.s32.totalorder %v249, 14
  %vm318 = vcmp.le.s32.totalorder %v250, 14
  %vm319 = vcmp.le.s32.totalorder %v251, 14
  %vm320 = vmand %vm316, %vm260
  %vm321 = vmand %vm317, %vm261
  %vm322 = vmand %vm318, %vm262
  %vm323 = vmand %vm319, %vm263
  %v324 = vsel %vm320, 1, 0
  %v325 = vsel %vm321, 1, 0
  %v326 = vsel %vm322, 1, 0
  %v327 = vsel %vm323, 1, 0
  %v328 = vcvt.s32.f32 %v324
  %v329 = vcvt.s32.f32 %v325
  %v330 = vcvt.s32.f32 %v326
  %v331 = vcvt.s32.f32 %v327
  %v332 = vsel %vm316, 1, 0
  %v333 = vsel %vm317, 1, 0
  %v334 = vsel %vm318, 1, 0
  %v335 = vsel %vm319, 1, 0
  %v336 = vcvt.s32.f32 %v332
  %v337 = vcvt.s32.f32 %v333
  %v338 = vcvt.s32.f32 %v334
  %v339 = vcvt.s32.f32 %v335
  %vm340 = vmand %vm316, %vm284
  %vm341 = vmand %vm317, %vm285
  %vm342 = vmand %vm318, %vm286
  %vm343 = vmand %vm319, %vm287
  %v344 = vsel %vm340, 1, 0
  %v345 = vsel %vm341, 1, 0
  %v346 = vsel %vm342, 1, 0
  %v347 = vsel %vm343, 1, 0
  %v348 = vcvt.s32.f32 %v344
  %v349 = vcvt.s32.f32 %v345
  %v350 = vcvt.s32.f32 %v346
  %v351 = vcvt.s32.f32 %v347
  %v352 = vlaneseq
  %v353 = vshrl.u32 %v352, 7
  %vm354 = vcmp.eq.s32.totalorder %v353, %v252
  %vm355 = vcmp.eq.s32.totalorder %v353, %v253
  %vm356 = vcmp.eq.s32.totalorder %v353, %v254
  %vm357 = vcmp.eq.s32.totalorder %v353, %v255
  %v358 = vsel %vm354, 1, 0
  %v359 = vsel %vm355, 1, 0
  %v360 = vsel %vm356, 1, 0
  %v361 = vsel %vm357, 1, 0
  %v362 = vcvt.s32.f32 %v358
  %v363 = vcvt.s32.f32 %v359
  %v364 = vcvt.s32.f32 %v360
  %v365 = vcvt.s32.f32 %v361
  %v366 = vand.u32 %v236, 7
  %v367 = vshra.s32 %v236, 3
  %v368 = vand.u32 %v367, 7
  %v369 = vshra.s32 %v236, 6
  %vm370 = vcmp.ge.s32.totalorder %v368, 1
  %vm371 = vcmp.ge.s32.totalorder %v366, 1
  %vm372 = vmand %vm370, %vm371
  %v373 = vsel %vm372, 1, 0
  %v374 = vcvt.s32.f32 %v373
  %v375 = vsel %vm370, 1, 0
  %v376 = vcvt.s32.f32 %v375
  %vm377 = vcmp.le.s32.totalorder %v366, 6
  %vm378 = vmand %vm370, %vm377
  %v379 = vsel %vm378, 1, 0
  %v380 = vcvt.s32.f32 %v379
  %v381 = vsel %vm371, 1, 0
  %v382 = vcvt.s32.f32 %v381
  %v383 = vsel %vm377, 1, 0
  %v384 = vcvt.s32.f32 %v383
  %vm385 = vcmp.le.s32.totalorder %v368, 6
  %vm386 = vmand %vm385, %vm371
  %v387 = vsel %vm386, 1, 0
  %v388 = vcvt.s32.f32 %v387
  %v389 = vsel %vm385, 1, 0
  %v390 = vcvt.s32.f32 %v389
  %vm391 = vmand %vm385, %vm377
  %v392 = vsel %vm391, 1, 0
  %v393 = vcvt.s32.f32 %v392
  %vm394 = vcmp.eq.s32.totalorder %v353, %v369
  %v395 = vsel %vm394, 1, 0
  %v396 = vcvt.s32.f32 %v395
  %v397 = vand.u32 %v236, 3
  %v398 = vshra.s32 %v236, 2
  %v399 = vand.u32 %v398, 3
  %vm400 = vcmp.ge.s32.totalorder %v399, 1
  %vm401 = vcmp.ge.s32.totalorder %v397, 1
  %vm402 = vmand %vm400, %vm401
  %v403 = vsel %vm402, 1, 0
  %v404 = vcvt.s32.f32 %v403
  %v405 = vsel %vm400, 1, 0
  %v406 = vcvt.s32.f32 %v405
  %vm407 = vcmp.le.s32.totalorder %v397, 2
  %vm408 = vmand %vm400, %vm407
  %v409 = vsel %vm408, 1, 0
  %v410 = vcvt.s32.f32 %v409
  %v411 = vsel %vm401, 1, 0
  %v412 = vcvt.s32.f32 %v411
  %v413 = vsel %vm407, 1, 0
  %v414 = vcvt.s32.f32 %v413
  %vm415 = vcmp.le.s32.totalorder %v399, 2
  %vm416 = vmand %vm415, %vm401
  %v417 = vsel %vm416, 1, 0
  %v418 = vcvt.s32.f32 %v417
  %v419 = vsel %vm415, 1, 0
  %v420 = vcvt.s32.f32 %v419
  %vm421 = vmand %vm415, %vm407
  %v422 = vsel %vm421, 1, 0
  %v423 = vcvt.s32.f32 %v422
  %vm424 = vcmp.eq.s32.totalorder %v353, %v244
  %v425 = vsel %vm424, 1, 0
  %v426 = vcvt.s32.f32 %v425
  %v427 = vand.u32 %v236, 1
  %v428 = vshra.s32 %v236, 1
  %v429 = vand.u32 %v428, 1
  %vm430 = vcmp.ge.s32.totalorder %v429, 1
  %vm431 = vcmp.ge.s32.totalorder %v427, 1
  %vm432 = vmand %vm430, %vm431
  %v433 = vsel %vm432, 1, 0
  %v434 = vcvt.s32.f32 %v433
  %v435 = vsel %vm430, 1, 0
  %v436 = vcvt.s32.f32 %v435
  %vm437 = vcmp.le.s32.totalorder %v427, 0
  %vm438 = vmand %vm430, %vm437
  %v439 = vsel %vm438, 1, 0
  %v440 = vcvt.s32.f32 %v439
  %v441 = vsel %vm431, 1, 0
  %v442 = vcvt.s32.f32 %v441
  %v443 = vsel %vm437, 1, 0
  %v444 = vcvt.s32.f32 %v443
  %vm445 = vcmp.le.s32.totalorder %v429, 0
  %vm446 = vmand %vm445, %vm431
  %v447 = vsel %vm446, 1, 0
  %v448 = vcvt.s32.f32 %v447
  %v449 = vsel %vm445, 1, 0
  %v450 = vcvt.s32.f32 %v449
  %vm451 = vmand %vm445, %vm437
  %v452 = vsel %vm451, 1, 0
  %v453 = vcvt.s32.f32 %v452
  %vm454 = vcmp.eq.s32.totalorder %v353, %v398
  %v455 = vsel %vm454, 1, 0
  %v456 = vcvt.s32.f32 %v455
  %v457 = vadd.s32 %v353, 8
  %v458 = vadd.s32 %v353, 16
  %v459 = vadd.s32 %v353, 24
  %v460 = vadd.s32 %v353, 32
  %v461 = vadd.s32 %v353, 40
  %v462 = vadd.s32 %v353, 48
  %v463 = vadd.s32 %v353, 56
  %v464 = vadd.s32 %v353, 64
  %v465 = vadd.s32 %v353, 72
  %v466 = vadd.s32 %v353, 80
  %v467 = vadd.s32 %v353, 88
  %v468 = vadd.s32 %v353, 96
  %v469 = vadd.s32 %v353, 104
  %v470 = vadd.s32 %v353, 112
  %v471 = vadd.s32 %v353, 120
  %v472 = vadd.s32 %v353, 128
  %v473 = vadd.s32 %v353, 136
  %v474 = vadd.s32 %v353, 144
  %v475 = vadd.s32 %v353, 152
  %v476 = vadd.s32 %v353, 160
  %v477 = vadd.s32 %v353, 168
  %v478 = vadd.s32 %v353, 176
  %v479 = vadd.s32 %v353, 184
  %v480 = vadd.s32 %v353, 192
  %v481 = vadd.s32 %v353, 200
  %v482 = vadd.s32 %v353, 208
  %v483 = vadd.s32 %v353, 216
  %v484 = vadd.s32 %v353, 224
  %v485 = vadd.s32 %v353, 232
  %v486 = vadd.s32 %v353, 240
  %v487 = vadd.s32 %v353, 248
  %v488 = vadd.s32 %v353, 256
  %v489 = vadd.s32 %v353, 264
  %v490 = vadd.s32 %v353, 272
  %v491 = vadd.s32 %v353, 280
  %v492 = vadd.s32 %v353, 288
  %v493 = vadd.s32 %v353, 296
  %v494 = vadd.s32 %v353, 304
  %v495 = vadd.s32 %v353, 312
  %v496 = vadd.s32 %v353, 320
  %v497 = vadd.s32 %v353, 328
  %v498 = vadd.s32 %v353, 336
  %v499 = vadd.s32 %v353, 344
  %v500 = vadd.s32 %v353, 352
  %v501 = vadd.s32 %v353, 360
  %v502 = vadd.s32 %v353, 368
  %v503 = vadd.s32 %v353, 376
  %v504 = vadd.s32 %v353, 384
  %v505 = vadd.s32 %v353, 392
  %v506 = vadd.s32 %v353, 400
  %v507 = vadd.s32 %v353, 408
  %v508 = vadd.s32 %v353, 416
  %v509 = vadd.s32 %v353, 424
  %v510 = vadd.s32 %v353, 432
  %v511 = vadd.s32 %v353, 440
  %v512 = vadd.s32 %v353, 448
  %v513 = vadd.s32 %v353, 456
  %v514 = vadd.s32 %v353, 464
  %v515 = vadd.s32 %v353, 472
  %v516 = vadd.s32 %v353, 480
  %v517 = vadd.s32 %v353, 488
  %v518 = vadd.s32 %v353, 496
  %v519 = vadd.s32 %v353, 504
  %v520 = vand.u32 %v353, 15
  %v521 = vand.u32 %v457, 15
  %v522 = vand.u32 %v458, 15
  %v523 = vand.u32 %v459, 15
  %v524 = vand.u32 %v460, 15
  %v525 = vand.u32 %v461, 15
  %v526 = vand.u32 %v462, 15
  %v527 = vand.u32 %v463, 15
  %v528 = vand.u32 %v464, 15
  %v529 = vand.u32 %v465, 15
  %v530 = vand.u32 %v466, 15
  %v531 = vand.u32 %v467, 15
  %v532 = vand.u32 %v468, 15
  %v533 = vand.u32 %v469, 15
  %v534 = vand.u32 %v470, 15
  %v535 = vand.u32 %v471, 15
  %v536 = vand.u32 %v472, 15
  %v537 = vand.u32 %v473, 15
  %v538 = vand.u32 %v474, 15
  %v539 = vand.u32 %v475, 15
  %v540 = vand.u32 %v476, 15
  %v541 = vand.u32 %v477, 15
  %v542 = vand.u32 %v478, 15
  %v543 = vand.u32 %v479, 15
  %v544 = vand.u32 %v480, 15
  %v545 = vand.u32 %v481, 15
  %v546 = vand.u32 %v482, 15
  %v547 = vand.u32 %v483, 15
  %v548 = vand.u32 %v484, 15
  %v549 = vand.u32 %v485, 15
  %v550 = vand.u32 %v486, 15
  %v551 = vand.u32 %v487, 15
  %v552 = vand.u32 %v488, 15
  %v553 = vand.u32 %v489, 15
  %v554 = vand.u32 %v490, 15
  %v555 = vand.u32 %v491, 15
  %v556 = vand.u32 %v492, 15
  %v557 = vand.u32 %v493, 15
  %v558 = vand.u32 %v494, 15
  %v559 = vand.u32 %v495, 15
  %v560 = vand.u32 %v496, 15
  %v561 = vand.u32 %v497, 15
  %v562 = vand.u32 %v498, 15
  %v563 = vand.u32 %v499, 15
  %v564 = vand.u32 %v500, 15
  %v565 = vand.u32 %v501, 15
  %v566 = vand.u32 %v502, 15
  %v567 = vand.u32 %v503, 15
  %v568 = vand.u32 %v504, 15
  %v569 = vand.u32 %v505, 15
  %v570 = vand.u32 %v506, 15
  %v571 = vand.u32 %v507, 15
  %v572 = vand.u32 %v508, 15
  %v573 = vand.u32 %v509, 15
  %v574 = vand.u32 %v510, 15
  %v575 = vand.u32 %v511, 15
  %v576 = vand.u32 %v512, 15
  %v577 = vand.u32 %v513, 15
  %v578 = vand.u32 %v514, 15
  %v579 = vand.u32 %v515, 15
  %v580 = vand.u32 %v516, 15
  %v581 = vand.u32 %v517, 15
  %v582 = vand.u32 %v518, 15
  %v583 = vand.u32 %v519, 15
  %v584 = vshra.s32 %v353, 4
  %v585 = vshra.s32 %v457, 4
  %v586 = vshra.s32 %v458, 4
  %v587 = vshra.s32 %v459, 4
  %v588 = vshra.s32 %v460, 4
  %v589 = vshra.s32 %v461, 4
  %v590 = vshra.s32 %v462, 4
  %v591 = vshra.s32 %v463, 4
  %v592 = vshra.s32 %v464, 4
  %v593 = vshra.s32 %v465, 4
  %v594 = vshra.s32 %v466, 4
  %v595 = vshra.s32 %v467, 4
  %v596 = vshra.s32 %v468, 4
  %v597 = vshra.s32 %v469, 4
  %v598 = vshra.s32 %v470, 4
  %v599 = vshra.s32 %v471, 4
  %v600 = vshra.s32 %v472, 4
  %v601 = vshra.s32 %v473, 4
  %v602 = vshra.s32 %v474, 4
  %v603 = vshra.s32 %v475, 4
  %v604 = vshra.s32 %v476, 4
  %v605 = vshra.s32 %v477, 4
  %v606 = vshra.s32 %v478, 4
  %v607 = vshra.s32 %v479, 4
  %v608 = vshra.s32 %v480, 4
  %v609 = vshra.s32 %v481, 4
  %v610 = vshra.s32 %v482, 4
  %v611 = vshra.s32 %v483, 4
  %v612 = vshra.s32 %v484, 4
  %v613 = vshra.s32 %v485, 4
  %v614 = vshra.s32 %v486, 4
  %v615 = vshra.s32 %v487, 4
  %v616 = vshra.s32 %v488, 4
  %v617 = vshra.s32 %v489, 4
  %v618 = vshra.s32 %v490, 4
  %v619 = vshra.s32 %v491, 4
  %v620 = vshra.s32 %v492, 4
  %v621 = vshra.s32 %v493, 4
  %v622 = vshra.s32 %v494, 4
  %v623 = vshra.s32 %v495, 4
  %v624 = vshra.s32 %v496, 4
  %v625 = vshra.s32 %v497, 4
  %v626 = vshra.s32 %v498, 4
  %v627 = vshra.s32 %v499, 4
  %v628 = vshra.s32 %v500, 4
  %v629 = vshra.s32 %v501, 4
  %v630 = vshra.s32 %v502, 4
  %v631 = vshra.s32 %v503, 4
  %v632 = vshra.s32 %v504, 4
  %v633 = vshra.s32 %v505, 4
  %v634 = vshra.s32 %v506, 4
  %v635 = vshra.s32 %v507, 4
  %v636 = vshra.s32 %v508, 4
  %v637 = vshra.s32 %v509, 4
  %v638 = vshra.s32 %v510, 4
  %v639 = vshra.s32 %v511, 4
  %v640 = vshra.s32 %v512, 4
  %v641 = vshra.s32 %v513, 4
  %v642 = vshra.s32 %v514, 4
  %v643 = vshra.s32 %v515, 4
  %v644 = vshra.s32 %v516, 4
  %v645 = vshra.s32 %v517, 4
  %v646 = vshra.s32 %v518, 4
  %v647 = vshra.s32 %v519, 4
  %v648 = vand.u32 %v584, 15
  %v649 = vand.u32 %v585, 15
  %v650 = vand.u32 %v586, 15
  %v651 = vand.u32 %v587, 15
  %v652 = vand.u32 %v588, 15
  %v653 = vand.u32 %v589, 15
  %v654 = vand.u32 %v590, 15
  %v655 = vand.u32 %v591, 15
  %v656 = vand.u32 %v592, 15
  %v657 = vand.u32 %v593, 15
  %v658 = vand.u32 %v594, 15
  %v659 = vand.u32 %v595, 15
  %v660 = vand.u32 %v596, 15
  %v661 = vand.u32 %v597, 15
  %v662 = vand.u32 %v598, 15
  %v663 = vand.u32 %v599, 15
  %v664 = vand.u32 %v600, 15
  %v665 = vand.u32 %v601, 15
  %v666 = vand.u32 %v602, 15
  %v667 = vand.u32 %v603, 15
  %v668 = vand.u32 %v604, 15
  %v669 = vand.u32 %v605, 15
  %v670 = vand.u32 %v606, 15
  %v671 = vand.u32 %v607, 15
  %v672 = vand.u32 %v608, 15
  %v673 = vand.u32 %v609, 15
  %v674 = vand.u32 %v610, 15
  %v675 = vand.u32 %v611, 15
  %v676 = vand.u32 %v612, 15
  %v677 = vand.u32 %v613, 15
  %v678 = vand.u32 %v614, 15
  %v679 = vand.u32 %v615, 15
  %v680 = vand.u32 %v616, 15
  %v681 = vand.u32 %v617, 15
  %v682 = vand.u32 %v618, 15
  %v683 = vand.u32 %v619, 15
  %v684 = vand.u32 %v620, 15
  %v685 = vand.u32 %v621, 15
  %v686 = vand.u32 %v622, 15
  %v687 = vand.u32 %v623, 15
  %v688 = vand.u32 %v624, 15
  %v689 = vand.u32 %v625, 15
  %v690 = vand.u32 %v626, 15
  %v691 = vand.u32 %v627, 15
  %v692 = vand.u32 %v628, 15
  %v693 = vand.u32 %v629, 15
  %v694 = vand.u32 %v630, 15
  %v695 = vand.u32 %v631, 15
  %v696 = vand.u32 %v632, 15
  %v697 = vand.u32 %v633, 15
  %v698 = vand.u32 %v634, 15
  %v699 = vand.u32 %v635, 15
  %v700 = vand.u32 %v636, 15
  %v701 = vand.u32 %v637, 15
  %v702 = vand.u32 %v638, 15
  %v703 = vand.u32 %v639, 15
  %v704 = vand.u32 %v640, 15
  %v705 = vand.u32 %v641, 15
  %v706 = vand.u32 %v642, 15
  %v707 = vand.u32 %v643, 15
  %v708 = vand.u32 %v644, 15
  %v709 = vand.u32 %v645, 15
  %v710 = vand.u32 %v646, 15
  %v711 = vand.u32 %v647, 15
  %v712 = vshra.s32 %v353, 8
  %v713 = vshra.s32 %v457, 8
  %v714 = vshra.s32 %v458, 8
  %v715 = vshra.s32 %v459, 8
  %v716 = vshra.s32 %v460, 8
  %v717 = vshra.s32 %v461, 8
  %v718 = vshra.s32 %v462, 8
  %v719 = vshra.s32 %v463, 8
  %v720 = vshra.s32 %v464, 8
  %v721 = vshra.s32 %v465, 8
  %v722 = vshra.s32 %v466, 8
  %v723 = vshra.s32 %v467, 8
  %v724 = vshra.s32 %v468, 8
  %v725 = vshra.s32 %v469, 8
  %v726 = vshra.s32 %v470, 8
  %v727 = vshra.s32 %v471, 8
  %v728 = vshra.s32 %v472, 8
  %v729 = vshra.s32 %v473, 8
  %v730 = vshra.s32 %v474, 8
  %v731 = vshra.s32 %v475, 8
  %v732 = vshra.s32 %v476, 8
  %v733 = vshra.s32 %v477, 8
  %v734 = vshra.s32 %v478, 8
  %v735 = vshra.s32 %v479, 8
  %v736 = vshra.s32 %v480, 8
  %v737 = vshra.s32 %v481, 8
  %v738 = vshra.s32 %v482, 8
  %v739 = vshra.s32 %v483, 8
  %v740 = vshra.s32 %v484, 8
  %v741 = vshra.s32 %v485, 8
  %v742 = vshra.s32 %v486, 8
  %v743 = vshra.s32 %v487, 8
  %v744 = vshra.s32 %v488, 8
  %v745 = vshra.s32 %v489, 8
  %v746 = vshra.s32 %v490, 8
  %v747 = vshra.s32 %v491, 8
  %v748 = vshra.s32 %v492, 8
  %v749 = vshra.s32 %v493, 8
  %v750 = vshra.s32 %v494, 8
  %v751 = vshra.s32 %v495, 8
  %v752 = vshra.s32 %v496, 8
  %v753 = vshra.s32 %v497, 8
  %v754 = vshra.s32 %v498, 8
  %v755 = vshra.s32 %v499, 8
  %v756 = vshra.s32 %v500, 8
  %v757 = vshra.s32 %v501, 8
  %v758 = vshra.s32 %v502, 8
  %v759 = vshra.s32 %v503, 8
  %v760 = vshra.s32 %v504, 8
  %v761 = vshra.s32 %v505, 8
  %v762 = vshra.s32 %v506, 8
  %v763 = vshra.s32 %v507, 8
  %v764 = vshra.s32 %v508, 8
  %v765 = vshra.s32 %v509, 8
  %v766 = vshra.s32 %v510, 8
  %v767 = vshra.s32 %v511, 8
  %v768 = vshra.s32 %v512, 8
  %v769 = vshra.s32 %v513, 8
  %v770 = vshra.s32 %v514, 8
  %v771 = vshra.s32 %v515, 8
  %v772 = vshra.s32 %v516, 8
  %v773 = vshra.s32 %v517, 8
  %v774 = vshra.s32 %v518, 8
  %v775 = vshra.s32 %v519, 8
  %v776 = vmul.u32 %v712, 8
  %v777 = vmul.u32 %v713, 8
  %v778 = vmul.u32 %v714, 8
  %v779 = vmul.u32 %v715, 8
  %v780 = vmul.u32 %v716, 8
  %v781 = vmul.u32 %v717, 8
  %v782 = vmul.u32 %v718, 8
  %v783 = vmul.u32 %v719, 8
  %v784 = vmul.u32 %v720, 8
  %v785 = vmul.u32 %v721, 8
  %v786 = vmul.u32 %v722, 8
  %v787 = vmul.u32 %v723, 8
  %v788 = vmul.u32 %v724, 8
  %v789 = vmul.u32 %v725, 8
  %v790 = vmul.u32 %v726, 8
  %v791 = vmul.u32 %v727, 8
  %v792 = vmul.u32 %v728, 8
  %v793 = vmul.u32 %v729, 8
  %v794 = vmul.u32 %v730, 8
  %v795 = vmul.u32 %v731, 8
  %v796 = vmul.u32 %v732, 8
  %v797 = vmul.u32 %v733, 8
  %v798 = vmul.u32 %v734, 8
  %v799 = vmul.u32 %v735, 8
  %v800 = vmul.u32 %v736, 8
  %v801 = vmul.u32 %v737, 8
  %v802 = vmul.u32 %v738, 8
  %v803 = vmul.u32 %v739, 8
  %v804 = vmul.u32 %v740, 8
  %v805 = vmul.u32 %v741, 8
  %v806 = vmul.u32 %v742, 8
  %v807 = vmul.u32 %v743, 8
  %v808 = vmul.u32 %v744, 8
  %v809 = vmul.u32 %v745, 8
  %v810 = vmul.u32 %v746, 8
  %v811 = vmul.u32 %v747, 8
  %v812 = vmul.u32 %v748, 8
  %v813 = vmul.u32 %v749, 8
  %v814 = vmul.u32 %v750, 8
  %v815 = vmul.u32 %v751, 8
  %v816 = vmul.u32 %v752, 8
  %v817 = vmul.u32 %v753, 8
  %v818 = vmul.u32 %v754, 8
  %v819 = vmul.u32 %v755, 8
  %v820 = vmul.u32 %v756, 8
  %v821 = vmul.u32 %v757, 8
  %v822 = vmul.u32 %v758, 8
  %v823 = vmul.u32 %v759, 8
  %v824 = vmul.u32 %v760, 8
  %v825 = vmul.u32 %v761, 8
  %v826 = vmul.u32 %v762, 8
  %v827 = vmul.u32 %v763, 8
  %v828 = vmul.u32 %v764, 8
  %v829 = vmul.u32 %v765, 8
  %v830 = vmul.u32 %v766, 8
  %v831 = vmul.u32 %v767, 8
  %v832 = vmul.u32 %v768, 8
  %v833 = vmul.u32 %v769, 8
  %v834 = vmul.u32 %v770, 8
  %v835 = vmul.u32 %v771, 8
  %v836 = vmul.u32 %v772, 8
  %v837 = vmul.u32 %v773, 8
  %v838 = vmul.u32 %v774, 8
  %v839 = vmul.u32 %v775, 8
  %v840 = vshra.s32 %v648, 1
  %v841 = vshra.s32 %v649, 1
  %v842 = vshra.s32 %v650, 1
  %v843 = vshra.s32 %v651, 1
  %v844 = vshra.s32 %v652, 1
  %v845 = vshra.s32 %v653, 1
  %v846 = vshra.s32 %v654, 1
  %v847 = vshra.s32 %v655, 1
  %v848 = vshra.s32 %v656, 1
  %v849 = vshra.s32 %v657, 1
  %v850 = vshra.s32 %v658, 1
  %v851 = vshra.s32 %v659, 1
  %v852 = vshra.s32 %v660, 1
  %v853 = vshra.s32 %v661, 1
  %v854 = vshra.s32 %v662, 1
  %v855 = vshra.s32 %v663, 1
  %v856 = vshra.s32 %v664, 1
  %v857 = vshra.s32 %v665, 1
  %v858 = vshra.s32 %v666, 1
  %v859 = vshra.s32 %v667, 1
  %v860 = vshra.s32 %v668, 1
  %v861 = vshra.s32 %v669, 1
  %v862 = vshra.s32 %v670, 1
  %v863 = vshra.s32 %v671, 1
  %v864 = vshra.s32 %v672, 1
  %v865 = vshra.s32 %v673, 1
  %v866 = vshra.s32 %v674, 1
  %v867 = vshra.s32 %v675, 1
  %v868 = vshra.s32 %v676, 1
  %v869 = vshra.s32 %v677, 1
  %v870 = vshra.s32 %v678, 1
  %v871 = vshra.s32 %v679, 1
  %v872 = vshra.s32 %v680, 1
  %v873 = vshra.s32 %v681, 1
  %v874 = vshra.s32 %v682, 1
  %v875 = vshra.s32 %v683, 1
  %v876 = vshra.s32 %v684, 1
  %v877 = vshra.s32 %v685, 1
  %v878 = vshra.s32 %v686, 1
  %v879 = vshra.s32 %v687, 1
  %v880 = vshra.s32 %v688, 1
  %v881 = vshra.s32 %v689, 1
  %v882 = vshra.s32 %v690, 1
  %v883 = vshra.s32 %v691, 1
  %v884 = vshra.s32 %v692, 1
  %v885 = vshra.s32 %v693, 1
  %v886 = vshra.s32 %v694, 1
  %v887 = vshra.s32 %v695, 1
  %v888 = vshra.s32 %v696, 1
  %v889 = vshra.s32 %v697, 1
  %v890 = vshra.s32 %v698, 1
  %v891 = vshra.s32 %v699, 1
  %v892 = vshra.s32 %v700, 1
  %v893 = vshra.s32 %v701, 1
  %v894 = vshra.s32 %v702, 1
  %v895 = vshra.s32 %v703, 1
  %v896 = vshra.s32 %v704, 1
  %v897 = vshra.s32 %v705, 1
  %v898 = vshra.s32 %v706, 1
  %v899 = vshra.s32 %v707, 1
  %v900 = vshra.s32 %v708, 1
  %v901 = vshra.s32 %v709, 1
  %v902 = vshra.s32 %v710, 1
  %v903 = vshra.s32 %v711, 1
  %v904 = vadd.s32 %v776, %v840
  %v905 = vadd.s32 %v777, %v841
  %v906 = vadd.s32 %v778, %v842
  %v907 = vadd.s32 %v779, %v843
  %v908 = vadd.s32 %v780, %v844
  %v909 = vadd.s32 %v781, %v845
  %v910 = vadd.s32 %v782, %v846
  %v911 = vadd.s32 %v783, %v847
  %v912 = vadd.s32 %v784, %v848
  %v913 = vadd.s32 %v785, %v849
  %v914 = vadd.s32 %v786, %v850
  %v915 = vadd.s32 %v787, %v851
  %v916 = vadd.s32 %v788, %v852
  %v917 = vadd.s32 %v789, %v853
  %v918 = vadd.s32 %v790, %v854
  %v919 = vadd.s32 %v791, %v855
  %v920 = vadd.s32 %v792, %v856
  %v921 = vadd.s32 %v793, %v857
  %v922 = vadd.s32 %v794, %v858
  %v923 = vadd.s32 %v795, %v859
  %v924 = vadd.s32 %v796, %v860
  %v925 = vadd.s32 %v797, %v861
  %v926 = vadd.s32 %v798, %v862
  %v927 = vadd.s32 %v799, %v863
  %v928 = vadd.s32 %v800, %v864
  %v929 = vadd.s32 %v801, %v865
  %v930 = vadd.s32 %v802, %v866
  %v931 = vadd.s32 %v803, %v867
  %v932 = vadd.s32 %v804, %v868
  %v933 = vadd.s32 %v805, %v869
  %v934 = vadd.s32 %v806, %v870
  %v935 = vadd.s32 %v807, %v871
  %v936 = vadd.s32 %v808, %v872
  %v937 = vadd.s32 %v809, %v873
  %v938 = vadd.s32 %v810, %v874
  %v939 = vadd.s32 %v811, %v875
  %v940 = vadd.s32 %v812, %v876
  %v941 = vadd.s32 %v813, %v877
  %v942 = vadd.s32 %v814, %v878
  %v943 = vadd.s32 %v815, %v879
  %v944 = vadd.s32 %v816, %v880
  %v945 = vadd.s32 %v817, %v881
  %v946 = vadd.s32 %v818, %v882
  %v947 = vadd.s32 %v819, %v883
  %v948 = vadd.s32 %v820, %v884
  %v949 = vadd.s32 %v821, %v885
  %v950 = vadd.s32 %v822, %v886
  %v951 = vadd.s32 %v823, %v887
  %v952 = vadd.s32 %v824, %v888
  %v953 = vadd.s32 %v825, %v889
  %v954 = vadd.s32 %v826, %v890
  %v955 = vadd.s32 %v827, %v891
  %v956 = vadd.s32 %v828, %v892
  %v957 = vadd.s32 %v829, %v893
  %v958 = vadd.s32 %v830, %v894
  %v959 = vadd.s32 %v831, %v895
  %v960 = vadd.s32 %v832, %v896
  %v961 = vadd.s32 %v833, %v897
  %v962 = vadd.s32 %v834, %v898
  %v963 = vadd.s32 %v835, %v899
  %v964 = vadd.s32 %v836, %v900
  %v965 = vadd.s32 %v837, %v901
  %v966 = vadd.s32 %v838, %v902
  %v967 = vadd.s32 %v839, %v903
  %v968 = vmul.u32 %v904, 8
  %v969 = vmul.u32 %v905, 8
  %v970 = vmul.u32 %v906, 8
  %v971 = vmul.u32 %v907, 8
  %v972 = vmul.u32 %v908, 8
  %v973 = vmul.u32 %v909, 8
  %v974 = vmul.u32 %v910, 8
  %v975 = vmul.u32 %v911, 8
  %v976 = vmul.u32 %v912, 8
  %v977 = vmul.u32 %v913, 8
  %v978 = vmul.u32 %v914, 8
  %v979 = vmul.u32 %v915, 8
  %v980 = vmul.u32 %v916, 8
  %v981 = vmul.u32 %v917, 8
  %v982 = vmul.u32 %v918, 8
  %v983 = vmul.u32 %v919, 8
  %v984 = vmul.u32 %v920, 8
  %v985 = vmul.u32 %v921, 8
  %v986 = vmul.u32 %v922, 8
  %v987 = vmul.u32 %v923, 8
  %v988 = vmul.u32 %v924, 8
  %v989 = vmul.u32 %v925, 8
  %v990 = vmul.u32 %v926, 8
  %v991 = vmul.u32 %v927, 8
  %v992 = vmul.u32 %v928, 8
  %v993 = vmul.u32 %v929, 8
  %v994 = vmul.u32 %v930, 8
  %v995 = vmul.u32 %v931, 8
  %v996 = vmul.u32 %v932, 8
  %v997 = vmul.u32 %v933, 8
  %v998 = vmul.u32 %v934, 8
  %v999 = vmul.u32 %v935, 8
  %v1000 = vmul.u32 %v936, 8
  %v1001 = vmul.u32 %v937, 8
  %v1002 = vmul.u32 %v938, 8
  %v1003 = vmul.u32 %v939, 8
  %v1004 = vmul.u32 %v940, 8
  %v1005 = vmul.u32 %v941, 8
  %v1006 = vmul.u32 %v942, 8
  %v1007 = vmul.u32 %v943, 8
  %v1008 = vmul.u32 %v944, 8
  %v1009 = vmul.u32 %v945, 8
  %v1010 = vmul.u32 %v946, 8
  %v1011 = vmul.u32 %v947, 8
  %v1012 = vmul.u32 %v948, 8
  %v1013 = vmul.u32 %v949, 8
  %v1014 = vmul.u32 %v950, 8
  %v1015 = vmul.u32 %v951, 8
  %v1016 = vmul.u32 %v952, 8
  %v1017 = vmul.u32 %v953, 8
  %v1018 = vmul.u32 %v954, 8
  %v1019 = vmul.u32 %v955, 8
  %v1020 = vmul.u32 %v956, 8
  %v1021 = vmul.u32 %v957, 8
  %v1022 = vmul.u32 %v958, 8
  %v1023 = vmul.u32 %v959, 8
  %v1024 = vmul.u32 %v960, 8
  %v1025 = vmul.u32 %v961, 8
  %v1026 = vmul.u32 %v962, 8
  %v1027 = vmul.u32 %v963, 8
  %v1028 = vmul.u32 %v964, 8
  %v1029 = vmul.u32 %v965, 8
  %v1030 = vmul.u32 %v966, 8
  %v1031 = vmul.u32 %v967, 8
  %v1032 = vshra.s32 %v520, 1
  %v1033 = vshra.s32 %v521, 1
  %v1034 = vshra.s32 %v522, 1
  %v1035 = vshra.s32 %v523, 1
  %v1036 = vshra.s32 %v524, 1
  %v1037 = vshra.s32 %v525, 1
  %v1038 = vshra.s32 %v526, 1
  %v1039 = vshra.s32 %v527, 1
  %v1040 = vshra.s32 %v528, 1
  %v1041 = vshra.s32 %v529, 1
  %v1042 = vshra.s32 %v530, 1
  %v1043 = vshra.s32 %v531, 1
  %v1044 = vshra.s32 %v532, 1
  %v1045 = vshra.s32 %v533, 1
  %v1046 = vshra.s32 %v534, 1
  %v1047 = vshra.s32 %v535, 1
  %v1048 = vshra.s32 %v536, 1
  %v1049 = vshra.s32 %v537, 1
  %v1050 = vshra.s32 %v538, 1
  %v1051 = vshra.s32 %v539, 1
  %v1052 = vshra.s32 %v540, 1
  %v1053 = vshra.s32 %v541, 1
  %v1054 = vshra.s32 %v542, 1
  %v1055 = vshra.s32 %v543, 1
  %v1056 = vshra.s32 %v544, 1
  %v1057 = vshra.s32 %v545, 1
  %v1058 = vshra.s32 %v546, 1
  %v1059 = vshra.s32 %v547, 1
  %v1060 = vshra.s32 %v548, 1
  %v1061 = vshra.s32 %v549, 1
  %v1062 = vshra.s32 %v550, 1
  %v1063 = vshra.s32 %v551, 1
  %v1064 = vshra.s32 %v552, 1
  %v1065 = vshra.s32 %v553, 1
  %v1066 = vshra.s32 %v554, 1
  %v1067 = vshra.s32 %v555, 1
  %v1068 = vshra.s32 %v556, 1
  %v1069 = vshra.s32 %v557, 1
  %v1070 = vshra.s32 %v558, 1
  %v1071 = vshra.s32 %v559, 1
  %v1072 = vshra.s32 %v560, 1
  %v1073 = vshra.s32 %v561, 1
  %v1074 = vshra.s32 %v562, 1
  %v1075 = vshra.s32 %v563, 1
  %v1076 = vshra.s32 %v564, 1
  %v1077 = vshra.s32 %v565, 1
  %v1078 = vshra.s32 %v566, 1
  %v1079 = vshra.s32 %v567, 1
  %v1080 = vshra.s32 %v568, 1
  %v1081 = vshra.s32 %v569, 1
  %v1082 = vshra.s32 %v570, 1
  %v1083 = vshra.s32 %v571, 1
  %v1084 = vshra.s32 %v572, 1
  %v1085 = vshra.s32 %v573, 1
  %v1086 = vshra.s32 %v574, 1
  %v1087 = vshra.s32 %v575, 1
  %v1088 = vshra.s32 %v576, 1
  %v1089 = vshra.s32 %v577, 1
  %v1090 = vshra.s32 %v578, 1
  %v1091 = vshra.s32 %v579, 1
  %v1092 = vshra.s32 %v580, 1
  %v1093 = vshra.s32 %v581, 1
  %v1094 = vshra.s32 %v582, 1
  %v1095 = vshra.s32 %v583, 1
  %v1096 = vadd.s32 %v968, %v1032
  %v1097 = vadd.s32 %v969, %v1033
  %v1098 = vadd.s32 %v970, %v1034
  %v1099 = vadd.s32 %v971, %v1035
  %v1100 = vadd.s32 %v972, %v1036
  %v1101 = vadd.s32 %v973, %v1037
  %v1102 = vadd.s32 %v974, %v1038
  %v1103 = vadd.s32 %v975, %v1039
  %v1104 = vadd.s32 %v976, %v1040
  %v1105 = vadd.s32 %v977, %v1041
  %v1106 = vadd.s32 %v978, %v1042
  %v1107 = vadd.s32 %v979, %v1043
  %v1108 = vadd.s32 %v980, %v1044
  %v1109 = vadd.s32 %v981, %v1045
  %v1110 = vadd.s32 %v982, %v1046
  %v1111 = vadd.s32 %v983, %v1047
  %v1112 = vadd.s32 %v984, %v1048
  %v1113 = vadd.s32 %v985, %v1049
  %v1114 = vadd.s32 %v986, %v1050
  %v1115 = vadd.s32 %v987, %v1051
  %v1116 = vadd.s32 %v988, %v1052
  %v1117 = vadd.s32 %v989, %v1053
  %v1118 = vadd.s32 %v990, %v1054
  %v1119 = vadd.s32 %v991, %v1055
  %v1120 = vadd.s32 %v992, %v1056
  %v1121 = vadd.s32 %v993, %v1057
  %v1122 = vadd.s32 %v994, %v1058
  %v1123 = vadd.s32 %v995, %v1059
  %v1124 = vadd.s32 %v996, %v1060
  %v1125 = vadd.s32 %v997, %v1061
  %v1126 = vadd.s32 %v998, %v1062
  %v1127 = vadd.s32 %v999, %v1063
  %v1128 = vadd.s32 %v1000, %v1064
  %v1129 = vadd.s32 %v1001, %v1065
  %v1130 = vadd.s32 %v1002, %v1066
  %v1131 = vadd.s32 %v1003, %v1067
  %v1132 = vadd.s32 %v1004, %v1068
  %v1133 = vadd.s32 %v1005, %v1069
  %v1134 = vadd.s32 %v1006, %v1070
  %v1135 = vadd.s32 %v1007, %v1071
  %v1136 = vadd.s32 %v1008, %v1072
  %v1137 = vadd.s32 %v1009, %v1073
  %v1138 = vadd.s32 %v1010, %v1074
  %v1139 = vadd.s32 %v1011, %v1075
  %v1140 = vadd.s32 %v1012, %v1076
  %v1141 = vadd.s32 %v1013, %v1077
  %v1142 = vadd.s32 %v1014, %v1078
  %v1143 = vadd.s32 %v1015, %v1079
  %v1144 = vadd.s32 %v1016, %v1080
  %v1145 = vadd.s32 %v1017, %v1081
  %v1146 = vadd.s32 %v1018, %v1082
  %v1147 = vadd.s32 %v1019, %v1083
  %v1148 = vadd.s32 %v1020, %v1084
  %v1149 = vadd.s32 %v1021, %v1085
  %v1150 = vadd.s32 %v1022, %v1086
  %v1151 = vadd.s32 %v1023, %v1087
  %v1152 = vadd.s32 %v1024, %v1088
  %v1153 = vadd.s32 %v1025, %v1089
  %v1154 = vadd.s32 %v1026, %v1090
  %v1155 = vadd.s32 %v1027, %v1091
  %v1156 = vadd.s32 %v1028, %v1092
  %v1157 = vadd.s32 %v1029, %v1093
  %v1158 = vadd.s32 %v1030, %v1094
  %v1159 = vadd.s32 %v1031, %v1095
  %vm1160 = vcmp.eq.s32.totalorder %v236, %v1096
  %vm1161 = vcmp.eq.s32.totalorder %v236, %v1097
  %vm1162 = vcmp.eq.s32.totalorder %v236, %v1098
  %vm1163 = vcmp.eq.s32.totalorder %v236, %v1099
  %vm1164 = vcmp.eq.s32.totalorder %v236, %v1100
  %vm1165 = vcmp.eq.s32.totalorder %v236, %v1101
  %vm1166 = vcmp.eq.s32.totalorder %v236, %v1102
  %vm1167 = vcmp.eq.s32.totalorder %v236, %v1103
  %vm1168 = vcmp.eq.s32.totalorder %v236, %v1104
  %vm1169 = vcmp.eq.s32.totalorder %v236, %v1105
  %vm1170 = vcmp.eq.s32.totalorder %v236, %v1106
  %vm1171 = vcmp.eq.s32.totalorder %v236, %v1107
  %vm1172 = vcmp.eq.s32.totalorder %v236, %v1108
  %vm1173 = vcmp.eq.s32.totalorder %v236, %v1109
  %vm1174 = vcmp.eq.s32.totalorder %v236, %v1110
  %vm1175 = vcmp.eq.s32.totalorder %v236, %v1111
  %vm1176 = vcmp.eq.s32.totalorder %v236, %v1112
  %vm1177 = vcmp.eq.s32.totalorder %v236, %v1113
  %vm1178 = vcmp.eq.s32.totalorder %v236, %v1114
  %vm1179 = vcmp.eq.s32.totalorder %v236, %v1115
  %vm1180 = vcmp.eq.s32.totalorder %v236, %v1116
  %vm1181 = vcmp.eq.s32.totalorder %v236, %v1117
  %vm1182 = vcmp.eq.s32.totalorder %v236, %v1118
  %vm1183 = vcmp.eq.s32.totalorder %v236, %v1119
  %vm1184 = vcmp.eq.s32.totalorder %v236, %v1120
  %vm1185 = vcmp.eq.s32.totalorder %v236, %v1121
  %vm1186 = vcmp.eq.s32.totalorder %v236, %v1122
  %vm1187 = vcmp.eq.s32.totalorder %v236, %v1123
  %vm1188 = vcmp.eq.s32.totalorder %v236, %v1124
  %vm1189 = vcmp.eq.s32.totalorder %v236, %v1125
  %vm1190 = vcmp.eq.s32.totalorder %v236, %v1126
  %vm1191 = vcmp.eq.s32.totalorder %v236, %v1127
  %vm1192 = vcmp.eq.s32.totalorder %v236, %v1128
  %vm1193 = vcmp.eq.s32.totalorder %v236, %v1129
  %vm1194 = vcmp.eq.s32.totalorder %v236, %v1130
  %vm1195 = vcmp.eq.s32.totalorder %v236, %v1131
  %vm1196 = vcmp.eq.s32.totalorder %v236, %v1132
  %vm1197 = vcmp.eq.s32.totalorder %v236, %v1133
  %vm1198 = vcmp.eq.s32.totalorder %v236, %v1134
  %vm1199 = vcmp.eq.s32.totalorder %v236, %v1135
  %vm1200 = vcmp.eq.s32.totalorder %v236, %v1136
  %vm1201 = vcmp.eq.s32.totalorder %v236, %v1137
  %vm1202 = vcmp.eq.s32.totalorder %v236, %v1138
  %vm1203 = vcmp.eq.s32.totalorder %v236, %v1139
  %vm1204 = vcmp.eq.s32.totalorder %v236, %v1140
  %vm1205 = vcmp.eq.s32.totalorder %v236, %v1141
  %vm1206 = vcmp.eq.s32.totalorder %v236, %v1142
  %vm1207 = vcmp.eq.s32.totalorder %v236, %v1143
  %vm1208 = vcmp.eq.s32.totalorder %v236, %v1144
  %vm1209 = vcmp.eq.s32.totalorder %v236, %v1145
  %vm1210 = vcmp.eq.s32.totalorder %v236, %v1146
  %vm1211 = vcmp.eq.s32.totalorder %v236, %v1147
  %vm1212 = vcmp.eq.s32.totalorder %v236, %v1148
  %vm1213 = vcmp.eq.s32.totalorder %v236, %v1149
  %vm1214 = vcmp.eq.s32.totalorder %v236, %v1150
  %vm1215 = vcmp.eq.s32.totalorder %v236, %v1151
  %vm1216 = vcmp.eq.s32.totalorder %v236, %v1152
  %vm1217 = vcmp.eq.s32.totalorder %v236, %v1153
  %vm1218 = vcmp.eq.s32.totalorder %v236, %v1154
  %vm1219 = vcmp.eq.s32.totalorder %v236, %v1155
  %vm1220 = vcmp.eq.s32.totalorder %v236, %v1156
  %vm1221 = vcmp.eq.s32.totalorder %v236, %v1157
  %vm1222 = vcmp.eq.s32.totalorder %v236, %v1158
  %vm1223 = vcmp.eq.s32.totalorder %v236, %v1159
  %vm1224 = vcmp.lt.s32.totalorder %v353, 512
  %vm1225 = vcmp.lt.s32.totalorder %v457, 512
  %vm1226 = vcmp.lt.s32.totalorder %v458, 512
  %vm1227 = vcmp.lt.s32.totalorder %v459, 512
  %vm1228 = vcmp.lt.s32.totalorder %v460, 512
  %vm1229 = vcmp.lt.s32.totalorder %v461, 512
  %vm1230 = vcmp.lt.s32.totalorder %v462, 512
  %vm1231 = vcmp.lt.s32.totalorder %v463, 512
  %vm1232 = vcmp.lt.s32.totalorder %v464, 512
  %vm1233 = vcmp.lt.s32.totalorder %v465, 512
  %vm1234 = vcmp.lt.s32.totalorder %v466, 512
  %vm1235 = vcmp.lt.s32.totalorder %v467, 512
  %vm1236 = vcmp.lt.s32.totalorder %v468, 512
  %vm1237 = vcmp.lt.s32.totalorder %v469, 512
  %vm1238 = vcmp.lt.s32.totalorder %v470, 512
  %vm1239 = vcmp.lt.s32.totalorder %v471, 512
  %vm1240 = vcmp.lt.s32.totalorder %v472, 512
  %vm1241 = vcmp.lt.s32.totalorder %v473, 512
  %vm1242 = vcmp.lt.s32.totalorder %v474, 512
  %vm1243 = vcmp.lt.s32.totalorder %v475, 512
  %vm1244 = vcmp.lt.s32.totalorder %v476, 512
  %vm1245 = vcmp.lt.s32.totalorder %v477, 512
  %vm1246 = vcmp.lt.s32.totalorder %v478, 512
  %vm1247 = vcmp.lt.s32.totalorder %v479, 512
  %vm1248 = vcmp.lt.s32.totalorder %v480, 512
  %vm1249 = vcmp.lt.s32.totalorder %v481, 512
  %vm1250 = vcmp.lt.s32.totalorder %v482, 512
  %vm1251 = vcmp.lt.s32.totalorder %v483, 512
  %vm1252 = vcmp.lt.s32.totalorder %v484, 512
  %vm1253 = vcmp.lt.s32.totalorder %v485, 512
  %vm1254 = vcmp.lt.s32.totalorder %v486, 512
  %vm1255 = vcmp.lt.s32.totalorder %v487, 512
  %vm1256 = vcmp.lt.s32.totalorder %v488, 512
  %vm1257 = vcmp.lt.s32.totalorder %v489, 512
  %vm1258 = vcmp.lt.s32.totalorder %v490, 512
  %vm1259 = vcmp.lt.s32.totalorder %v491, 512
  %vm1260 = vcmp.lt.s32.totalorder %v492, 512
  %vm1261 = vcmp.lt.s32.totalorder %v493, 512
  %vm1262 = vcmp.lt.s32.totalorder %v494, 512
  %vm1263 = vcmp.lt.s32.totalorder %v495, 512
  %vm1264 = vcmp.lt.s32.totalorder %v496, 512
  %vm1265 = vcmp.lt.s32.totalorder %v497, 512
  %vm1266 = vcmp.lt.s32.totalorder %v498, 512
  %vm1267 = vcmp.lt.s32.totalorder %v499, 512
  %vm1268 = vcmp.lt.s32.totalorder %v500, 512
  %vm1269 = vcmp.lt.s32.totalorder %v501, 512
  %vm1270 = vcmp.lt.s32.totalorder %v502, 512
  %vm1271 = vcmp.lt.s32.totalorder %v503, 512
  %vm1272 = vcmp.lt.s32.totalorder %v504, 512
  %vm1273 = vcmp.lt.s32.totalorder %v505, 512
  %vm1274 = vcmp.lt.s32.totalorder %v506, 512
  %vm1275 = vcmp.lt.s32.totalorder %v507, 512
  %vm1276 = vcmp.lt.s32.totalorder %v508, 512
  %vm1277 = vcmp.lt.s32.totalorder %v509, 512
  %vm1278 = vcmp.lt.s32.totalorder %v510, 512
  %vm1279 = vcmp.lt.s32.totalorder %v511, 512
  %vm1280 = vcmp.lt.s32.totalorder %v512, 512
  %vm1281 = vcmp.lt.s32.totalorder %v513, 512
  %vm1282 = vcmp.lt.s32.totalorder %v514, 512
  %vm1283 = vcmp.lt.s32.totalorder %v515, 512
  %vm1284 = vcmp.lt.s32.totalorder %v516, 512
  %vm1285 = vcmp.lt.s32.totalorder %v517, 512
  %vm1286 = vcmp.lt.s32.totalorder %v518, 512
  %vm1287 = vcmp.lt.s32.totalorder %v519, 512
  %vm1288 = vmand %vm1160, %vm1224
  %vm1289 = vmand %vm1161, %vm1225
  %vm1290 = vmand %vm1162, %vm1226
  %vm1291 = vmand %vm1163, %vm1227
  %vm1292 = vmand %vm1164, %vm1228
  %vm1293 = vmand %vm1165, %vm1229
  %vm1294 = vmand %vm1166, %vm1230
  %vm1295 = vmand %vm1167, %vm1231
  %vm1296 = vmand %vm1168, %vm1232
  %vm1297 = vmand %vm1169, %vm1233
  %vm1298 = vmand %vm1170, %vm1234
  %vm1299 = vmand %vm1171, %vm1235
  %vm1300 = vmand %vm1172, %vm1236
  %vm1301 = vmand %vm1173, %vm1237
  %vm1302 = vmand %vm1174, %vm1238
  %vm1303 = vmand %vm1175, %vm1239
  %vm1304 = vmand %vm1176, %vm1240
  %vm1305 = vmand %vm1177, %vm1241
  %vm1306 = vmand %vm1178, %vm1242
  %vm1307 = vmand %vm1179, %vm1243
  %vm1308 = vmand %vm1180, %vm1244
  %vm1309 = vmand %vm1181, %vm1245
  %vm1310 = vmand %vm1182, %vm1246
  %vm1311 = vmand %vm1183, %vm1247
  %vm1312 = vmand %vm1184, %vm1248
  %vm1313 = vmand %vm1185, %vm1249
  %vm1314 = vmand %vm1186, %vm1250
  %vm1315 = vmand %vm1187, %vm1251
  %vm1316 = vmand %vm1188, %vm1252
  %vm1317 = vmand %vm1189, %vm1253
  %vm1318 = vmand %vm1190, %vm1254
  %vm1319 = vmand %vm1191, %vm1255
  %vm1320 = vmand %vm1192, %vm1256
  %vm1321 = vmand %vm1193, %vm1257
  %vm1322 = vmand %vm1194, %vm1258
  %vm1323 = vmand %vm1195, %vm1259
  %vm1324 = vmand %vm1196, %vm1260
  %vm1325 = vmand %vm1197, %vm1261
  %vm1326 = vmand %vm1198, %vm1262
  %vm1327 = vmand %vm1199, %vm1263
  %vm1328 = vmand %vm1200, %vm1264
  %vm1329 = vmand %vm1201, %vm1265
  %vm1330 = vmand %vm1202, %vm1266
  %vm1331 = vmand %vm1203, %vm1267
  %vm1332 = vmand %vm1204, %vm1268
  %vm1333 = vmand %vm1205, %vm1269
  %vm1334 = vmand %vm1206, %vm1270
  %vm1335 = vmand %vm1207, %vm1271
  %vm1336 = vmand %vm1208, %vm1272
  %vm1337 = vmand %vm1209, %vm1273
  %vm1338 = vmand %vm1210, %vm1274
  %vm1339 = vmand %vm1211, %vm1275
  %vm1340 = vmand %vm1212, %vm1276
  %vm1341 = vmand %vm1213, %vm1277
  %vm1342 = vmand %vm1214, %vm1278
  %vm1343 = vmand %vm1215, %vm1279
  %vm1344 = vmand %vm1216, %vm1280
  %vm1345 = vmand %vm1217, %vm1281
  %vm1346 = vmand %vm1218, %vm1282
  %vm1347 = vmand %vm1219, %vm1283
  %vm1348 = vmand %vm1220, %vm1284
  %vm1349 = vmand %vm1221, %vm1285
  %vm1350 = vmand %vm1222, %vm1286
  %vm1351 = vmand %vm1223, %vm1287
  %v1352 = vsel %vm1288, 0.25, 0.0
  %v1353 = vsel %vm1289, 0.25, 0.0
  %v1354 = vsel %vm1290, 0.25, 0.0
  %v1355 = vsel %vm1291, 0.25, 0.0
  %v1356 = vsel %vm1292, 0.25, 0.0
  %v1357 = vsel %vm1293, 0.25, 0.0
  %v1358 = vsel %vm1294, 0.25, 0.0
  %v1359 = vsel %vm1295, 0.25, 0.0
  %v1360 = vsel %vm1296, 0.25, 0.0
  %v1361 = vsel %vm1297, 0.25, 0.0
  %v1362 = vsel %vm1298, 0.25, 0.0
  %v1363 = vsel %vm1299, 0.25, 0.0
  %v1364 = vsel %vm1300, 0.25, 0.0
  %v1365 = vsel %vm1301, 0.25, 0.0
  %v1366 = vsel %vm1302, 0.25, 0.0
  %v1367 = vsel %vm1303, 0.25, 0.0
  %v1368 = vsel %vm1304, 0.25, 0.0
  %v1369 = vsel %vm1305, 0.25, 0.0
  %v1370 = vsel %vm1306, 0.25, 0.0
  %v1371 = vsel %vm1307, 0.25, 0.0
  %v1372 = vsel %vm1308, 0.25, 0.0
  %v1373 = vsel %vm1309, 0.25, 0.0
  %v1374 = vsel %vm1310, 0.25, 0.0
  %v1375 = vsel %vm1311, 0.25, 0.0
  %v1376 = vsel %vm1312, 0.25, 0.0
  %v1377 = vsel %vm1313, 0.25, 0.0
  %v1378 = vsel %vm1314, 0.25, 0.0
  %v1379 = vsel %vm1315, 0.25, 0.0
  %v1380 = vsel %vm1316, 0.25, 0.0
  %v1381 = vsel %vm1317, 0.25, 0.0
  %v1382 = vsel %vm1318, 0.25, 0.0
  %v1383 = vsel %vm1319, 0.25, 0.0
  %v1384 = vsel %vm1320, 0.25, 0.0
  %v1385 = vsel %vm1321, 0.25, 0.0
  %v1386 = vsel %vm1322, 0.25, 0.0
  %v1387 = vsel %vm1323, 0.25, 0.0
  %v1388 = vsel %vm1324, 0.25, 0.0
  %v1389 = vsel %vm1325, 0.25, 0.0
  %v1390 = vsel %vm1326, 0.25, 0.0
  %v1391 = vsel %vm1327, 0.25, 0.0
  %v1392 = vsel %vm1328, 0.25, 0.0
  %v1393 = vsel %vm1329, 0.25, 0.0
  %v1394 = vsel %vm1330, 0.25, 0.0
  %v1395 = vsel %vm1331, 0.25, 0.0
  %v1396 = vsel %vm1332, 0.25, 0.0
  %v1397 = vsel %vm1333, 0.25, 0.0
  %v1398 = vsel %vm1334, 0.25, 0.0
  %v1399 = vsel %vm1335, 0.25, 0.0
  %v1400 = vsel %vm1336, 0.25, 0.0
  %v1401 = vsel %vm1337, 0.25, 0.0
  %v1402 = vsel %vm1338, 0.25, 0.0
  %v1403 = vsel %vm1339, 0.25, 0.0
  %v1404 = vsel %vm1340, 0.25, 0.0
  %v1405 = vsel %vm1341, 0.25, 0.0
  %v1406 = vsel %vm1342, 0.25, 0.0
  %v1407 = vsel %vm1343, 0.25, 0.0
  %v1408 = vsel %vm1344, 0.25, 0.0
  %v1409 = vsel %vm1345, 0.25, 0.0
  %v1410 = vsel %vm1346, 0.25, 0.0
  %v1411 = vsel %vm1347, 0.25, 0.0
  %v1412 = vsel %vm1348, 0.25, 0.0
  %v1413 = vsel %vm1349, 0.25, 0.0
  %v1414 = vsel %vm1350, 0.25, 0.0
  %v1415 = vsel %vm1351, 0.25, 0.0
  %v1416 = vmul.u32 %v252, 8
  %v1417 = vmul.u32 %v253, 8
  %v1418 = vmul.u32 %v254, 8
  %v1419 = vmul.u32 %v255, 8
  %v1420 = vshra.s32 %v248, 1
  %v1421 = vshra.s32 %v249, 1
  %v1422 = vshra.s32 %v250, 1
  %v1423 = vshra.s32 %v251, 1
  %v1424 = vadd.s32 %v1416, %v1420
  %v1425 = vadd.s32 %v1417, %v1421
  %v1426 = vadd.s32 %v1418, %v1422
  %v1427 = vadd.s32 %v1419, %v1423
  %v1428 = vmul.u32 %v1424, 8
  %v1429 = vmul.u32 %v1425, 8
  %v1430 = vmul.u32 %v1426, 8
  %v1431 = vmul.u32 %v1427, 8
  %v1432 = vshra.s32 %v240, 1
  %v1433 = vshra.s32 %v241, 1
  %v1434 = vshra.s32 %v242, 1
  %v1435 = vshra.s32 %v243, 1
  %v1436 = vadd.s32 %v1428, %v1432
  %v1437 = vadd.s32 %v1429, %v1433
  %v1438 = vadd.s32 %v1430, %v1434
  %v1439 = vadd.s32 %v1431, %v1435
  %vm1440 = vcmp.eq.s32.totalorder %v353, %v1436
  %vm1441 = vcmp.eq.s32.totalorder %v353, %v1437
  %vm1442 = vcmp.eq.s32.totalorder %v353, %v1438
  %vm1443 = vcmp.eq.s32.totalorder %v353, %v1439
  %vm1444 = vcmp.eq.s32.totalorder %v457, %v1436
  %vm1445 = vcmp.eq.s32.totalorder %v457, %v1437
  %vm1446 = vcmp.eq.s32.totalorder %v457, %v1438
  %vm1447 = vcmp.eq.s32.totalorder %v457, %v1439
  %vm1448 = vcmp.eq.s32.totalorder %v458, %v1436
  %vm1449 = vcmp.eq.s32.totalorder %v458, %v1437
  %vm1450 = vcmp.eq.s32.totalorder %v458, %v1438
  %vm1451 = vcmp.eq.s32.totalorder %v458, %v1439
  %vm1452 = vcmp.eq.s32.totalorder %v459, %v1436
  %vm1453 = vcmp.eq.s32.totalorder %v459, %v1437
  %vm1454 = vcmp.eq.s32.totalorder %v459, %v1438
  %vm1455 = vcmp.eq.s32.totalorder %v459, %v1439
  %vm1456 = vcmp.eq.s32.totalorder %v460, %v1436
  %vm1457 = vcmp.eq.s32.totalorder %v460, %v1437
  %vm1458 = vcmp.eq.s32.totalorder %v460, %v1438
  %vm1459 = vcmp.eq.s32.totalorder %v460, %v1439
  %vm1460 = vcmp.eq.s32.totalorder %v461, %v1436
  %vm1461 = vcmp.eq.s32.totalorder %v461, %v1437
  %vm1462 = vcmp.eq.s32.totalorder %v461, %v1438
  %vm1463 = vcmp.eq.s32.totalorder %v461, %v1439
  %vm1464 = vcmp.eq.s32.totalorder %v462, %v1436
  %vm1465 = vcmp.eq.s32.totalorder %v462, %v1437
  %vm1466 = vcmp.eq.s32.totalorder %v462, %v1438
  %vm1467 = vcmp.eq.s32.totalorder %v462, %v1439
  %vm1468 = vcmp.eq.s32.totalorder %v463, %v1436
  %vm1469 = vcmp.eq.s32.totalorder %v463, %v1437
  %vm1470 = vcmp.eq.s32.totalorder %v463, %v1438
  %vm1471 = vcmp.eq.s32.totalorder %v463, %v1439
  %vm1472 = vcmp.eq.s32.totalorder %v464, %v1436
  %vm1473 = vcmp.eq.s32.totalorder %v464, %v1437
  %vm1474 = vcmp.eq.s32.totalorder %v464, %v1438
  %vm1475 = vcmp.eq.s32.totalorder %v464, %v1439
  %vm1476 = vcmp.eq.s32.totalorder %v465, %v1436
  %vm1477 = vcmp.eq.s32.totalorder %v465, %v1437
  %vm1478 = vcmp.eq.s32.totalorder %v465, %v1438
  %vm1479 = vcmp.eq.s32.totalorder %v465, %v1439
  %vm1480 = vcmp.eq.s32.totalorder %v466, %v1436
  %vm1481 = vcmp.eq.s32.totalorder %v466, %v1437
  %vm1482 = vcmp.eq.s32.totalorder %v466, %v1438
  %vm1483 = vcmp.eq.s32.totalorder %v466, %v1439
  %vm1484 = vcmp.eq.s32.totalorder %v467, %v1436
  %vm1485 = vcmp.eq.s32.totalorder %v467, %v1437
  %vm1486 = vcmp.eq.s32.totalorder %v467, %v1438
  %vm1487 = vcmp.eq.s32.totalorder %v467, %v1439
  %vm1488 = vcmp.eq.s32.totalorder %v468, %v1436
  %vm1489 = vcmp.eq.s32.totalorder %v468, %v1437
  %vm1490 = vcmp.eq.s32.totalorder %v468, %v1438
  %vm1491 = vcmp.eq.s32.totalorder %v468, %v1439
  %vm1492 = vcmp.eq.s32.totalorder %v469, %v1436
  %vm1493 = vcmp.eq.s32.totalorder %v469, %v1437
  %vm1494 = vcmp.eq.s32.totalorder %v469, %v1438
  %vm1495 = vcmp.eq.s32.totalorder %v469, %v1439
  %vm1496 = vcmp.eq.s32.totalorder %v470, %v1436
  %vm1497 = vcmp.eq.s32.totalorder %v470, %v1437
  %vm1498 = vcmp.eq.s32.totalorder %v470, %v1438
  %vm1499 = vcmp.eq.s32.totalorder %v470, %v1439
  %vm1500 = vcmp.eq.s32.totalorder %v471, %v1436
  %vm1501 = vcmp.eq.s32.totalorder %v471, %v1437
  %vm1502 = vcmp.eq.s32.totalorder %v471, %v1438
  %vm1503 = vcmp.eq.s32.totalorder %v471, %v1439
  %vm1504 = vcmp.lt.s32.totalorder %v236, 512
  %vm1505 = vcmp.lt.s32.totalorder %v237, 512
  %vm1506 = vcmp.lt.s32.totalorder %v238, 512
  %vm1507 = vcmp.lt.s32.totalorder %v239, 512
  %vm1508 = vmand %vm1440, %vm1504
  %vm1509 = vmand %vm1441, %vm1505
  %vm1510 = vmand %vm1442, %vm1506
  %vm1511 = vmand %vm1443, %vm1507
  %vm1512 = vmand %vm1444, %vm1504
  %vm1513 = vmand %vm1445, %vm1505
  %vm1514 = vmand %vm1446, %vm1506
  %vm1515 = vmand %vm1447, %vm1507
  %vm1516 = vmand %vm1448, %vm1504
  %vm1517 = vmand %vm1449, %vm1505
  %vm1518 = vmand %vm1450, %vm1506
  %vm1519 = vmand %vm1451, %vm1507
  %vm1520 = vmand %vm1452, %vm1504
  %vm1521 = vmand %vm1453, %vm1505
  %vm1522 = vmand %vm1454, %vm1506
  %vm1523 = vmand %vm1455, %vm1507
  %vm1524 = vmand %vm1456, %vm1504
  %vm1525 = vmand %vm1457, %vm1505
  %vm1526 = vmand %vm1458, %vm1506
  %vm1527 = vmand %vm1459, %vm1507
  %vm1528 = vmand %vm1460, %vm1504
  %vm1529 = vmand %vm1461, %vm1505
  %vm1530 = vmand %vm1462, %vm1506
  %vm1531 = vmand %vm1463, %vm1507
  %vm1532 = vmand %vm1464, %vm1504
  %vm1533 = vmand %vm1465, %vm1505
  %vm1534 = vmand %vm1466, %vm1506
  %vm1535 = vmand %vm1467, %vm1507
  %vm1536 = vmand %vm1468, %vm1504
  %vm1537 = vmand %vm1469, %vm1505
  %vm1538 = vmand %vm1470, %vm1506
  %vm1539 = vmand %vm1471, %vm1507
  %vm1540 = vmand %vm1472, %vm1504
  %vm1541 = vmand %vm1473, %vm1505
  %vm1542 = vmand %vm1474, %vm1506
  %vm1543 = vmand %vm1475, %vm1507
  %vm1544 = vmand %vm1476, %vm1504
  %vm1545 = vmand %vm1477, %vm1505
  %vm1546 = vmand %vm1478, %vm1506
  %vm1547 = vmand %vm1479, %vm1507
  %vm1548 = vmand %vm1480, %vm1504
  %vm1549 = vmand %vm1481, %vm1505
  %vm1550 = vmand %vm1482, %vm1506
  %vm1551 = vmand %vm1483, %vm1507
  %vm1552 = vmand %vm1484, %vm1504
  %vm1553 = vmand %vm1485, %vm1505
  %vm1554 = vmand %vm1486, %vm1506
  %vm1555 = vmand %vm1487, %vm1507
  %vm1556 = vmand %vm1488, %vm1504
  %vm1557 = vmand %vm1489, %vm1505
  %vm1558 = vmand %vm1490, %vm1506
  %vm1559 = vmand %vm1491, %vm1507
  %vm1560 = vmand %vm1492, %vm1504
  %vm1561 = vmand %vm1493, %vm1505
  %vm1562 = vmand %vm1494, %vm1506
  %vm1563 = vmand %vm1495, %vm1507
  %vm1564 = vmand %vm1496, %vm1504
  %vm1565 = vmand %vm1497, %vm1505
  %vm1566 = vmand %vm1498, %vm1506
  %vm1567 = vmand %vm1499, %vm1507
  %vm1568 = vmand %vm1500, %vm1504
  %vm1569 = vmand %vm1501, %vm1505
  %vm1570 = vmand %vm1502, %vm1506
  %vm1571 = vmand %vm1503, %vm1507
  %v1572 = vsel %vm1508, 1.0, 0.0
  %v1573 = vsel %vm1509, 1.0, 0.0
  %v1574 = vsel %vm1510, 1.0, 0.0
  %v1575 = vsel %vm1511, 1.0, 0.0
  %v1576 = vsel %vm1512, 1.0, 0.0
  %v1577 = vsel %vm1513, 1.0, 0.0
  %v1578 = vsel %vm1514, 1.0, 0.0
  %v1579 = vsel %vm1515, 1.0, 0.0
  %v1580 = vsel %vm1516, 1.0, 0.0
  %v1581 = vsel %vm1517, 1.0, 0.0
  %v1582 = vsel %vm1518, 1.0, 0.0
  %v1583 = vsel %vm1519, 1.0, 0.0
  %v1584 = vsel %vm1520, 1.0, 0.0
  %v1585 = vsel %vm1521, 1.0, 0.0
  %v1586 = vsel %vm1522, 1.0, 0.0
  %v1587 = vsel %vm1523, 1.0, 0.0
  %v1588 = vsel %vm1524, 1.0, 0.0
  %v1589 = vsel %vm1525, 1.0, 0.0
  %v1590 = vsel %vm1526, 1.0, 0.0
  %v1591 = vsel %vm1527, 1.0, 0.0
  %v1592 = vsel %vm1528, 1.0, 0.0
  %v1593 = vsel %vm1529, 1.0, 0.0
  %v1594 = vsel %vm1530, 1.0, 0.0
  %v1595 = vsel %vm1531, 1.0, 0.0
  %v1596 = vsel %vm1532, 1.0, 0.0
  %v1597 = vsel %vm1533, 1.0, 0.0
  %v1598 = vsel %vm1534, 1.0, 0.0
  %v1599 = vsel %vm1535, 1.0, 0.0
  %v1600 = vsel %vm1536, 1.0, 0.0
  %v1601 = vsel %vm1537, 1.0, 0.0
  %v1602 = vsel %vm1538, 1.0, 0.0
  %v1603 = vsel %vm1539, 1.0, 0.0
  %v1604 = vsel %vm1540, 1.0, 0.0
  %v1605 = vsel %vm1541, 1.0, 0.0
  %v1606 = vsel %vm1542, 1.0, 0.0
  %v1607 = vsel %vm1543, 1.0, 0.0
  %v1608 = vsel %vm1544, 1.0, 0.0
  %v1609 = vsel %vm1545, 1.0, 0.0
  %v1610 = vsel %vm1546, 1.0, 0.0
  %v1611 = vsel %vm1547, 1.0, 0.0
  %v1612 = vsel %vm1548, 1.0, 0.0
  %v1613 = vsel %vm1549, 1.0, 0.0
  %v1614 = vsel %vm1550, 1.0, 0.0
  %v1615 = vsel %vm1551, 1.0, 0.0
  %v1616 = vsel %vm1552, 1.0, 0.0
  %v1617 = vsel %vm1553, 1.0, 0.0
  %v1618 = vsel %vm1554, 1.0, 0.0
  %v1619 = vsel %vm1555, 1.0, 0.0
  %v1620 = vsel %vm1556, 1.0, 0.0
  %v1621 = vsel %vm1557, 1.0, 0.0
  %v1622 = vsel %vm1558, 1.0, 0.0
  %v1623 = vsel %vm1559, 1.0, 0.0
  %v1624 = vsel %vm1560, 1.0, 0.0
  %v1625 = vsel %vm1561, 1.0, 0.0
  %v1626 = vsel %vm1562, 1.0, 0.0
  %v1627 = vsel %vm1563, 1.0, 0.0
  %v1628 = vsel %vm1564, 1.0, 0.0
  %v1629 = vsel %vm1565, 1.0, 0.0
  %v1630 = vsel %vm1566, 1.0, 0.0
  %v1631 = vsel %vm1567, 1.0, 0.0
  %v1632 = vsel %vm1568, 1.0, 0.0
  %v1633 = vsel %vm1569, 1.0, 0.0
  %v1634 = vsel %vm1570, 1.0, 0.0
  %v1635 = vsel %vm1571, 1.0, 0.0
  %v1636 = vand.u32 %v353, 7
  %v1637 = vand.u32 %v457, 7
  %v1638 = vand.u32 %v458, 7
  %v1639 = vand.u32 %v459, 7
  %v1640 = vand.u32 %v460, 7
  %v1641 = vand.u32 %v461, 7
  %v1642 = vand.u32 %v462, 7
  %v1643 = vand.u32 %v463, 7
  %v1644 = vand.u32 %v464, 7
  %v1645 = vand.u32 %v465, 7
  %v1646 = vand.u32 %v466, 7
  %v1647 = vand.u32 %v467, 7
  %v1648 = vand.u32 %v468, 7
  %v1649 = vand.u32 %v469, 7
  %v1650 = vand.u32 %v470, 7
  %v1651 = vand.u32 %v471, 7
  %v1652 = vshra.s32 %v353, 3
  %v1653 = vshra.s32 %v457, 3
  %v1654 = vshra.s32 %v458, 3
  %v1655 = vshra.s32 %v459, 3
  %v1656 = vshra.s32 %v460, 3
  %v1657 = vshra.s32 %v461, 3
  %v1658 = vshra.s32 %v462, 3
  %v1659 = vshra.s32 %v463, 3
  %v1660 = vshra.s32 %v464, 3
  %v1661 = vshra.s32 %v465, 3
  %v1662 = vshra.s32 %v466, 3
  %v1663 = vshra.s32 %v467, 3
  %v1664 = vshra.s32 %v468, 3
  %v1665 = vshra.s32 %v469, 3
  %v1666 = vshra.s32 %v470, 3
  %v1667 = vshra.s32 %v471, 3
  %v1668 = vand.u32 %v1652, 7
  %v1669 = vand.u32 %v1653, 7
  %v1670 = vand.u32 %v1654, 7
  %v1671 = vand.u32 %v1655, 7
  %v1672 = vand.u32 %v1656, 7
  %v1673 = vand.u32 %v1657, 7
  %v1674 = vand.u32 %v1658, 7
  %v1675 = vand.u32 %v1659, 7
  %v1676 = vand.u32 %v1660, 7
  %v1677 = vand.u32 %v1661, 7
  %v1678 = vand.u32 %v1662, 7
  %v1679 = vand.u32 %v1663, 7
  %v1680 = vand.u32 %v1664, 7
  %v1681 = vand.u32 %v1665, 7
  %v1682 = vand.u32 %v1666, 7
  %v1683 = vand.u32 %v1667, 7
  %v1684 = vshra.s32 %v353, 6
  %v1685 = vshra.s32 %v457, 6
  %v1686 = vshra.s32 %v458, 6
  %v1687 = vshra.s32 %v459, 6
  %v1688 = vshra.s32 %v460, 6
  %v1689 = vshra.s32 %v461, 6
  %v1690 = vshra.s32 %v462, 6
  %v1691 = vshra.s32 %v463, 6
  %v1692 = vshra.s32 %v464, 6
  %v1693 = vshra.s32 %v465, 6
  %v1694 = vshra.s32 %v466, 6
  %v1695 = vshra.s32 %v467, 6
  %v1696 = vshra.s32 %v468, 6
  %v1697 = vshra.s32 %v469, 6
  %v1698 = vshra.s32 %v470, 6
  %v1699 = vshra.s32 %v471, 6
  %v1700 = vmul.u32 %v1684, 4
  %v1701 = vmul.u32 %v1685, 4
  %v1702 = vmul.u32 %v1686, 4
  %v1703 = vmul.u32 %v1687, 4
  %v1704 = vmul.u32 %v1688, 4
  %v1705 = vmul.u32 %v1689, 4
  %v1706 = vmul.u32 %v1690, 4
  %v1707 = vmul.u32 %v1691, 4
  %v1708 = vmul.u32 %v1692, 4
  %v1709 = vmul.u32 %v1693, 4
  %v1710 = vmul.u32 %v1694, 4
  %v1711 = vmul.u32 %v1695, 4
  %v1712 = vmul.u32 %v1696, 4
  %v1713 = vmul.u32 %v1697, 4
  %v1714 = vmul.u32 %v1698, 4
  %v1715 = vmul.u32 %v1699, 4
  %v1716 = vshra.s32 %v1668, 1
  %v1717 = vshra.s32 %v1669, 1
  %v1718 = vshra.s32 %v1670, 1
  %v1719 = vshra.s32 %v1671, 1
  %v1720 = vshra.s32 %v1672, 1
  %v1721 = vshra.s32 %v1673, 1
  %v1722 = vshra.s32 %v1674, 1
  %v1723 = vshra.s32 %v1675, 1
  %v1724 = vshra.s32 %v1676, 1
  %v1725 = vshra.s32 %v1677, 1
  %v1726 = vshra.s32 %v1678, 1
  %v1727 = vshra.s32 %v1679, 1
  %v1728 = vshra.s32 %v1680, 1
  %v1729 = vshra.s32 %v1681, 1
  %v1730 = vshra.s32 %v1682, 1
  %v1731 = vshra.s32 %v1683, 1
  %v1732 = vadd.s32 %v1700, %v1716
  %v1733 = vadd.s32 %v1701, %v1717
  %v1734 = vadd.s32 %v1702, %v1718
  %v1735 = vadd.s32 %v1703, %v1719
  %v1736 = vadd.s32 %v1704, %v1720
  %v1737 = vadd.s32 %v1705, %v1721
  %v1738 = vadd.s32 %v1706, %v1722
  %v1739 = vadd.s32 %v1707, %v1723
  %v1740 = vadd.s32 %v1708, %v1724
  %v1741 = vadd.s32 %v1709, %v1725
  %v1742 = vadd.s32 %v1710, %v1726
  %v1743 = vadd.s32 %v1711, %v1727
  %v1744 = vadd.s32 %v1712, %v1728
  %v1745 = vadd.s32 %v1713, %v1729
  %v1746 = vadd.s32 %v1714, %v1730
  %v1747 = vadd.s32 %v1715, %v1731
  %v1748 = vmul.u32 %v1732, 4
  %v1749 = vmul.u32 %v1733, 4
  %v1750 = vmul.u32 %v1734, 4
  %v1751 = vmul.u32 %v1735, 4
  %v1752 = vmul.u32 %v1736, 4
  %v1753 = vmul.u32 %v1737, 4
  %v1754 = vmul.u32 %v1738, 4
  %v1755 = vmul.u32 %v1739, 4
  %v1756 = vmul.u32 %v1740, 4
  %v1757 = vmul.u32 %v1741, 4
  %v1758 = vmul.u32 %v1742, 4
  %v1759 = vmul.u32 %v1743, 4
  %v1760 = vmul.u32 %v1744, 4
  %v1761 = vmul.u32 %v1745, 4
  %v1762 = vmul.u32 %v1746, 4
  %v1763 = vmul.u32 %v1747, 4
  %v1764 = vshra.s32 %v1636, 1
  %v1765 = vshra.s32 %v1637, 1
  %v1766 = vshra.s32 %v1638, 1
  %v1767 = vshra.s32 %v1639, 1
  %v1768 = vshra.s32 %v1640, 1
  %v1769 = vshra.s32 %v1641, 1
  %v1770 = vshra.s32 %v1642, 1
  %v1771 = vshra.s32 %v1643, 1
  %v1772 = vshra.s32 %v1644, 1
  %v1773 = vshra.s32 %v1645, 1
  %v1774 = vshra.s32 %v1646, 1
  %v1775 = vshra.s32 %v1647, 1
  %v1776 = vshra.s32 %v1648, 1
  %v1777 = vshra.s32 %v1649, 1
  %v1778 = vshra.s32 %v1650, 1
  %v1779 = vshra.s32 %v1651, 1
  %v1780 = vadd.s32 %v1748, %v1764
  %v1781 = vadd.s32 %v1749, %v1765
  %v1782 = vadd.s32 %v1750, %v1766
  %v1783 = vadd.s32 %v1751, %v1767
  %v1784 = vadd.s32 %v1752, %v1768
  %v1785 = vadd.s32 %v1753, %v1769
  %v1786 = vadd.s32 %v1754, %v1770
  %v1787 = vadd.s32 %v1755, %v1771
  %v1788 = vadd.s32 %v1756, %v1772
  %v1789 = vadd.s32 %v1757, %v1773
  %v1790 = vadd.s32 %v1758, %v1774
  %v1791 = vadd.s32 %v1759, %v1775
  %v1792 = vadd.s32 %v1760, %v1776
  %v1793 = vadd.s32 %v1761, %v1777
  %v1794 = vadd.s32 %v1762, %v1778
  %v1795 = vadd.s32 %v1763, %v1779
  %vm1796 = vcmp.eq.s32.totalorder %v236, %v1780
  %vm1797 = vcmp.eq.s32.totalorder %v236, %v1781
  %vm1798 = vcmp.eq.s32.totalorder %v236, %v1782
  %vm1799 = vcmp.eq.s32.totalorder %v236, %v1783
  %vm1800 = vcmp.eq.s32.totalorder %v236, %v1784
  %vm1801 = vcmp.eq.s32.totalorder %v236, %v1785
  %vm1802 = vcmp.eq.s32.totalorder %v236, %v1786
  %vm1803 = vcmp.eq.s32.totalorder %v236, %v1787
  %vm1804 = vcmp.eq.s32.totalorder %v236, %v1788
  %vm1805 = vcmp.eq.s32.totalorder %v236, %v1789
  %vm1806 = vcmp.eq.s32.totalorder %v236, %v1790
  %vm1807 = vcmp.eq.s32.totalorder %v236, %v1791
  %vm1808 = vcmp.eq.s32.totalorder %v236, %v1792
  %vm1809 = vcmp.eq.s32.totalorder %v236, %v1793
  %vm1810 = vcmp.eq.s32.totalorder %v236, %v1794
  %vm1811 = vcmp.eq.s32.totalorder %v236, %v1795
  %vm1812 = vcmp.lt.s32.totalorder %v353, 128
  %vm1813 = vcmp.lt.s32.totalorder %v457, 128
  %vm1814 = vcmp.lt.s32.totalorder %v458, 128
  %vm1815 = vcmp.lt.s32.totalorder %v459, 128
  %vm1816 = vcmp.lt.s32.totalorder %v460, 128
  %vm1817 = vcmp.lt.s32.totalorder %v461, 128
  %vm1818 = vcmp.lt.s32.totalorder %v462, 128
  %vm1819 = vcmp.lt.s32.totalorder %v463, 128
  %vm1820 = vcmp.lt.s32.totalorder %v464, 128
  %vm1821 = vcmp.lt.s32.totalorder %v465, 128
  %vm1822 = vcmp.lt.s32.totalorder %v466, 128
  %vm1823 = vcmp.lt.s32.totalorder %v467, 128
  %vm1824 = vcmp.lt.s32.totalorder %v468, 128
  %vm1825 = vcmp.lt.s32.totalorder %v469, 128
  %vm1826 = vcmp.lt.s32.totalorder %v470, 128
  %vm1827 = vcmp.lt.s32.totalorder %v471, 128
  %vm1828 = vmand %vm1796, %vm1812
  %vm1829 = vmand %vm1797, %vm1813
  %vm1830 = vmand %vm1798, %vm1814
  %vm1831 = vmand %vm1799, %vm1815
  %vm1832 = vmand %vm1800, %vm1816
  %vm1833 = vmand %vm1801, %vm1817
  %vm1834 = vmand %vm1802, %vm1818
  %vm1835 = vmand %vm1803, %vm1819
  %vm1836 = vmand %vm1804, %vm1820
  %vm1837 = vmand %vm1805, %vm1821
  %vm1838 = vmand %vm1806, %vm1822
  %vm1839 = vmand %vm1807, %vm1823
  %vm1840 = vmand %vm1808, %vm1824
  %vm1841 = vmand %vm1809, %vm1825
  %vm1842 = vmand %vm1810, %vm1826
  %vm1843 = vmand %vm1811, %vm1827
  %v1844 = vsel %vm1828, 0.25, 0.0
  %v1845 = vsel %vm1829, 0.25, 0.0
  %v1846 = vsel %vm1830, 0.25, 0.0
  %v1847 = vsel %vm1831, 0.25, 0.0
  %v1848 = vsel %vm1832, 0.25, 0.0
  %v1849 = vsel %vm1833, 0.25, 0.0
  %v1850 = vsel %vm1834, 0.25, 0.0
  %v1851 = vsel %vm1835, 0.25, 0.0
  %v1852 = vsel %vm1836, 0.25, 0.0
  %v1853 = vsel %vm1837, 0.25, 0.0
  %v1854 = vsel %vm1838, 0.25, 0.0
  %v1855 = vsel %vm1839, 0.25, 0.0
  %v1856 = vsel %vm1840, 0.25, 0.0
  %v1857 = vsel %vm1841, 0.25, 0.0
  %v1858 = vsel %vm1842, 0.25, 0.0
  %v1859 = vsel %vm1843, 0.25, 0.0
  %v1860 = vmul.u32 %v369, 4
  %v1861 = vshra.s32 %v368, 1
  %v1862 = vadd.s32 %v1860, %v1861
  %v1863 = vmul.u32 %v1862, 4
  %v1864 = vshra.s32 %v366, 1
  %v1865 = vadd.s32 %v1863, %v1864
  %vm1866 = vcmp.eq.s32.totalorder %v353, %v1865
  %vm1867 = vcmp.eq.s32.totalorder %v457, %v1865
  %vm1868 = vcmp.eq.s32.totalorder %v458, %v1865
  %vm1869 = vcmp.eq.s32.totalorder %v459, %v1865
  %vm1870 = vcmp.eq.s32.totalorder %v460, %v1865
  %vm1871 = vcmp.eq.s32.totalorder %v461, %v1865
  %vm1872 = vcmp.eq.s32.totalorder %v462, %v1865
  %vm1873 = vcmp.eq.s32.totalorder %v463, %v1865
  %vm1874 = vcmp.eq.s32.totalorder %v464, %v1865
  %vm1875 = vcmp.eq.s32.totalorder %v465, %v1865
  %vm1876 = vcmp.eq.s32.totalorder %v466, %v1865
  %vm1877 = vcmp.eq.s32.totalorder %v467, %v1865
  %vm1878 = vcmp.eq.s32.totalorder %v468, %v1865
  %vm1879 = vcmp.eq.s32.totalorder %v469, %v1865
  %vm1880 = vcmp.eq.s32.totalorder %v470, %v1865
  %vm1881 = vcmp.eq.s32.totalorder %v471, %v1865
  %vm1882 = vcmp.lt.s32.totalorder %v236, 128
  %vm1883 = vmand %vm1866, %vm1882
  %vm1884 = vmand %vm1867, %vm1882
  %vm1885 = vmand %vm1868, %vm1882
  %vm1886 = vmand %vm1869, %vm1882
  %vm1887 = vmand %vm1870, %vm1882
  %vm1888 = vmand %vm1871, %vm1882
  %vm1889 = vmand %vm1872, %vm1882
  %vm1890 = vmand %vm1873, %vm1882
  %vm1891 = vmand %vm1874, %vm1882
  %vm1892 = vmand %vm1875, %vm1882
  %vm1893 = vmand %vm1876, %vm1882
  %vm1894 = vmand %vm1877, %vm1882
  %vm1895 = vmand %vm1878, %vm1882
  %vm1896 = vmand %vm1879, %vm1882
  %vm1897 = vmand %vm1880, %vm1882
  %vm1898 = vmand %vm1881, %vm1882
  %v1899 = vsel %vm1883, 1.0, 0.0
  %v1900 = vsel %vm1884, 1.0, 0.0
  %v1901 = vsel %vm1885, 1.0, 0.0
  %v1902 = vsel %vm1886, 1.0, 0.0
  %v1903 = vsel %vm1887, 1.0, 0.0
  %v1904 = vsel %vm1888, 1.0, 0.0
  %v1905 = vsel %vm1889, 1.0, 0.0
  %v1906 = vsel %vm1890, 1.0, 0.0
  %v1907 = vsel %vm1891, 1.0, 0.0
  %v1908 = vsel %vm1892, 1.0, 0.0
  %v1909 = vsel %vm1893, 1.0, 0.0
  %v1910 = vsel %vm1894, 1.0, 0.0
  %v1911 = vsel %vm1895, 1.0, 0.0
  %v1912 = vsel %vm1896, 1.0, 0.0
  %v1913 = vsel %vm1897, 1.0, 0.0
  %v1914 = vsel %vm1898, 1.0, 0.0
  %v1915 = vand.u32 %v353, 3
  %v1916 = vand.u32 %v457, 3
  %v1917 = vand.u32 %v458, 3
  %v1918 = vand.u32 %v459, 3
  %v1919 = vand.u32 %v460, 3
  %v1920 = vand.u32 %v461, 3
  %v1921 = vand.u32 %v462, 3
  %v1922 = vand.u32 %v463, 3
  %v1923 = vand.u32 %v464, 3
  %v1924 = vand.u32 %v465, 3
  %v1925 = vand.u32 %v466, 3
  %v1926 = vand.u32 %v467, 3
  %v1927 = vand.u32 %v468, 3
  %v1928 = vand.u32 %v469, 3
  %v1929 = vand.u32 %v470, 3
  %v1930 = vand.u32 %v471, 3
  %v1931 = vshra.s32 %v353, 2
  %v1932 = vshra.s32 %v457, 2
  %v1933 = vshra.s32 %v458, 2
  %v1934 = vshra.s32 %v459, 2
  %v1935 = vshra.s32 %v460, 2
  %v1936 = vshra.s32 %v461, 2
  %v1937 = vshra.s32 %v462, 2
  %v1938 = vshra.s32 %v463, 2
  %v1939 = vshra.s32 %v464, 2
  %v1940 = vshra.s32 %v465, 2
  %v1941 = vshra.s32 %v466, 2
  %v1942 = vshra.s32 %v467, 2
  %v1943 = vshra.s32 %v468, 2
  %v1944 = vshra.s32 %v469, 2
  %v1945 = vshra.s32 %v470, 2
  %v1946 = vshra.s32 %v471, 2
  %v1947 = vand.u32 %v1931, 3
  %v1948 = vand.u32 %v1932, 3
  %v1949 = vand.u32 %v1933, 3
  %v1950 = vand.u32 %v1934, 3
  %v1951 = vand.u32 %v1935, 3
  %v1952 = vand.u32 %v1936, 3
  %v1953 = vand.u32 %v1937, 3
  %v1954 = vand.u32 %v1938, 3
  %v1955 = vand.u32 %v1939, 3
  %v1956 = vand.u32 %v1940, 3
  %v1957 = vand.u32 %v1941, 3
  %v1958 = vand.u32 %v1942, 3
  %v1959 = vand.u32 %v1943, 3
  %v1960 = vand.u32 %v1944, 3
  %v1961 = vand.u32 %v1945, 3
  %v1962 = vand.u32 %v1946, 3
  %v1963 = vmul.u32 %v584, 2
  %v1964 = vmul.u32 %v585, 2
  %v1965 = vmul.u32 %v586, 2
  %v1966 = vmul.u32 %v587, 2
  %v1967 = vmul.u32 %v588, 2
  %v1968 = vmul.u32 %v589, 2
  %v1969 = vmul.u32 %v590, 2
  %v1970 = vmul.u32 %v591, 2
  %v1971 = vmul.u32 %v592, 2
  %v1972 = vmul.u32 %v593, 2
  %v1973 = vmul.u32 %v594, 2
  %v1974 = vmul.u32 %v595, 2
  %v1975 = vmul.u32 %v596, 2
  %v1976 = vmul.u32 %v597, 2
  %v1977 = vmul.u32 %v598, 2
  %v1978 = vmul.u32 %v599, 2
  %v1979 = vshra.s32 %v1947, 1
  %v1980 = vshra.s32 %v1948, 1
  %v1981 = vshra.s32 %v1949, 1
  %v1982 = vshra.s32 %v1950, 1
  %v1983 = vshra.s32 %v1951, 1
  %v1984 = vshra.s32 %v1952, 1
  %v1985 = vshra.s32 %v1953, 1
  %v1986 = vshra.s32 %v1954, 1
  %v1987 = vshra.s32 %v1955, 1
  %v1988 = vshra.s32 %v1956, 1
  %v1989 = vshra.s32 %v1957, 1
  %v1990 = vshra.s32 %v1958, 1
  %v1991 = vshra.s32 %v1959, 1
  %v1992 = vshra.s32 %v1960, 1
  %v1993 = vshra.s32 %v1961, 1
  %v1994 = vshra.s32 %v1962, 1
  %v1995 = vadd.s32 %v1963, %v1979
  %v1996 = vadd.s32 %v1964, %v1980
  %v1997 = vadd.s32 %v1965, %v1981
  %v1998 = vadd.s32 %v1966, %v1982
  %v1999 = vadd.s32 %v1967, %v1983
  %v2000 = vadd.s32 %v1968, %v1984
  %v2001 = vadd.s32 %v1969, %v1985
  %v2002 = vadd.s32 %v1970, %v1986
  %v2003 = vadd.s32 %v1971, %v1987
  %v2004 = vadd.s32 %v1972, %v1988
  %v2005 = vadd.s32 %v1973, %v1989
  %v2006 = vadd.s32 %v1974, %v1990
  %v2007 = vadd.s32 %v1975, %v1991
  %v2008 = vadd.s32 %v1976, %v1992
  %v2009 = vadd.s32 %v1977, %v1993
  %v2010 = vadd.s32 %v1978, %v1994
  %v2011 = vmul.u32 %v1995, 2
  %v2012 = vmul.u32 %v1996, 2
  %v2013 = vmul.u32 %v1997, 2
  %v2014 = vmul.u32 %v1998, 2
  %v2015 = vmul.u32 %v1999, 2
  %v2016 = vmul.u32 %v2000, 2
  %v2017 = vmul.u32 %v2001, 2
  %v2018 = vmul.u32 %v2002, 2
  %v2019 = vmul.u32 %v2003, 2
  %v2020 = vmul.u32 %v2004, 2
  %v2021 = vmul.u32 %v2005, 2
  %v2022 = vmul.u32 %v2006, 2
  %v2023 = vmul.u32 %v2007, 2
  %v2024 = vmul.u32 %v2008, 2
  %v2025 = vmul.u32 %v2009, 2
  %v2026 = vmul.u32 %v2010, 2
  %v2027 = vshra.s32 %v1915, 1
  %v2028 = vshra.s32 %v1916, 1
  %v2029 = vshra.s32 %v1917, 1
  %v2030 = vshra.s32 %v1918, 1
  %v2031 = vshra.s32 %v1919, 1
  %v2032 = vshra.s32 %v1920, 1
  %v2033 = vshra.s32 %v1921, 1
  %v2034 = vshra.s32 %v1922, 1
  %v2035 = vshra.s32 %v1923, 1
  %v2036 = vshra.s32 %v1924, 1
  %v2037 = vshra.s32 %v1925, 1
  %v2038 = vshra.s32 %v1926, 1
  %v2039 = vshra.s32 %v1927, 1
  %v2040 = vshra.s32 %v1928, 1
  %v2041 = vshra.s32 %v1929, 1
  %v2042 = vshra.s32 %v1930, 1
  %v2043 = vadd.s32 %v2011, %v2027
  %v2044 = vadd.s32 %v2012, %v2028
  %v2045 = vadd.s32 %v2013, %v2029
  %v2046 = vadd.s32 %v2014, %v2030
  %v2047 = vadd.s32 %v2015, %v2031
  %v2048 = vadd.s32 %v2016, %v2032
  %v2049 = vadd.s32 %v2017, %v2033
  %v2050 = vadd.s32 %v2018, %v2034
  %v2051 = vadd.s32 %v2019, %v2035
  %v2052 = vadd.s32 %v2020, %v2036
  %v2053 = vadd.s32 %v2021, %v2037
  %v2054 = vadd.s32 %v2022, %v2038
  %v2055 = vadd.s32 %v2023, %v2039
  %v2056 = vadd.s32 %v2024, %v2040
  %v2057 = vadd.s32 %v2025, %v2041
  %v2058 = vadd.s32 %v2026, %v2042
  %vm2059 = vcmp.eq.s32.totalorder %v236, %v2043
  %vm2060 = vcmp.eq.s32.totalorder %v236, %v2044
  %vm2061 = vcmp.eq.s32.totalorder %v236, %v2045
  %vm2062 = vcmp.eq.s32.totalorder %v236, %v2046
  %vm2063 = vcmp.eq.s32.totalorder %v236, %v2047
  %vm2064 = vcmp.eq.s32.totalorder %v236, %v2048
  %vm2065 = vcmp.eq.s32.totalorder %v236, %v2049
  %vm2066 = vcmp.eq.s32.totalorder %v236, %v2050
  %vm2067 = vcmp.eq.s32.totalorder %v236, %v2051
  %vm2068 = vcmp.eq.s32.totalorder %v236, %v2052
  %vm2069 = vcmp.eq.s32.totalorder %v236, %v2053
  %vm2070 = vcmp.eq.s32.totalorder %v236, %v2054
  %vm2071 = vcmp.eq.s32.totalorder %v236, %v2055
  %vm2072 = vcmp.eq.s32.totalorder %v236, %v2056
  %vm2073 = vcmp.eq.s32.totalorder %v236, %v2057
  %vm2074 = vcmp.eq.s32.totalorder %v236, %v2058
  %vm2075 = vcmp.lt.s32.totalorder %v353, 32
  %vm2076 = vcmp.lt.s32.totalorder %v457, 32
  %vm2077 = vcmp.lt.s32.totalorder %v458, 32
  %vm2078 = vcmp.lt.s32.totalorder %v459, 32
  %vm2079 = vcmp.lt.s32.totalorder %v460, 32
  %vm2080 = vcmp.lt.s32.totalorder %v461, 32
  %vm2081 = vcmp.lt.s32.totalorder %v462, 32
  %vm2082 = vcmp.lt.s32.totalorder %v463, 32
  %vm2083 = vcmp.lt.s32.totalorder %v464, 32
  %vm2084 = vcmp.lt.s32.totalorder %v465, 32
  %vm2085 = vcmp.lt.s32.totalorder %v466, 32
  %vm2086 = vcmp.lt.s32.totalorder %v467, 32
  %vm2087 = vcmp.lt.s32.totalorder %v468, 32
  %vm2088 = vcmp.lt.s32.totalorder %v469, 32
  %vm2089 = vcmp.lt.s32.totalorder %v470, 32
  %vm2090 = vcmp.lt.s32.totalorder %v471, 32
  %vm2091 = vmand %vm2059, %vm2075
  %vm2092 = vmand %vm2060, %vm2076
  %vm2093 = vmand %vm2061, %vm2077
  %vm2094 = vmand %vm2062, %vm2078
  %vm2095 = vmand %vm2063, %vm2079
  %vm2096 = vmand %vm2064, %vm2080
  %vm2097 = vmand %vm2065, %vm2081
  %vm2098 = vmand %vm2066, %vm2082
  %vm2099 = vmand %vm2067, %vm2083
  %vm2100 = vmand %vm2068, %vm2084
  %vm2101 = vmand %vm2069, %vm2085
  %vm2102 = vmand %vm2070, %vm2086
  %vm2103 = vmand %vm2071, %vm2087
  %vm2104 = vmand %vm2072, %vm2088
  %vm2105 = vmand %vm2073, %vm2089
  %vm2106 = vmand %vm2074, %vm2090
  %v2107 = vsel %vm2091, 0.25, 0.0
  %v2108 = vsel %vm2092, 0.25, 0.0
  %v2109 = vsel %vm2093, 0.25, 0.0
  %v2110 = vsel %vm2094, 0.25, 0.0
  %v2111 = vsel %vm2095, 0.25, 0.0
  %v2112 = vsel %vm2096, 0.25, 0.0
  %v2113 = vsel %vm2097, 0.25, 0.0
  %v2114 = vsel %vm2098, 0.25, 0.0
  %v2115 = vsel %vm2099, 0.25, 0.0
  %v2116 = vsel %vm2100, 0.25, 0.0
  %v2117 = vsel %vm2101, 0.25, 0.0
  %v2118 = vsel %vm2102, 0.25, 0.0
  %v2119 = vsel %vm2103, 0.25, 0.0
  %v2120 = vsel %vm2104, 0.25, 0.0
  %v2121 = vsel %vm2105, 0.25, 0.0
  %v2122 = vsel %vm2106, 0.25, 0.0
  %v2123 = vmul.u32 %v244, 2
  %v2124 = vshra.s32 %v399, 1
  %v2125 = vadd.s32 %v2123, %v2124
  %v2126 = vmul.u32 %v2125, 2
  %v2127 = vshra.s32 %v397, 1
  %v2128 = vadd.s32 %v2126, %v2127
  %vm2129 = vcmp.eq.s32.totalorder %v353, %v2128
  %vm2130 = vcmp.eq.s32.totalorder %v457, %v2128
  %vm2131 = vcmp.eq.s32.totalorder %v458, %v2128
  %vm2132 = vcmp.eq.s32.totalorder %v459, %v2128
  %vm2133 = vcmp.eq.s32.totalorder %v460, %v2128
  %vm2134 = vcmp.eq.s32.totalorder %v461, %v2128
  %vm2135 = vcmp.eq.s32.totalorder %v462, %v2128
  %vm2136 = vcmp.eq.s32.totalorder %v463, %v2128
  %vm2137 = vcmp.eq.s32.totalorder %v464, %v2128
  %vm2138 = vcmp.eq.s32.totalorder %v465, %v2128
  %vm2139 = vcmp.eq.s32.totalorder %v466, %v2128
  %vm2140 = vcmp.eq.s32.totalorder %v467, %v2128
  %vm2141 = vcmp.eq.s32.totalorder %v468, %v2128
  %vm2142 = vcmp.eq.s32.totalorder %v469, %v2128
  %vm2143 = vcmp.eq.s32.totalorder %v470, %v2128
  %vm2144 = vcmp.eq.s32.totalorder %v471, %v2128
  %vm2145 = vcmp.lt.s32.totalorder %v236, 32
  %vm2146 = vmand %vm2129, %vm2145
  %vm2147 = vmand %vm2130, %vm2145
  %vm2148 = vmand %vm2131, %vm2145
  %vm2149 = vmand %vm2132, %vm2145
  %vm2150 = vmand %vm2133, %vm2145
  %vm2151 = vmand %vm2134, %vm2145
  %vm2152 = vmand %vm2135, %vm2145
  %vm2153 = vmand %vm2136, %vm2145
  %vm2154 = vmand %vm2137, %vm2145
  %vm2155 = vmand %vm2138, %vm2145
  %vm2156 = vmand %vm2139, %vm2145
  %vm2157 = vmand %vm2140, %vm2145
  %vm2158 = vmand %vm2141, %vm2145
  %vm2159 = vmand %vm2142, %vm2145
  %vm2160 = vmand %vm2143, %vm2145
  %vm2161 = vmand %vm2144, %vm2145
  %v2162 = vsel %vm2146, 1.0, 0.0
  %v2163 = vsel %vm2147, 1.0, 0.0
  %v2164 = vsel %vm2148, 1.0, 0.0
  %v2165 = vsel %vm2149, 1.0, 0.0
  %v2166 = vsel %vm2150, 1.0, 0.0
  %v2167 = vsel %vm2151, 1.0, 0.0
  %v2168 = vsel %vm2152, 1.0, 0.0
  %v2169 = vsel %vm2153, 1.0, 0.0
  %v2170 = vsel %vm2154, 1.0, 0.0
  %v2171 = vsel %vm2155, 1.0, 0.0
  %v2172 = vsel %vm2156, 1.0, 0.0
  %v2173 = vsel %vm2157, 1.0, 0.0
  %v2174 = vsel %vm2158, 1.0, 0.0
  %v2175 = vsel %vm2159, 1.0, 0.0
  %v2176 = vsel %vm2160, 1.0, 0.0
  %v2177 = vsel %vm2161, 1.0, 0.0
  %v2178 = vld [vmem:[%s5] sm:$0xff]
  %v2179 = vld [vmem:[%s7] sm:$0xff]
  %v2180 = vld [vmem:[%s11] sm:$0xff]
  %v2181 = vld [vmem:[%s15] sm:$0xff]
  %v2182 = vld [vmem:[%s17] sm:$0xff]
  %v2183 = vld [vmem:[%s19] sm:$0xff]
  %2185 = vset.pattern.permute.xlu0 0
  %2186 = vperm.xlu0 %2185, %v2179
  %v2187 = vpop.permute.xlu0 %2186
  %vm2189 = vcmask 130048
  %v2191 = vsel %vm2189, %v2178, 0
  %2193 = vmatprep.subr.mxu0 0.0
  %2194 = vmatpush1.msra.mxu0 0.0
  %2195 = vmatprep.subr.mxu0 0.0
  %2196 = vmatpush1.msra.mxu0 0.0
  %2197 = vmatprep.subr.mxu0 0.0
  %2198 = vmatpush1.msra.mxu0 0.0
  %2199 = vmatprep.subr.mxu0 0.0
  %2200 = vmatpush1.msra.mxu0 0.0
  %2201 = vmatprep.subr.mxu0 0.0
  %2202 = vmatpush1.msra.mxu0 0.0
  %2203 = vmatprep.subr.mxu0 0.0
  %2204 = vmatpush1.msra.mxu0 0.0
  %2205 = vmatprep.subr.mxu0 0.0
  %2206 = vmatpush1.msra.mxu0 0.0
  %2207 = vmatprep.subr.mxu0 0.0
  %2208 = vmatpush1.msra.mxu0 0.0
  %2209 = vmatprep.subr.mxu0 0.0
  %2210 = vmatpush1.msra.mxu0 0.0
  %2211 = vmatprep.subr.mxu0 0.0
  %2212 = vmatpush1.msra.mxu0 0.0
  %2213 = vmatprep.subr.mxu0 0.0
  %2214 = vmatpush1.msra.mxu0 0.0
  %2215 = vmatprep.subr.mxu0 0.0
  %2216 = vmatpush1.msra.mxu0 0.0
  %2217 = vmatprep.subr.mxu0 0.0
  %2218 = vmatpush1.msra.mxu0 0.0
  %2219 = vmatprep.subr.mxu0 0.0
  %2220 = vmatpush1.msra.mxu0 0.0
  %2221 = vmatprep.subr.mxu0 0.0
  %2222 = vmatpush1.msra.mxu0 %v234
  %2223 = vmatprep.subr.mxu0 0.0
  %2224 = vmatpush1.msra.mxu0 %v233
  %2225 = vmatprep.subr.mxu0 0.0
  %2226 = vmatpush2.msra.mxu0 0.0
  %2227 = vmatprep.subr.mxu0 0.0
  %2228 = vmatpush2.msra.mxu0 0.0
  %2229 = vmatprep.subr.mxu0 0.0
  %2230 = vmatpush2.msra.mxu0 0.0
  %2231 = vmatprep.subr.mxu0 0.0
  %2232 = vmatpush2.msra.mxu0 0.0
  %2233 = vmatprep.subr.mxu0 0.0
  %2234 = vmatpush2.msra.mxu0 0.0
  %2235 = vmatprep.subr.mxu0 0.0
  %2236 = vmatpush2.msra.mxu0 0.0
  %2237 = vmatprep.subr.mxu0 0.0
  %2238 = vmatpush2.msra.mxu0 0.0
  %2239 = vmatprep.subr.mxu0 0.0
  %2240 = vmatpush2.msra.mxu0 0.0
  %2241 = vmatprep.subr.mxu0 0.0
  %2242 = vmatpush2.msra.mxu0 0.0
  %2243 = vmatprep.subr.mxu0 0.0
  %2244 = vmatpush2.msra.mxu0 0.0
  %2245 = vmatprep.subr.mxu0 0.0
  %2246 = vmatpush2.msra.mxu0 0.0
  %2247 = vmatprep.subr.mxu0 0.0
  %2248 = vmatpush2.msra.mxu0 0.0
  %2249 = vmatprep.subr.mxu0 0.0
  %2250 = vmatpush2.msra.mxu0 0.0
  %2251 = vmatprep.subr.mxu0 0.0
  %2252 = vmatpush2.msra.mxu0 0.0
  %2253 = vmatprep.subr.mxu0 0.0
  %2254 = vmatpush2.msra.mxu0 0.0
  %2255 = vmatprep.subr.mxu0 0.0
  %2256 = vmatpush2.msra.mxu0 0.0
  %2257 = vmatprep.mubr.f32.mxu0 0.0
  %2258 = vmatmul.mubr.f32.gmra.mxu0 %v2191
  %v2259 = vpop.f32.mrf.mxu0
  %v2260 = vadd.f32 %v2187, %v2259
  %v2261 = vpop.f32.mrf.mxu0
  %2262 = vdwg.mxu0
  %vm2263 = vcmask 15360
  %v2265 = vsel %vm2263, %v2260, 0
  %vm2267 = vcmask 1041408
  %v2269 = vsel %vm2267, %v362, 0
  %v2272 = vsel %vm2267, %v363, 0
  %v2275 = vsel %vm2267, %v364, 0
  %v2278 = vsel %vm2267, %v365, 0
  %2280 = vmatprep.subr.mxu0 0.0
  %2281 = vmatpush1.msra.mxu0 0.0
  %2282 = vmatprep.subr.mxu0 0.0
  %2283 = vmatpush1.msra.mxu0 0.0
  %2284 = vmatprep.subr.mxu0 0.0
  %2285 = vmatpush1.msra.mxu0 0.0
  %2286 = vmatprep.subr.mxu0 0.0
  %2287 = vmatpush1.msra.mxu0 0.0
  %2288 = vmatprep.subr.mxu0 0.0
  %2289 = vmatpush1.msra.mxu0 0.0
  %2290 = vmatprep.subr.mxu0 0.0
  %2291 = vmatpush1.msra.mxu0 0.0
  %2292 = vmatprep.subr.mxu0 0.0
  %2293 = vmatpush1.msra.mxu0 0.0
  %2294 = vmatprep.subr.mxu0 0.0
  %2295 = vmatpush1.msra.mxu0 0.0
  %2296 = vmatprep.subr.mxu0 0.0
  %2297 = vmatpush1.msra.mxu0 0.0
  %2298 = vmatprep.subr.mxu0 0.0
  %2299 = vmatpush1.msra.mxu0 0.0
  %2300 = vmatprep.subr.mxu0 0.0
  %2301 = vmatpush1.msra.mxu0 0.0
  %2302 = vmatprep.subr.mxu0 0.0
  %2303 = vmatpush1.msra.mxu0 0.0
  %2304 = vmatprep.subr.mxu0 0.0
  %2305 = vmatpush1.msra.mxu0 0.0
  %2306 = vmatprep.subr.mxu0 0.0
  %2307 = vmatpush1.msra.mxu0 0.0
  %2308 = vmatprep.subr.mxu0 0.0
  %2309 = vmatpush1.msra.mxu0 0.0
  %2310 = vmatprep.subr.mxu0 %v2272
  %2311 = vmatpush1.msra.mxu0 %v2269
  %2312 = vmatprep.subr.mxu0 0.0
  %2313 = vmatpush2.msra.mxu0 0.0
  %2314 = vmatprep.subr.mxu0 0.0
  %2315 = vmatpush2.msra.mxu0 0.0
  %2316 = vmatprep.subr.mxu0 0.0
  %2317 = vmatpush2.msra.mxu0 0.0
  %2318 = vmatprep.subr.mxu0 0.0
  %2319 = vmatpush2.msra.mxu0 0.0
  %2320 = vmatprep.subr.mxu0 0.0
  %2321 = vmatpush2.msra.mxu0 0.0
  %2322 = vmatprep.subr.mxu0 0.0
  %2323 = vmatpush2.msra.mxu0 0.0
  %2324 = vmatprep.subr.mxu0 0.0
  %2325 = vmatpush2.msra.mxu0 0.0
  %2326 = vmatprep.subr.mxu0 0.0
  %2327 = vmatpush2.msra.mxu0 0.0
  %2328 = vmatprep.subr.mxu0 0.0
  %2329 = vmatpush2.msra.mxu0 0.0
  %2330 = vmatprep.subr.mxu0 0.0
  %2331 = vmatpush2.msra.mxu0 0.0
  %2332 = vmatprep.subr.mxu0 0.0
  %2333 = vmatpush2.msra.mxu0 0.0
  %2334 = vmatprep.subr.mxu0 0.0
  %2335 = vmatpush2.msra.mxu0 0.0
  %2336 = vmatprep.subr.mxu0 0.0
  %2337 = vmatpush2.msra.mxu0 0.0
  %2338 = vmatprep.subr.mxu0 0.0
  %2339 = vmatpush2.msra.mxu0 0.0
  %2340 = vmatprep.subr.mxu0 0.0
  %2341 = vmatpush2.msra.mxu0 0.0
  %2342 = vmatprep.subr.mxu0 0.0
  %2343 = vmatpush2.msra.mxu0 0.0
  %2344 = vmatprep.mubr.f32.mxu0 0.0
  %2345 = vmatmul.mubr.f32.gmra.mxu0 %v2265
  %v2346 = vpop.f32.mrf.mxu0
  %v2347 = vadd.f32 0.0, %v2346
  %v2348 = vpop.f32.mrf.mxu0
  %v2349 = vadd.f32 0.0, %v2348
  %2350 = vdwg.mxu0
  %2351 = vmatprep.subr.mxu0 0.0
  %2352 = vmatpush1.msra.mxu0 0.0
  %2353 = vmatprep.subr.mxu0 0.0
  %2354 = vmatpush1.msra.mxu0 0.0
  %2355 = vmatprep.subr.mxu0 0.0
  %2356 = vmatpush1.msra.mxu0 0.0
  %2357 = vmatprep.subr.mxu0 0.0
  %2358 = vmatpush1.msra.mxu0 0.0
  %2359 = vmatprep.subr.mxu0 0.0
  %2360 = vmatpush1.msra.mxu0 0.0
  %2361 = vmatprep.subr.mxu0 0.0
  %2362 = vmatpush1.msra.mxu0 0.0
  %2363 = vmatprep.subr.mxu0 0.0
  %2364 = vmatpush1.msra.mxu0 0.0
  %2365 = vmatprep.subr.mxu0 0.0
  %2366 = vmatpush1.msra.mxu0 0.0
  %2367 = vmatprep.subr.mxu0 0.0
  %2368 = vmatpush1.msra.mxu0 0.0
  %2369 = vmatprep.subr.mxu0 0.0
  %2370 = vmatpush1.msra.mxu0 0.0
  %2371 = vmatprep.subr.mxu0 0.0
  %2372 = vmatpush1.msra.mxu0 0.0
  %2373 = vmatprep.subr.mxu0 0.0
  %2374 = vmatpush1.msra.mxu0 0.0
  %2375 = vmatprep.subr.mxu0 0.0
  %2376 = vmatpush1.msra.mxu0 0.0
  %2377 = vmatprep.subr.mxu0 0.0
  %2378 = vmatpush1.msra.mxu0 0.0
  %2379 = vmatprep.subr.mxu0 0.0
  %2380 = vmatpush1.msra.mxu0 0.0
  %2381 = vmatprep.subr.mxu0 %v2278
  %2382 = vmatpush1.msra.mxu0 %v2275
  %2383 = vmatprep.subr.mxu0 0.0
  %2384 = vmatpush2.msra.mxu0 0.0
  %2385 = vmatprep.subr.mxu0 0.0
  %2386 = vmatpush2.msra.mxu0 0.0
  %2387 = vmatprep.subr.mxu0 0.0
  %2388 = vmatpush2.msra.mxu0 0.0
  %2389 = vmatprep.subr.mxu0 0.0
  %2390 = vmatpush2.msra.mxu0 0.0
  %2391 = vmatprep.subr.mxu0 0.0
  %2392 = vmatpush2.msra.mxu0 0.0
  %2393 = vmatprep.subr.mxu0 0.0
  %2394 = vmatpush2.msra.mxu0 0.0
  %2395 = vmatprep.subr.mxu0 0.0
  %2396 = vmatpush2.msra.mxu0 0.0
  %2397 = vmatprep.subr.mxu0 0.0
  %2398 = vmatpush2.msra.mxu0 0.0
  %2399 = vmatprep.subr.mxu0 0.0
  %2400 = vmatpush2.msra.mxu0 0.0
  %2401 = vmatprep.subr.mxu0 0.0
  %2402 = vmatpush2.msra.mxu0 0.0
  %2403 = vmatprep.subr.mxu0 0.0
  %2404 = vmatpush2.msra.mxu0 0.0
  %2405 = vmatprep.subr.mxu0 0.0
  %2406 = vmatpush2.msra.mxu0 0.0
  %2407 = vmatprep.subr.mxu0 0.0
  %2408 = vmatpush2.msra.mxu0 0.0
  %2409 = vmatprep.subr.mxu0 0.0
  %2410 = vmatpush2.msra.mxu0 0.0
  %2411 = vmatprep.subr.mxu0 0.0
  %2412 = vmatpush2.msra.mxu0 0.0
  %2413 = vmatprep.subr.mxu0 0.0
  %2414 = vmatpush2.msra.mxu0 0.0
  %2415 = vmatprep.mubr.f32.mxu0 0.0
  %2416 = vmatmul.mubr.f32.gmra.mxu0 %v2265
  %v2417 = vpop.f32.mrf.mxu0
  %v2418 = vadd.f32 0.0, %v2417
  %v2419 = vpop.f32.mrf.mxu0
  %v2420 = vadd.f32 0.0, %v2419
  %2421 = vdwg.mxu0
  %v2423 = vlaneseq
  %v2424 = vshrl.u32 %v2423, 7
  %v2425 = vsub.s32 0, %v2424
  %v2426 = vrot.slane %v232, %v2425
  %v2427 = vlaneseq
  %v2428 = vshrl.u32 %v2427, 7
  %v2429 = vsub.s32 1, %v2428
  %v2430 = vrot.slane %v232, %v2429
  %v2431 = vlaneseq
  %v2432 = vshrl.u32 %v2431, 7
  %v2433 = vsub.s32 2, %v2432
  %v2434 = vrot.slane %v232, %v2433
  %v2435 = vlaneseq
  %v2436 = vshrl.u32 %v2435, 7
  %v2437 = vsub.s32 3, %v2436
  %v2438 = vrot.slane %v232, %v2437
  %2443 = vrot.lane.b32.xlu0 %v2426, 17
  %v2444 = vpop.permute.xlu0 %2443
  %2445 = vrot.lane.b32.xlu0 %v2430, 17
  %v2446 = vpop.permute.xlu0 %2445
  %2447 = vrot.lane.b32.xlu0 %v2434, 17
  %v2448 = vpop.permute.xlu0 %2447
  %2449 = vrot.lane.b32.xlu0 %v2438, 17
  %v2450 = vpop.permute.xlu0 %2449
  %vm2451 = vcmp.lt.s32.totalorder %v236, 17
  %v2452 = vsel %vm2451, %v2448, %v2450
  %v2453 = vsel %vm2451, %v2446, %v2448
  %v2454 = vsel %vm2451, %v2444, %v2446
  %v2455 = vsel %vm2451, %v2450, %v2444
  %v2456 = vmul.f32 %v2455, %v272
  %v2457 = vmul.f32 %v2454, %v273
  %v2458 = vmul.f32 %v2453, %v274
  %v2459 = vmul.f32 %v2452, %v275
  %2460 = vrot.lane.b32.xlu0 %v2426, 16
  %v2461 = vpop.permute.xlu0 %2460
  %2462 = vrot.lane.b32.xlu0 %v2430, 16
  %v2463 = vpop.permute.xlu0 %2462
  %2464 = vrot.lane.b32.xlu0 %v2434, 16
  %v2465 = vpop.permute.xlu0 %2464
  %2466 = vrot.lane.b32.xlu0 %v2438, 16
  %v2467 = vpop.permute.xlu0 %2466
  %vm2468 = vcmp.lt.s32.totalorder %v236, 16
  %v2469 = vsel %vm2468, %v2465, %v2467
  %v2470 = vsel %vm2468, %v2463, %v2465
  %v2471 = vsel %vm2468, %v2461, %v2463
  %v2472 = vsel %vm2468, %v2467, %v2461
  %v2473 = vmul.f32 %v2472, %v280
  %v2474 = vmul.f32 %v2471, %v281
  %v2475 = vmul.f32 %v2470, %v282
  %v2476 = vmul.f32 %v2469, %v283
  %2477 = vrot.lane.b32.xlu0 %v2426, 15
  %v2478 = vpop.permute.xlu0 %2477
  %2479 = vrot.lane.b32.xlu0 %v2430, 15
  %v2480 = vpop.permute.xlu0 %2479
  %2481 = vrot.lane.b32.xlu0 %v2434, 15
  %v2482 = vpop.permute.xlu0 %2481
  %2483 = vrot.lane.b32.xlu0 %v2438, 15
  %v2484 = vpop.permute.xlu0 %2483
  %vm2485 = vcmp.lt.s32.totalorder %v236, 15
  %v2486 = vsel %vm2485, %v2482, %v2484
  %v2487 = vsel %vm2485, %v2480, %v2482
  %v2488 = vsel %vm2485, %v2478, %v2480
  %v2489 = vsel %vm2485, %v2484, %v2478
  %v2490 = vmul.f32 %v2489, %v296
  %v2491 = vmul.f32 %v2488, %v297
  %v2492 = vmul.f32 %v2487, %v298
  %v2493 = vmul.f32 %v2486, %v299
  %2494 = vrot.lane.b32.xlu0 %v2426, 1
  %v2495 = vpop.permute.xlu0 %2494
  %2496 = vrot.lane.b32.xlu0 %v2430, 1
  %v2497 = vpop.permute.xlu0 %2496
  %2498 = vrot.lane.b32.xlu0 %v2434, 1
  %v2499 = vpop.permute.xlu0 %2498
  %2500 = vrot.lane.b32.xlu0 %v2438, 1
  %v2501 = vpop.permute.xlu0 %2500
  %vm2502 = vcmp.lt.s32.totalorder %v236, 1
  %v2503 = vsel %vm2502, %v2499, %v2501
  %v2504 = vsel %vm2502, %v2497, %v2499
  %v2505 = vsel %vm2502, %v2495, %v2497
  %v2506 = vsel %vm2502, %v2501, %v2495
  %v2507 = vmul.f32 %v2506, %v304
  %v2508 = vmul.f32 %v2505, %v305
  %v2509 = vmul.f32 %v2504, %v306
  %v2510 = vmul.f32 %v2503, %v307
  %2511 = vrot.lane.b32.xlu0 %v2426, 127
  %v2512 = vpop.permute.xlu0 %2511
  %2513 = vrot.lane.b32.xlu0 %v2430, 127
  %v2514 = vpop.permute.xlu0 %2513
  %2515 = vrot.lane.b32.xlu0 %v2434, 127
  %v2516 = vpop.permute.xlu0 %2515
  %2517 = vrot.lane.b32.xlu0 %v2438, 127
  %v2518 = vpop.permute.xlu0 %2517
  %vm2519 = vcmp.lt.s32.totalorder %v236, 127
  %v2520 = vsel %vm2519, %v2516, %v2518
  %v2521 = vsel %vm2519, %v2514, %v2516
  %v2522 = vsel %vm2519, %v2512, %v2514
  %v2523 = vsel %vm2519, %v2518, %v2512
  %v2524 = vmul.f32 %v2522, %v312
  %v2525 = vmul.f32 %v2521, %v313
  %v2526 = vmul.f32 %v2520, %v314
  %v2527 = vmul.f32 %v2523, %v315
  %2528 = vrot.lane.b32.xlu0 %v2426, 113
  %v2529 = vpop.permute.xlu0 %2528
  %2530 = vrot.lane.b32.xlu0 %v2430, 113
  %v2531 = vpop.permute.xlu0 %2530
  %2532 = vrot.lane.b32.xlu0 %v2434, 113
  %v2533 = vpop.permute.xlu0 %2532
  %2534 = vrot.lane.b32.xlu0 %v2438, 113
  %v2535 = vpop.permute.xlu0 %2534
  %vm2536 = vcmp.lt.s32.totalorder %v236, 113
  %v2537 = vsel %vm2536, %v2533, %v2535
  %v2538 = vsel %vm2536, %v2531, %v2533
  %v2539 = vsel %vm2536, %v2529, %v2531
  %v2540 = vsel %vm2536, %v2535, %v2529
  %v2541 = vmul.f32 %v2539, %v328
  %v2542 = vmul.f32 %v2538, %v329
  %v2543 = vmul.f32 %v2537, %v330
  %v2544 = vmul.f32 %v2540, %v331
  %2545 = vrot.lane.b32.xlu0 %v2426, 112
  %v2546 = vpop.permute.xlu0 %2545
  %2547 = vrot.lane.b32.xlu0 %v2430, 112
  %v2548 = vpop.permute.xlu0 %2547
  %2549 = vrot.lane.b32.xlu0 %v2434, 112
  %v2550 = vpop.permute.xlu0 %2549
  %2551 = vrot.lane.b32.xlu0 %v2438, 112
  %v2552 = vpop.permute.xlu0 %2551
  %vm2553 = vcmp.lt.s32.totalorder %v236, 112
  %v2554 = vsel %vm2553, %v2550, %v2552
  %v2555 = vsel %vm2553, %v2548, %v2550
  %v2556 = vsel %vm2553, %v2546, %v2548
  %v2557 = vsel %vm2553, %v2552, %v2546
  %v2558 = vmul.f32 %v2556, %v336
  %v2559 = vmul.f32 %v2555, %v337
  %v2560 = vmul.f32 %v2554, %v338
  %v2561 = vmul.f32 %v2557, %v339
  %2562 = vrot.lane.b32.xlu0 %v2426, 111
  %v2563 = vpop.permute.xlu0 %2562
  %2564 = vrot.lane.b32.xlu0 %v2430, 111
  %v2565 = vpop.permute.xlu0 %2564
  %2566 = vrot.lane.b32.xlu0 %v2434, 111
  %v2567 = vpop.permute.xlu0 %2566
  %2568 = vrot.lane.b32.xlu0 %v2438, 111
  %v2569 = vpop.permute.xlu0 %2568
  %vm2570 = vcmp.lt.s32.totalorder %v236, 111
  %v2571 = vsel %vm2570, %v2567, %v2569
  %v2572 = vsel %vm2570, %v2565, %v2567
  %v2573 = vsel %vm2570, %v2563, %v2565
  %v2574 = vsel %vm2570, %v2569, %v2563
  %v2575 = vmul.f32 %v2573, %v348
  %v2576 = vmul.f32 %v2572, %v349
  %v2577 = vmul.f32 %v2571, %v350
  %v2578 = vmul.f32 %v2574, %v351
  %v2579 = vld [vmem:[%s9] sm:$0xff]
  %2581 = vset.pattern.permute.xlu0 0
  %2582 = vperm.xlu0 %2581, %v2579
  %v2583 = vpop.permute.xlu0 %2582
  %v2585 = vlaneseq
  %v2586 = vshrl.u32 %v2585, 7
  %v2587 = vsub.s32 0, %v2586
  %v2588 = vrot.slane %v2456, %v2587
  %v2589 = vlaneseq
  %v2590 = vshrl.u32 %v2589, 7
  %v2591 = vsub.s32 0, %v2590
  %v2592 = vrot.slane %v2457, %v2591
  %v2593 = vlaneseq
  %v2594 = vshrl.u32 %v2593, 7
  %v2595 = vsub.s32 0, %v2594
  %v2596 = vrot.slane %v2458, %v2595
  %v2597 = vlaneseq
  %v2598 = vshrl.u32 %v2597, 7
  %v2599 = vsub.s32 0, %v2598
  %v2600 = vrot.slane %v2459, %v2599
  %v2601 = vmul.f32 %v2583, %v2588
  %v2602 = vmul.f32 %v2583, %v2592
  %v2603 = vmul.f32 %v2583, %v2596
  %v2604 = vmul.f32 %v2583, %v2600
  %2606 = vset.pattern.permute.xlu0 0
  %2607 = vperm.xlu0 %2606, %v2180
  %v2608 = vpop.permute.xlu0 %2607
  %v2610 = vadd.f32 %v2608, %v2601
  %v2611 = vadd.f32 %v2608, %v2602
  %v2612 = vadd.f32 %v2608, %v2603
  %v2613 = vadd.f32 %v2608, %v2604
  %2614 = vset.pattern.permute.xlu0 1
  %2615 = vperm.xlu0 %2614, %v2579
  %v2616 = vpop.permute.xlu0 %2615
  %v2618 = vlaneseq
  %v2619 = vshrl.u32 %v2618, 7
  %v2620 = vsub.s32 0, %v2619
  %v2621 = vrot.slane %v2473, %v2620
  %v2622 = vlaneseq
  %v2623 = vshrl.u32 %v2622, 7
  %v2624 = vsub.s32 0, %v2623
  %v2625 = vrot.slane %v2474, %v2624
  %v2626 = vlaneseq
  %v2627 = vshrl.u32 %v2626, 7
  %v2628 = vsub.s32 0, %v2627
  %v2629 = vrot.slane %v2475, %v2628
  %v2630 = vlaneseq
  %v2631 = vshrl.u32 %v2630, 7
  %v2632 = vsub.s32 0, %v2631
  %v2633 = vrot.slane %v2476, %v2632
  %v2634 = vmul.f32 %v2616, %v2621
  %v2635 = vmul.f32 %v2616, %v2625
  %v2636 = vmul.f32 %v2616, %v2629
  %v2637 = vmul.f32 %v2616, %v2633
  %v2638 = vadd.f32 %v2610, %v2634
  %v2639 = vadd.f32 %v2611, %v2635
  %v2640 = vadd.f32 %v2612, %v2636
  %v2641 = vadd.f32 %v2613, %v2637
  %2642 = vset.pattern.permute.xlu0 2
  %2643 = vperm.xlu0 %2642, %v2579
  %v2644 = vpop.permute.xlu0 %2643
  %v2646 = vlaneseq
  %v2647 = vshrl.u32 %v2646, 7
  %v2648 = vsub.s32 0, %v2647
  %v2649 = vrot.slane %v2490, %v2648
  %v2650 = vlaneseq
  %v2651 = vshrl.u32 %v2650, 7
  %v2652 = vsub.s32 0, %v2651
  %v2653 = vrot.slane %v2491, %v2652
  %v2654 = vlaneseq
  %v2655 = vshrl.u32 %v2654, 7
  %v2656 = vsub.s32 0, %v2655
  %v2657 = vrot.slane %v2492, %v2656
  %v2658 = vlaneseq
  %v2659 = vshrl.u32 %v2658, 7
  %v2660 = vsub.s32 0, %v2659
  %v2661 = vrot.slane %v2493, %v2660
  %v2662 = vmul.f32 %v2644, %v2649
  %v2663 = vmul.f32 %v2644, %v2653
  %v2664 = vmul.f32 %v2644, %v2657
  %v2665 = vmul.f32 %v2644, %v2661
  %v2666 = vadd.f32 %v2638, %v2662
  %v2667 = vadd.f32 %v2639, %v2663
  %v2668 = vadd.f32 %v2640, %v2664
  %v2669 = vadd.f32 %v2641, %v2665
  %2670 = vset.pattern.permute.xlu0 3
  %2671 = vperm.xlu0 %2670, %v2579
  %v2672 = vpop.permute.xlu0 %2671
  %v2674 = vlaneseq
  %v2675 = vshrl.u32 %v2674, 7
  %v2676 = vsub.s32 0, %v2675
  %v2677 = vrot.slane %v2507, %v2676
  %v2678 = vlaneseq
  %v2679 = vshrl.u32 %v2678, 7
  %v2680 = vsub.s32 0, %v2679
  %v2681 = vrot.slane %v2508, %v2680
  %v2682 = vlaneseq
  %v2683 = vshrl.u32 %v2682, 7
  %v2684 = vsub.s32 0, %v2683
  %v2685 = vrot.slane %v2509, %v2684
  %v2686 = vlaneseq
  %v2687 = vshrl.u32 %v2686, 7
  %v2688 = vsub.s32 0, %v2687
  %v2689 = vrot.slane %v2510, %v2688
  %v2690 = vmul.f32 %v2672, %v2677
  %v2691 = vmul.f32 %v2672, %v2681
  %v2692 = vmul.f32 %v2672, %v2685
  %v2693 = vmul.f32 %v2672, %v2689
  %v2694 = vadd.f32 %v2666, %v2690
  %v2695 = vadd.f32 %v2667, %v2691
  %v2696 = vadd.f32 %v2668, %v2692
  %v2697 = vadd.f32 %v2669, %v2693
  %2698 = vset.pattern.permute.xlu0 4
  %2699 = vperm.xlu0 %2698, %v2579
  %v2700 = vpop.permute.xlu0 %2699
  %v2702 = vmul.f32 %v2700, %v2426
  %v2703 = vmul.f32 %v2700, %v2430
  %v2704 = vmul.f32 %v2700, %v2434
  %v2705 = vmul.f32 %v2700, %v2438
  %v2706 = vadd.f32 %v2694, %v2702
  %v2707 = vadd.f32 %v2695, %v2703
  %v2708 = vadd.f32 %v2696, %v2704
  %v2709 = vadd.f32 %v2697, %v2705
  %2710 = vset.pattern.permute.xlu0 5
  %2711 = vperm.xlu0 %2710, %v2579
  %v2712 = vpop.permute.xlu0 %2711
  %v2714 = vlaneseq
  %v2715 = vshrl.u32 %v2714, 7
  %v2716 = vsub.s32 0, %v2715
  %v2717 = vrot.slane %v2524, %v2716
  %v2718 = vlaneseq
  %v2719 = vshrl.u32 %v2718, 7
  %v2720 = vsub.s32 0, %v2719
  %v2721 = vrot.slane %v2525, %v2720
  %v2722 = vlaneseq
  %v2723 = vshrl.u32 %v2722, 7
  %v2724 = vsub.s32 0, %v2723
  %v2725 = vrot.slane %v2526, %v2724
  %v2726 = vlaneseq
  %v2727 = vshrl.u32 %v2726, 7
  %v2728 = vsub.s32 0, %v2727
  %v2729 = vrot.slane %v2527, %v2728
  %v2730 = vmul.f32 %v2712, %v2717
  %v2731 = vmul.f32 %v2712, %v2721
  %v2732 = vmul.f32 %v2712, %v2725
  %v2733 = vmul.f32 %v2712, %v2729
  %v2734 = vadd.f32 %v2706, %v2730
  %v2735 = vadd.f32 %v2707, %v2731
  %v2736 = vadd.f32 %v2708, %v2732
  %v2737 = vadd.f32 %v2709, %v2733
  %2738 = vset.pattern.permute.xlu0 6
  %2739 = vperm.xlu0 %2738, %v2579
  %v2740 = vpop.permute.xlu0 %2739
  %v2742 = vlaneseq
  %v2743 = vshrl.u32 %v2742, 7
  %v2744 = vsub.s32 0, %v2743
  %v2745 = vrot.slane %v2541, %v2744
  %v2746 = vlaneseq
  %v2747 = vshrl.u32 %v2746, 7
  %v2748 = vsub.s32 0, %v2747
  %v2749 = vrot.slane %v2542, %v2748
  %v2750 = vlaneseq
  %v2751 = vshrl.u32 %v2750, 7
  %v2752 = vsub.s32 0, %v2751
  %v2753 = vrot.slane %v2543, %v2752
  %v2754 = vlaneseq
  %v2755 = vshrl.u32 %v2754, 7
  %v2756 = vsub.s32 0, %v2755
  %v2757 = vrot.slane %v2544, %v2756
  %v2758 = vmul.f32 %v2740, %v2745
  %v2759 = vmul.f32 %v2740, %v2749
  %v2760 = vmul.f32 %v2740, %v2753
  %v2761 = vmul.f32 %v2740, %v2757
  %v2762 = vadd.f32 %v2734, %v2758
  %v2763 = vadd.f32 %v2735, %v2759
  %v2764 = vadd.f32 %v2736, %v2760
  %v2765 = vadd.f32 %v2737, %v2761
  %2766 = vset.pattern.permute.xlu0 7
  %2767 = vperm.xlu0 %2766, %v2579
  %v2768 = vpop.permute.xlu0 %2767
  %v2770 = vlaneseq
  %v2771 = vshrl.u32 %v2770, 7
  %v2772 = vsub.s32 0, %v2771
  %v2773 = vrot.slane %v2558, %v2772
  %v2774 = vlaneseq
  %v2775 = vshrl.u32 %v2774, 7
  %v2776 = vsub.s32 0, %v2775
  %v2777 = vrot.slane %v2559, %v2776
  %v2778 = vlaneseq
  %v2779 = vshrl.u32 %v2778, 7
  %v2780 = vsub.s32 0, %v2779
  %v2781 = vrot.slane %v2560, %v2780
  %v2782 = vlaneseq
  %v2783 = vshrl.u32 %v2782, 7
  %v2784 = vsub.s32 0, %v2783
  %v2785 = vrot.slane %v2561, %v2784
  %v2786 = vmul.f32 %v2768, %v2773
  %v2787 = vmul.f32 %v2768, %v2777
  %v2788 = vmul.f32 %v2768, %v2781
  %v2789 = vmul.f32 %v2768, %v2785
  %v2790 = vadd.f32 %v2762, %v2786
  %v2791 = vadd.f32 %v2763, %v2787
  %v2792 = vadd.f32 %v2764, %v2788
  %v2793 = vadd.f32 %v2765, %v2789
  %2794 = vset.pattern.permute.xlu0 8
  %2795 = vperm.xlu0 %2794, %v2579
  %v2796 = vpop.permute.xlu0 %2795
  %v2798 = vlaneseq
  %v2799 = vshrl.u32 %v2798, 7
  %v2800 = vsub.s32 0, %v2799
  %v2801 = vrot.slane %v2575, %v2800
  %v2802 = vlaneseq
  %v2803 = vshrl.u32 %v2802, 7
  %v2804 = vsub.s32 0, %v2803
  %v2805 = vrot.slane %v2576, %v2804
  %v2806 = vlaneseq
  %v2807 = vshrl.u32 %v2806, 7
  %v2808 = vsub.s32 0, %v2807
  %v2809 = vrot.slane %v2577, %v2808
  %v2810 = vlaneseq
  %v2811 = vshrl.u32 %v2810, 7
  %v2812 = vsub.s32 0, %v2811
  %v2813 = vrot.slane %v2578, %v2812
  %v2814 = vmul.f32 %v2796, %v2801
  %v2815 = vmul.f32 %v2796, %v2805
  %v2816 = vmul.f32 %v2796, %v2809
  %v2817 = vmul.f32 %v2796, %v2813
  %v2818 = vadd.f32 %v2790, %v2814
  %v2819 = vadd.f32 %v2791, %v2815
  %v2820 = vadd.f32 %v2792, %v2816
  %v2821 = vadd.f32 %v2793, %v2817
  %v2822 = vxor.u32 %v2818, 2147483648
  %v2823 = vxor.u32 %v2819, 2147483648
  %v2824 = vxor.u32 %v2820, 2147483648
  %v2825 = vxor.u32 %v2821, 2147483648
  %v2826 = vmul.f32 %v2822, 1.442695
  %v2827 = vpow.pop %v2826
  %v2828 = vmul.f32 %v2823, 1.442695
  %v2829 = vpow.pop %v2828
  %v2830 = vmul.f32 %v2824, 1.442695
  %v2831 = vpow.pop %v2830
  %v2832 = vmul.f32 %v2825, 1.442695
  %v2833 = vpow.pop %v2832
  %v2834 = vadd.f32 %v2827, 1.0
  %v2835 = vadd.f32 %v2829, 1.0
  %v2836 = vadd.f32 %v2831, 1.0
  %v2837 = vadd.f32 %v2833, 1.0
  %v2838 = vrcp.pop %v2834
  %v2839 = vmul.f32 1.0, %v2838
  %v2840 = vrcp.pop %v2835
  %v2841 = vmul.f32 1.0, %v2840
  %v2842 = vrcp.pop %v2836
  %v2843 = vmul.f32 1.0, %v2842
  %v2844 = vrcp.pop %v2837
  %v2845 = vmul.f32 1.0, %v2844
  %v2846 = vmul.f32 %v2818, %v2839
  %v2847 = vmul.f32 %v2819, %v2841
  %v2848 = vmul.f32 %v2820, %v2843
  %v2849 = vmul.f32 %v2821, %v2845
  %v2850 = vadd.f32 %v2846, %v2347
  %v2851 = vadd.f32 %v2847, %v2349
  %v2852 = vadd.f32 %v2848, %v2418
  %v2853 = vadd.f32 %v2849, %v2420
  %v2854 = vxor.u32 %v2850, 2147483648
  %v2855 = vxor.u32 %v2851, 2147483648
  %v2856 = vxor.u32 %v2852, 2147483648
  %v2857 = vxor.u32 %v2853, 2147483648
  %v2858 = vmul.f32 %v2854, 1.442695
  %v2859 = vpow.pop %v2858
  %v2860 = vmul.f32 %v2855, 1.442695
  %v2861 = vpow.pop %v2860
  %v2862 = vmul.f32 %v2856, 1.442695
  %v2863 = vpow.pop %v2862
  %v2864 = vmul.f32 %v2857, 1.442695
  %v2865 = vpow.pop %v2864
  %v2866 = vadd.f32 %v2859, 1.0
  %v2867 = vadd.f32 %v2861, 1.0
  %v2868 = vadd.f32 %v2863, 1.0
  %v2869 = vadd.f32 %v2865, 1.0
  %v2870 = vrcp.pop %v2866
  %v2871 = vmul.f32 1.0, %v2870
  %v2872 = vrcp.pop %v2867
  %v2873 = vmul.f32 1.0, %v2872
  %v2874 = vrcp.pop %v2868
  %v2875 = vmul.f32 1.0, %v2874
  %v2876 = vrcp.pop %v2869
  %v2877 = vmul.f32 1.0, %v2876
  %v2878 = vmul.f32 %v2850, %v2871
  %v2879 = vmul.f32 %v2851, %v2873
  %v2880 = vmul.f32 %v2852, %v2875
  %v2881 = vmul.f32 %v2853, %v2877
  %2882 = vrot.lane.b32.xlu0 %v2878, 17
  %v2883 = vpop.permute.xlu0 %2882
  %2884 = vrot.lane.b32.xlu0 %v2879, 17
  %v2885 = vpop.permute.xlu0 %2884
  %2886 = vrot.lane.b32.xlu0 %v2880, 17
  %v2887 = vpop.permute.xlu0 %2886
  %2888 = vrot.lane.b32.xlu0 %v2881, 17
  %v2889 = vpop.permute.xlu0 %2888
  %v2890 = vsel %vm2451, %v2887, %v2889
  %v2891 = vsel %vm2451, %v2885, %v2887
  %v2892 = vsel %vm2451, %v2883, %v2885
  %v2893 = vsel %vm2451, %v2889, %v2883
  %v2894 = vmul.f32 %v2893, %v272
  %v2895 = vmul.f32 %v2892, %v273
  %v2896 = vmul.f32 %v2891, %v274
  %v2897 = vmul.f32 %v2890, %v275
  %2898 = vrot.lane.b32.xlu0 %v2878, 16
  %v2899 = vpop.permute.xlu0 %2898
  %2900 = vrot.lane.b32.xlu0 %v2879, 16
  %v2901 = vpop.permute.xlu0 %2900
  %2902 = vrot.lane.b32.xlu0 %v2880, 16
  %v2903 = vpop.permute.xlu0 %2902
  %2904 = vrot.lane.b32.xlu0 %v2881, 16
  %v2905 = vpop.permute.xlu0 %2904
  %v2906 = vsel %vm2468, %v2903, %v2905
  %v2907 = vsel %vm2468, %v2901, %v2903
  %v2908 = vsel %vm2468, %v2899, %v2901
  %v2909 = vsel %vm2468, %v2905, %v2899
  %v2910 = vmul.f32 %v2909, %v280
  %v2911 = vmul.f32 %v2908, %v281
  %v2912 = vmul.f32 %v2907, %v282
  %v2913 = vmul.f32 %v2906, %v283
  %2914 = vrot.lane.b32.xlu0 %v2878, 15
  %v2915 = vpop.permute.xlu0 %2914
  %2916 = vrot.lane.b32.xlu0 %v2879, 15
  %v2917 = vpop.permute.xlu0 %2916
  %2918 = vrot.lane.b32.xlu0 %v2880, 15
  %v2919 = vpop.permute.xlu0 %2918
  %2920 = vrot.lane.b32.xlu0 %v2881, 15
  %v2921 = vpop.permute.xlu0 %2920
  %v2922 = vsel %vm2485, %v2919, %v2921
  %v2923 = vsel %vm2485, %v2917, %v2919
  %v2924 = vsel %vm2485, %v2915, %v2917
  %v2925 = vsel %vm2485, %v2921, %v2915
  %v2926 = vmul.f32 %v2925, %v296
  %v2927 = vmul.f32 %v2924, %v297
  %v2928 = vmul.f32 %v2923, %v298
  %v2929 = vmul.f32 %v2922, %v299
  %2930 = vrot.lane.b32.xlu0 %v2878, 1
  %v2931 = vpop.permute.xlu0 %2930
  %2932 = vrot.lane.b32.xlu0 %v2879, 1
  %v2933 = vpop.permute.xlu0 %2932
  %2934 = vrot.lane.b32.xlu0 %v2880, 1
  %v2935 = vpop.permute.xlu0 %2934
  %2936 = vrot.lane.b32.xlu0 %v2881, 1
  %v2937 = vpop.permute.xlu0 %2936
  %v2938 = vsel %vm2502, %v2935, %v2937
  %v2939 = vsel %vm2502, %v2933, %v2935
  %v2940 = vsel %vm2502, %v2931, %v2933
  %v2941 = vsel %vm2502, %v2937, %v2931
  %v2942 = vmul.f32 %v2941, %v304
  %v2943 = vmul.f32 %v2940, %v305
  %v2944 = vmul.f32 %v2939, %v306
  %v2945 = vmul.f32 %v2938, %v307
  %2946 = vrot.lane.b32.xlu0 %v2878, 127
  %v2947 = vpop.permute.xlu0 %2946
  %2948 = vrot.lane.b32.xlu0 %v2879, 127
  %v2949 = vpop.permute.xlu0 %2948
  %2950 = vrot.lane.b32.xlu0 %v2880, 127
  %v2951 = vpop.permute.xlu0 %2950
  %2952 = vrot.lane.b32.xlu0 %v2881, 127
  %v2953 = vpop.permute.xlu0 %2952
  %v2954 = vsel %vm2519, %v2951, %v2953
  %v2955 = vsel %vm2519, %v2949, %v2951
  %v2956 = vsel %vm2519, %v2947, %v2949
  %v2957 = vsel %vm2519, %v2953, %v2947
  %v2958 = vmul.f32 %v2956, %v312
  %v2959 = vmul.f32 %v2955, %v313
  %v2960 = vmul.f32 %v2954, %v314
  %v2961 = vmul.f32 %v2957, %v315
  %2962 = vrot.lane.b32.xlu0 %v2878, 113
  %v2963 = vpop.permute.xlu0 %2962
  %2964 = vrot.lane.b32.xlu0 %v2879, 113
  %v2965 = vpop.permute.xlu0 %2964
  %2966 = vrot.lane.b32.xlu0 %v2880, 113
  %v2967 = vpop.permute.xlu0 %2966
  %2968 = vrot.lane.b32.xlu0 %v2881, 113
  %v2969 = vpop.permute.xlu0 %2968
  %v2970 = vsel %vm2536, %v2967, %v2969
  %v2971 = vsel %vm2536, %v2965, %v2967
  %v2972 = vsel %vm2536, %v2963, %v2965
  %v2973 = vsel %vm2536, %v2969, %v2963
  %v2974 = vmul.f32 %v2972, %v328
  %v2975 = vmul.f32 %v2971, %v329
  %v2976 = vmul.f32 %v2970, %v330
  %v2977 = vmul.f32 %v2973, %v331
  %2978 = vrot.lane.b32.xlu0 %v2878, 112
  %v2979 = vpop.permute.xlu0 %2978
  %2980 = vrot.lane.b32.xlu0 %v2879, 112
  %v2981 = vpop.permute.xlu0 %2980
  %2982 = vrot.lane.b32.xlu0 %v2880, 112
  %v2983 = vpop.permute.xlu0 %2982
  %2984 = vrot.lane.b32.xlu0 %v2881, 112
  %v2985 = vpop.permute.xlu0 %2984
  %v2986 = vsel %vm2553, %v2983, %v2985
  %v2987 = vsel %vm2553, %v2981, %v2983
  %v2988 = vsel %vm2553, %v2979, %v2981
  %v2989 = vsel %vm2553, %v2985, %v2979
  %v2990 = vmul.f32 %v2988, %v336
  %v2991 = vmul.f32 %v2987, %v337
  %v2992 = vmul.f32 %v2986, %v338
  %v2993 = vmul.f32 %v2989, %v339
  %2994 = vrot.lane.b32.xlu0 %v2878, 111
  %v2995 = vpop.permute.xlu0 %2994
  %2996 = vrot.lane.b32.xlu0 %v2879, 111
  %v2997 = vpop.permute.xlu0 %2996
  %2998 = vrot.lane.b32.xlu0 %v2880, 111
  %v2999 = vpop.permute.xlu0 %2998
  %3000 = vrot.lane.b32.xlu0 %v2881, 111
  %v3001 = vpop.permute.xlu0 %3000
  %v3002 = vsel %vm2570, %v2999, %v3001
  %v3003 = vsel %vm2570, %v2997, %v2999
  %v3004 = vsel %vm2570, %v2995, %v2997
  %v3005 = vsel %vm2570, %v3001, %v2995
  %v3006 = vmul.f32 %v3004, %v348
  %v3007 = vmul.f32 %v3003, %v349
  %v3008 = vmul.f32 %v3002, %v350
  %v3009 = vmul.f32 %v3005, %v351
  %v3010 = vld [vmem:[%s13] sm:$0xff]
  %3012 = vset.pattern.permute.xlu0 0
  %3013 = vperm.xlu0 %3012, %v2181
  %v3014 = vpop.permute.xlu0 %3013
  %vm3016 = vcmask 588800
  %v3018 = vsel %vm3016, %v3010, 0
  %3020 = vmatprep.subr.mxu0 0.0
  %3021 = vmatpush1.msra.mxu0 0.0
  %3022 = vmatprep.subr.mxu0 0.0
  %3023 = vmatpush1.msra.mxu0 0.0
  %3024 = vmatprep.subr.mxu0 0.0
  %3025 = vmatpush1.msra.mxu0 0.0
  %3026 = vmatprep.subr.mxu0 0.0
  %3027 = vmatpush1.msra.mxu0 0.0
  %3028 = vmatprep.subr.mxu0 0.0
  %3029 = vmatpush1.msra.mxu0 0.0
  %3030 = vmatprep.subr.mxu0 0.0
  %3031 = vmatpush1.msra.mxu0 0.0
  %3032 = vmatprep.subr.mxu0 0.0
  %3033 = vmatpush1.msra.mxu0 0.0
  %3034 = vmatprep.subr.mxu0 %v3007
  %3035 = vmatpush1.msra.mxu0 %v3006
  %3036 = vmatprep.subr.mxu0 %v2991
  %3037 = vmatpush1.msra.mxu0 %v2990
  %3038 = vmatprep.subr.mxu0 %v2975
  %3039 = vmatpush1.msra.mxu0 %v2974
  %3040 = vmatprep.subr.mxu0 %v2959
  %3041 = vmatpush1.msra.mxu0 %v2958
  %3042 = vmatprep.subr.mxu0 %v2879
  %3043 = vmatpush1.msra.mxu0 %v2878
  %3044 = vmatprep.subr.mxu0 %v2943
  %3045 = vmatpush1.msra.mxu0 %v2942
  %3046 = vmatprep.subr.mxu0 %v2927
  %3047 = vmatpush1.msra.mxu0 %v2926
  %3048 = vmatprep.subr.mxu0 %v2911
  %3049 = vmatpush1.msra.mxu0 %v2910
  %3050 = vmatprep.subr.mxu0 %v2895
  %3051 = vmatpush1.msra.mxu0 %v2894
  %3052 = vmatprep.subr.mxu0 0.0
  %3053 = vmatpush2.msra.mxu0 0.0
  %3054 = vmatprep.subr.mxu0 0.0
  %3055 = vmatpush2.msra.mxu0 0.0
  %3056 = vmatprep.subr.mxu0 0.0
  %3057 = vmatpush2.msra.mxu0 0.0
  %3058 = vmatprep.subr.mxu0 0.0
  %3059 = vmatpush2.msra.mxu0 0.0
  %3060 = vmatprep.subr.mxu0 0.0
  %3061 = vmatpush2.msra.mxu0 0.0
  %3062 = vmatprep.subr.mxu0 0.0
  %3063 = vmatpush2.msra.mxu0 0.0
  %3064 = vmatprep.subr.mxu0 0.0
  %3065 = vmatpush2.msra.mxu0 0.0
  %3066 = vmatprep.subr.mxu0 0.0
  %3067 = vmatpush2.msra.mxu0 0.0
  %3068 = vmatprep.subr.mxu0 0.0
  %3069 = vmatpush2.msra.mxu0 0.0
  %3070 = vmatprep.subr.mxu0 0.0
  %3071 = vmatpush2.msra.mxu0 0.0
  %3072 = vmatprep.subr.mxu0 0.0
  %3073 = vmatpush2.msra.mxu0 0.0
  %3074 = vmatprep.subr.mxu0 0.0
  %3075 = vmatpush2.msra.mxu0 0.0
  %3076 = vmatprep.subr.mxu0 0.0
  %3077 = vmatpush2.msra.mxu0 0.0
  %3078 = vmatprep.subr.mxu0 0.0
  %3079 = vmatpush2.msra.mxu0 0.0
  %3080 = vmatprep.subr.mxu0 0.0
  %3081 = vmatpush2.msra.mxu0 0.0
  %3082 = vmatprep.subr.mxu0 0.0
  %3083 = vmatpush2.msra.mxu0 0.0
  %3084 = vmatprep.mubr.f32.mxu0 0.0
  %3085 = vmatmul.mubr.f32.gmra.mxu0 %v3018
  %v3086 = vpop.f32.mrf.mxu0
  %v3087 = vadd.f32 %v3014, %v3086
  %v3088 = vpop.f32.mrf.mxu0
  %v3089 = vadd.f32 %v3014, %v3088
  %3090 = vdwg.mxu0
  %3091 = vmatprep.subr.mxu0 0.0
  %3092 = vmatpush1.msra.mxu0 0.0
  %3093 = vmatprep.subr.mxu0 0.0
  %3094 = vmatpush1.msra.mxu0 0.0
  %3095 = vmatprep.subr.mxu0 0.0
  %3096 = vmatpush1.msra.mxu0 0.0
  %3097 = vmatprep.subr.mxu0 0.0
  %3098 = vmatpush1.msra.mxu0 0.0
  %3099 = vmatprep.subr.mxu0 0.0
  %3100 = vmatpush1.msra.mxu0 0.0
  %3101 = vmatprep.subr.mxu0 0.0
  %3102 = vmatpush1.msra.mxu0 0.0
  %3103 = vmatprep.subr.mxu0 0.0
  %3104 = vmatpush1.msra.mxu0 0.0
  %3105 = vmatprep.subr.mxu0 %v3009
  %3106 = vmatpush1.msra.mxu0 %v3008
  %3107 = vmatprep.subr.mxu0 %v2993
  %3108 = vmatpush1.msra.mxu0 %v2992
  %3109 = vmatprep.subr.mxu0 %v2977
  %3110 = vmatpush1.msra.mxu0 %v2976
  %3111 = vmatprep.subr.mxu0 %v2961
  %3112 = vmatpush1.msra.mxu0 %v2960
  %3113 = vmatprep.subr.mxu0 %v2881
  %3114 = vmatpush1.msra.mxu0 %v2880
  %3115 = vmatprep.subr.mxu0 %v2945
  %3116 = vmatpush1.msra.mxu0 %v2944
  %3117 = vmatprep.subr.mxu0 %v2929
  %3118 = vmatpush1.msra.mxu0 %v2928
  %3119 = vmatprep.subr.mxu0 %v2913
  %3120 = vmatpush1.msra.mxu0 %v2912
  %3121 = vmatprep.subr.mxu0 %v2897
  %3122 = vmatpush1.msra.mxu0 %v2896
  %3123 = vmatprep.subr.mxu0 0.0
  %3124 = vmatpush2.msra.mxu0 0.0
  %3125 = vmatprep.subr.mxu0 0.0
  %3126 = vmatpush2.msra.mxu0 0.0
  %3127 = vmatprep.subr.mxu0 0.0
  %3128 = vmatpush2.msra.mxu0 0.0
  %3129 = vmatprep.subr.mxu0 0.0
  %3130 = vmatpush2.msra.mxu0 0.0
  %3131 = vmatprep.subr.mxu0 0.0
  %3132 = vmatpush2.msra.mxu0 0.0
  %3133 = vmatprep.subr.mxu0 0.0
  %3134 = vmatpush2.msra.mxu0 0.0
  %3135 = vmatprep.subr.mxu0 0.0
  %3136 = vmatpush2.msra.mxu0 0.0
  %3137 = vmatprep.subr.mxu0 0.0
  %3138 = vmatpush2.msra.mxu0 0.0
  %3139 = vmatprep.subr.mxu0 0.0
  %3140 = vmatpush2.msra.mxu0 0.0
  %3141 = vmatprep.subr.mxu0 0.0
  %3142 = vmatpush2.msra.mxu0 0.0
  %3143 = vmatprep.subr.mxu0 0.0
  %3144 = vmatpush2.msra.mxu0 0.0
  %3145 = vmatprep.subr.mxu0 0.0
  %3146 = vmatpush2.msra.mxu0 0.0
  %3147 = vmatprep.subr.mxu0 0.0
  %3148 = vmatpush2.msra.mxu0 0.0
  %3149 = vmatprep.subr.mxu0 0.0
  %3150 = vmatpush2.msra.mxu0 0.0
  %3151 = vmatprep.subr.mxu0 0.0
  %3152 = vmatpush2.msra.mxu0 0.0
  %3153 = vmatprep.subr.mxu0 0.0
  %3154 = vmatpush2.msra.mxu0 0.0
  %3155 = vmatprep.mubr.f32.mxu0 0.0
  %3156 = vmatmul.mubr.f32.gmra.mxu0 %v3018
  %v3157 = vpop.f32.mrf.mxu0
  %v3158 = vadd.f32 %v3014, %v3157
  %v3159 = vpop.f32.mrf.mxu0
  %v3160 = vadd.f32 %v3014, %v3159
  %3161 = vdwg.mxu0
  %3163 = vset.pattern.permute.xlu0 0
  %3164 = vperm.xlu0 %3163, %v2182
  %v3165 = vpop.permute.xlu0 %3164
  %v3167 = vmul.f32 %v3165, %v2426
  %v3168 = vmul.f32 %v3165, %v2430
  %v3169 = vmul.f32 %v3165, %v2434
  %v3170 = vmul.f32 %v3165, %v2438
  %3172 = vset.pattern.permute.xlu0 0
  %3173 = vperm.xlu0 %3172, %v2183
  %v3174 = vpop.permute.xlu0 %3173
  %v3176 = vadd.f32 %v3167, %v3174
  %v3177 = vadd.f32 %v3168, %v3174
  %v3178 = vadd.f32 %v3169, %v3174
  %v3179 = vadd.f32 %v3170, %v3174
  %v3180 = vadd.f32 %v3087, %v3176
  %v3181 = vadd.f32 %v3089, %v3177
  %v3182 = vadd.f32 %v3158, %v3178
  %v3183 = vadd.f32 %v3160, %v3179
  %3184 = vst [vmem:[#allocation2] sm:$0xff] %v3180
  %3185 = vst [vmem:[#allocation2 + $0x8] sm:$0xff] %v3181
  %3186 = vst [vmem:[#allocation2 + $0x10] sm:$0xff] %v3182
  %3187 = vst [vmem:[#allocation2 + $0x18] sm:$0xff] %v3183
  %3188 = vmatprep.subr.mxu0 0.0
  %3189 = vmatpush1.msra.mxu0 %v1367
  %3190 = vmatprep.subr.mxu0 0.0
  %3191 = vmatpush1.msra.mxu0 %v1366
  %3192 = vmatprep.subr.mxu0 0.0
  %3193 = vmatpush1.msra.mxu0 %v1365
  %3194 = vmatprep.subr.mxu0 0.0
  %3195 = vmatpush1.msra.mxu0 %v1364
  %3196 = vmatprep.subr.mxu0 0.0
  %3197 = vmatpush1.msra.mxu0 %v1363
  %3198 = vmatprep.subr.mxu0 0.0
  %3199 = vmatpush1.msra.mxu0 %v1362
  %3200 = vmatprep.subr.mxu0 0.0
  %3201 = vmatpush1.msra.mxu0 %v1361
  %3202 = vmatprep.subr.mxu0 0.0
  %3203 = vmatpush1.msra.mxu0 %v1360
  %3204 = vmatprep.subr.mxu0 0.0
  %3205 = vmatpush1.msra.mxu0 %v1359
  %3206 = vmatprep.subr.mxu0 0.0
  %3207 = vmatpush1.msra.mxu0 %v1358
  %3208 = vmatprep.subr.mxu0 0.0
  %3209 = vmatpush1.msra.mxu0 %v1357
  %3210 = vmatprep.subr.mxu0 0.0
  %3211 = vmatpush1.msra.mxu0 %v1356
  %3212 = vmatprep.subr.mxu0 0.0
  %3213 = vmatpush1.msra.mxu0 %v1355
  %3214 = vmatprep.subr.mxu0 0.0
  %3215 = vmatpush1.msra.mxu0 %v1354
  %3216 = vmatprep.subr.mxu0 0.0
  %3217 = vmatpush1.msra.mxu0 %v1353
  %3218 = vmatprep.subr.mxu0 0.0
  %3219 = vmatpush1.msra.mxu0 %v1352
  %3220 = vmatprep.subr.mxu0 0.0
  %3221 = vmatpush2.msra.mxu0 %v1383
  %3222 = vmatprep.subr.mxu0 0.0
  %3223 = vmatpush2.msra.mxu0 %v1382
  %3224 = vmatprep.subr.mxu0 0.0
  %3225 = vmatpush2.msra.mxu0 %v1381
  %3226 = vmatprep.subr.mxu0 0.0
  %3227 = vmatpush2.msra.mxu0 %v1380
  %3228 = vmatprep.subr.mxu0 0.0
  %3229 = vmatpush2.msra.mxu0 %v1379
  %3230 = vmatprep.subr.mxu0 0.0
  %3231 = vmatpush2.msra.mxu0 %v1378
  %3232 = vmatprep.subr.mxu0 0.0
  %3233 = vmatpush2.msra.mxu0 %v1377
  %3234 = vmatprep.subr.mxu0 0.0
  %3235 = vmatpush2.msra.mxu0 %v1376
  %3236 = vmatprep.subr.mxu0 0.0
  %3237 = vmatpush2.msra.mxu0 %v1375
  %3238 = vmatprep.subr.mxu0 0.0
  %3239 = vmatpush2.msra.mxu0 %v1374
  %3240 = vmatprep.subr.mxu0 0.0
  %3241 = vmatpush2.msra.mxu0 %v1373
  %3242 = vmatprep.subr.mxu0 0.0
  %3243 = vmatpush2.msra.mxu0 %v1372
  %3244 = vmatprep.subr.mxu0 0.0
  %3245 = vmatpush2.msra.mxu0 %v1371
  %3246 = vmatprep.subr.mxu0 0.0
  %3247 = vmatpush2.msra.mxu0 %v1370
  %3248 = vmatprep.subr.mxu0 0.0
  %3249 = vmatpush2.msra.mxu0 %v1369
  %3250 = vmatprep.subr.mxu0 0.0
  %3251 = vmatpush2.msra.mxu0 %v1368
  %3252 = vmatprep.mubr.f32.mxu0 %v3181
  %3253 = vmatmul.mubr.f32.gmra.mxu0 %v3180
  %v3254 = vpop.f32.mrf.mxu0
  %v3255 = vadd.f32 0.0, %v3254
  %v3256 = vpop.f32.mrf.mxu0
  %3257 = vdwg.mxu0
  %3258 = vmatprep.subr.mxu0 0.0
  %3259 = vmatpush1.msra.mxu0 %v1399
  %3260 = vmatprep.subr.mxu0 0.0
  %3261 = vmatpush1.msra.mxu0 %v1398
  %3262 = vmatprep.subr.mxu0 0.0
  %3263 = vmatpush1.msra.mxu0 %v1397
  %3264 = vmatprep.subr.mxu0 0.0
  %3265 = vmatpush1.msra.mxu0 %v1396
  %3266 = vmatprep.subr.mxu0 0.0
  %3267 = vmatpush1.msra.mxu0 %v1395
  %3268 = vmatprep.subr.mxu0 0.0
  %3269 = vmatpush1.msra.mxu0 %v1394
  %3270 = vmatprep.subr.mxu0 0.0
  %3271 = vmatpush1.msra.mxu0 %v1393
  %3272 = vmatprep.subr.mxu0 0.0
  %3273 = vmatpush1.msra.mxu0 %v1392
  %3274 = vmatprep.subr.mxu0 0.0
  %3275 = vmatpush1.msra.mxu0 %v1391
  %3276 = vmatprep.subr.mxu0 0.0
  %3277 = vmatpush1.msra.mxu0 %v1390
  %3278 = vmatprep.subr.mxu0 0.0
  %3279 = vmatpush1.msra.mxu0 %v1389
  %3280 = vmatprep.subr.mxu0 0.0
  %3281 = vmatpush1.msra.mxu0 %v1388
  %3282 = vmatprep.subr.mxu0 0.0
  %3283 = vmatpush1.msra.mxu0 %v1387
  %3284 = vmatprep.subr.mxu0 0.0
  %3285 = vmatpush1.msra.mxu0 %v1386
  %3286 = vmatprep.subr.mxu0 0.0
  %3287 = vmatpush1.msra.mxu0 %v1385
  %3288 = vmatprep.subr.mxu0 0.0
  %3289 = vmatpush1.msra.mxu0 %v1384
  %3290 = vmatprep.subr.mxu0 0.0
  %3291 = vmatpush2.msra.mxu0 %v1415
  %3292 = vmatprep.subr.mxu0 0.0
  %3293 = vmatpush2.msra.mxu0 %v1414
  %3294 = vmatprep.subr.mxu0 0.0
  %3295 = vmatpush2.msra.mxu0 %v1413
  %3296 = vmatprep.subr.mxu0 0.0
  %3297 = vmatpush2.msra.mxu0 %v1412
  %3298 = vmatprep.subr.mxu0 0.0
  %3299 = vmatpush2.msra.mxu0 %v1411
  %3300 = vmatprep.subr.mxu0 0.0
  %3301 = vmatpush2.msra.mxu0 %v1410
  %3302 = vmatprep.subr.mxu0 0.0
  %3303 = vmatpush2.msra.mxu0 %v1409
  %3304 = vmatprep.subr.mxu0 0.0
  %3305 = vmatpush2.msra.mxu0 %v1408
  %3306 = vmatprep.subr.mxu0 0.0
  %3307 = vmatpush2.msra.mxu0 %v1407
  %3308 = vmatprep.subr.mxu0 0.0
  %3309 = vmatpush2.msra.mxu0 %v1406
  %3310 = vmatprep.subr.mxu0 0.0
  %3311 = vmatpush2.msra.mxu0 %v1405
  %3312 = vmatprep.subr.mxu0 0.0
  %3313 = vmatpush2.msra.mxu0 %v1404
  %3314 = vmatprep.subr.mxu0 0.0
  %3315 = vmatpush2.msra.mxu0 %v1403
  %3316 = vmatprep.subr.mxu0 0.0
  %3317 = vmatpush2.msra.mxu0 %v1402
  %3318 = vmatprep.subr.mxu0 0.0
  %3319 = vmatpush2.msra.mxu0 %v1401
  %3320 = vmatprep.subr.mxu0 0.0
  %3321 = vmatpush2.msra.mxu0 %v1400
  %3322 = vmatprep.mubr.f32.mxu0 %v3183
  %3323 = vmatmul.mubr.f32.gmra.mxu0 %v3182
  %v3324 = vpop.f32.mrf.mxu0
  %v3325 = vadd.f32 %v3255, %v3324
  %v3326 = vpop.f32.mrf.mxu0
  %3327 = vdwg.mxu0
  %v3328 = vld [vmem:[%s21] sm:$0xff]
  %v3329 = vld [vmem:[%s21 + $0x8] sm:$0xff]
  %v3330 = vld [vmem:[%s23] sm:$0xff]
  %v3331 = vld [vmem:[%s23 + $0x8] sm:$0xff]
  %v3332 = vld [vmem:[%s27] sm:$0xff]
  %v3333 = vld [vmem:[%s27 + $0x8] sm:$0xff]
  %v3334 = vld [vmem:[%s31] sm:$0xff]
  %v3335 = vld [vmem:[%s31 + $0x8] sm:$0xff]
  %v3336 = vld [vmem:[%s33] sm:$0xff]
  %v3337 = vld [vmem:[%s33 + $0x8] sm:$0xff]
  %v3338 = vld [vmem:[%s35] sm:$0xff]
  %v3339 = vld [vmem:[%s35 + $0x8] sm:$0xff]
  %3341 = vset.pattern.permute.xlu0 0
  %3342 = vperm.xlu0 %3341, %v3330
  %v3343 = vpop.permute.xlu0 %3342
  %3346 = vset.pattern.permute.xlu0 0
  %3347 = vperm.xlu0 %3346, %v3331
  %v3348 = vpop.permute.xlu0 %3347
  %v3351 = vsel %vm2189, %v3328, 0
  %v3354 = vsel %vm2189, %v3329, 0
  %3356 = vmatprep.subr.mxu0 0.0
  %3357 = vmatpush1.msra.mxu0 0.0
  %3358 = vmatprep.subr.mxu0 0.0
  %3359 = vmatpush1.msra.mxu0 0.0
  %3360 = vmatprep.subr.mxu0 0.0
  %3361 = vmatpush1.msra.mxu0 0.0
  %3362 = vmatprep.subr.mxu0 0.0
  %3363 = vmatpush1.msra.mxu0 0.0
  %3364 = vmatprep.subr.mxu0 0.0
  %3365 = vmatpush1.msra.mxu0 0.0
  %3366 = vmatprep.subr.mxu0 0.0
  %3367 = vmatpush1.msra.mxu0 0.0
  %3368 = vmatprep.subr.mxu0 0.0
  %3369 = vmatpush1.msra.mxu0 0.0
  %3370 = vmatprep.subr.mxu0 0.0
  %3371 = vmatpush1.msra.mxu0 0.0
  %3372 = vmatprep.subr.mxu0 0.0
  %3373 = vmatpush1.msra.mxu0 0.0
  %3374 = vmatprep.subr.mxu0 0.0
  %3375 = vmatpush1.msra.mxu0 0.0
  %3376 = vmatprep.subr.mxu0 0.0
  %3377 = vmatpush1.msra.mxu0 0.0
  %3378 = vmatprep.subr.mxu0 0.0
  %3379 = vmatpush1.msra.mxu0 0.0
  %3380 = vmatprep.subr.mxu0 0.0
  %3381 = vmatpush1.msra.mxu0 0.0
  %3382 = vmatprep.subr.mxu0 0.0
  %3383 = vmatpush1.msra.mxu0 0.0
  %3384 = vmatprep.subr.mxu0 0.0
  %3385 = vmatpush1.msra.mxu0 %v234
  %3386 = vmatprep.subr.mxu0 0.0
  %3387 = vmatpush1.msra.mxu0 %v233
  %3388 = vmatprep.subr.mxu0 0.0
  %3389 = vmatpush2.msra.mxu0 0.0
  %3390 = vmatprep.subr.mxu0 0.0
  %3391 = vmatpush2.msra.mxu0 0.0
  %3392 = vmatprep.subr.mxu0 0.0
  %3393 = vmatpush2.msra.mxu0 0.0
  %3394 = vmatprep.subr.mxu0 0.0
  %3395 = vmatpush2.msra.mxu0 0.0
  %3396 = vmatprep.subr.mxu0 0.0
  %3397 = vmatpush2.msra.mxu0 0.0
  %3398 = vmatprep.subr.mxu0 0.0
  %3399 = vmatpush2.msra.mxu0 0.0
  %3400 = vmatprep.subr.mxu0 0.0
  %3401 = vmatpush2.msra.mxu0 0.0
  %3402 = vmatprep.subr.mxu0 0.0
  %3403 = vmatpush2.msra.mxu0 0.0
  %3404 = vmatprep.subr.mxu0 0.0
  %3405 = vmatpush2.msra.mxu0 0.0
  %3406 = vmatprep.subr.mxu0 0.0
  %3407 = vmatpush2.msra.mxu0 0.0
  %3408 = vmatprep.subr.mxu0 0.0
  %3409 = vmatpush2.msra.mxu0 0.0
  %3410 = vmatprep.subr.mxu0 0.0
  %3411 = vmatpush2.msra.mxu0 0.0
  %3412 = vmatprep.subr.mxu0 0.0
  %3413 = vmatpush2.msra.mxu0 0.0
  %3414 = vmatprep.subr.mxu0 0.0
  %3415 = vmatpush2.msra.mxu0 0.0
  %3416 = vmatprep.subr.mxu0 0.0
  %3417 = vmatpush2.msra.mxu0 0.0
  %3418 = vmatprep.subr.mxu0 0.0
  %3419 = vmatpush2.msra.mxu0 0.0
  %3420 = vmatprep.mubr.f32.mxu0 0.0
  %3421 = vmatmul.mubr.f32.gmra.mxu0 %v3351
  %v3422 = vpop.f32.mrf.mxu0
  %v3423 = vadd.f32 %v3343, %v3422
  %v3424 = vpop.f32.mrf.mxu0
  %3425 = vmatprep.mubr.f32.mxu0 0.0
  %3426 = vmatmul.mubr.f32.gmra.mxu0 %v3354
  %v3427 = vpop.f32.mrf.mxu0
  %v3428 = vadd.f32 %v3348, %v3427
  %v3429 = vpop.f32.mrf.mxu0
  %3430 = vdwg.mxu0
  %v3432 = vsel %vm2263, %v3423, 0
  %v3435 = vsel %vm2263, %v3428, 0
  %v3438 = vsel %vm2267, %v396, 0
  %3440 = vmatprep.subr.mxu0 0.0
  %3441 = vmatpush1.msra.mxu0 0.0
  %3442 = vmatprep.subr.mxu0 0.0
  %3443 = vmatpush1.msra.mxu0 0.0
  %3444 = vmatprep.subr.mxu0 0.0
  %3445 = vmatpush1.msra.mxu0 0.0
  %3446 = vmatprep.subr.mxu0 0.0
  %3447 = vmatpush1.msra.mxu0 0.0
  %3448 = vmatprep.subr.mxu0 0.0
  %3449 = vmatpush1.msra.mxu0 0.0
  %3450 = vmatprep.subr.mxu0 0.0
  %3451 = vmatpush1.msra.mxu0 0.0
  %3452 = vmatprep.subr.mxu0 0.0
  %3453 = vmatpush1.msra.mxu0 0.0
  %3454 = vmatprep.subr.mxu0 0.0
  %3455 = vmatpush1.msra.mxu0 0.0
  %3456 = vmatprep.subr.mxu0 0.0
  %3457 = vmatpush1.msra.mxu0 0.0
  %3458 = vmatprep.subr.mxu0 0.0
  %3459 = vmatpush1.msra.mxu0 0.0
  %3460 = vmatprep.subr.mxu0 0.0
  %3461 = vmatpush1.msra.mxu0 0.0
  %3462 = vmatprep.subr.mxu0 0.0
  %3463 = vmatpush1.msra.mxu0 0.0
  %3464 = vmatprep.subr.mxu0 0.0
  %3465 = vmatpush1.msra.mxu0 0.0
  %3466 = vmatprep.subr.mxu0 0.0
  %3467 = vmatpush1.msra.mxu0 0.0
  %3468 = vmatprep.subr.mxu0 0.0
  %3469 = vmatpush1.msra.mxu0 0.0
  %3470 = vmatprep.subr.mxu0 0.0
  %3471 = vmatpush1.msra.mxu0 %v3438
  %3472 = vmatprep.subr.mxu0 0.0
  %3473 = vmatpush2.msra.mxu0 0.0
  %3474 = vmatprep.subr.mxu0 0.0
  %3475 = vmatpush2.msra.mxu0 0.0
  %3476 = vmatprep.subr.mxu0 0.0
  %3477 = vmatpush2.msra.mxu0 0.0
  %3478 = vmatprep.subr.mxu0 0.0
  %3479 = vmatpush2.msra.mxu0 0.0
  %3480 = vmatprep.subr.mxu0 0.0
  %3481 = vmatpush2.msra.mxu0 0.0
  %3482 = vmatprep.subr.mxu0 0.0
  %3483 = vmatpush2.msra.mxu0 0.0
  %3484 = vmatprep.subr.mxu0 0.0
  %3485 = vmatpush2.msra.mxu0 0.0
  %3486 = vmatprep.subr.mxu0 0.0
  %3487 = vmatpush2.msra.mxu0 0.0
  %3488 = vmatprep.subr.mxu0 0.0
  %3489 = vmatpush2.msra.mxu0 0.0
  %3490 = vmatprep.subr.mxu0 0.0
  %3491 = vmatpush2.msra.mxu0 0.0
  %3492 = vmatprep.subr.mxu0 0.0
  %3493 = vmatpush2.msra.mxu0 0.0
  %3494 = vmatprep.subr.mxu0 0.0
  %3495 = vmatpush2.msra.mxu0 0.0
  %3496 = vmatprep.subr.mxu0 0.0
  %3497 = vmatpush2.msra.mxu0 0.0
  %3498 = vmatprep.subr.mxu0 0.0
  %3499 = vmatpush2.msra.mxu0 0.0
  %3500 = vmatprep.subr.mxu0 0.0
  %3501 = vmatpush2.msra.mxu0 0.0
  %3502 = vmatprep.subr.mxu0 0.0
  %3503 = vmatpush2.msra.mxu0 0.0
  %3504 = vmatprep.mubr.f32.mxu0 0.0
  %3505 = vmatmul.mubr.f32.gmra.mxu0 %v3432
  %v3506 = vpop.f32.mrf.mxu0
  %v3507 = vadd.f32 0.0, %v3506
  %v3508 = vpop.f32.mrf.mxu0
  %3509 = vmatprep.mubr.f32.mxu0 0.0
  %3510 = vmatmul.mubr.f32.gmra.mxu0 %v3435
  %v3511 = vpop.f32.mrf.mxu0
  %v3512 = vadd.f32 0.0, %v3511
  %v3513 = vpop.f32.mrf.mxu0
  %3514 = vdwg.mxu0
  %3515 = vrot.lane.b32.xlu0 %v3325, 9
  %v3516 = vpop.permute.xlu0 %3515
  %v3517 = vmul.f32 %v3516, %v374
  %3518 = vrot.lane.b32.xlu0 %v3325, 8
  %v3519 = vpop.permute.xlu0 %3518
  %v3520 = vmul.f32 %v3519, %v376
  %3521 = vrot.lane.b32.xlu0 %v3325, 7
  %v3522 = vpop.permute.xlu0 %3521
  %v3523 = vmul.f32 %v3522, %v380
  %3524 = vrot.lane.b32.xlu0 %v3325, 1
  %v3525 = vpop.permute.xlu0 %3524
  %v3526 = vmul.f32 %v3525, %v382
  %3527 = vrot.lane.b32.xlu0 %v3325, 127
  %v3528 = vpop.permute.xlu0 %3527
  %v3529 = vmul.f32 %v3528, %v384
  %3530 = vrot.lane.b32.xlu0 %v3325, 121
  %v3531 = vpop.permute.xlu0 %3530
  %v3532 = vmul.f32 %v3531, %v388
  %3533 = vrot.lane.b32.xlu0 %v3325, 120
  %v3534 = vpop.permute.xlu0 %3533
  %v3535 = vmul.f32 %v3534, %v390
  %3536 = vrot.lane.b32.xlu0 %v3325, 119
  %v3537 = vpop.permute.xlu0 %3536
  %v3538 = vmul.f32 %v3537, %v393
  %v3539 = vld [vmem:[%s25] sm:$0xff]
  %v3540 = vld [vmem:[%s25 + $0x8] sm:$0xff]
  %3542 = vset.pattern.permute.xlu0 0
  %3543 = vperm.xlu0 %3542, %v3332
  %v3544 = vpop.permute.xlu0 %3543
  %3547 = vset.pattern.permute.xlu0 0
  %3548 = vperm.xlu0 %3547, %v3333
  %v3549 = vpop.permute.xlu0 %3548
  %v3552 = vsel %vm3016, %v3539, 0
  %v3555 = vsel %vm3016, %v3540, 0
  %3557 = vmatprep.subr.mxu0 0.0
  %3558 = vmatpush1.msra.mxu0 0.0
  %3559 = vmatprep.subr.mxu0 0.0
  %3560 = vmatpush1.msra.mxu0 0.0
  %3561 = vmatprep.subr.mxu0 0.0
  %3562 = vmatpush1.msra.mxu0 0.0
  %3563 = vmatprep.subr.mxu0 0.0
  %3564 = vmatpush1.msra.mxu0 0.0
  %3565 = vmatprep.subr.mxu0 0.0
  %3566 = vmatpush1.msra.mxu0 0.0
  %3567 = vmatprep.subr.mxu0 0.0
  %3568 = vmatpush1.msra.mxu0 0.0
  %3569 = vmatprep.subr.mxu0 0.0
  %3570 = vmatpush1.msra.mxu0 0.0
  %3571 = vmatprep.subr.mxu0 0.0
  %3572 = vmatpush1.msra.mxu0 %v3538
  %3573 = vmatprep.subr.mxu0 0.0
  %3574 = vmatpush1.msra.mxu0 %v3535
  %3575 = vmatprep.subr.mxu0 0.0
  %3576 = vmatpush1.msra.mxu0 %v3532
  %3577 = vmatprep.subr.mxu0 0.0
  %3578 = vmatpush1.msra.mxu0 %v3529
  %3579 = vmatprep.subr.mxu0 0.0
  %3580 = vmatpush1.msra.mxu0 %v3325
  %3581 = vmatprep.subr.mxu0 0.0
  %3582 = vmatpush1.msra.mxu0 %v3526
  %3583 = vmatprep.subr.mxu0 0.0
  %3584 = vmatpush1.msra.mxu0 %v3523
  %3585 = vmatprep.subr.mxu0 0.0
  %3586 = vmatpush1.msra.mxu0 %v3520
  %3587 = vmatprep.subr.mxu0 0.0
  %3588 = vmatpush1.msra.mxu0 %v3517
  %3589 = vmatprep.subr.mxu0 0.0
  %3590 = vmatpush2.msra.mxu0 0.0
  %3591 = vmatprep.subr.mxu0 0.0
  %3592 = vmatpush2.msra.mxu0 0.0
  %3593 = vmatprep.subr.mxu0 0.0
  %3594 = vmatpush2.msra.mxu0 0.0
  %3595 = vmatprep.subr.mxu0 0.0
  %3596 = vmatpush2.msra.mxu0 0.0
  %3597 = vmatprep.subr.mxu0 0.0
  %3598 = vmatpush2.msra.mxu0 0.0
  %3599 = vmatprep.subr.mxu0 0.0
  %3600 = vmatpush2.msra.mxu0 0.0
  %3601 = vmatprep.subr.mxu0 0.0
  %3602 = vmatpush2.msra.mxu0 0.0
  %3603 = vmatprep.subr.mxu0 0.0
  %3604 = vmatpush2.msra.mxu0 0.0
  %3605 = vmatprep.subr.mxu0 0.0
  %3606 = vmatpush2.msra.mxu0 0.0
  %3607 = vmatprep.subr.mxu0 0.0
  %3608 = vmatpush2.msra.mxu0 0.0
  %3609 = vmatprep.subr.mxu0 0.0
  %3610 = vmatpush2.msra.mxu0 0.0
  %3611 = vmatprep.subr.mxu0 0.0
  %3612 = vmatpush2.msra.mxu0 0.0
  %3613 = vmatprep.subr.mxu0 0.0
  %3614 = vmatpush2.msra.mxu0 0.0
  %3615 = vmatprep.subr.mxu0 0.0
  %3616 = vmatpush2.msra.mxu0 0.0
  %3617 = vmatprep.subr.mxu0 0.0
  %3618 = vmatpush2.msra.mxu0 0.0
  %3619 = vmatprep.subr.mxu0 0.0
  %3620 = vmatpush2.msra.mxu0 0.0
  %3621 = vmatprep.mubr.f32.mxu0 0.0
  %3622 = vmatmul.mubr.f32.gmra.mxu0 %v3552
  %v3623 = vpop.f32.mrf.mxu0
  %v3624 = vadd.f32 %v3544, %v3623
  %v3625 = vpop.f32.mrf.mxu0
  %3626 = vmatprep.mubr.f32.mxu0 0.0
  %3627 = vmatmul.mubr.f32.gmra.mxu0 %v3555
  %v3628 = vpop.f32.mrf.mxu0
  %v3629 = vadd.f32 %v3549, %v3628
  %v3630 = vpop.f32.mrf.mxu0
  %3631 = vdwg.mxu0
  %v3632 = vxor.u32 %v3624, 2147483648
  %v3633 = vxor.u32 %v3629, 2147483648
  %v3634 = vmul.f32 %v3632, 1.442695
  %v3635 = vpow.pop %v3634
  %v3636 = vmul.f32 %v3633, 1.442695
  %v3637 = vpow.pop %v3636
  %v3638 = vadd.f32 %v3635, 1.0
  %v3639 = vadd.f32 %v3637, 1.0
  %v3640 = vrcp.pop %v3638
  %v3641 = vmul.f32 1.0, %v3640
  %v3642 = vrcp.pop %v3639
  %v3643 = vmul.f32 1.0, %v3642
  %v3644 = vmul.f32 %v3624, %v3641
  %v3645 = vmul.f32 %v3629, %v3643
  %v3646 = vadd.f32 %v3644, %v3507
  %v3647 = vadd.f32 %v3645, %v3512
  %v3648 = vxor.u32 %v3646, 2147483648
  %v3649 = vxor.u32 %v3647, 2147483648
  %v3650 = vmul.f32 %v3648, 1.442695
  %v3651 = vpow.pop %v3650
  %v3652 = vmul.f32 %v3649, 1.442695
  %v3653 = vpow.pop %v3652
  %v3654 = vadd.f32 %v3651, 1.0
  %v3655 = vadd.f32 %v3653, 1.0
  %v3656 = vrcp.pop %v3654
  %v3657 = vmul.f32 1.0, %v3656
  %v3658 = vrcp.pop %v3655
  %v3659 = vmul.f32 1.0, %v3658
  %v3660 = vmul.f32 %v3646, %v3657
  %v3661 = vmul.f32 %v3647, %v3659
  %3662 = vrot.lane.b32.xlu0 %v3660, 9
  %v3663 = vpop.permute.xlu0 %3662
  %3664 = vrot.lane.b32.xlu0 %v3661, 9
  %v3665 = vpop.permute.xlu0 %3664
  %v3666 = vmul.f32 %v3663, %v374
  %v3667 = vmul.f32 %v3665, %v374
  %3668 = vrot.lane.b32.xlu0 %v3660, 8
  %v3669 = vpop.permute.xlu0 %3668
  %3670 = vrot.lane.b32.xlu0 %v3661, 8
  %v3671 = vpop.permute.xlu0 %3670
  %v3672 = vmul.f32 %v3669, %v376
  %v3673 = vmul.f32 %v3671, %v376
  %3674 = vrot.lane.b32.xlu0 %v3660, 7
  %v3675 = vpop.permute.xlu0 %3674
  %3676 = vrot.lane.b32.xlu0 %v3661, 7
  %v3677 = vpop.permute.xlu0 %3676
  %v3678 = vmul.f32 %v3675, %v380
  %v3679 = vmul.f32 %v3677, %v380
  %3680 = vrot.lane.b32.xlu0 %v3660, 1
  %v3681 = vpop.permute.xlu0 %3680
  %3682 = vrot.lane.b32.xlu0 %v3661, 1
  %v3683 = vpop.permute.xlu0 %3682
  %v3684 = vmul.f32 %v3681, %v382
  %v3685 = vmul.f32 %v3683, %v382
  %3686 = vrot.lane.b32.xlu0 %v3660, 127
  %v3687 = vpop.permute.xlu0 %3686
  %3688 = vrot.lane.b32.xlu0 %v3661, 127
  %v3689 = vpop.permute.xlu0 %3688
  %v3690 = vmul.f32 %v3687, %v384
  %v3691 = vmul.f32 %v3689, %v384
  %3692 = vrot.lane.b32.xlu0 %v3660, 121
  %v3693 = vpop.permute.xlu0 %3692
  %3694 = vrot.lane.b32.xlu0 %v3661, 121
  %v3695 = vpop.permute.xlu0 %3694
  %v3696 = vmul.f32 %v3693, %v388
  %v3697 = vmul.f32 %v3695, %v388
  %3698 = vrot.lane.b32.xlu0 %v3660, 120
  %v3699 = vpop.permute.xlu0 %3698
  %3700 = vrot.lane.b32.xlu0 %v3661, 120
  %v3701 = vpop.permute.xlu0 %3700
  %v3702 = vmul.f32 %v3699, %v390
  %v3703 = vmul.f32 %v3701, %v390
  %3704 = vrot.lane.b32.xlu0 %v3660, 119
  %v3705 = vpop.permute.xlu0 %3704
  %3706 = vrot.lane.b32.xlu0 %v3661, 119
  %v3707 = vpop.permute.xlu0 %3706
  %v3708 = vmul.f32 %v3705, %v393
  %v3709 = vmul.f32 %v3707, %v393
  %v3710 = vld [vmem:[%s29] sm:$0xff]
  %v3711 = vld [vmem:[%s29 + $0x8] sm:$0xff]
  %v3712 = vld [vmem:[%s29 + $0x10] sm:$0xff]
  %v3713 = vld [vmem:[%s29 + $0x18] sm:$0xff]
  %3715 = vset.pattern.permute.xlu0 0
  %3716 = vperm.xlu0 %3715, %v3334
  %v3717 = vpop.permute.xlu0 %3716
  %3720 = vset.pattern.permute.xlu0 0
  %3721 = vperm.xlu0 %3720, %v3335
  %v3722 = vpop.permute.xlu0 %3721
  %v3725 = vsel %vm2189, %v3711, 0
  %v3728 = vsel %vm2189, %v3713, 0
  %3730 = vmatprep.subr.mxu0 0.0
  %3731 = vmatpush1.msra.mxu0 %v3703
  %3732 = vmatprep.subr.mxu0 0.0
  %3733 = vmatpush1.msra.mxu0 %v3702
  %3734 = vmatprep.subr.mxu0 0.0
  %3735 = vmatpush1.msra.mxu0 %v3697
  %3736 = vmatprep.subr.mxu0 0.0
  %3737 = vmatpush1.msra.mxu0 %v3696
  %3738 = vmatprep.subr.mxu0 0.0
  %3739 = vmatpush1.msra.mxu0 %v3691
  %3740 = vmatprep.subr.mxu0 0.0
  %3741 = vmatpush1.msra.mxu0 %v3690
  %3742 = vmatprep.subr.mxu0 0.0
  %3743 = vmatpush1.msra.mxu0 %v3661
  %3744 = vmatprep.subr.mxu0 0.0
  %3745 = vmatpush1.msra.mxu0 %v3660
  %3746 = vmatprep.subr.mxu0 0.0
  %3747 = vmatpush1.msra.mxu0 %v3685
  %3748 = vmatprep.subr.mxu0 0.0
  %3749 = vmatpush1.msra.mxu0 %v3684
  %3750 = vmatprep.subr.mxu0 0.0
  %3751 = vmatpush1.msra.mxu0 %v3679
  %3752 = vmatprep.subr.mxu0 0.0
  %3753 = vmatpush1.msra.mxu0 %v3678
  %3754 = vmatprep.subr.mxu0 0.0
  %3755 = vmatpush1.msra.mxu0 %v3673
  %3756 = vmatprep.subr.mxu0 0.0
  %3757 = vmatpush1.msra.mxu0 %v3672
  %3758 = vmatprep.subr.mxu0 0.0
  %3759 = vmatpush1.msra.mxu0 %v3667
  %3760 = vmatprep.subr.mxu0 0.0
  %3761 = vmatpush1.msra.mxu0 %v3666
  %3762 = vmatprep.subr.mxu0 0.0
  %3763 = vmatpush2.msra.mxu0 0.0
  %3764 = vmatprep.subr.mxu0 0.0
  %3765 = vmatpush2.msra.mxu0 0.0
  %3766 = vmatprep.subr.mxu0 0.0
  %3767 = vmatpush2.msra.mxu0 0.0
  %3768 = vmatprep.subr.mxu0 0.0
  %3769 = vmatpush2.msra.mxu0 0.0
  %3770 = vmatprep.subr.mxu0 0.0
  %3771 = vmatpush2.msra.mxu0 0.0
  %3772 = vmatprep.subr.mxu0 0.0
  %3773 = vmatpush2.msra.mxu0 0.0
  %3774 = vmatprep.subr.mxu0 0.0
  %3775 = vmatpush2.msra.mxu0 0.0
  %3776 = vmatprep.subr.mxu0 0.0
  %3777 = vmatpush2.msra.mxu0 0.0
  %3778 = vmatprep.subr.mxu0 0.0
  %3779 = vmatpush2.msra.mxu0 0.0
  %3780 = vmatprep.subr.mxu0 0.0
  %3781 = vmatpush2.msra.mxu0 0.0
  %3782 = vmatprep.subr.mxu0 0.0
  %3783 = vmatpush2.msra.mxu0 0.0
  %3784 = vmatprep.subr.mxu0 0.0
  %3785 = vmatpush2.msra.mxu0 0.0
  %3786 = vmatprep.subr.mxu0 0.0
  %3787 = vmatpush2.msra.mxu0 0.0
  %3788 = vmatprep.subr.mxu0 0.0
  %3789 = vmatpush2.msra.mxu0 0.0
  %3790 = vmatprep.subr.mxu0 0.0
  %3791 = vmatpush2.msra.mxu0 %v3709
  %3792 = vmatprep.subr.mxu0 0.0
  %3793 = vmatpush2.msra.mxu0 %v3708
  %3794 = vmatprep.mubr.f32.mxu0 %v3725
  %3795 = vmatmul.mubr.f32.gmra.mxu0 %v3710
  %v3796 = vpop.f32.mrf.mxu0
  %v3797 = vadd.f32 %v3717, %v3796
  %v3798 = vpop.f32.mrf.mxu0
  %3799 = vmatprep.mubr.f32.mxu0 %v3728
  %3800 = vmatmul.mubr.f32.gmra.mxu0 %v3712
  %v3801 = vpop.f32.mrf.mxu0
  %v3802 = vadd.f32 %v3722, %v3801
  %v3803 = vpop.f32.mrf.mxu0
  %3804 = vdwg.mxu0
  %3806 = vset.pattern.permute.xlu0 0
  %3807 = vperm.xlu0 %3806, %v3338
  %v3808 = vpop.permute.xlu0 %3807
  %3811 = vset.pattern.permute.xlu0 0
  %3812 = vperm.xlu0 %3811, %v3339
  %v3813 = vpop.permute.xlu0 %3812
  %vm3815 = vcmask 64512
  %v3817 = vsel %vm3815, %v3336, 0
  %v3820 = vsel %vm3815, %v3337, 0
  %3822 = vmatprep.subr.mxu0 0.0
  %3823 = vmatpush1.msra.mxu0 0.0
  %3824 = vmatprep.subr.mxu0 0.0
  %3825 = vmatpush1.msra.mxu0 0.0
  %3826 = vmatprep.subr.mxu0 0.0
  %3827 = vmatpush1.msra.mxu0 0.0
  %3828 = vmatprep.subr.mxu0 0.0
  %3829 = vmatpush1.msra.mxu0 0.0
  %3830 = vmatprep.subr.mxu0 0.0
  %3831 = vmatpush1.msra.mxu0 0.0
  %3832 = vmatprep.subr.mxu0 0.0
  %3833 = vmatpush1.msra.mxu0 0.0
  %3834 = vmatprep.subr.mxu0 0.0
  %3835 = vmatpush1.msra.mxu0 0.0
  %3836 = vmatprep.subr.mxu0 0.0
  %3837 = vmatpush1.msra.mxu0 0.0
  %3838 = vmatprep.subr.mxu0 0.0
  %3839 = vmatpush1.msra.mxu0 0.0
  %3840 = vmatprep.subr.mxu0 0.0
  %3841 = vmatpush1.msra.mxu0 0.0
  %3842 = vmatprep.subr.mxu0 0.0
  %3843 = vmatpush1.msra.mxu0 0.0
  %3844 = vmatprep.subr.mxu0 0.0
  %3845 = vmatpush1.msra.mxu0 0.0
  %3846 = vmatprep.subr.mxu0 0.0
  %3847 = vmatpush1.msra.mxu0 0.0
  %3848 = vmatprep.subr.mxu0 0.0
  %3849 = vmatpush1.msra.mxu0 0.0
  %3850 = vmatprep.subr.mxu0 0.0
  %3851 = vmatpush1.msra.mxu0 0.0
  %3852 = vmatprep.subr.mxu0 0.0
  %3853 = vmatpush1.msra.mxu0 %v3325
  %3854 = vmatprep.subr.mxu0 0.0
  %3855 = vmatpush2.msra.mxu0 0.0
  %3856 = vmatprep.subr.mxu0 0.0
  %3857 = vmatpush2.msra.mxu0 0.0
  %3858 = vmatprep.subr.mxu0 0.0
  %3859 = vmatpush2.msra.mxu0 0.0
  %3860 = vmatprep.subr.mxu0 0.0
  %3861 = vmatpush2.msra.mxu0 0.0
  %3862 = vmatprep.subr.mxu0 0.0
  %3863 = vmatpush2.msra.mxu0 0.0
  %3864 = vmatprep.subr.mxu0 0.0
  %3865 = vmatpush2.msra.mxu0 0.0
  %3866 = vmatprep.subr.mxu0 0.0
  %3867 = vmatpush2.msra.mxu0 0.0
  %3868 = vmatprep.subr.mxu0 0.0
  %3869 = vmatpush2.msra.mxu0 0.0
  %3870 = vmatprep.subr.mxu0 0.0
  %3871 = vmatpush2.msra.mxu0 0.0
  %3872 = vmatprep.subr.mxu0 0.0
  %3873 = vmatpush2.msra.mxu0 0.0
  %3874 = vmatprep.subr.mxu0 0.0
  %3875 = vmatpush2.msra.mxu0 0.0
  %3876 = vmatprep.subr.mxu0 0.0
  %3877 = vmatpush2.msra.mxu0 0.0
  %3878 = vmatprep.subr.mxu0 0.0
  %3879 = vmatpush2.msra.mxu0 0.0
  %3880 = vmatprep.subr.mxu0 0.0
  %3881 = vmatpush2.msra.mxu0 0.0
  %3882 = vmatprep.subr.mxu0 0.0
  %3883 = vmatpush2.msra.mxu0 0.0
  %3884 = vmatprep.subr.mxu0 0.0
  %3885 = vmatpush2.msra.mxu0 0.0
  %3886 = vmatprep.mubr.f32.mxu0 0.0
  %3887 = vmatmul.mubr.f32.gmra.mxu0 %v3817
  %v3888 = vpop.f32.mrf.mxu0
  %v3889 = vadd.f32 %v3808, %v3888
  %v3890 = vpop.f32.mrf.mxu0
  %3891 = vmatprep.mubr.f32.mxu0 0.0
  %3892 = vmatmul.mubr.f32.gmra.mxu0 %v3820
  %v3893 = vpop.f32.mrf.mxu0
  %v3894 = vadd.f32 %v3813, %v3893
  %v3895 = vpop.f32.mrf.mxu0
  %3896 = vdwg.mxu0
  %v3897 = vadd.f32 %v3797, %v3889
  %v3898 = vadd.f32 %v3802, %v3894
  %3899 = vst [vmem:[#allocation3] sm:$0xff] %v3897
  %3900 = vst [vmem:[#allocation3 + $0x8] sm:$0xff] %v3898
  %3901 = vmatprep.subr.mxu0 0.0
  %3902 = vmatpush1.msra.mxu0 %v1859
  %3903 = vmatprep.subr.mxu0 0.0
  %3904 = vmatpush1.msra.mxu0 %v1858
  %3905 = vmatprep.subr.mxu0 0.0
  %3906 = vmatpush1.msra.mxu0 %v1857
  %3907 = vmatprep.subr.mxu0 0.0
  %3908 = vmatpush1.msra.mxu0 %v1856
  %3909 = vmatprep.subr.mxu0 0.0
  %3910 = vmatpush1.msra.mxu0 %v1855
  %3911 = vmatprep.subr.mxu0 0.0
  %3912 = vmatpush1.msra.mxu0 %v1854
  %3913 = vmatprep.subr.mxu0 0.0
  %3914 = vmatpush1.msra.mxu0 %v1853
  %3915 = vmatprep.subr.mxu0 0.0
  %3916 = vmatpush1.msra.mxu0 %v1852
  %3917 = vmatprep.subr.mxu0 0.0
  %3918 = vmatpush1.msra.mxu0 %v1851
  %3919 = vmatprep.subr.mxu0 0.0
  %3920 = vmatpush1.msra.mxu0 %v1850
  %3921 = vmatprep.subr.mxu0 0.0
  %3922 = vmatpush1.msra.mxu0 %v1849
  %3923 = vmatprep.subr.mxu0 0.0
  %3924 = vmatpush1.msra.mxu0 %v1848
  %3925 = vmatprep.subr.mxu0 0.0
  %3926 = vmatpush1.msra.mxu0 %v1847
  %3927 = vmatprep.subr.mxu0 0.0
  %3928 = vmatpush1.msra.mxu0 %v1846
  %3929 = vmatprep.subr.mxu0 0.0
  %3930 = vmatpush1.msra.mxu0 %v1845
  %3931 = vmatprep.subr.mxu0 0.0
  %3932 = vmatpush1.msra.mxu0 %v1844
  %3933 = vmatprep.subr.mxu0 0.0
  %3934 = vmatpush2.msra.mxu0 0.0
  %3935 = vmatprep.subr.mxu0 0.0
  %3936 = vmatpush2.msra.mxu0 0.0
  %3937 = vmatprep.subr.mxu0 0.0
  %3938 = vmatpush2.msra.mxu0 0.0
  %3939 = vmatprep.subr.mxu0 0.0
  %3940 = vmatpush2.msra.mxu0 0.0
  %3941 = vmatprep.subr.mxu0 0.0
  %3942 = vmatpush2.msra.mxu0 0.0
  %3943 = vmatprep.subr.mxu0 0.0
  %3944 = vmatpush2.msra.mxu0 0.0
  %3945 = vmatprep.subr.mxu0 0.0
  %3946 = vmatpush2.msra.mxu0 0.0
  %3947 = vmatprep.subr.mxu0 0.0
  %3948 = vmatpush2.msra.mxu0 0.0
  %3949 = vmatprep.subr.mxu0 0.0
  %3950 = vmatpush2.msra.mxu0 0.0
  %3951 = vmatprep.subr.mxu0 0.0
  %3952 = vmatpush2.msra.mxu0 0.0
  %3953 = vmatprep.subr.mxu0 0.0
  %3954 = vmatpush2.msra.mxu0 0.0
  %3955 = vmatprep.subr.mxu0 0.0
  %3956 = vmatpush2.msra.mxu0 0.0
  %3957 = vmatprep.subr.mxu0 0.0
  %3958 = vmatpush2.msra.mxu0 0.0
  %3959 = vmatprep.subr.mxu0 0.0
  %3960 = vmatpush2.msra.mxu0 0.0
  %3961 = vmatprep.subr.mxu0 0.0
  %3962 = vmatpush2.msra.mxu0 0.0
  %3963 = vmatprep.subr.mxu0 0.0
  %3964 = vmatpush2.msra.mxu0 0.0
  %3965 = vmatprep.mubr.f32.mxu0 0.0
  %3966 = vmatmul.mubr.f32.gmra.mxu0 %v3897
  %v3967 = vpop.f32.mrf.mxu0
  %v3968 = vadd.f32 0.0, %v3967
  %v3969 = vpop.f32.mrf.mxu0
  %3970 = vmatprep.mubr.f32.mxu0 0.0
  %3971 = vmatmul.mubr.f32.gmra.mxu0 %v3898
  %v3972 = vpop.f32.mrf.mxu0
  %v3973 = vadd.f32 0.0, %v3972
  %v3974 = vpop.f32.mrf.mxu0
  %3975 = vdwg.mxu0
  %v3976 = vld [vmem:[%s37] sm:$0xff]
  %v3977 = vld [vmem:[%s37 + $0x8] sm:$0xff]
  %v3978 = vld [vmem:[%s37 + $0x10] sm:$0xff]
  %v3979 = vld [vmem:[%s37 + $0x18] sm:$0xff]
  %v3980 = vld [vmem:[%s39] sm:$0xff]
  %v3981 = vld [vmem:[%s39 + $0x8] sm:$0xff]
  %v3982 = vld [vmem:[%s39 + $0x10] sm:$0xff]
  %v3983 = vld [vmem:[%s39 + $0x18] sm:$0xff]
  %v3984 = vld [vmem:[%s43] sm:$0xff]
  %v3985 = vld [vmem:[%s43 + $0x8] sm:$0xff]
  %v3986 = vld [vmem:[%s43 + $0x10] sm:$0xff]
  %v3987 = vld [vmem:[%s43 + $0x18] sm:$0xff]
  %v3988 = vld [vmem:[%s47] sm:$0xff]
  %v3989 = vld [vmem:[%s47 + $0x8] sm:$0xff]
  %v3990 = vld [vmem:[%s47 + $0x10] sm:$0xff]
  %v3991 = vld [vmem:[%s47 + $0x18] sm:$0xff]
  %v3992 = vld [vmem:[%s49] sm:$0xff]
  %v3993 = vld [vmem:[%s49 + $0x8] sm:$0xff]
  %v3994 = vld [vmem:[%s49 + $0x10] sm:$0xff]
  %v3995 = vld [vmem:[%s49 + $0x18] sm:$0xff]
  %v3996 = vld [vmem:[%s51] sm:$0xff]
  %v3997 = vld [vmem:[%s51 + $0x8] sm:$0xff]
  %v3998 = vld [vmem:[%s51 + $0x10] sm:$0xff]
  %v3999 = vld [vmem:[%s51 + $0x18] sm:$0xff]
  %4001 = vset.pattern.permute.xlu0 0
  %4002 = vperm.xlu0 %4001, %v3980
  %v4003 = vpop.permute.xlu0 %4002
  %4006 = vset.pattern.permute.xlu0 0
  %4007 = vperm.xlu0 %4006, %v3981
  %v4008 = vpop.permute.xlu0 %4007
  %4011 = vset.pattern.permute.xlu0 0
  %4012 = vperm.xlu0 %4011, %v3982
  %v4013 = vpop.permute.xlu0 %4012
  %4016 = vset.pattern.permute.xlu0 0
  %4017 = vperm.xlu0 %4016, %v3983
  %v4018 = vpop.permute.xlu0 %4017
  %v4021 = vsel %vm2189, %v3976, 0
  %v4024 = vsel %vm2189, %v3977, 0
  %v4027 = vsel %vm2189, %v3978, 0
  %v4030 = vsel %vm2189, %v3979, 0
  %4032 = vmatprep.subr.mxu0 0.0
  %4033 = vmatpush1.msra.mxu0 0.0
  %4034 = vmatprep.subr.mxu0 0.0
  %4035 = vmatpush1.msra.mxu0 0.0
  %4036 = vmatprep.subr.mxu0 0.0
  %4037 = vmatpush1.msra.mxu0 0.0
  %4038 = vmatprep.subr.mxu0 0.0
  %4039 = vmatpush1.msra.mxu0 0.0
  %4040 = vmatprep.subr.mxu0 0.0
  %4041 = vmatpush1.msra.mxu0 0.0
  %4042 = vmatprep.subr.mxu0 0.0
  %4043 = vmatpush1.msra.mxu0 0.0
  %4044 = vmatprep.subr.mxu0 0.0
  %4045 = vmatpush1.msra.mxu0 0.0
  %4046 = vmatprep.subr.mxu0 0.0
  %4047 = vmatpush1.msra.mxu0 0.0
  %4048 = vmatprep.subr.mxu0 0.0
  %4049 = vmatpush1.msra.mxu0 0.0
  %4050 = vmatprep.subr.mxu0 0.0
  %4051 = vmatpush1.msra.mxu0 0.0
  %4052 = vmatprep.subr.mxu0 0.0
  %4053 = vmatpush1.msra.mxu0 0.0
  %4054 = vmatprep.subr.mxu0 0.0
  %4055 = vmatpush1.msra.mxu0 0.0
  %4056 = vmatprep.subr.mxu0 0.0
  %4057 = vmatpush1.msra.mxu0 0.0
  %4058 = vmatprep.subr.mxu0 0.0
  %4059 = vmatpush1.msra.mxu0 0.0
  %4060 = vmatprep.subr.mxu0 0.0
  %4061 = vmatpush1.msra.mxu0 %v234
  %4062 = vmatprep.subr.mxu0 0.0
  %4063 = vmatpush1.msra.mxu0 %v233
  %4064 = vmatprep.subr.mxu0 0.0
  %4065 = vmatpush2.msra.mxu0 0.0
  %4066 = vmatprep.subr.mxu0 0.0
  %4067 = vmatpush2.msra.mxu0 0.0
  %4068 = vmatprep.subr.mxu0 0.0
  %4069 = vmatpush2.msra.mxu0 0.0
  %4070 = vmatprep.subr.mxu0 0.0
  %4071 = vmatpush2.msra.mxu0 0.0
  %4072 = vmatprep.subr.mxu0 0.0
  %4073 = vmatpush2.msra.mxu0 0.0
  %4074 = vmatprep.subr.mxu0 0.0
  %4075 = vmatpush2.msra.mxu0 0.0
  %4076 = vmatprep.subr.mxu0 0.0
  %4077 = vmatpush2.msra.mxu0 0.0
  %4078 = vmatprep.subr.mxu0 0.0
  %4079 = vmatpush2.msra.mxu0 0.0
  %4080 = vmatprep.subr.mxu0 0.0
  %4081 = vmatpush2.msra.mxu0 0.0
  %4082 = vmatprep.subr.mxu0 0.0
  %4083 = vmatpush2.msra.mxu0 0.0
  %4084 = vmatprep.subr.mxu0 0.0
  %4085 = vmatpush2.msra.mxu0 0.0
  %4086 = vmatprep.subr.mxu0 0.0
  %4087 = vmatpush2.msra.mxu0 0.0
  %4088 = vmatprep.subr.mxu0 0.0
  %4089 = vmatpush2.msra.mxu0 0.0
  %4090 = vmatprep.subr.mxu0 0.0
  %4091 = vmatpush2.msra.mxu0 0.0
  %4092 = vmatprep.subr.mxu0 0.0
  %4093 = vmatpush2.msra.mxu0 0.0
  %4094 = vmatprep.subr.mxu0 0.0
  %4095 = vmatpush2.msra.mxu0 0.0
  %4096 = vmatprep.mubr.f32.mxu0 0.0
  %4097 = vmatmul.mubr.f32.gmra.mxu0 %v4021
  %v4098 = vpop.f32.mrf.mxu0
  %v4099 = vadd.f32 %v4003, %v4098
  %v4100 = vpop.f32.mrf.mxu0
  %4101 = vmatprep.mubr.f32.mxu0 0.0
  %4102 = vmatmul.mubr.f32.gmra.mxu0 %v4024
  %v4103 = vpop.f32.mrf.mxu0
  %v4104 = vadd.f32 %v4008, %v4103
  %v4105 = vpop.f32.mrf.mxu0
  %4106 = vmatprep.mubr.f32.mxu0 0.0
  %4107 = vmatmul.mubr.f32.gmra.mxu0 %v4027
  %v4108 = vpop.f32.mrf.mxu0
  %v4109 = vadd.f32 %v4013, %v4108
  %v4110 = vpop.f32.mrf.mxu0
  %4111 = vmatprep.mubr.f32.mxu0 0.0
  %4112 = vmatmul.mubr.f32.gmra.mxu0 %v4030
  %v4113 = vpop.f32.mrf.mxu0
  %v4114 = vadd.f32 %v4018, %v4113
  %v4115 = vpop.f32.mrf.mxu0
  %4116 = vdwg.mxu0
  %v4118 = vsel %vm2263, %v4099, 0
  %v4121 = vsel %vm2263, %v4104, 0
  %v4124 = vsel %vm2263, %v4109, 0
  %v4127 = vsel %vm2263, %v4114, 0
  %v4130 = vsel %vm2267, %v426, 0
  %4132 = vmatprep.subr.mxu0 0.0
  %4133 = vmatpush1.msra.mxu0 0.0
  %4134 = vmatprep.subr.mxu0 0.0
  %4135 = vmatpush1.msra.mxu0 0.0
  %4136 = vmatprep.subr.mxu0 0.0
  %4137 = vmatpush1.msra.mxu0 0.0
  %4138 = vmatprep.subr.mxu0 0.0
  %4139 = vmatpush1.msra.mxu0 0.0
  %4140 = vmatprep.subr.mxu0 0.0
  %4141 = vmatpush1.msra.mxu0 0.0
  %4142 = vmatprep.subr.mxu0 0.0
  %4143 = vmatpush1.msra.mxu0 0.0
  %4144 = vmatprep.subr.mxu0 0.0
  %4145 = vmatpush1.msra.mxu0 0.0
  %4146 = vmatprep.subr.mxu0 0.0
  %4147 = vmatpush1.msra.mxu0 0.0
  %4148 = vmatprep.subr.mxu0 0.0
  %4149 = vmatpush1.msra.mxu0 0.0
  %4150 = vmatprep.subr.mxu0 0.0
  %4151 = vmatpush1.msra.mxu0 0.0
  %4152 = vmatprep.subr.mxu0 0.0
  %4153 = vmatpush1.msra.mxu0 0.0
  %4154 = vmatprep.subr.mxu0 0.0
  %4155 = vmatpush1.msra.mxu0 0.0
  %4156 = vmatprep.subr.mxu0 0.0
  %4157 = vmatpush1.msra.mxu0 0.0
  %4158 = vmatprep.subr.mxu0 0.0
  %4159 = vmatpush1.msra.mxu0 0.0
  %4160 = vmatprep.subr.mxu0 0.0
  %4161 = vmatpush1.msra.mxu0 0.0
  %4162 = vmatprep.subr.mxu0 0.0
  %4163 = vmatpush1.msra.mxu0 %v4130
  %4164 = vmatprep.subr.mxu0 0.0
  %4165 = vmatpush2.msra.mxu0 0.0
  %4166 = vmatprep.subr.mxu0 0.0
  %4167 = vmatpush2.msra.mxu0 0.0
  %4168 = vmatprep.subr.mxu0 0.0
  %4169 = vmatpush2.msra.mxu0 0.0
  %4170 = vmatprep.subr.mxu0 0.0
  %4171 = vmatpush2.msra.mxu0 0.0
  %4172 = vmatprep.subr.mxu0 0.0
  %4173 = vmatpush2.msra.mxu0 0.0
  %4174 = vmatprep.subr.mxu0 0.0
  %4175 = vmatpush2.msra.mxu0 0.0
  %4176 = vmatprep.subr.mxu0 0.0
  %4177 = vmatpush2.msra.mxu0 0.0
  %4178 = vmatprep.subr.mxu0 0.0
  %4179 = vmatpush2.msra.mxu0 0.0
  %4180 = vmatprep.subr.mxu0 0.0
  %4181 = vmatpush2.msra.mxu0 0.0
  %4182 = vmatprep.subr.mxu0 0.0
  %4183 = vmatpush2.msra.mxu0 0.0
  %4184 = vmatprep.subr.mxu0 0.0
  %4185 = vmatpush2.msra.mxu0 0.0
  %4186 = vmatprep.subr.mxu0 0.0
  %4187 = vmatpush2.msra.mxu0 0.0
  %4188 = vmatprep.subr.mxu0 0.0
  %4189 = vmatpush2.msra.mxu0 0.0
  %4190 = vmatprep.subr.mxu0 0.0
  %4191 = vmatpush2.msra.mxu0 0.0
  %4192 = vmatprep.subr.mxu0 0.0
  %4193 = vmatpush2.msra.mxu0 0.0
  %4194 = vmatprep.subr.mxu0 0.0
  %4195 = vmatpush2.msra.mxu0 0.0
  %4196 = vmatprep.mubr.f32.mxu0 0.0
  %4197 = vmatmul.mubr.f32.gmra.mxu0 %v4118
  %v4198 = vpop.f32.mrf.mxu0
  %v4199 = vadd.f32 0.0, %v4198
  %v4200 = vpop.f32.mrf.mxu0
  %4201 = vmatprep.mubr.f32.mxu0 0.0
  %4202 = vmatmul.mubr.f32.gmra.mxu0 %v4121
  %v4203 = vpop.f32.mrf.mxu0
  %v4204 = vadd.f32 0.0, %v4203
  %v4205 = vpop.f32.mrf.mxu0
  %4206 = vmatprep.mubr.f32.mxu0 0.0
  %4207 = vmatmul.mubr.f32.gmra.mxu0 %v4124
  %v4208 = vpop.f32.mrf.mxu0
  %v4209 = vadd.f32 0.0, %v4208
  %v4210 = vpop.f32.mrf.mxu0
  %4211 = vmatprep.mubr.f32.mxu0 0.0
  %4212 = vmatmul.mubr.f32.gmra.mxu0 %v4127
  %v4213 = vpop.f32.mrf.mxu0
  %v4214 = vadd.f32 0.0, %v4213
  %v4215 = vpop.f32.mrf.mxu0
  %4216 = vdwg.mxu0
  %4217 = vrot.lane.b32.xlu0 %v3968, 5
  %v4218 = vpop.permute.xlu0 %4217
  %4219 = vrot.lane.b32.xlu0 %v3973, 5
  %v4220 = vpop.permute.xlu0 %4219
  %v4221 = vmul.f32 %v4218, %v404
  %v4222 = vmul.f32 %v4220, %v404
  %4223 = vrot.lane.b32.xlu0 %v3968, 4
  %v4224 = vpop.permute.xlu0 %4223
  %4225 = vrot.lane.b32.xlu0 %v3973, 4
  %v4226 = vpop.permute.xlu0 %4225
  %v4227 = vmul.f32 %v4224, %v406
  %v4228 = vmul.f32 %v4226, %v406
  %4229 = vrot.lane.b32.xlu0 %v3968, 3
  %v4230 = vpop.permute.xlu0 %4229
  %4231 = vrot.lane.b32.xlu0 %v3973, 3
  %v4232 = vpop.permute.xlu0 %4231
  %v4233 = vmul.f32 %v4230, %v410
  %v4234 = vmul.f32 %v4232, %v410
  %4235 = vrot.lane.b32.xlu0 %v3968, 1
  %v4236 = vpop.permute.xlu0 %4235
  %4237 = vrot.lane.b32.xlu0 %v3973, 1
  %v4238 = vpop.permute.xlu0 %4237
  %v4239 = vmul.f32 %v4236, %v412
  %v4240 = vmul.f32 %v4238, %v412
  %4241 = vrot.lane.b32.xlu0 %v3968, 127
  %v4242 = vpop.permute.xlu0 %4241
  %4243 = vrot.lane.b32.xlu0 %v3973, 127
  %v4244 = vpop.permute.xlu0 %4243
  %v4245 = vmul.f32 %v4242, %v414
  %v4246 = vmul.f32 %v4244, %v414
  %4247 = vrot.lane.b32.xlu0 %v3968, 125
  %v4248 = vpop.permute.xlu0 %4247
  %4249 = vrot.lane.b32.xlu0 %v3973, 125
  %v4250 = vpop.permute.xlu0 %4249
  %v4251 = vmul.f32 %v4248, %v418
  %v4252 = vmul.f32 %v4250, %v418
  %4253 = vrot.lane.b32.xlu0 %v3968, 124
  %v4254 = vpop.permute.xlu0 %4253
  %4255 = vrot.lane.b32.xlu0 %v3973, 124
  %v4256 = vpop.permute.xlu0 %4255
  %v4257 = vmul.f32 %v4254, %v420
  %v4258 = vmul.f32 %v4256, %v420
  %4259 = vrot.lane.b32.xlu0 %v3968, 123
  %v4260 = vpop.permute.xlu0 %4259
  %4261 = vrot.lane.b32.xlu0 %v3973, 123
  %v4262 = vpop.permute.xlu0 %4261
  %v4263 = vmul.f32 %v4260, %v423
  %v4264 = vmul.f32 %v4262, %v423
  %v4265 = vld [vmem:[%s41] sm:$0xff]
  %v4266 = vld [vmem:[%s41 + $0x8] sm:$0xff]
  %v4267 = vld [vmem:[%s41 + $0x10] sm:$0xff]
  %v4268 = vld [vmem:[%s41 + $0x18] sm:$0xff]
  %v4269 = vld [vmem:[%s41 + $0x20] sm:$0xff]
  %v4270 = vld [vmem:[%s41 + $0x28] sm:$0xff]
  %v4271 = vld [vmem:[%s41 + $0x30] sm:$0xff]
  %v4272 = vld [vmem:[%s41 + $0x38] sm:$0xff]
  %4274 = vset.pattern.permute.xlu0 0
  %4275 = vperm.xlu0 %4274, %v3984
  %v4276 = vpop.permute.xlu0 %4275
  %4279 = vset.pattern.permute.xlu0 0
  %4280 = vperm.xlu0 %4279, %v3985
  %v4281 = vpop.permute.xlu0 %4280
  %4284 = vset.pattern.permute.xlu0 0
  %4285 = vperm.xlu0 %4284, %v3986
  %v4286 = vpop.permute.xlu0 %4285
  %4289 = vset.pattern.permute.xlu0 0
  %4290 = vperm.xlu0 %4289, %v3987
  %v4291 = vpop.permute.xlu0 %4290
  %v4294 = vsel %vm2189, %v4266, 0
  %v4297 = vsel %vm2189, %v4268, 0
  %v4300 = vsel %vm2189, %v4270, 0
  %v4303 = vsel %vm2189, %v4272, 0
  %4305 = vmatprep.subr.mxu0 0.0
  %4306 = vmatpush1.msra.mxu0 %v4258
  %4307 = vmatprep.subr.mxu0 0.0
  %4308 = vmatpush1.msra.mxu0 %v4257
  %4309 = vmatprep.subr.mxu0 0.0
  %4310 = vmatpush1.msra.mxu0 %v4252
  %4311 = vmatprep.subr.mxu0 0.0
  %4312 = vmatpush1.msra.mxu0 %v4251
  %4313 = vmatprep.subr.mxu0 0.0
  %4314 = vmatpush1.msra.mxu0 %v4246
  %4315 = vmatprep.subr.mxu0 0.0
  %4316 = vmatpush1.msra.mxu0 %v4245
  %4317 = vmatprep.subr.mxu0 0.0
  %4318 = vmatpush1.msra.mxu0 %v3973
  %4319 = vmatprep.subr.mxu0 0.0
  %4320 = vmatpush1.msra.mxu0 %v3968
  %4321 = vmatprep.subr.mxu0 0.0
  %4322 = vmatpush1.msra.mxu0 %v4240
  %4323 = vmatprep.subr.mxu0 0.0
  %4324 = vmatpush1.msra.mxu0 %v4239
  %4325 = vmatprep.subr.mxu0 0.0
  %4326 = vmatpush1.msra.mxu0 %v4234
  %4327 = vmatprep.subr.mxu0 0.0
  %4328 = vmatpush1.msra.mxu0 %v4233
  %4329 = vmatprep.subr.mxu0 0.0
  %4330 = vmatpush1.msra.mxu0 %v4228
  %4331 = vmatprep.subr.mxu0 0.0
  %4332 = vmatpush1.msra.mxu0 %v4227
  %4333 = vmatprep.subr.mxu0 0.0
  %4334 = vmatpush1.msra.mxu0 %v4222
  %4335 = vmatprep.subr.mxu0 0.0
  %4336 = vmatpush1.msra.mxu0 %v4221
  %4337 = vmatprep.subr.mxu0 0.0
  %4338 = vmatpush2.msra.mxu0 0.0
  %4339 = vmatprep.subr.mxu0 0.0
  %4340 = vmatpush2.msra.mxu0 0.0
  %4341 = vmatprep.subr.mxu0 0.0
  %4342 = vmatpush2.msra.mxu0 0.0
  %4343 = vmatprep.subr.mxu0 0.0
  %4344 = vmatpush2.msra.mxu0 0.0
  %4345 = vmatprep.subr.mxu0 0.0
  %4346 = vmatpush2.msra.mxu0 0.0
  %4347 = vmatprep.subr.mxu0 0.0
  %4348 = vmatpush2.msra.mxu0 0.0
  %4349 = vmatprep.subr.mxu0 0.0
  %4350 = vmatpush2.msra.mxu0 0.0
  %4351 = vmatprep.subr.mxu0 0.0
  %4352 = vmatpush2.msra.mxu0 0.0
  %4353 = vmatprep.subr.mxu0 0.0
  %4354 = vmatpush2.msra.mxu0 0.0
  %4355 = vmatprep.subr.mxu0 0.0
  %4356 = vmatpush2.msra.mxu0 0.0
  %4357 = vmatprep.subr.mxu0 0.0
  %4358 = vmatpush2.msra.mxu0 0.0
  %4359 = vmatprep.subr.mxu0 0.0
  %4360 = vmatpush2.msra.mxu0 0.0
  %4361 = vmatprep.subr.mxu0 0.0
  %4362 = vmatpush2.msra.mxu0 0.0
  %4363 = vmatprep.subr.mxu0 0.0
  %4364 = vmatpush2.msra.mxu0 0.0
  %4365 = vmatprep.subr.mxu0 0.0
  %4366 = vmatpush2.msra.mxu0 %v4264
  %4367 = vmatprep.subr.mxu0 0.0
  %4368 = vmatpush2.msra.mxu0 %v4263
  %4369 = vmatprep.mubr.f32.mxu0 %v4294
  %4370 = vmatmul.mubr.f32.gmra.mxu0 %v4265
  %v4371 = vpop.f32.mrf.mxu0
  %v4372 = vadd.f32 %v4276, %v4371
  %v4373 = vpop.f32.mrf.mxu0
  %4374 = vmatprep.mubr.f32.mxu0 %v4297
  %4375 = vmatmul.mubr.f32.gmra.mxu0 %v4267
  %v4376 = vpop.f32.mrf.mxu0
  %v4377 = vadd.f32 %v4281, %v4376
  %v4378 = vpop.f32.mrf.mxu0
  %4379 = vmatprep.mubr.f32.mxu0 %v4300
  %4380 = vmatmul.mubr.f32.gmra.mxu0 %v4269
  %v4381 = vpop.f32.mrf.mxu0
  %v4382 = vadd.f32 %v4286, %v4381
  %v4383 = vpop.f32.mrf.mxu0
  %4384 = vmatprep.mubr.f32.mxu0 %v4303
  %4385 = vmatmul.mubr.f32.gmra.mxu0 %v4271
  %v4386 = vpop.f32.mrf.mxu0
  %v4387 = vadd.f32 %v4291, %v4386
  %v4388 = vpop.f32.mrf.mxu0
  %4389 = vdwg.mxu0
  %v4390 = vxor.u32 %v4372, 2147483648
  %v4391 = vxor.u32 %v4377, 2147483648
  %v4392 = vxor.u32 %v4382, 2147483648
  %v4393 = vxor.u32 %v4387, 2147483648
  %v4394 = vmul.f32 %v4390, 1.442695
  %v4395 = vpow.pop %v4394
  %v4396 = vmul.f32 %v4391, 1.442695
  %v4397 = vpow.pop %v4396
  %v4398 = vmul.f32 %v4392, 1.442695
  %v4399 = vpow.pop %v4398
  %v4400 = vmul.f32 %v4393, 1.442695
  %v4401 = vpow.pop %v4400
  %v4402 = vadd.f32 %v4395, 1.0
  %v4403 = vadd.f32 %v4397, 1.0
  %v4404 = vadd.f32 %v4399, 1.0
  %v4405 = vadd.f32 %v4401, 1.0
  %v4406 = vrcp.pop %v4402
  %v4407 = vmul.f32 1.0, %v4406
  %v4408 = vrcp.pop %v4403
  %v4409 = vmul.f32 1.0, %v4408
  %v4410 = vrcp.pop %v4404
  %v4411 = vmul.f32 1.0, %v4410
  %v4412 = vrcp.pop %v4405
  %v4413 = vmul.f32 1.0, %v4412
  %v4414 = vmul.f32 %v4372, %v4407
  %v4415 = vmul.f32 %v4377, %v4409
  %v4416 = vmul.f32 %v4382, %v4411
  %v4417 = vmul.f32 %v4387, %v4413
  %v4418 = vadd.f32 %v4414, %v4199
  %v4419 = vadd.f32 %v4415, %v4204
  %v4420 = vadd.f32 %v4416, %v4209
  %v4421 = vadd.f32 %v4417, %v4214
  %v4422 = vxor.u32 %v4418, 2147483648
  %v4423 = vxor.u32 %v4419, 2147483648
  %v4424 = vxor.u32 %v4420, 2147483648
  %v4425 = vxor.u32 %v4421, 2147483648
  %v4426 = vmul.f32 %v4422, 1.442695
  %v4427 = vpow.pop %v4426
  %v4428 = vmul.f32 %v4423, 1.442695
  %v4429 = vpow.pop %v4428
  %v4430 = vmul.f32 %v4424, 1.442695
  %v4431 = vpow.pop %v4430
  %v4432 = vmul.f32 %v4425, 1.442695
  %v4433 = vpow.pop %v4432
  %v4434 = vadd.f32 %v4427, 1.0
  %v4435 = vadd.f32 %v4429, 1.0
  %v4436 = vadd.f32 %v4431, 1.0
  %v4437 = vadd.f32 %v4433, 1.0
  %v4438 = vrcp.pop %v4434
  %v4439 = vmul.f32 1.0, %v4438
  %v4440 = vrcp.pop %v4435
  %v4441 = vmul.f32 1.0, %v4440
  %v4442 = vrcp.pop %v4436
  %v4443 = vmul.f32 1.0, %v4442
  %v4444 = vrcp.pop %v4437
  %v4445 = vmul.f32 1.0, %v4444
  %v4446 = vmul.f32 %v4418, %v4439
  %v4447 = vmul.f32 %v4419, %v4441
  %v4448 = vmul.f32 %v4420, %v4443
  %v4449 = vmul.f32 %v4421, %v4445
  %4450 = vrot.lane.b32.xlu0 %v4446, 5
  %v4451 = vpop.permute.xlu0 %4450
  %4452 = vrot.lane.b32.xlu0 %v4447, 5
  %v4453 = vpop.permute.xlu0 %4452
  %4454 = vrot.lane.b32.xlu0 %v4448, 5
  %v4455 = vpop.permute.xlu0 %4454
  %4456 = vrot.lane.b32.xlu0 %v4449, 5
  %v4457 = vpop.permute.xlu0 %4456
  %v4458 = vmul.f32 %v4451, %v404
  %v4459 = vmul.f32 %v4453, %v404
  %v4460 = vmul.f32 %v4455, %v404
  %v4461 = vmul.f32 %v4457, %v404
  %4462 = vrot.lane.b32.xlu0 %v4446, 4
  %v4463 = vpop.permute.xlu0 %4462
  %4464 = vrot.lane.b32.xlu0 %v4447, 4
  %v4465 = vpop.permute.xlu0 %4464
  %4466 = vrot.lane.b32.xlu0 %v4448, 4
  %v4467 = vpop.permute.xlu0 %4466
  %4468 = vrot.lane.b32.xlu0 %v4449, 4
  %v4469 = vpop.permute.xlu0 %4468
  %v4470 = vmul.f32 %v4463, %v406
  %v4471 = vmul.f32 %v4465, %v406
  %v4472 = vmul.f32 %v4467, %v406
  %v4473 = vmul.f32 %v4469, %v406
  %4474 = vrot.lane.b32.xlu0 %v4446, 3
  %v4475 = vpop.permute.xlu0 %4474
  %4476 = vrot.lane.b32.xlu0 %v4447, 3
  %v4477 = vpop.permute.xlu0 %4476
  %4478 = vrot.lane.b32.xlu0 %v4448, 3
  %v4479 = vpop.permute.xlu0 %4478
  %4480 = vrot.lane.b32.xlu0 %v4449, 3
  %v4481 = vpop.permute.xlu0 %4480
  %v4482 = vmul.f32 %v4475, %v410
  %v4483 = vmul.f32 %v4477, %v410
  %v4484 = vmul.f32 %v4479, %v410
  %v4485 = vmul.f32 %v4481, %v410
  %4486 = vrot.lane.b32.xlu0 %v4446, 1
  %v4487 = vpop.permute.xlu0 %4486
  %4488 = vrot.lane.b32.xlu0 %v4447, 1
  %v4489 = vpop.permute.xlu0 %4488
  %4490 = vrot.lane.b32.xlu0 %v4448, 1
  %v4491 = vpop.permute.xlu0 %4490
  %4492 = vrot.lane.b32.xlu0 %v4449, 1
  %v4493 = vpop.permute.xlu0 %4492
  %v4494 = vmul.f32 %v4487, %v412
  %v4495 = vmul.f32 %v4489, %v412
  %v4496 = vmul.f32 %v4491, %v412
  %v4497 = vmul.f32 %v4493, %v412
  %4498 = vrot.lane.b32.xlu0 %v4446, 127
  %v4499 = vpop.permute.xlu0 %4498
  %4500 = vrot.lane.b32.xlu0 %v4447, 127
  %v4501 = vpop.permute.xlu0 %4500
  %4502 = vrot.lane.b32.xlu0 %v4448, 127
  %v4503 = vpop.permute.xlu0 %4502
  %4504 = vrot.lane.b32.xlu0 %v4449, 127
  %v4505 = vpop.permute.xlu0 %4504
  %v4506 = vmul.f32 %v4499, %v414
  %v4507 = vmul.f32 %v4501, %v414
  %v4508 = vmul.f32 %v4503, %v414
  %v4509 = vmul.f32 %v4505, %v414
  %4510 = vrot.lane.b32.xlu0 %v4446, 125
  %v4511 = vpop.permute.xlu0 %4510
  %4512 = vrot.lane.b32.xlu0 %v4447, 125
  %v4513 = vpop.permute.xlu0 %4512
  %4514 = vrot.lane.b32.xlu0 %v4448, 125
  %v4515 = vpop.permute.xlu0 %4514
  %4516 = vrot.lane.b32.xlu0 %v4449, 125
  %v4517 = vpop.permute.xlu0 %4516
  %v4518 = vmul.f32 %v4511, %v418
  %v4519 = vmul.f32 %v4513, %v418
  %v4520 = vmul.f32 %v4515, %v418
  %v4521 = vmul.f32 %v4517, %v418
  %4522 = vrot.lane.b32.xlu0 %v4446, 124
  %v4523 = vpop.permute.xlu0 %4522
  %4524 = vrot.lane.b32.xlu0 %v4447, 124
  %v4525 = vpop.permute.xlu0 %4524
  %4526 = vrot.lane.b32.xlu0 %v4448, 124
  %v4527 = vpop.permute.xlu0 %4526
  %4528 = vrot.lane.b32.xlu0 %v4449, 124
  %v4529 = vpop.permute.xlu0 %4528
  %v4530 = vmul.f32 %v4523, %v420
  %v4531 = vmul.f32 %v4525, %v420
  %v4532 = vmul.f32 %v4527, %v420
  %v4533 = vmul.f32 %v4529, %v420
  %4534 = vrot.lane.b32.xlu0 %v4446, 123
  %v4535 = vpop.permute.xlu0 %4534
  %4536 = vrot.lane.b32.xlu0 %v4447, 123
  %v4537 = vpop.permute.xlu0 %4536
  %4538 = vrot.lane.b32.xlu0 %v4448, 123
  %v4539 = vpop.permute.xlu0 %4538
  %4540 = vrot.lane.b32.xlu0 %v4449, 123
  %v4541 = vpop.permute.xlu0 %4540
  %v4542 = vmul.f32 %v4535, %v423
  %v4543 = vmul.f32 %v4537, %v423
  %v4544 = vmul.f32 %v4539, %v423
  %v4545 = vmul.f32 %v4541, %v423
  %v4546 = vld [vmem:[%s45] sm:$0xff]
  %v4547 = vld [vmem:[%s45 + $0x8] sm:$0xff]
  %v4548 = vld [vmem:[%s45 + $0x10] sm:$0xff]
  %v4549 = vld [vmem:[%s45 + $0x18] sm:$0xff]
  %v4550 = vld [vmem:[%s45 + $0x20] sm:$0xff]
  %v4551 = vld [vmem:[%s45 + $0x28] sm:$0xff]
  %v4552 = vld [vmem:[%s45 + $0x30] sm:$0xff]
  %v4553 = vld [vmem:[%s45 + $0x38] sm:$0xff]
  %v4554 = vld [vmem:[%s45 + $0x40] sm:$0xff]
  %v4555 = vld [vmem:[%s45 + $0x48] sm:$0xff]
  %v4556 = vld [vmem:[%s45 + $0x50] sm:$0xff]
  %v4557 = vld [vmem:[%s45 + $0x58] sm:$0xff]
  %4559 = vset.pattern.permute.xlu0 0
  %4560 = vperm.xlu0 %4559, %v3988
  %v4561 = vpop.permute.xlu0 %4560
  %4564 = vset.pattern.permute.xlu0 0
  %4565 = vperm.xlu0 %4564, %v3989
  %v4566 = vpop.permute.xlu0 %4565
  %4569 = vset.pattern.permute.xlu0 0
  %4570 = vperm.xlu0 %4569, %v3990
  %v4571 = vpop.permute.xlu0 %4570
  %4574 = vset.pattern.permute.xlu0 0
  %4575 = vperm.xlu0 %4574, %v3991
  %v4576 = vpop.permute.xlu0 %4575
  %vm4578 = vcmask 261120
  %v4580 = vsel %vm4578, %v4548, 0
  %v4583 = vsel %vm4578, %v4551, 0
  %v4586 = vsel %vm4578, %v4554, 0
  %v4589 = vsel %vm4578, %v4557, 0
  %4591 = vmatprep.subr.mxu0 0.0
  %4592 = vmatpush1.msra.mxu0 %v4497
  %4593 = vmatprep.subr.mxu0 0.0
  %4594 = vmatpush1.msra.mxu0 %v4496
  %4595 = vmatprep.subr.mxu0 0.0
  %4596 = vmatpush1.msra.mxu0 %v4495
  %4597 = vmatprep.subr.mxu0 0.0
  %4598 = vmatpush1.msra.mxu0 %v4494
  %4599 = vmatprep.subr.mxu0 0.0
  %4600 = vmatpush1.msra.mxu0 %v4485
  %4601 = vmatprep.subr.mxu0 0.0
  %4602 = vmatpush1.msra.mxu0 %v4484
  %4603 = vmatprep.subr.mxu0 0.0
  %4604 = vmatpush1.msra.mxu0 %v4483
  %4605 = vmatprep.subr.mxu0 0.0
  %4606 = vmatpush1.msra.mxu0 %v4482
  %4607 = vmatprep.subr.mxu0 0.0
  %4608 = vmatpush1.msra.mxu0 %v4473
  %4609 = vmatprep.subr.mxu0 0.0
  %4610 = vmatpush1.msra.mxu0 %v4472
  %4611 = vmatprep.subr.mxu0 0.0
  %4612 = vmatpush1.msra.mxu0 %v4471
  %4613 = vmatprep.subr.mxu0 0.0
  %4614 = vmatpush1.msra.mxu0 %v4470
  %4615 = vmatprep.subr.mxu0 0.0
  %4616 = vmatpush1.msra.mxu0 %v4461
  %4617 = vmatprep.subr.mxu0 0.0
  %4618 = vmatpush1.msra.mxu0 %v4460
  %4619 = vmatprep.subr.mxu0 0.0
  %4620 = vmatpush1.msra.mxu0 %v4459
  %4621 = vmatprep.subr.mxu0 0.0
  %4622 = vmatpush1.msra.mxu0 %v4458
  %4623 = vmatprep.subr.mxu0 0.0
  %4624 = vmatpush2.msra.mxu0 %v4533
  %4625 = vmatprep.subr.mxu0 0.0
  %4626 = vmatpush2.msra.mxu0 %v4532
  %4627 = vmatprep.subr.mxu0 0.0
  %4628 = vmatpush2.msra.mxu0 %v4531
  %4629 = vmatprep.subr.mxu0 0.0
  %4630 = vmatpush2.msra.mxu0 %v4530
  %4631 = vmatprep.subr.mxu0 0.0
  %4632 = vmatpush2.msra.mxu0 %v4521
  %4633 = vmatprep.subr.mxu0 0.0
  %4634 = vmatpush2.msra.mxu0 %v4520
  %4635 = vmatprep.subr.mxu0 0.0
  %4636 = vmatpush2.msra.mxu0 %v4519
  %4637 = vmatprep.subr.mxu0 0.0
  %4638 = vmatpush2.msra.mxu0 %v4518
  %4639 = vmatprep.subr.mxu0 0.0
  %4640 = vmatpush2.msra.mxu0 %v4509
  %4641 = vmatprep.subr.mxu0 0.0
  %4642 = vmatpush2.msra.mxu0 %v4508
  %4643 = vmatprep.subr.mxu0 0.0
  %4644 = vmatpush2.msra.mxu0 %v4507
  %4645 = vmatprep.subr.mxu0 0.0
  %4646 = vmatpush2.msra.mxu0 %v4506
  %4647 = vmatprep.subr.mxu0 0.0
  %4648 = vmatpush2.msra.mxu0 %v4449
  %4649 = vmatprep.subr.mxu0 0.0
  %4650 = vmatpush2.msra.mxu0 %v4448
  %4651 = vmatprep.subr.mxu0 0.0
  %4652 = vmatpush2.msra.mxu0 %v4447
  %4653 = vmatprep.subr.mxu0 0.0
  %4654 = vmatpush2.msra.mxu0 %v4446
  %4655 = vmatprep.mubr.f32.mxu0 %v4547
  %4656 = vmatmul.mubr.f32.gmra.mxu0 %v4546
  %v4657 = vpop.f32.mrf.mxu0
  %v4658 = vadd.f32 %v4561, %v4657
  %v4659 = vpop.f32.mrf.mxu0
  %4660 = vmatprep.mubr.f32.mxu0 %v4550
  %4661 = vmatmul.mubr.f32.gmra.mxu0 %v4549
  %v4662 = vpop.f32.mrf.mxu0
  %v4663 = vadd.f32 %v4566, %v4662
  %v4664 = vpop.f32.mrf.mxu0
  %4665 = vmatprep.mubr.f32.mxu0 %v4553
  %4666 = vmatmul.mubr.f32.gmra.mxu0 %v4552
  %v4667 = vpop.f32.mrf.mxu0
  %v4668 = vadd.f32 %v4571, %v4667
  %v4669 = vpop.f32.mrf.mxu0
  %4670 = vmatprep.mubr.f32.mxu0 %v4556
  %4671 = vmatmul.mubr.f32.gmra.mxu0 %v4555
  %v4672 = vpop.f32.mrf.mxu0
  %v4673 = vadd.f32 %v4576, %v4672
  %v4674 = vpop.f32.mrf.mxu0
  %4675 = vdwg.mxu0
  %4676 = vmatprep.subr.mxu0 0.0
  %4677 = vmatpush1.msra.mxu0 0.0
  %4678 = vmatprep.subr.mxu0 0.0
  %4679 = vmatpush1.msra.mxu0 0.0
  %4680 = vmatprep.subr.mxu0 0.0
  %4681 = vmatpush1.msra.mxu0 0.0
  %4682 = vmatprep.subr.mxu0 0.0
  %4683 = vmatpush1.msra.mxu0 0.0
  %4684 = vmatprep.subr.mxu0 0.0
  %4685 = vmatpush1.msra.mxu0 0.0
  %4686 = vmatprep.subr.mxu0 0.0
  %4687 = vmatpush1.msra.mxu0 0.0
  %4688 = vmatprep.subr.mxu0 0.0
  %4689 = vmatpush1.msra.mxu0 0.0
  %4690 = vmatprep.subr.mxu0 0.0
  %4691 = vmatpush1.msra.mxu0 0.0
  %4692 = vmatprep.subr.mxu0 0.0
  %4693 = vmatpush1.msra.mxu0 0.0
  %4694 = vmatprep.subr.mxu0 0.0
  %4695 = vmatpush1.msra.mxu0 0.0
  %4696 = vmatprep.subr.mxu0 0.0
  %4697 = vmatpush1.msra.mxu0 0.0
  %4698 = vmatprep.subr.mxu0 0.0
  %4699 = vmatpush1.msra.mxu0 0.0
  %4700 = vmatprep.subr.mxu0 0.0
  %4701 = vmatpush1.msra.mxu0 %v4545
  %4702 = vmatprep.subr.mxu0 0.0
  %4703 = vmatpush1.msra.mxu0 %v4544
  %4704 = vmatprep.subr.mxu0 0.0
  %4705 = vmatpush1.msra.mxu0 %v4543
  %4706 = vmatprep.subr.mxu0 0.0
  %4707 = vmatpush1.msra.mxu0 %v4542
  %4708 = vmatprep.subr.mxu0 0.0
  %4709 = vmatpush2.msra.mxu0 0.0
  %4710 = vmatprep.subr.mxu0 0.0
  %4711 = vmatpush2.msra.mxu0 0.0
  %4712 = vmatprep.subr.mxu0 0.0
  %4713 = vmatpush2.msra.mxu0 0.0
  %4714 = vmatprep.subr.mxu0 0.0
  %4715 = vmatpush2.msra.mxu0 0.0
  %4716 = vmatprep.subr.mxu0 0.0
  %4717 = vmatpush2.msra.mxu0 0.0
  %4718 = vmatprep.subr.mxu0 0.0
  %4719 = vmatpush2.msra.mxu0 0.0
  %4720 = vmatprep.subr.mxu0 0.0
  %4721 = vmatpush2.msra.mxu0 0.0
  %4722 = vmatprep.subr.mxu0 0.0
  %4723 = vmatpush2.msra.mxu0 0.0
  %4724 = vmatprep.subr.mxu0 0.0
  %4725 = vmatpush2.msra.mxu0 0.0
  %4726 = vmatprep.subr.mxu0 0.0
  %4727 = vmatpush2.msra.mxu0 0.0
  %4728 = vmatprep.subr.mxu0 0.0
  %4729 = vmatpush2.msra.mxu0 0.0
  %4730 = vmatprep.subr.mxu0 0.0
  %4731 = vmatpush2.msra.mxu0 0.0
  %4732 = vmatprep.subr.mxu0 0.0
  %4733 = vmatpush2.msra.mxu0 0.0
  %4734 = vmatprep.subr.mxu0 0.0
  %4735 = vmatpush2.msra.mxu0 0.0
  %4736 = vmatprep.subr.mxu0 0.0
  %4737 = vmatpush2.msra.mxu0 0.0
  %4738 = vmatprep.subr.mxu0 0.0
  %4739 = vmatpush2.msra.mxu0 0.0
  %4740 = vmatprep.mubr.f32.mxu0 0.0
  %4741 = vmatmul.mubr.f32.gmra.mxu0 %v4580
  %v4742 = vpop.f32.mrf.mxu0
  %v4743 = vadd.f32 %v4658, %v4742
  %v4744 = vpop.f32.mrf.mxu0
  %4745 = vmatprep.mubr.f32.mxu0 0.0
  %4746 = vmatmul.mubr.f32.gmra.mxu0 %v4583
  %v4747 = vpop.f32.mrf.mxu0
  %v4748 = vadd.f32 %v4663, %v4747
  %v4749 = vpop.f32.mrf.mxu0
  %4750 = vmatprep.mubr.f32.mxu0 0.0
  %4751 = vmatmul.mubr.f32.gmra.mxu0 %v4586
  %v4752 = vpop.f32.mrf.mxu0
  %v4753 = vadd.f32 %v4668, %v4752
  %v4754 = vpop.f32.mrf.mxu0
  %4755 = vmatprep.mubr.f32.mxu0 0.0
  %4756 = vmatmul.mubr.f32.gmra.mxu0 %v4589
  %v4757 = vpop.f32.mrf.mxu0
  %v4758 = vadd.f32 %v4673, %v4757
  %v4759 = vpop.f32.mrf.mxu0
  %4760 = vdwg.mxu0
  %4762 = vset.pattern.permute.xlu0 0
  %4763 = vperm.xlu0 %4762, %v3996
  %v4764 = vpop.permute.xlu0 %4763
  %4767 = vset.pattern.permute.xlu0 0
  %4768 = vperm.xlu0 %4767, %v3997
  %v4769 = vpop.permute.xlu0 %4768
  %4772 = vset.pattern.permute.xlu0 0
  %4773 = vperm.xlu0 %4772, %v3998
  %v4774 = vpop.permute.xlu0 %4773
  %4777 = vset.pattern.permute.xlu0 0
  %4778 = vperm.xlu0 %4777, %v3999
  %v4779 = vpop.permute.xlu0 %4778
  %v4782 = vsel %vm2189, %v3992, 0
  %v4785 = vsel %vm2189, %v3993, 0
  %v4788 = vsel %vm2189, %v3994, 0
  %v4791 = vsel %vm2189, %v3995, 0
  %4793 = vmatprep.subr.mxu0 0.0
  %4794 = vmatpush1.msra.mxu0 0.0
  %4795 = vmatprep.subr.mxu0 0.0
  %4796 = vmatpush1.msra.mxu0 0.0
  %4797 = vmatprep.subr.mxu0 0.0
  %4798 = vmatpush1.msra.mxu0 0.0
  %4799 = vmatprep.subr.mxu0 0.0
  %4800 = vmatpush1.msra.mxu0 0.0
  %4801 = vmatprep.subr.mxu0 0.0
  %4802 = vmatpush1.msra.mxu0 0.0
  %4803 = vmatprep.subr.mxu0 0.0
  %4804 = vmatpush1.msra.mxu0 0.0
  %4805 = vmatprep.subr.mxu0 0.0
  %4806 = vmatpush1.msra.mxu0 0.0
  %4807 = vmatprep.subr.mxu0 0.0
  %4808 = vmatpush1.msra.mxu0 0.0
  %4809 = vmatprep.subr.mxu0 0.0
  %4810 = vmatpush1.msra.mxu0 0.0
  %4811 = vmatprep.subr.mxu0 0.0
  %4812 = vmatpush1.msra.mxu0 0.0
  %4813 = vmatprep.subr.mxu0 0.0
  %4814 = vmatpush1.msra.mxu0 0.0
  %4815 = vmatprep.subr.mxu0 0.0
  %4816 = vmatpush1.msra.mxu0 0.0
  %4817 = vmatprep.subr.mxu0 0.0
  %4818 = vmatpush1.msra.mxu0 0.0
  %4819 = vmatprep.subr.mxu0 0.0
  %4820 = vmatpush1.msra.mxu0 0.0
  %4821 = vmatprep.subr.mxu0 0.0
  %4822 = vmatpush1.msra.mxu0 %v3973
  %4823 = vmatprep.subr.mxu0 0.0
  %4824 = vmatpush1.msra.mxu0 %v3968
  %4825 = vmatprep.subr.mxu0 0.0
  %4826 = vmatpush2.msra.mxu0 0.0
  %4827 = vmatprep.subr.mxu0 0.0
  %4828 = vmatpush2.msra.mxu0 0.0
  %4829 = vmatprep.subr.mxu0 0.0
  %4830 = vmatpush2.msra.mxu0 0.0
  %4831 = vmatprep.subr.mxu0 0.0
  %4832 = vmatpush2.msra.mxu0 0.0
  %4833 = vmatprep.subr.mxu0 0.0
  %4834 = vmatpush2.msra.mxu0 0.0
  %4835 = vmatprep.subr.mxu0 0.0
  %4836 = vmatpush2.msra.mxu0 0.0
  %4837 = vmatprep.subr.mxu0 0.0
  %4838 = vmatpush2.msra.mxu0 0.0
  %4839 = vmatprep.subr.mxu0 0.0
  %4840 = vmatpush2.msra.mxu0 0.0
  %4841 = vmatprep.subr.mxu0 0.0
  %4842 = vmatpush2.msra.mxu0 0.0
  %4843 = vmatprep.subr.mxu0 0.0
  %4844 = vmatpush2.msra.mxu0 0.0
  %4845 = vmatprep.subr.mxu0 0.0
  %4846 = vmatpush2.msra.mxu0 0.0
  %4847 = vmatprep.subr.mxu0 0.0
  %4848 = vmatpush2.msra.mxu0 0.0
  %4849 = vmatprep.subr.mxu0 0.0
  %4850 = vmatpush2.msra.mxu0 0.0
  %4851 = vmatprep.subr.mxu0 0.0
  %4852 = vmatpush2.msra.mxu0 0.0
  %4853 = vmatprep.subr.mxu0 0.0
  %4854 = vmatpush2.msra.mxu0 0.0
  %4855 = vmatprep.subr.mxu0 0.0
  %4856 = vmatpush2.msra.mxu0 0.0
  %4857 = vmatprep.mubr.f32.mxu0 0.0
  %4858 = vmatmul.mubr.f32.gmra.mxu0 %v4782
  %v4859 = vpop.f32.mrf.mxu0
  %v4860 = vadd.f32 %v4764, %v4859
  %v4861 = vpop.f32.mrf.mxu0
  %4862 = vmatprep.mubr.f32.mxu0 0.0
  %4863 = vmatmul.mubr.f32.gmra.mxu0 %v4785
  %v4864 = vpop.f32.mrf.mxu0
  %v4865 = vadd.f32 %v4769, %v4864
  %v4866 = vpop.f32.mrf.mxu0
  %4867 = vmatprep.mubr.f32.mxu0 0.0
  %4868 = vmatmul.mubr.f32.gmra.mxu0 %v4788
  %v4869 = vpop.f32.mrf.mxu0
  %v4870 = vadd.f32 %v4774, %v4869
  %v4871 = vpop.f32.mrf.mxu0
  %4872 = vmatprep.mubr.f32.mxu0 0.0
  %4873 = vmatmul.mubr.f32.gmra.mxu0 %v4791
  %v4874 = vpop.f32.mrf.mxu0
  %v4875 = vadd.f32 %v4779, %v4874
  %v4876 = vpop.f32.mrf.mxu0
  %4877 = vdwg.mxu0
  %v4878 = vadd.f32 %v4743, %v4860
  %v4879 = vadd.f32 %v4748, %v4865
  %v4880 = vadd.f32 %v4753, %v4870
  %v4881 = vadd.f32 %v4758, %v4875
  %4882 = vst [vmem:[#allocation4] sm:$0xff] %v4878
  %4883 = vst [vmem:[#allocation4 + $0x8] sm:$0xff] %v4879
  %4884 = vst [vmem:[#allocation4 + $0x10] sm:$0xff] %v4880
  %4885 = vst [vmem:[#allocation4 + $0x18] sm:$0xff] %v4881
  %4886 = vmatprep.subr.mxu0 0.0
  %4887 = vmatpush1.msra.mxu0 %v2122
  %4888 = vmatprep.subr.mxu0 0.0
  %4889 = vmatpush1.msra.mxu0 %v2121
  %4890 = vmatprep.subr.mxu0 0.0
  %4891 = vmatpush1.msra.mxu0 %v2120
  %4892 = vmatprep.subr.mxu0 0.0
  %4893 = vmatpush1.msra.mxu0 %v2119
  %4894 = vmatprep.subr.mxu0 0.0
  %4895 = vmatpush1.msra.mxu0 %v2118
  %4896 = vmatprep.subr.mxu0 0.0
  %4897 = vmatpush1.msra.mxu0 %v2117
  %4898 = vmatprep.subr.mxu0 0.0
  %4899 = vmatpush1.msra.mxu0 %v2116
  %4900 = vmatprep.subr.mxu0 0.0
  %4901 = vmatpush1.msra.mxu0 %v2115
  %4902 = vmatprep.subr.mxu0 0.0
  %4903 = vmatpush1.msra.mxu0 %v2114
  %4904 = vmatprep.subr.mxu0 0.0
  %4905 = vmatpush1.msra.mxu0 %v2113
  %4906 = vmatprep.subr.mxu0 0.0
  %4907 = vmatpush1.msra.mxu0 %v2112
  %4908 = vmatprep.subr.mxu0 0.0
  %4909 = vmatpush1.msra.mxu0 %v2111
  %4910 = vmatprep.subr.mxu0 0.0
  %4911 = vmatpush1.msra.mxu0 %v2110
  %4912 = vmatprep.subr.mxu0 0.0
  %4913 = vmatpush1.msra.mxu0 %v2109
  %4914 = vmatprep.subr.mxu0 0.0
  %4915 = vmatpush1.msra.mxu0 %v2108
  %4916 = vmatprep.subr.mxu0 0.0
  %4917 = vmatpush1.msra.mxu0 %v2107
  %4918 = vmatprep.subr.mxu0 0.0
  %4919 = vmatpush2.msra.mxu0 0.0
  %4920 = vmatprep.subr.mxu0 0.0
  %4921 = vmatpush2.msra.mxu0 0.0
  %4922 = vmatprep.subr.mxu0 0.0
  %4923 = vmatpush2.msra.mxu0 0.0
  %4924 = vmatprep.subr.mxu0 0.0
  %4925 = vmatpush2.msra.mxu0 0.0
  %4926 = vmatprep.subr.mxu0 0.0
  %4927 = vmatpush2.msra.mxu0 0.0
  %4928 = vmatprep.subr.mxu0 0.0
  %4929 = vmatpush2.msra.mxu0 0.0
  %4930 = vmatprep.subr.mxu0 0.0
  %4931 = vmatpush2.msra.mxu0 0.0
  %4932 = vmatprep.subr.mxu0 0.0
  %4933 = vmatpush2.msra.mxu0 0.0
  %4934 = vmatprep.subr.mxu0 0.0
  %4935 = vmatpush2.msra.mxu0 0.0
  %4936 = vmatprep.subr.mxu0 0.0
  %4937 = vmatpush2.msra.mxu0 0.0
  %4938 = vmatprep.subr.mxu0 0.0
  %4939 = vmatpush2.msra.mxu0 0.0
  %4940 = vmatprep.subr.mxu0 0.0
  %4941 = vmatpush2.msra.mxu0 0.0
  %4942 = vmatprep.subr.mxu0 0.0
  %4943 = vmatpush2.msra.mxu0 0.0
  %4944 = vmatprep.subr.mxu0 0.0
  %4945 = vmatpush2.msra.mxu0 0.0
  %4946 = vmatprep.subr.mxu0 0.0
  %4947 = vmatpush2.msra.mxu0 0.0
  %4948 = vmatprep.subr.mxu0 0.0
  %4949 = vmatpush2.msra.mxu0 0.0
  %4950 = vmatprep.mubr.f32.mxu0 0.0
  %4951 = vmatmul.mubr.f32.gmra.mxu0 %v4878
  %v4952 = vpop.f32.mrf.mxu0
  %v4953 = vadd.f32 0.0, %v4952
  %v4954 = vpop.f32.mrf.mxu0
  %4955 = vmatprep.mubr.f32.mxu0 0.0
  %4956 = vmatmul.mubr.f32.gmra.mxu0 %v4879
  %v4957 = vpop.f32.mrf.mxu0
  %v4958 = vadd.f32 0.0, %v4957
  %v4959 = vpop.f32.mrf.mxu0
  %4960 = vmatprep.mubr.f32.mxu0 0.0
  %4961 = vmatmul.mubr.f32.gmra.mxu0 %v4880
  %v4962 = vpop.f32.mrf.mxu0
  %v4963 = vadd.f32 0.0, %v4962
  %v4964 = vpop.f32.mrf.mxu0
  %4965 = vmatprep.mubr.f32.mxu0 0.0
  %4966 = vmatmul.mubr.f32.gmra.mxu0 %v4881
  %v4967 = vpop.f32.mrf.mxu0
  %v4968 = vadd.f32 0.0, %v4967
  %v4969 = vpop.f32.mrf.mxu0
  %4970 = vdwg.mxu0
  %v4971 = vld [vmem:[%s53] sm:$0xff]
  %v4972 = vld [vmem:[%s53 + $0x8] sm:$0xff]
  %v4973 = vld [vmem:[%s53 + $0x10] sm:$0xff]
  %v4974 = vld [vmem:[%s53 + $0x18] sm:$0xff]
  %v4975 = vld [vmem:[%s55] sm:$0xff]
  %v4976 = vld [vmem:[%s55 + $0x8] sm:$0xff]
  %v4977 = vld [vmem:[%s55 + $0x10] sm:$0xff]
  %v4978 = vld [vmem:[%s55 + $0x18] sm:$0xff]
  %v4979 = vld [vmem:[%s59] sm:$0xff]
  %v4980 = vld [vmem:[%s59 + $0x8] sm:$0xff]
  %v4981 = vld [vmem:[%s59 + $0x10] sm:$0xff]
  %v4982 = vld [vmem:[%s59 + $0x18] sm:$0xff]
  %v4983 = vld [vmem:[%s63] sm:$0xff]
  %v4984 = vld [vmem:[%s63 + $0x8] sm:$0xff]
  %v4985 = vld [vmem:[%s63 + $0x10] sm:$0xff]
  %v4986 = vld [vmem:[%s63 + $0x18] sm:$0xff]
  %4988 = vset.pattern.permute.xlu0 0
  %4989 = vperm.xlu0 %4988, %v4975
  %v4990 = vpop.permute.xlu0 %4989
  %4993 = vset.pattern.permute.xlu0 0
  %4994 = vperm.xlu0 %4993, %v4976
  %v4995 = vpop.permute.xlu0 %4994
  %4998 = vset.pattern.permute.xlu0 0
  %4999 = vperm.xlu0 %4998, %v4977
  %v5000 = vpop.permute.xlu0 %4999
  %5003 = vset.pattern.permute.xlu0 0
  %5004 = vperm.xlu0 %5003, %v4978
  %v5005 = vpop.permute.xlu0 %5004
  %v5008 = vsel %vm2189, %v4971, 0
  %v5011 = vsel %vm2189, %v4972, 0
  %v5014 = vsel %vm2189, %v4973, 0
  %v5017 = vsel %vm2189, %v4974, 0
  %5019 = vmatprep.subr.mxu0 0.0
  %5020 = vmatpush1.msra.mxu0 0.0
  %5021 = vmatprep.subr.mxu0 0.0
  %5022 = vmatpush1.msra.mxu0 0.0
  %5023 = vmatprep.subr.mxu0 0.0
  %5024 = vmatpush1.msra.mxu0 0.0
  %5025 = vmatprep.subr.mxu0 0.0
  %5026 = vmatpush1.msra.mxu0 0.0
  %5027 = vmatprep.subr.mxu0 0.0
  %5028 = vmatpush1.msra.mxu0 0.0
  %5029 = vmatprep.subr.mxu0 0.0
  %5030 = vmatpush1.msra.mxu0 0.0
  %5031 = vmatprep.subr.mxu0 0.0
  %5032 = vmatpush1.msra.mxu0 0.0
  %5033 = vmatprep.subr.mxu0 0.0
  %5034 = vmatpush1.msra.mxu0 0.0
  %5035 = vmatprep.subr.mxu0 0.0
  %5036 = vmatpush1.msra.mxu0 0.0
  %5037 = vmatprep.subr.mxu0 0.0
  %5038 = vmatpush1.msra.mxu0 0.0
  %5039 = vmatprep.subr.mxu0 0.0
  %5040 = vmatpush1.msra.mxu0 0.0
  %5041 = vmatprep.subr.mxu0 0.0
  %5042 = vmatpush1.msra.mxu0 0.0
  %5043 = vmatprep.subr.mxu0 0.0
  %5044 = vmatpush1.msra.mxu0 0.0
  %5045 = vmatprep.subr.mxu0 0.0
  %5046 = vmatpush1.msra.mxu0 0.0
  %5047 = vmatprep.subr.mxu0 0.0
  %5048 = vmatpush1.msra.mxu0 %v234
  %5049 = vmatprep.subr.mxu0 0.0
  %5050 = vmatpush1.msra.mxu0 %v233
  %5051 = vmatprep.subr.mxu0 0.0
  %5052 = vmatpush2.msra.mxu0 0.0
  %5053 = vmatprep.subr.mxu0 0.0
  %5054 = vmatpush2.msra.mxu0 0.0
  %5055 = vmatprep.subr.mxu0 0.0
  %5056 = vmatpush2.msra.mxu0 0.0
  %5057 = vmatprep.subr.mxu0 0.0
  %5058 = vmatpush2.msra.mxu0 0.0
  %5059 = vmatprep.subr.mxu0 0.0
  %5060 = vmatpush2.msra.mxu0 0.0
  %5061 = vmatprep.subr.mxu0 0.0
  %5062 = vmatpush2.msra.mxu0 0.0
  %5063 = vmatprep.subr.mxu0 0.0
  %5064 = vmatpush2.msra.mxu0 0.0
  %5065 = vmatprep.subr.mxu0 0.0
  %5066 = vmatpush2.msra.mxu0 0.0
  %5067 = vmatprep.subr.mxu0 0.0
  %5068 = vmatpush2.msra.mxu0 0.0
  %5069 = vmatprep.subr.mxu0 0.0
  %5070 = vmatpush2.msra.mxu0 0.0
  %5071 = vmatprep.subr.mxu0 0.0
  %5072 = vmatpush2.msra.mxu0 0.0
  %5073 = vmatprep.subr.mxu0 0.0
  %5074 = vmatpush2.msra.mxu0 0.0
  %5075 = vmatprep.subr.mxu0 0.0
  %5076 = vmatpush2.msra.mxu0 0.0
  %5077 = vmatprep.subr.mxu0 0.0
  %5078 = vmatpush2.msra.mxu0 0.0
  %5079 = vmatprep.subr.mxu0 0.0
  %5080 = vmatpush2.msra.mxu0 0.0
  %5081 = vmatprep.subr.mxu0 0.0
  %5082 = vmatpush2.msra.mxu0 0.0
  %5083 = vmatprep.mubr.f32.mxu0 0.0
  %5084 = vmatmul.mubr.f32.gmra.mxu0 %v5008
  %v5085 = vpop.f32.mrf.mxu0
  %v5086 = vadd.f32 %v4990, %v5085
  %v5087 = vpop.f32.mrf.mxu0
  %5088 = vmatprep.mubr.f32.mxu0 0.0
  %5089 = vmatmul.mubr.f32.gmra.mxu0 %v5011
  %v5090 = vpop.f32.mrf.mxu0
  %v5091 = vadd.f32 %v4995, %v5090
  %v5092 = vpop.f32.mrf.mxu0
  %5093 = vmatprep.mubr.f32.mxu0 0.0
  %5094 = vmatmul.mubr.f32.gmra.mxu0 %v5014
  %v5095 = vpop.f32.mrf.mxu0
  %v5096 = vadd.f32 %v5000, %v5095
  %v5097 = vpop.f32.mrf.mxu0
  %5098 = vmatprep.mubr.f32.mxu0 0.0
  %5099 = vmatmul.mubr.f32.gmra.mxu0 %v5017
  %v5100 = vpop.f32.mrf.mxu0
  %v5101 = vadd.f32 %v5005, %v5100
  %v5102 = vpop.f32.mrf.mxu0
  %5103 = vdwg.mxu0
  %v5105 = vsel %vm2263, %v5086, 0
  %v5108 = vsel %vm2263, %v5091, 0
  %v5111 = vsel %vm2263, %v5096, 0
  %v5114 = vsel %vm2263, %v5101, 0
  %v5117 = vsel %vm2267, %v456, 0
  %5119 = vmatprep.subr.mxu0 0.0
  %5120 = vmatpush1.msra.mxu0 0.0
  %5121 = vmatprep.subr.mxu0 0.0
  %5122 = vmatpush1.msra.mxu0 0.0
  %5123 = vmatprep.subr.mxu0 0.0
  %5124 = vmatpush1.msra.mxu0 0.0
  %5125 = vmatprep.subr.mxu0 0.0
  %5126 = vmatpush1.msra.mxu0 0.0
  %5127 = vmatprep.subr.mxu0 0.0
  %5128 = vmatpush1.msra.mxu0 0.0
  %5129 = vmatprep.subr.mxu0 0.0
  %5130 = vmatpush1.msra.mxu0 0.0
  %5131 = vmatprep.subr.mxu0 0.0
  %5132 = vmatpush1.msra.mxu0 0.0
  %5133 = vmatprep.subr.mxu0 0.0
  %5134 = vmatpush1.msra.mxu0 0.0
  %5135 = vmatprep.subr.mxu0 0.0
  %5136 = vmatpush1.msra.mxu0 0.0
  %5137 = vmatprep.subr.mxu0 0.0
  %5138 = vmatpush1.msra.mxu0 0.0
  %5139 = vmatprep.subr.mxu0 0.0
  %5140 = vmatpush1.msra.mxu0 0.0
  %5141 = vmatprep.subr.mxu0 0.0
  %5142 = vmatpush1.msra.mxu0 0.0
  %5143 = vmatprep.subr.mxu0 0.0
  %5144 = vmatpush1.msra.mxu0 0.0
  %5145 = vmatprep.subr.mxu0 0.0
  %5146 = vmatpush1.msra.mxu0 0.0
  %5147 = vmatprep.subr.mxu0 0.0
  %5148 = vmatpush1.msra.mxu0 0.0
  %5149 = vmatprep.subr.mxu0 0.0
  %5150 = vmatpush1.msra.mxu0 %v5117
  %5151 = vmatprep.subr.mxu0 0.0
  %5152 = vmatpush2.msra.mxu0 0.0
  %5153 = vmatprep.subr.mxu0 0.0
  %5154 = vmatpush2.msra.mxu0 0.0
  %5155 = vmatprep.subr.mxu0 0.0
  %5156 = vmatpush2.msra.mxu0 0.0
  %5157 = vmatprep.subr.mxu0 0.0
  %5158 = vmatpush2.msra.mxu0 0.0
  %5159 = vmatprep.subr.mxu0 0.0
  %5160 = vmatpush2.msra.mxu0 0.0
  %5161 = vmatprep.subr.mxu0 0.0
  %5162 = vmatpush2.msra.mxu0 0.0
  %5163 = vmatprep.subr.mxu0 0.0
  %5164 = vmatpush2.msra.mxu0 0.0
  %5165 = vmatprep.subr.mxu0 0.0
  %5166 = vmatpush2.msra.mxu0 0.0
  %5167 = vmatprep.subr.mxu0 0.0
  %5168 = vmatpush2.msra.mxu0 0.0
  %5169 = vmatprep.subr.mxu0 0.0
  %5170 = vmatpush2.msra.mxu0 0.0
  %5171 = vmatprep.subr.mxu0 0.0
  %5172 = vmatpush2.msra.mxu0 0.0
  %5173 = vmatprep.subr.mxu0 0.0
  %5174 = vmatpush2.msra.mxu0 0.0
  %5175 = vmatprep.subr.mxu0 0.0
  %5176 = vmatpush2.msra.mxu0 0.0
  %5177 = vmatprep.subr.mxu0 0.0
  %5178 = vmatpush2.msra.mxu0 0.0
  %5179 = vmatprep.subr.mxu0 0.0
  %5180 = vmatpush2.msra.mxu0 0.0
  %5181 = vmatprep.subr.mxu0 0.0
  %5182 = vmatpush2.msra.mxu0 0.0
  %5183 = vmatprep.mubr.f32.mxu0 0.0
  %5184 = vmatmul.mubr.f32.gmra.mxu0 %v5105
  %v5185 = vpop.f32.mrf.mxu0
  %v5186 = vadd.f32 0.0, %v5185
  %v5187 = vpop.f32.mrf.mxu0
  %5188 = vmatprep.mubr.f32.mxu0 0.0
  %5189 = vmatmul.mubr.f32.gmra.mxu0 %v5108
  %v5190 = vpop.f32.mrf.mxu0
  %v5191 = vadd.f32 0.0, %v5190
  %v5192 = vpop.f32.mrf.mxu0
  %5193 = vmatprep.mubr.f32.mxu0 0.0
  %5194 = vmatmul.mubr.f32.gmra.mxu0 %v5111
  %v5195 = vpop.f32.mrf.mxu0
  %v5196 = vadd.f32 0.0, %v5195
  %v5197 = vpop.f32.mrf.mxu0
  %5198 = vmatprep.mubr.f32.mxu0 0.0
  %5199 = vmatmul.mubr.f32.gmra.mxu0 %v5114
  %v5200 = vpop.f32.mrf.mxu0
  %v5201 = vadd.f32 0.0, %v5200
  %v5202 = vpop.f32.mrf.mxu0
  %5203 = vdwg.mxu0
  %5204 = vrot.lane.b32.xlu0 %v4953, 3
  %v5205 = vpop.permute.xlu0 %5204
  %5206 = vrot.lane.b32.xlu0 %v4958, 3
  %v5207 = vpop.permute.xlu0 %5206
  %5208 = vrot.lane.b32.xlu0 %v4963, 3
  %v5209 = vpop.permute.xlu0 %5208
  %5210 = vrot.lane.b32.xlu0 %v4968, 3
  %v5211 = vpop.permute.xlu0 %5210
  %v5212 = vmul.f32 %v5205, %v434
  %v5213 = vmul.f32 %v5207, %v434
  %v5214 = vmul.f32 %v5209, %v434
  %v5215 = vmul.f32 %v5211, %v434
  %5216 = vrot.lane.b32.xlu0 %v4953, 2
  %v5217 = vpop.permute.xlu0 %5216
  %5218 = vrot.lane.b32.xlu0 %v4958, 2
  %v5219 = vpop.permute.xlu0 %5218
  %5220 = vrot.lane.b32.xlu0 %v4963, 2
  %v5221 = vpop.permute.xlu0 %5220
  %5222 = vrot.lane.b32.xlu0 %v4968, 2
  %v5223 = vpop.permute.xlu0 %5222
  %v5224 = vmul.f32 %v5217, %v436
  %v5225 = vmul.f32 %v5219, %v436
  %v5226 = vmul.f32 %v5221, %v436
  %v5227 = vmul.f32 %v5223, %v436
  %5228 = vrot.lane.b32.xlu0 %v4953, 1
  %v5229 = vpop.permute.xlu0 %5228
  %5230 = vrot.lane.b32.xlu0 %v4958, 1
  %v5231 = vpop.permute.xlu0 %5230
  %5232 = vrot.lane.b32.xlu0 %v4963, 1
  %v5233 = vpop.permute.xlu0 %5232
  %5234 = vrot.lane.b32.xlu0 %v4968, 1
  %v5235 = vpop.permute.xlu0 %5234
  %v5236 = vmul.f32 %v5229, %v440
  %v5237 = vmul.f32 %v5231, %v440
  %v5238 = vmul.f32 %v5233, %v440
  %v5239 = vmul.f32 %v5235, %v440
  %v5240 = vmul.f32 %v5229, %v442
  %v5241 = vmul.f32 %v5231, %v442
  %v5242 = vmul.f32 %v5233, %v442
  %v5243 = vmul.f32 %v5235, %v442
  %5244 = vrot.lane.b32.xlu0 %v4953, 127
  %v5245 = vpop.permute.xlu0 %5244
  %5246 = vrot.lane.b32.xlu0 %v4958, 127
  %v5247 = vpop.permute.xlu0 %5246
  %5248 = vrot.lane.b32.xlu0 %v4963, 127
  %v5249 = vpop.permute.xlu0 %5248
  %5250 = vrot.lane.b32.xlu0 %v4968, 127
  %v5251 = vpop.permute.xlu0 %5250
  %v5252 = vmul.f32 %v5245, %v444
  %v5253 = vmul.f32 %v5247, %v444
  %v5254 = vmul.f32 %v5249, %v444
  %v5255 = vmul.f32 %v5251, %v444
  %v5256 = vmul.f32 %v5245, %v448
  %v5257 = vmul.f32 %v5247, %v448
  %v5258 = vmul.f32 %v5249, %v448
  %v5259 = vmul.f32 %v5251, %v448
  %5260 = vrot.lane.b32.xlu0 %v4953, 126
  %v5261 = vpop.permute.xlu0 %5260
  %5262 = vrot.lane.b32.xlu0 %v4958, 126
  %v5263 = vpop.permute.xlu0 %5262
  %5264 = vrot.lane.b32.xlu0 %v4963, 126
  %v5265 = vpop.permute.xlu0 %5264
  %5266 = vrot.lane.b32.xlu0 %v4968, 126
  %v5267 = vpop.permute.xlu0 %5266
  %v5268 = vmul.f32 %v5261, %v450
  %v5269 = vmul.f32 %v5263, %v450
  %v5270 = vmul.f32 %v5265, %v450
  %v5271 = vmul.f32 %v5267, %v450
  %5272 = vrot.lane.b32.xlu0 %v4953, 125
  %v5273 = vpop.permute.xlu0 %5272
  %5274 = vrot.lane.b32.xlu0 %v4958, 125
  %v5275 = vpop.permute.xlu0 %5274
  %5276 = vrot.lane.b32.xlu0 %v4963, 125
  %v5277 = vpop.permute.xlu0 %5276
  %5278 = vrot.lane.b32.xlu0 %v4968, 125
  %v5279 = vpop.permute.xlu0 %5278
  %v5280 = vmul.f32 %v5273, %v453
  %v5281 = vmul.f32 %v5275, %v453
  %v5282 = vmul.f32 %v5277, %v453
  %v5283 = vmul.f32 %v5279, %v453
  %v5284 = vld [vmem:[%s57] sm:$0xff]
  %v5285 = vld [vmem:[%s57 + $0x8] sm:$0xff]
  %v5286 = vld [vmem:[%s57 + $0x10] sm:$0xff]
  %v5287 = vld [vmem:[%s57 + $0x18] sm:$0xff]
  %v5288 = vld [vmem:[%s57 + $0x20] sm:$0xff]
  %v5289 = vld [vmem:[%s57 + $0x28] sm:$0xff]
  %v5290 = vld [vmem:[%s57 + $0x30] sm:$0xff]
  %v5291 = vld [vmem:[%s57 + $0x38] sm:$0xff]
  %v5292 = vld [vmem:[%s57 + $0x40] sm:$0xff]
  %v5293 = vld [vmem:[%s57 + $0x48] sm:$0xff]
  %v5294 = vld [vmem:[%s57 + $0x50] sm:$0xff]
  %v5295 = vld [vmem:[%s57 + $0x58] sm:$0xff]
  %5297 = vset.pattern.permute.xlu0 0
  %5298 = vperm.xlu0 %5297, %v4979
  %v5299 = vpop.permute.xlu0 %5298
  %5302 = vset.pattern.permute.xlu0 0
  %5303 = vperm.xlu0 %5302, %v4980
  %v5304 = vpop.permute.xlu0 %5303
  %5307 = vset.pattern.permute.xlu0 0
  %5308 = vperm.xlu0 %5307, %v4981
  %v5309 = vpop.permute.xlu0 %5308
  %5312 = vset.pattern.permute.xlu0 0
  %5313 = vperm.xlu0 %5312, %v4982
  %v5314 = vpop.permute.xlu0 %5313
  %v5317 = vsel %vm4578, %v5286, 0
  %v5320 = vsel %vm4578, %v5289, 0
  %v5323 = vsel %vm4578, %v5292, 0
  %v5326 = vsel %vm4578, %v5295, 0
  %5328 = vmatprep.subr.mxu0 0.0
  %5329 = vmatpush1.msra.mxu0 %v5243
  %5330 = vmatprep.subr.mxu0 0.0
  %5331 = vmatpush1.msra.mxu0 %v5242
  %5332 = vmatprep.subr.mxu0 0.0
  %5333 = vmatpush1.msra.mxu0 %v5241
  %5334 = vmatprep.subr.mxu0 0.0
  %5335 = vmatpush1.msra.mxu0 %v5240
  %5336 = vmatprep.subr.mxu0 0.0
  %5337 = vmatpush1.msra.mxu0 %v5239
  %5338 = vmatprep.subr.mxu0 0.0
  %5339 = vmatpush1.msra.mxu0 %v5238
  %5340 = vmatprep.subr.mxu0 0.0
  %5341 = vmatpush1.msra.mxu0 %v5237
  %5342 = vmatprep.subr.mxu0 0.0
  %5343 = vmatpush1.msra.mxu0 %v5236
  %5344 = vmatprep.subr.mxu0 0.0
  %5345 = vmatpush1.msra.mxu0 %v5227
  %5346 = vmatprep.subr.mxu0 0.0
  %5347 = vmatpush1.msra.mxu0 %v5226
  %5348 = vmatprep.subr.mxu0 0.0
  %5349 = vmatpush1.msra.mxu0 %v5225
  %5350 = vmatprep.subr.mxu0 0.0
  %5351 = vmatpush1.msra.mxu0 %v5224
  %5352 = vmatprep.subr.mxu0 0.0
  %5353 = vmatpush1.msra.mxu0 %v5215
  %5354 = vmatprep.subr.mxu0 0.0
  %5355 = vmatpush1.msra.mxu0 %v5214
  %5356 = vmatprep.subr.mxu0 0.0
  %5357 = vmatpush1.msra.mxu0 %v5213
  %5358 = vmatprep.subr.mxu0 0.0
  %5359 = vmatpush1.msra.mxu0 %v5212
  %5360 = vmatprep.subr.mxu0 0.0
  %5361 = vmatpush2.msra.mxu0 %v5271
  %5362 = vmatprep.subr.mxu0 0.0
  %5363 = vmatpush2.msra.mxu0 %v5270
  %5364 = vmatprep.subr.mxu0 0.0
  %5365 = vmatpush2.msra.mxu0 %v5269
  %5366 = vmatprep.subr.mxu0 0.0
  %5367 = vmatpush2.msra.mxu0 %v5268
  %5368 = vmatprep.subr.mxu0 0.0
  %5369 = vmatpush2.msra.mxu0 %v5259
  %5370 = vmatprep.subr.mxu0 0.0
  %5371 = vmatpush2.msra.mxu0 %v5258
  %5372 = vmatprep.subr.mxu0 0.0
  %5373 = vmatpush2.msra.mxu0 %v5257
  %5374 = vmatprep.subr.mxu0 0.0
  %5375 = vmatpush2.msra.mxu0 %v5256
  %5376 = vmatprep.subr.mxu0 0.0
  %5377 = vmatpush2.msra.mxu0 %v5255
  %5378 = vmatprep.subr.mxu0 0.0
  %5379 = vmatpush2.msra.mxu0 %v5254
  %5380 = vmatprep.subr.mxu0 0.0
  %5381 = vmatpush2.msra.mxu0 %v5253
  %5382 = vmatprep.subr.mxu0 0.0
  %5383 = vmatpush2.msra.mxu0 %v5252
  %5384 = vmatprep.subr.mxu0 0.0
  %5385 = vmatpush2.msra.mxu0 %v4968
  %5386 = vmatprep.subr.mxu0 0.0
  %5387 = vmatpush2.msra.mxu0 %v4963
  %5388 = vmatprep.subr.mxu0 0.0
  %5389 = vmatpush2.msra.mxu0 %v4958
  %5390 = vmatprep.subr.mxu0 0.0
  %5391 = vmatpush2.msra.mxu0 %v4953
  %5392 = vmatprep.mubr.f32.mxu0 %v5285
  %5393 = vmatmul.mubr.f32.gmra.mxu0 %v5284
  %v5394 = vpop.f32.mrf.mxu0
  %v5395 = vadd.f32 %v5299, %v5394
  %v5396 = vpop.f32.mrf.mxu0
  %5397 = vmatprep.mubr.f32.mxu0 %v5288
  %5398 = vmatmul.mubr.f32.gmra.mxu0 %v5287
  %v5399 = vpop.f32.mrf.mxu0
  %v5400 = vadd.f32 %v5304, %v5399
  %v5401 = vpop.f32.mrf.mxu0
  %5402 = vmatprep.mubr.f32.mxu0 %v5291
  %5403 = vmatmul.mubr.f32.gmra.mxu0 %v5290
  %v5404 = vpop.f32.mrf.mxu0
  %v5405 = vadd.f32 %v5309, %v5404
  %v5406 = vpop.f32.mrf.mxu0
  %5407 = vmatprep.mubr.f32.mxu0 %v5294
  %5408 = vmatmul.mubr.f32.gmra.mxu0 %v5293
  %v5409 = vpop.f32.mrf.mxu0
  %v5410 = vadd.f32 %v5314, %v5409
  %v5411 = vpop.f32.mrf.mxu0
  %5412 = vdwg.mxu0
  %5413 = vmatprep.subr.mxu0 0.0
  %5414 = vmatpush1.msra.mxu0 0.0
  %5415 = vmatprep.subr.mxu0 0.0
  %5416 = vmatpush1.msra.mxu0 0.0
  %5417 = vmatprep.subr.mxu0 0.0
  %5418 = vmatpush1.msra.mxu0 0.0
  %5419 = vmatprep.subr.mxu0 0.0
  %5420 = vmatpush1.msra.mxu0 0.0
  %5421 = vmatprep.subr.mxu0 0.0
  %5422 = vmatpush1.msra.mxu0 0.0
  %5423 = vmatprep.subr.mxu0 0.0
  %5424 = vmatpush1.msra.mxu0 0.0
  %5425 = vmatprep.subr.mxu0 0.0
  %5426 = vmatpush1.msra.mxu0 0.0
  %5427 = vmatprep.subr.mxu0 0.0
  %5428 = vmatpush1.msra.mxu0 0.0
  %5429 = vmatprep.subr.mxu0 0.0
  %5430 = vmatpush1.msra.mxu0 0.0
  %5431 = vmatprep.subr.mxu0 0.0
  %5432 = vmatpush1.msra.mxu0 0.0
  %5433 = vmatprep.subr.mxu0 0.0
  %5434 = vmatpush1.msra.mxu0 0.0
  %5435 = vmatprep.subr.mxu0 0.0
  %5436 = vmatpush1.msra.mxu0 0.0
  %5437 = vmatprep.subr.mxu0 0.0
  %5438 = vmatpush1.msra.mxu0 %v5283
  %5439 = vmatprep.subr.mxu0 0.0
  %5440 = vmatpush1.msra.mxu0 %v5282
  %5441 = vmatprep.subr.mxu0 0.0
  %5442 = vmatpush1.msra.mxu0 %v5281
  %5443 = vmatprep.subr.mxu0 0.0
  %5444 = vmatpush1.msra.mxu0 %v5280
  %5445 = vmatprep.subr.mxu0 0.0
  %5446 = vmatpush2.msra.mxu0 0.0
  %5447 = vmatprep.subr.mxu0 0.0
  %5448 = vmatpush2.msra.mxu0 0.0
  %5449 = vmatprep.subr.mxu0 0.0
  %5450 = vmatpush2.msra.mxu0 0.0
  %5451 = vmatprep.subr.mxu0 0.0
  %5452 = vmatpush2.msra.mxu0 0.0
  %5453 = vmatprep.subr.mxu0 0.0
  %5454 = vmatpush2.msra.mxu0 0.0
  %5455 = vmatprep.subr.mxu0 0.0
  %5456 = vmatpush2.msra.mxu0 0.0
  %5457 = vmatprep.subr.mxu0 0.0
  %5458 = vmatpush2.msra.mxu0 0.0
  %5459 = vmatprep.subr.mxu0 0.0
  %5460 = vmatpush2.msra.mxu0 0.0
  %5461 = vmatprep.subr.mxu0 0.0
  %5462 = vmatpush2.msra.mxu0 0.0
  %5463 = vmatprep.subr.mxu0 0.0
  %5464 = vmatpush2.msra.mxu0 0.0
  %5465 = vmatprep.subr.mxu0 0.0
  %5466 = vmatpush2.msra.mxu0 0.0
  %5467 = vmatprep.subr.mxu0 0.0
  %5468 = vmatpush2.msra.mxu0 0.0
  %5469 = vmatprep.subr.mxu0 0.0
  %5470 = vmatpush2.msra.mxu0 0.0
  %5471 = vmatprep.subr.mxu0 0.0
  %5472 = vmatpush2.msra.mxu0 0.0
  %5473 = vmatprep.subr.mxu0 0.0
  %5474 = vmatpush2.msra.mxu0 0.0
  %5475 = vmatprep.subr.mxu0 0.0
  %5476 = vmatpush2.msra.mxu0 0.0
  %5477 = vmatprep.mubr.f32.mxu0 0.0
  %5478 = vmatmul.mubr.f32.gmra.mxu0 %v5317
  %v5479 = vpop.f32.mrf.mxu0
  %v5480 = vadd.f32 %v5395, %v5479
  %v5481 = vpop.f32.mrf.mxu0
  %5482 = vmatprep.mubr.f32.mxu0 0.0
  %5483 = vmatmul.mubr.f32.gmra.mxu0 %v5320
  %v5484 = vpop.f32.mrf.mxu0
  %v5485 = vadd.f32 %v5400, %v5484
  %v5486 = vpop.f32.mrf.mxu0
  %5487 = vmatprep.mubr.f32.mxu0 0.0
  %5488 = vmatmul.mubr.f32.gmra.mxu0 %v5323
  %v5489 = vpop.f32.mrf.mxu0
  %v5490 = vadd.f32 %v5405, %v5489
  %v5491 = vpop.f32.mrf.mxu0
  %5492 = vmatprep.mubr.f32.mxu0 0.0
  %5493 = vmatmul.mubr.f32.gmra.mxu0 %v5326
  %v5494 = vpop.f32.mrf.mxu0
  %v5495 = vadd.f32 %v5410, %v5494
  %v5496 = vpop.f32.mrf.mxu0
  %5497 = vdwg.mxu0
  %v5498 = vxor.u32 %v5480, 2147483648
  %v5499 = vxor.u32 %v5485, 2147483648
  %v5500 = vxor.u32 %v5490, 2147483648
  %v5501 = vxor.u32 %v5495, 2147483648
  %v5502 = vmul.f32 %v5498, 1.442695
  %v5503 = vpow.pop %v5502
  %v5504 = vmul.f32 %v5499, 1.442695
  %v5505 = vpow.pop %v5504
  %v5506 = vmul.f32 %v5500, 1.442695
  %v5507 = vpow.pop %v5506
  %v5508 = vmul.f32 %v5501, 1.442695
  %v5509 = vpow.pop %v5508
  %v5510 = vadd.f32 %v5503, 1.0
  %v5511 = vadd.f32 %v5505, 1.0
  %v5512 = vadd.f32 %v5507, 1.0
  %v5513 = vadd.f32 %v5509, 1.0
  %v5514 = vrcp.pop %v5510
  %v5515 = vmul.f32 1.0, %v5514
  %v5516 = vrcp.pop %v5511
  %v5517 = vmul.f32 1.0, %v5516
  %v5518 = vrcp.pop %v5512
  %v5519 = vmul.f32 1.0, %v5518
  %v5520 = vrcp.pop %v5513
  %v5521 = vmul.f32 1.0, %v5520
  %v5522 = vmul.f32 %v5480, %v5515
  %v5523 = vmul.f32 %v5485, %v5517
  %v5524 = vmul.f32 %v5490, %v5519
  %v5525 = vmul.f32 %v5495, %v5521
  %v5526 = vadd.f32 %v5522, %v5186
  %v5527 = vadd.f32 %v5523, %v5191
  %v5528 = vadd.f32 %v5524, %v5196
  %v5529 = vadd.f32 %v5525, %v5201
  %v5530 = vxor.u32 %v5526, 2147483648
  %v5531 = vxor.u32 %v5527, 2147483648
  %v5532 = vxor.u32 %v5528, 2147483648
  %v5533 = vxor.u32 %v5529, 2147483648
  %v5534 = vmul.f32 %v5530, 1.442695
  %v5535 = vpow.pop %v5534
  %v5536 = vmul.f32 %v5531, 1.442695
  %v5537 = vpow.pop %v5536
  %v5538 = vmul.f32 %v5532, 1.442695
  %v5539 = vpow.pop %v5538
  %v5540 = vmul.f32 %v5533, 1.442695
  %v5541 = vpow.pop %v5540
  %v5542 = vadd.f32 %v5535, 1.0
  %v5543 = vadd.f32 %v5537, 1.0
  %v5544 = vadd.f32 %v5539, 1.0
  %v5545 = vadd.f32 %v5541, 1.0
  %v5546 = vrcp.pop %v5542
  %v5547 = vmul.f32 1.0, %v5546
  %v5548 = vrcp.pop %v5543
  %v5549 = vmul.f32 1.0, %v5548
  %v5550 = vrcp.pop %v5544
  %v5551 = vmul.f32 1.0, %v5550
  %v5552 = vrcp.pop %v5545
  %v5553 = vmul.f32 1.0, %v5552
  %v5554 = vmul.f32 %v5526, %v5547
  %v5555 = vmul.f32 %v5527, %v5549
  %v5556 = vmul.f32 %v5528, %v5551
  %v5557 = vmul.f32 %v5529, %v5553
  %5558 = vrot.lane.b32.xlu0 %v5554, 3
  %v5559 = vpop.permute.xlu0 %5558
  %5560 = vrot.lane.b32.xlu0 %v5555, 3
  %v5561 = vpop.permute.xlu0 %5560
  %5562 = vrot.lane.b32.xlu0 %v5556, 3
  %v5563 = vpop.permute.xlu0 %5562
  %5564 = vrot.lane.b32.xlu0 %v5557, 3
  %v5565 = vpop.permute.xlu0 %5564
  %v5566 = vmul.f32 %v5559, %v434
  %v5567 = vmul.f32 %v5561, %v434
  %v5568 = vmul.f32 %v5563, %v434
  %v5569 = vmul.f32 %v5565, %v434
  %5570 = vrot.lane.b32.xlu0 %v5554, 2
  %v5571 = vpop.permute.xlu0 %5570
  %5572 = vrot.lane.b32.xlu0 %v5555, 2
  %v5573 = vpop.permute.xlu0 %5572
  %5574 = vrot.lane.b32.xlu0 %v5556, 2
  %v5575 = vpop.permute.xlu0 %5574
  %5576 = vrot.lane.b32.xlu0 %v5557, 2
  %v5577 = vpop.permute.xlu0 %5576
  %v5578 = vmul.f32 %v5571, %v436
  %v5579 = vmul.f32 %v5573, %v436
  %v5580 = vmul.f32 %v5575, %v436
  %v5581 = vmul.f32 %v5577, %v436
  %5582 = vrot.lane.b32.xlu0 %v5554, 1
  %v5583 = vpop.permute.xlu0 %5582
  %5584 = vrot.lane.b32.xlu0 %v5555, 1
  %v5585 = vpop.permute.xlu0 %5584
  %5586 = vrot.lane.b32.xlu0 %v5556, 1
  %v5587 = vpop.permute.xlu0 %5586
  %5588 = vrot.lane.b32.xlu0 %v5557, 1
  %v5589 = vpop.permute.xlu0 %5588
  %v5590 = vmul.f32 %v5583, %v440
  %v5591 = vmul.f32 %v5585, %v440
  %v5592 = vmul.f32 %v5587, %v440
  %v5593 = vmul.f32 %v5589, %v440
  %v5594 = vmul.f32 %v5583, %v442
  %v5595 = vmul.f32 %v5585, %v442
  %v5596 = vmul.f32 %v5587, %v442
  %v5597 = vmul.f32 %v5589, %v442
  %5598 = vrot.lane.b32.xlu0 %v5554, 127
  %v5599 = vpop.permute.xlu0 %5598
  %5600 = vrot.lane.b32.xlu0 %v5555, 127
  %v5601 = vpop.permute.xlu0 %5600
  %5602 = vrot.lane.b32.xlu0 %v5556, 127
  %v5603 = vpop.permute.xlu0 %5602
  %5604 = vrot.lane.b32.xlu0 %v5557, 127
  %v5605 = vpop.permute.xlu0 %5604
  %v5606 = vmul.f32 %v5599, %v444
  %v5607 = vmul.f32 %v5601, %v444
  %v5608 = vmul.f32 %v5603, %v444
  %v5609 = vmul.f32 %v5605, %v444
  %v5610 = vmul.f32 %v5599, %v448
  %v5611 = vmul.f32 %v5601, %v448
  %v5612 = vmul.f32 %v5603, %v448
  %v5613 = vmul.f32 %v5605, %v448
  %5614 = vrot.lane.b32.xlu0 %v5554, 126
  %v5615 = vpop.permute.xlu0 %5614
  %5616 = vrot.lane.b32.xlu0 %v5555, 126
  %v5617 = vpop.permute.xlu0 %5616
  %5618 = vrot.lane.b32.xlu0 %v5556, 126
  %v5619 = vpop.permute.xlu0 %5618
  %5620 = vrot.lane.b32.xlu0 %v5557, 126
  %v5621 = vpop.permute.xlu0 %5620
  %v5622 = vmul.f32 %v5615, %v450
  %v5623 = vmul.f32 %v5617, %v450
  %v5624 = vmul.f32 %v5619, %v450
  %v5625 = vmul.f32 %v5621, %v450
  %5626 = vrot.lane.b32.xlu0 %v5554, 125
  %v5627 = vpop.permute.xlu0 %5626
  %5628 = vrot.lane.b32.xlu0 %v5555, 125
  %v5629 = vpop.permute.xlu0 %5628
  %5630 = vrot.lane.b32.xlu0 %v5556, 125
  %v5631 = vpop.permute.xlu0 %5630
  %5632 = vrot.lane.b32.xlu0 %v5557, 125
  %v5633 = vpop.permute.xlu0 %5632
  %v5634 = vmul.f32 %v5627, %v453
  %v5635 = vmul.f32 %v5629, %v453
  %v5636 = vmul.f32 %v5631, %v453
  %v5637 = vmul.f32 %v5633, %v453
  %v5638 = vld [vmem:[%s61] sm:$0xff]
  %v5639 = vld [vmem:[%s61 + $0x8] sm:$0xff]
  %v5640 = vld [vmem:[%s61 + $0x10] sm:$0xff]
  %v5641 = vld [vmem:[%s61 + $0x18] sm:$0xff]
  %v5642 = vld [vmem:[%s61 + $0x20] sm:$0xff]
  %v5643 = vld [vmem:[%s61 + $0x28] sm:$0xff]
  %v5644 = vld [vmem:[%s61 + $0x30] sm:$0xff]
  %v5645 = vld [vmem:[%s61 + $0x38] sm:$0xff]
  %v5646 = vld [vmem:[%s61 + $0x40] sm:$0xff]
  %v5647 = vld [vmem:[%s61 + $0x48] sm:$0xff]
  %v5648 = vld [vmem:[%s61 + $0x50] sm:$0xff]
  %v5649 = vld [vmem:[%s61 + $0x58] sm:$0xff]
  %5651 = vset.pattern.permute.xlu0 0
  %5652 = vperm.xlu0 %5651, %v4983
  %v5653 = vpop.permute.xlu0 %5652
  %5656 = vset.pattern.permute.xlu0 0
  %5657 = vperm.xlu0 %5656, %v4984
  %v5658 = vpop.permute.xlu0 %5657
  %5661 = vset.pattern.permute.xlu0 0
  %5662 = vperm.xlu0 %5661, %v4985
  %v5663 = vpop.permute.xlu0 %5662
  %5666 = vset.pattern.permute.xlu0 0
  %5667 = vperm.xlu0 %5666, %v4986
  %v5668 = vpop.permute.xlu0 %5667
  %v5671 = vsel %vm4578, %v5640, 0
  %v5674 = vsel %vm4578, %v5643, 0
  %v5677 = vsel %vm4578, %v5646, 0
  %v5680 = vsel %vm4578, %v5649, 0
  %5682 = vmatprep.subr.mxu0 0.0
  %5683 = vmatpush1.msra.mxu0 %v5597
  %5684 = vmatprep.subr.mxu0 0.0
  %5685 = vmatpush1.msra.mxu0 %v5596
  %5686 = vmatprep.subr.mxu0 0.0
  %5687 = vmatpush1.msra.mxu0 %v5595
  %5688 = vmatprep.subr.mxu0 0.0
  %5689 = vmatpush1.msra.mxu0 %v5594
  %5690 = vmatprep.subr.mxu0 0.0
  %5691 = vmatpush1.msra.mxu0 %v5593
  %5692 = vmatprep.subr.mxu0 0.0
  %5693 = vmatpush1.msra.mxu0 %v5592
  %5694 = vmatprep.subr.mxu0 0.0
  %5695 = vmatpush1.msra.mxu0 %v5591
  %5696 = vmatprep.subr.mxu0 0.0
  %5697 = vmatpush1.msra.mxu0 %v5590
  %5698 = vmatprep.subr.mxu0 0.0
  %5699 = vmatpush1.msra.mxu0 %v5581
  %5700 = vmatprep.subr.mxu0 0.0
  %5701 = vmatpush1.msra.mxu0 %v5580
  %5702 = vmatprep.subr.mxu0 0.0
  %5703 = vmatpush1.msra.mxu0 %v5579
  %5704 = vmatprep.subr.mxu0 0.0
  %5705 = vmatpush1.msra.mxu0 %v5578
  %5706 = vmatprep.subr.mxu0 0.0
  %5707 = vmatpush1.msra.mxu0 %v5569
  %5708 = vmatprep.subr.mxu0 0.0
  %5709 = vmatpush1.msra.mxu0 %v5568
  %5710 = vmatprep.subr.mxu0 0.0
  %5711 = vmatpush1.msra.mxu0 %v5567
  %5712 = vmatprep.subr.mxu0 0.0
  %5713 = vmatpush1.msra.mxu0 %v5566
  %5714 = vmatprep.subr.mxu0 0.0
  %5715 = vmatpush2.msra.mxu0 %v5625
  %5716 = vmatprep.subr.mxu0 0.0
  %5717 = vmatpush2.msra.mxu0 %v5624
  %5718 = vmatprep.subr.mxu0 0.0
  %5719 = vmatpush2.msra.mxu0 %v5623
  %5720 = vmatprep.subr.mxu0 0.0
  %5721 = vmatpush2.msra.mxu0 %v5622
  %5722 = vmatprep.subr.mxu0 0.0
  %5723 = vmatpush2.msra.mxu0 %v5613
  %5724 = vmatprep.subr.mxu0 0.0
  %5725 = vmatpush2.msra.mxu0 %v5612
  %5726 = vmatprep.subr.mxu0 0.0
  %5727 = vmatpush2.msra.mxu0 %v5611
  %5728 = vmatprep.subr.mxu0 0.0
  %5729 = vmatpush2.msra.mxu0 %v5610
  %5730 = vmatprep.subr.mxu0 0.0
  %5731 = vmatpush2.msra.mxu0 %v5609
  %5732 = vmatprep.subr.mxu0 0.0
  %5733 = vmatpush2.msra.mxu0 %v5608
  %5734 = vmatprep.subr.mxu0 0.0
  %5735 = vmatpush2.msra.mxu0 %v5607
  %5736 = vmatprep.subr.mxu0 0.0
  %5737 = vmatpush2.msra.mxu0 %v5606
  %5738 = vmatprep.subr.mxu0 0.0
  %5739 = vmatpush2.msra.mxu0 %v5557
  %5740 = vmatprep.subr.mxu0 0.0
  %5741 = vmatpush2.msra.mxu0 %v5556
  %5742 = vmatprep.subr.mxu0 0.0
  %5743 = vmatpush2.msra.mxu0 %v5555
  %5744 = vmatprep.subr.mxu0 0.0
  %5745 = vmatpush2.msra.mxu0 %v5554
  %5746 = vmatprep.mubr.f32.mxu0 %v5639
  %5747 = vmatmul.mubr.f32.gmra.mxu0 %v5638
  %v5748 = vpop.f32.mrf.mxu0
  %v5749 = vadd.f32 %v5653, %v5748
  %v5750 = vpop.f32.mrf.mxu0
  %5751 = vmatprep.mubr.f32.mxu0 %v5642
  %5752 = vmatmul.mubr.f32.gmra.mxu0 %v5641
  %v5753 = vpop.f32.mrf.mxu0
  %v5754 = vadd.f32 %v5658, %v5753
  %v5755 = vpop.f32.mrf.mxu0
  %5756 = vmatprep.mubr.f32.mxu0 %v5645
  %5757 = vmatmul.mubr.f32.gmra.mxu0 %v5644
  %v5758 = vpop.f32.mrf.mxu0
  %v5759 = vadd.f32 %v5663, %v5758
  %v5760 = vpop.f32.mrf.mxu0
  %5761 = vmatprep.mubr.f32.mxu0 %v5648
  %5762 = vmatmul.mubr.f32.gmra.mxu0 %v5647
  %v5763 = vpop.f32.mrf.mxu0
  %v5764 = vadd.f32 %v5668, %v5763
  %v5765 = vpop.f32.mrf.mxu0
  %5766 = vdwg.mxu0
  %5767 = vmatprep.subr.mxu0 0.0
  %5768 = vmatpush1.msra.mxu0 0.0
  %5769 = vmatprep.subr.mxu0 0.0
  %5770 = vmatpush1.msra.mxu0 0.0
  %5771 = vmatprep.subr.mxu0 0.0
  %5772 = vmatpush1.msra.mxu0 0.0
  %5773 = vmatprep.subr.mxu0 0.0
  %5774 = vmatpush1.msra.mxu0 0.0
  %5775 = vmatprep.subr.mxu0 0.0
  %5776 = vmatpush1.msra.mxu0 0.0
  %5777 = vmatprep.subr.mxu0 0.0
  %5778 = vmatpush1.msra.mxu0 0.0
  %5779 = vmatprep.subr.mxu0 0.0
  %5780 = vmatpush1.msra.mxu0 0.0
  %5781 = vmatprep.subr.mxu0 0.0
  %5782 = vmatpush1.msra.mxu0 0.0
  %5783 = vmatprep.subr.mxu0 0.0
  %5784 = vmatpush1.msra.mxu0 0.0
  %5785 = vmatprep.subr.mxu0 0.0
  %5786 = vmatpush1.msra.mxu0 0.0
  %5787 = vmatprep.subr.mxu0 0.0
  %5788 = vmatpush1.msra.mxu0 0.0
  %5789 = vmatprep.subr.mxu0 0.0
  %5790 = vmatpush1.msra.mxu0 0.0
  %5791 = vmatprep.subr.mxu0 0.0
  %5792 = vmatpush1.msra.mxu0 %v5637
  %5793 = vmatprep.subr.mxu0 0.0
  %5794 = vmatpush1.msra.mxu0 %v5636
  %5795 = vmatprep.subr.mxu0 0.0
  %5796 = vmatpush1.msra.mxu0 %v5635
  %5797 = vmatprep.subr.mxu0 0.0
  %5798 = vmatpush1.msra.mxu0 %v5634
  %5799 = vmatprep.subr.mxu0 0.0
  %5800 = vmatpush2.msra.mxu0 0.0
  %5801 = vmatprep.subr.mxu0 0.0
  %5802 = vmatpush2.msra.mxu0 0.0
  %5803 = vmatprep.subr.mxu0 0.0
  %5804 = vmatpush2.msra.mxu0 0.0
  %5805 = vmatprep.subr.mxu0 0.0
  %5806 = vmatpush2.msra.mxu0 0.0
  %5807 = vmatprep.subr.mxu0 0.0
  %5808 = vmatpush2.msra.mxu0 0.0
  %5809 = vmatprep.subr.mxu0 0.0
  %5810 = vmatpush2.msra.mxu0 0.0
  %5811 = vmatprep.subr.mxu0 0.0
  %5812 = vmatpush2.msra.mxu0 0.0
  %5813 = vmatprep.subr.mxu0 0.0
  %5814 = vmatpush2.msra.mxu0 0.0
  %5815 = vmatprep.subr.mxu0 0.0
  %5816 = vmatpush2.msra.mxu0 0.0
  %5817 = vmatprep.subr.mxu0 0.0
  %5818 = vmatpush2.msra.mxu0 0.0
  %5819 = vmatprep.subr.mxu0 0.0
  %5820 = vmatpush2.msra.mxu0 0.0
  %5821 = vmatprep.subr.mxu0 0.0
  %5822 = vmatpush2.msra.mxu0 0.0
  %5823 = vmatprep.subr.mxu0 0.0
  %5824 = vmatpush2.msra.mxu0 0.0
  %5825 = vmatprep.subr.mxu0 0.0
  %5826 = vmatpush2.msra.mxu0 0.0
  %5827 = vmatprep.subr.mxu0 0.0
  %5828 = vmatpush2.msra.mxu0 0.0
  %5829 = vmatprep.subr.mxu0 0.0
  %5830 = vmatpush2.msra.mxu0 0.0
  %5831 = vmatprep.mubr.f32.mxu0 0.0
  %5832 = vmatmul.mubr.f32.gmra.mxu0 %v5671
  %v5833 = vpop.f32.mrf.mxu0
  %v5834 = vadd.f32 %v5749, %v5833
  %v5835 = vpop.f32.mrf.mxu0
  %5836 = vmatprep.mubr.f32.mxu0 0.0
  %5837 = vmatmul.mubr.f32.gmra.mxu0 %v5674
  %v5838 = vpop.f32.mrf.mxu0
  %v5839 = vadd.f32 %v5754, %v5838
  %v5840 = vpop.f32.mrf.mxu0
  %5841 = vmatprep.mubr.f32.mxu0 0.0
  %5842 = vmatmul.mubr.f32.gmra.mxu0 %v5677
  %v5843 = vpop.f32.mrf.mxu0
  %v5844 = vadd.f32 %v5759, %v5843
  %v5845 = vpop.f32.mrf.mxu0
  %5846 = vmatprep.mubr.f32.mxu0 0.0
  %5847 = vmatmul.mubr.f32.gmra.mxu0 %v5680
  %v5848 = vpop.f32.mrf.mxu0
  %v5849 = vadd.f32 %v5764, %v5848
  %v5850 = vpop.f32.mrf.mxu0
  %5851 = vdwg.mxu0
  %v5852 = vadd.f32 %v5834, %v4953
  %v5853 = vadd.f32 %v5839, %v4958
  %v5854 = vadd.f32 %v5844, %v4963
  %v5855 = vadd.f32 %v5849, %v4968
  %v5856 = vld [vmem:[#allocation4] sm:$0xff]
  %v5857 = vld [vmem:[#allocation4 + $0x8] sm:$0xff]
  %v5858 = vld [vmem:[#allocation4 + $0x10] sm:$0xff]
  %v5859 = vld [vmem:[#allocation4 + $0x18] sm:$0xff]
  %5860 = vmatprep.subr.mxu0 0.0
  %5861 = vmatpush1.msra.mxu0 %v2177
  %5862 = vmatprep.subr.mxu0 0.0
  %5863 = vmatpush1.msra.mxu0 %v2176
  %5864 = vmatprep.subr.mxu0 0.0
  %5865 = vmatpush1.msra.mxu0 %v2175
  %5866 = vmatprep.subr.mxu0 0.0
  %5867 = vmatpush1.msra.mxu0 %v2174
  %5868 = vmatprep.subr.mxu0 0.0
  %5869 = vmatpush1.msra.mxu0 %v2173
  %5870 = vmatprep.subr.mxu0 0.0
  %5871 = vmatpush1.msra.mxu0 %v2172
  %5872 = vmatprep.subr.mxu0 0.0
  %5873 = vmatpush1.msra.mxu0 %v2171
  %5874 = vmatprep.subr.mxu0 0.0
  %5875 = vmatpush1.msra.mxu0 %v2170
  %5876 = vmatprep.subr.mxu0 0.0
  %5877 = vmatpush1.msra.mxu0 %v2169
  %5878 = vmatprep.subr.mxu0 0.0
  %5879 = vmatpush1.msra.mxu0 %v2168
  %5880 = vmatprep.subr.mxu0 0.0
  %5881 = vmatpush1.msra.mxu0 %v2167
  %5882 = vmatprep.subr.mxu0 0.0
  %5883 = vmatpush1.msra.mxu0 %v2166
  %5884 = vmatprep.subr.mxu0 0.0
  %5885 = vmatpush1.msra.mxu0 %v2165
  %5886 = vmatprep.subr.mxu0 0.0
  %5887 = vmatpush1.msra.mxu0 %v2164
  %5888 = vmatprep.subr.mxu0 0.0
  %5889 = vmatpush1.msra.mxu0 %v2163
  %5890 = vmatprep.subr.mxu0 0.0
  %5891 = vmatpush1.msra.mxu0 %v2162
  %5892 = vmatprep.subr.mxu0 0.0
  %5893 = vmatpush2.msra.mxu0 0.0
  %5894 = vmatprep.subr.mxu0 0.0
  %5895 = vmatpush2.msra.mxu0 0.0
  %5896 = vmatprep.subr.mxu0 0.0
  %5897 = vmatpush2.msra.mxu0 0.0
  %5898 = vmatprep.subr.mxu0 0.0
  %5899 = vmatpush2.msra.mxu0 0.0
  %5900 = vmatprep.subr.mxu0 0.0
  %5901 = vmatpush2.msra.mxu0 0.0
  %5902 = vmatprep.subr.mxu0 0.0
  %5903 = vmatpush2.msra.mxu0 0.0
  %5904 = vmatprep.subr.mxu0 0.0
  %5905 = vmatpush2.msra.mxu0 0.0
  %5906 = vmatprep.subr.mxu0 0.0
  %5907 = vmatpush2.msra.mxu0 0.0
  %5908 = vmatprep.subr.mxu0 0.0
  %5909 = vmatpush2.msra.mxu0 0.0
  %5910 = vmatprep.subr.mxu0 0.0
  %5911 = vmatpush2.msra.mxu0 0.0
  %5912 = vmatprep.subr.mxu0 0.0
  %5913 = vmatpush2.msra.mxu0 0.0
  %5914 = vmatprep.subr.mxu0 0.0
  %5915 = vmatpush2.msra.mxu0 0.0
  %5916 = vmatprep.subr.mxu0 0.0
  %5917 = vmatpush2.msra.mxu0 0.0
  %5918 = vmatprep.subr.mxu0 0.0
  %5919 = vmatpush2.msra.mxu0 0.0
  %5920 = vmatprep.subr.mxu0 0.0
  %5921 = vmatpush2.msra.mxu0 0.0
  %5922 = vmatprep.subr.mxu0 0.0
  %5923 = vmatpush2.msra.mxu0 0.0
  %5924 = vmatprep.mubr.f32.mxu0 0.0
  %5925 = vmatmul.mubr.f32.gmra.mxu0 %v5852
  %v5926 = vpop.f32.mrf.mxu0
  %v5927 = vadd.f32 %v5856, %v5926
  %v5928 = vpop.f32.mrf.mxu0
  %5929 = vmatprep.mubr.f32.mxu0 0.0
  %5930 = vmatmul.mubr.f32.gmra.mxu0 %v5853
  %v5931 = vpop.f32.mrf.mxu0
  %v5932 = vadd.f32 %v5857, %v5931
  %v5933 = vpop.f32.mrf.mxu0
  %5934 = vmatprep.mubr.f32.mxu0 0.0
  %5935 = vmatmul.mubr.f32.gmra.mxu0 %v5854
  %v5936 = vpop.f32.mrf.mxu0
  %v5937 = vadd.f32 %v5858, %v5936
  %v5938 = vpop.f32.mrf.mxu0
  %5939 = vmatprep.mubr.f32.mxu0 0.0
  %5940 = vmatmul.mubr.f32.gmra.mxu0 %v5855
  %v5941 = vpop.f32.mrf.mxu0
  %v5942 = vadd.f32 %v5859, %v5941
  %v5943 = vpop.f32.mrf.mxu0
  %5944 = vdwg.mxu0
  %v5945 = vld [vmem:[%s65] sm:$0xff]
  %v5946 = vld [vmem:[%s65 + $0x8] sm:$0xff]
  %v5947 = vld [vmem:[%s67] sm:$0xff]
  %v5948 = vld [vmem:[%s67 + $0x8] sm:$0xff]
  %v5949 = vld [vmem:[%s71] sm:$0xff]
  %v5950 = vld [vmem:[%s71 + $0x8] sm:$0xff]
  %v5951 = vld [vmem:[%s75] sm:$0xff]
  %v5952 = vld [vmem:[%s75 + $0x8] sm:$0xff]
  %v5953 = vld [vmem:[%s77] sm:$0xff]
  %v5954 = vld [vmem:[%s77 + $0x8] sm:$0xff]
  %v5955 = vld [vmem:[%s79] sm:$0xff]
  %v5956 = vld [vmem:[%s79 + $0x8] sm:$0xff]
  %5958 = vset.pattern.permute.xlu0 0
  %5959 = vperm.xlu0 %5958, %v5947
  %v5960 = vpop.permute.xlu0 %5959
  %5963 = vset.pattern.permute.xlu0 0
  %5964 = vperm.xlu0 %5963, %v5948
  %v5965 = vpop.permute.xlu0 %5964
  %v5968 = vsel %vm2189, %v5945, 0
  %v5971 = vsel %vm2189, %v5946, 0
  %5973 = vmatprep.subr.mxu0 0.0
  %5974 = vmatpush1.msra.mxu0 0.0
  %5975 = vmatprep.subr.mxu0 0.0
  %5976 = vmatpush1.msra.mxu0 0.0
  %5977 = vmatprep.subr.mxu0 0.0
  %5978 = vmatpush1.msra.mxu0 0.0
  %5979 = vmatprep.subr.mxu0 0.0
  %5980 = vmatpush1.msra.mxu0 0.0
  %5981 = vmatprep.subr.mxu0 0.0
  %5982 = vmatpush1.msra.mxu0 0.0
  %5983 = vmatprep.subr.mxu0 0.0
  %5984 = vmatpush1.msra.mxu0 0.0
  %5985 = vmatprep.subr.mxu0 0.0
  %5986 = vmatpush1.msra.mxu0 0.0
  %5987 = vmatprep.subr.mxu0 0.0
  %5988 = vmatpush1.msra.mxu0 0.0
  %5989 = vmatprep.subr.mxu0 0.0
  %5990 = vmatpush1.msra.mxu0 0.0
  %5991 = vmatprep.subr.mxu0 0.0
  %5992 = vmatpush1.msra.mxu0 0.0
  %5993 = vmatprep.subr.mxu0 0.0
  %5994 = vmatpush1.msra.mxu0 0.0
  %5995 = vmatprep.subr.mxu0 0.0
  %5996 = vmatpush1.msra.mxu0 0.0
  %5997 = vmatprep.subr.mxu0 0.0
  %5998 = vmatpush1.msra.mxu0 0.0
  %5999 = vmatprep.subr.mxu0 0.0
  %6000 = vmatpush1.msra.mxu0 0.0
  %6001 = vmatprep.subr.mxu0 0.0
  %6002 = vmatpush1.msra.mxu0 %v234
  %6003 = vmatprep.subr.mxu0 0.0
  %6004 = vmatpush1.msra.mxu0 %v233
  %6005 = vmatprep.subr.mxu0 0.0
  %6006 = vmatpush2.msra.mxu0 0.0
  %6007 = vmatprep.subr.mxu0 0.0
  %6008 = vmatpush2.msra.mxu0 0.0
  %6009 = vmatprep.subr.mxu0 0.0
  %6010 = vmatpush2.msra.mxu0 0.0
  %6011 = vmatprep.subr.mxu0 0.0
  %6012 = vmatpush2.msra.mxu0 0.0
  %6013 = vmatprep.subr.mxu0 0.0
  %6014 = vmatpush2.msra.mxu0 0.0
  %6015 = vmatprep.subr.mxu0 0.0
  %6016 = vmatpush2.msra.mxu0 0.0
  %6017 = vmatprep.subr.mxu0 0.0
  %6018 = vmatpush2.msra.mxu0 0.0
  %6019 = vmatprep.subr.mxu0 0.0
  %6020 = vmatpush2.msra.mxu0 0.0
  %6021 = vmatprep.subr.mxu0 0.0
  %6022 = vmatpush2.msra.mxu0 0.0
  %6023 = vmatprep.subr.mxu0 0.0
  %6024 = vmatpush2.msra.mxu0 0.0
  %6025 = vmatprep.subr.mxu0 0.0
  %6026 = vmatpush2.msra.mxu0 0.0
  %6027 = vmatprep.subr.mxu0 0.0
  %6028 = vmatpush2.msra.mxu0 0.0
  %6029 = vmatprep.subr.mxu0 0.0
  %6030 = vmatpush2.msra.mxu0 0.0
  %6031 = vmatprep.subr.mxu0 0.0
  %6032 = vmatpush2.msra.mxu0 0.0
  %6033 = vmatprep.subr.mxu0 0.0
  %6034 = vmatpush2.msra.mxu0 0.0
  %6035 = vmatprep.subr.mxu0 0.0
  %6036 = vmatpush2.msra.mxu0 0.0
  %6037 = vmatprep.mubr.f32.mxu0 0.0
  %6038 = vmatmul.mubr.f32.gmra.mxu0 %v5968
  %v6039 = vpop.f32.mrf.mxu0
  %v6040 = vadd.f32 %v5960, %v6039
  %v6041 = vpop.f32.mrf.mxu0
  %6042 = vmatprep.mubr.f32.mxu0 0.0
  %6043 = vmatmul.mubr.f32.gmra.mxu0 %v5971
  %v6044 = vpop.f32.mrf.mxu0
  %v6045 = vadd.f32 %v5965, %v6044
  %v6046 = vpop.f32.mrf.mxu0
  %6047 = vdwg.mxu0
  %v6049 = vsel %vm2263, %v6040, 0
  %v6052 = vsel %vm2263, %v6045, 0
  %6054 = vmatprep.subr.mxu0 0.0
  %6055 = vmatpush1.msra.mxu0 0.0
  %6056 = vmatprep.subr.mxu0 0.0
  %6057 = vmatpush1.msra.mxu0 0.0
  %6058 = vmatprep.subr.mxu0 0.0
  %6059 = vmatpush1.msra.mxu0 0.0
  %6060 = vmatprep.subr.mxu0 0.0
  %6061 = vmatpush1.msra.mxu0 0.0
  %6062 = vmatprep.subr.mxu0 0.0
  %6063 = vmatpush1.msra.mxu0 0.0
  %6064 = vmatprep.subr.mxu0 0.0
  %6065 = vmatpush1.msra.mxu0 0.0
  %6066 = vmatprep.subr.mxu0 0.0
  %6067 = vmatpush1.msra.mxu0 0.0
  %6068 = vmatprep.subr.mxu0 0.0
  %6069 = vmatpush1.msra.mxu0 0.0
  %6070 = vmatprep.subr.mxu0 0.0
  %6071 = vmatpush1.msra.mxu0 0.0
  %6072 = vmatprep.subr.mxu0 0.0
  %6073 = vmatpush1.msra.mxu0 0.0
  %6074 = vmatprep.subr.mxu0 0.0
  %6075 = vmatpush1.msra.mxu0 0.0
  %6076 = vmatprep.subr.mxu0 0.0
  %6077 = vmatpush1.msra.mxu0 0.0
  %6078 = vmatprep.subr.mxu0 0.0
  %6079 = vmatpush1.msra.mxu0 0.0
  %6080 = vmatprep.subr.mxu0 0.0
  %6081 = vmatpush1.msra.mxu0 0.0
  %6082 = vmatprep.subr.mxu0 0.0
  %6083 = vmatpush1.msra.mxu0 0.0
  %6084 = vmatprep.subr.mxu0 0.0
  %6085 = vmatpush1.msra.mxu0 %v4130
  %6086 = vmatprep.subr.mxu0 0.0
  %6087 = vmatpush2.msra.mxu0 0.0
  %6088 = vmatprep.subr.mxu0 0.0
  %6089 = vmatpush2.msra.mxu0 0.0
  %6090 = vmatprep.subr.mxu0 0.0
  %6091 = vmatpush2.msra.mxu0 0.0
  %6092 = vmatprep.subr.mxu0 0.0
  %6093 = vmatpush2.msra.mxu0 0.0
  %6094 = vmatprep.subr.mxu0 0.0
  %6095 = vmatpush2.msra.mxu0 0.0
  %6096 = vmatprep.subr.mxu0 0.0
  %6097 = vmatpush2.msra.mxu0 0.0
  %6098 = vmatprep.subr.mxu0 0.0
  %6099 = vmatpush2.msra.mxu0 0.0
  %6100 = vmatprep.subr.mxu0 0.0
  %6101 = vmatpush2.msra.mxu0 0.0
  %6102 = vmatprep.subr.mxu0 0.0
  %6103 = vmatpush2.msra.mxu0 0.0
  %6104 = vmatprep.subr.mxu0 0.0
  %6105 = vmatpush2.msra.mxu0 0.0
  %6106 = vmatprep.subr.mxu0 0.0
  %6107 = vmatpush2.msra.mxu0 0.0
  %6108 = vmatprep.subr.mxu0 0.0
  %6109 = vmatpush2.msra.mxu0 0.0
  %6110 = vmatprep.subr.mxu0 0.0
  %6111 = vmatpush2.msra.mxu0 0.0
  %6112 = vmatprep.subr.mxu0 0.0
  %6113 = vmatpush2.msra.mxu0 0.0
  %6114 = vmatprep.subr.mxu0 0.0
  %6115 = vmatpush2.msra.mxu0 0.0
  %6116 = vmatprep.subr.mxu0 0.0
  %6117 = vmatpush2.msra.mxu0 0.0
  %6118 = vmatprep.mubr.f32.mxu0 0.0
  %6119 = vmatmul.mubr.f32.gmra.mxu0 %v6049
  %v6120 = vpop.f32.mrf.mxu0
  %v6121 = vadd.f32 0.0, %v6120
  %v6122 = vpop.f32.mrf.mxu0
  %6123 = vmatprep.mubr.f32.mxu0 0.0
  %6124 = vmatmul.mubr.f32.gmra.mxu0 %v6052
  %v6125 = vpop.f32.mrf.mxu0
  %v6126 = vadd.f32 0.0, %v6125
  %v6127 = vpop.f32.mrf.mxu0
  %6128 = vdwg.mxu0
  %6129 = vrot.lane.b32.xlu0 %v5927, 5
  %v6130 = vpop.permute.xlu0 %6129
  %6131 = vrot.lane.b32.xlu0 %v5932, 5
  %v6132 = vpop.permute.xlu0 %6131
  %6133 = vrot.lane.b32.xlu0 %v5937, 5
  %v6134 = vpop.permute.xlu0 %6133
  %6135 = vrot.lane.b32.xlu0 %v5942, 5
  %v6136 = vpop.permute.xlu0 %6135
  %v6137 = vmul.f32 %v6130, %v404
  %v6138 = vmul.f32 %v6132, %v404
  %v6139 = vmul.f32 %v6134, %v404
  %v6140 = vmul.f32 %v6136, %v404
  %6141 = vrot.lane.b32.xlu0 %v5927, 4
  %v6142 = vpop.permute.xlu0 %6141
  %6143 = vrot.lane.b32.xlu0 %v5932, 4
  %v6144 = vpop.permute.xlu0 %6143
  %6145 = vrot.lane.b32.xlu0 %v5937, 4
  %v6146 = vpop.permute.xlu0 %6145
  %6147 = vrot.lane.b32.xlu0 %v5942, 4
  %v6148 = vpop.permute.xlu0 %6147
  %v6149 = vmul.f32 %v6142, %v406
  %v6150 = vmul.f32 %v6144, %v406
  %v6151 = vmul.f32 %v6146, %v406
  %v6152 = vmul.f32 %v6148, %v406
  %6153 = vrot.lane.b32.xlu0 %v5927, 3
  %v6154 = vpop.permute.xlu0 %6153
  %6155 = vrot.lane.b32.xlu0 %v5932, 3
  %v6156 = vpop.permute.xlu0 %6155
  %6157 = vrot.lane.b32.xlu0 %v5937, 3
  %v6158 = vpop.permute.xlu0 %6157
  %6159 = vrot.lane.b32.xlu0 %v5942, 3
  %v6160 = vpop.permute.xlu0 %6159
  %v6161 = vmul.f32 %v6154, %v410
  %v6162 = vmul.f32 %v6156, %v410
  %v6163 = vmul.f32 %v6158, %v410
  %v6164 = vmul.f32 %v6160, %v410
  %6165 = vrot.lane.b32.xlu0 %v5927, 1
  %v6166 = vpop.permute.xlu0 %6165
  %6167 = vrot.lane.b32.xlu0 %v5932, 1
  %v6168 = vpop.permute.xlu0 %6167
  %6169 = vrot.lane.b32.xlu0 %v5937, 1
  %v6170 = vpop.permute.xlu0 %6169
  %6171 = vrot.lane.b32.xlu0 %v5942, 1
  %v6172 = vpop.permute.xlu0 %6171
  %v6173 = vmul.f32 %v6166, %v412
  %v6174 = vmul.f32 %v6168, %v412
  %v6175 = vmul.f32 %v6170, %v412
  %v6176 = vmul.f32 %v6172, %v412
  %6177 = vrot.lane.b32.xlu0 %v5927, 127
  %v6178 = vpop.permute.xlu0 %6177
  %6179 = vrot.lane.b32.xlu0 %v5932, 127
  %v6180 = vpop.permute.xlu0 %6179
  %6181 = vrot.lane.b32.xlu0 %v5937, 127
  %v6182 = vpop.permute.xlu0 %6181
  %6183 = vrot.lane.b32.xlu0 %v5942, 127
  %v6184 = vpop.permute.xlu0 %6183
  %v6185 = vmul.f32 %v6178, %v414
  %v6186 = vmul.f32 %v6180, %v414
  %v6187 = vmul.f32 %v6182, %v414
  %v6188 = vmul.f32 %v6184, %v414
  %6189 = vrot.lane.b32.xlu0 %v5927, 125
  %v6190 = vpop.permute.xlu0 %6189
  %6191 = vrot.lane.b32.xlu0 %v5932, 125
  %v6192 = vpop.permute.xlu0 %6191
  %6193 = vrot.lane.b32.xlu0 %v5937, 125
  %v6194 = vpop.permute.xlu0 %6193
  %6195 = vrot.lane.b32.xlu0 %v5942, 125
  %v6196 = vpop.permute.xlu0 %6195
  %v6197 = vmul.f32 %v6190, %v418
  %v6198 = vmul.f32 %v6192, %v418
  %v6199 = vmul.f32 %v6194, %v418
  %v6200 = vmul.f32 %v6196, %v418
  %6201 = vrot.lane.b32.xlu0 %v5927, 124
  %v6202 = vpop.permute.xlu0 %6201
  %6203 = vrot.lane.b32.xlu0 %v5932, 124
  %v6204 = vpop.permute.xlu0 %6203
  %6205 = vrot.lane.b32.xlu0 %v5937, 124
  %v6206 = vpop.permute.xlu0 %6205
  %6207 = vrot.lane.b32.xlu0 %v5942, 124
  %v6208 = vpop.permute.xlu0 %6207
  %v6209 = vmul.f32 %v6202, %v420
  %v6210 = vmul.f32 %v6204, %v420
  %v6211 = vmul.f32 %v6206, %v420
  %v6212 = vmul.f32 %v6208, %v420
  %6213 = vrot.lane.b32.xlu0 %v5927, 123
  %v6214 = vpop.permute.xlu0 %6213
  %6215 = vrot.lane.b32.xlu0 %v5932, 123
  %v6216 = vpop.permute.xlu0 %6215
  %6217 = vrot.lane.b32.xlu0 %v5937, 123
  %v6218 = vpop.permute.xlu0 %6217
  %6219 = vrot.lane.b32.xlu0 %v5942, 123
  %v6220 = vpop.permute.xlu0 %6219
  %v6221 = vmul.f32 %v6214, %v423
  %v6222 = vmul.f32 %v6216, %v423
  %v6223 = vmul.f32 %v6218, %v423
  %v6224 = vmul.f32 %v6220, %v423
  %v6225 = vld [vmem:[%s69] sm:$0xff]
  %v6226 = vld [vmem:[%s69 + $0x8] sm:$0xff]
  %v6227 = vld [vmem:[%s69 + $0x10] sm:$0xff]
  %v6228 = vld [vmem:[%s69 + $0x18] sm:$0xff]
  %v6229 = vld [vmem:[%s69 + $0x20] sm:$0xff]
  %v6230 = vld [vmem:[%s69 + $0x28] sm:$0xff]
  %6232 = vset.pattern.permute.xlu0 0
  %6233 = vperm.xlu0 %6232, %v5949
  %v6234 = vpop.permute.xlu0 %6233
  %6237 = vset.pattern.permute.xlu0 0
  %6238 = vperm.xlu0 %6237, %v5950
  %v6239 = vpop.permute.xlu0 %6238
  %v6242 = vsel %vm4578, %v6227, 0
  %v6245 = vsel %vm4578, %v6230, 0
  %6247 = vmatprep.subr.mxu0 0.0
  %6248 = vmatpush1.msra.mxu0 %v6176
  %6249 = vmatprep.subr.mxu0 0.0
  %6250 = vmatpush1.msra.mxu0 %v6175
  %6251 = vmatprep.subr.mxu0 0.0
  %6252 = vmatpush1.msra.mxu0 %v6174
  %6253 = vmatprep.subr.mxu0 0.0
  %6254 = vmatpush1.msra.mxu0 %v6173
  %6255 = vmatprep.subr.mxu0 0.0
  %6256 = vmatpush1.msra.mxu0 %v6164
  %6257 = vmatprep.subr.mxu0 0.0
  %6258 = vmatpush1.msra.mxu0 %v6163
  %6259 = vmatprep.subr.mxu0 0.0
  %6260 = vmatpush1.msra.mxu0 %v6162
  %6261 = vmatprep.subr.mxu0 0.0
  %6262 = vmatpush1.msra.mxu0 %v6161
  %6263 = vmatprep.subr.mxu0 0.0
  %6264 = vmatpush1.msra.mxu0 %v6152
  %6265 = vmatprep.subr.mxu0 0.0
  %6266 = vmatpush1.msra.mxu0 %v6151
  %6267 = vmatprep.subr.mxu0 0.0
  %6268 = vmatpush1.msra.mxu0 %v6150
  %6269 = vmatprep.subr.mxu0 0.0
  %6270 = vmatpush1.msra.mxu0 %v6149
  %6271 = vmatprep.subr.mxu0 0.0
  %6272 = vmatpush1.msra.mxu0 %v6140
  %6273 = vmatprep.subr.mxu0 0.0
  %6274 = vmatpush1.msra.mxu0 %v6139
  %6275 = vmatprep.subr.mxu0 0.0
  %6276 = vmatpush1.msra.mxu0 %v6138
  %6277 = vmatprep.subr.mxu0 0.0
  %6278 = vmatpush1.msra.mxu0 %v6137
  %6279 = vmatprep.subr.mxu0 0.0
  %6280 = vmatpush2.msra.mxu0 %v6212
  %6281 = vmatprep.subr.mxu0 0.0
  %6282 = vmatpush2.msra.mxu0 %v6211
  %6283 = vmatprep.subr.mxu0 0.0
  %6284 = vmatpush2.msra.mxu0 %v6210
  %6285 = vmatprep.subr.mxu0 0.0
  %6286 = vmatpush2.msra.mxu0 %v6209
  %6287 = vmatprep.subr.mxu0 0.0
  %6288 = vmatpush2.msra.mxu0 %v6200
  %6289 = vmatprep.subr.mxu0 0.0
  %6290 = vmatpush2.msra.mxu0 %v6199
  %6291 = vmatprep.subr.mxu0 0.0
  %6292 = vmatpush2.msra.mxu0 %v6198
  %6293 = vmatprep.subr.mxu0 0.0
  %6294 = vmatpush2.msra.mxu0 %v6197
  %6295 = vmatprep.subr.mxu0 0.0
  %6296 = vmatpush2.msra.mxu0 %v6188
  %6297 = vmatprep.subr.mxu0 0.0
  %6298 = vmatpush2.msra.mxu0 %v6187
  %6299 = vmatprep.subr.mxu0 0.0
  %6300 = vmatpush2.msra.mxu0 %v6186
  %6301 = vmatprep.subr.mxu0 0.0
  %6302 = vmatpush2.msra.mxu0 %v6185
  %6303 = vmatprep.subr.mxu0 0.0
  %6304 = vmatpush2.msra.mxu0 %v5942
  %6305 = vmatprep.subr.mxu0 0.0
  %6306 = vmatpush2.msra.mxu0 %v5937
  %6307 = vmatprep.subr.mxu0 0.0
  %6308 = vmatpush2.msra.mxu0 %v5932
  %6309 = vmatprep.subr.mxu0 0.0
  %6310 = vmatpush2.msra.mxu0 %v5927
  %6311 = vmatprep.mubr.f32.mxu0 %v6226
  %6312 = vmatmul.mubr.f32.gmra.mxu0 %v6225
  %v6313 = vpop.f32.mrf.mxu0
  %v6314 = vadd.f32 %v6234, %v6313
  %v6315 = vpop.f32.mrf.mxu0
  %6316 = vmatprep.mubr.f32.mxu0 %v6229
  %6317 = vmatmul.mubr.f32.gmra.mxu0 %v6228
  %v6318 = vpop.f32.mrf.mxu0
  %v6319 = vadd.f32 %v6239, %v6318
  %v6320 = vpop.f32.mrf.mxu0
  %6321 = vdwg.mxu0
  %6322 = vmatprep.subr.mxu0 0.0
  %6323 = vmatpush1.msra.mxu0 0.0
  %6324 = vmatprep.subr.mxu0 0.0
  %6325 = vmatpush1.msra.mxu0 0.0
  %6326 = vmatprep.subr.mxu0 0.0
  %6327 = vmatpush1.msra.mxu0 0.0
  %6328 = vmatprep.subr.mxu0 0.0
  %6329 = vmatpush1.msra.mxu0 0.0
  %6330 = vmatprep.subr.mxu0 0.0
  %6331 = vmatpush1.msra.mxu0 0.0
  %6332 = vmatprep.subr.mxu0 0.0
  %6333 = vmatpush1.msra.mxu0 0.0
  %6334 = vmatprep.subr.mxu0 0.0
  %6335 = vmatpush1.msra.mxu0 0.0
  %6336 = vmatprep.subr.mxu0 0.0
  %6337 = vmatpush1.msra.mxu0 0.0
  %6338 = vmatprep.subr.mxu0 0.0
  %6339 = vmatpush1.msra.mxu0 0.0
  %6340 = vmatprep.subr.mxu0 0.0
  %6341 = vmatpush1.msra.mxu0 0.0
  %6342 = vmatprep.subr.mxu0 0.0
  %6343 = vmatpush1.msra.mxu0 0.0
  %6344 = vmatprep.subr.mxu0 0.0
  %6345 = vmatpush1.msra.mxu0 0.0
  %6346 = vmatprep.subr.mxu0 0.0
  %6347 = vmatpush1.msra.mxu0 %v6224
  %6348 = vmatprep.subr.mxu0 0.0
  %6349 = vmatpush1.msra.mxu0 %v6223
  %6350 = vmatprep.subr.mxu0 0.0
  %6351 = vmatpush1.msra.mxu0 %v6222
  %6352 = vmatprep.subr.mxu0 0.0
  %6353 = vmatpush1.msra.mxu0 %v6221
  %6354 = vmatprep.subr.mxu0 0.0
  %6355 = vmatpush2.msra.mxu0 0.0
  %6356 = vmatprep.subr.mxu0 0.0
  %6357 = vmatpush2.msra.mxu0 0.0
  %6358 = vmatprep.subr.mxu0 0.0
  %6359 = vmatpush2.msra.mxu0 0.0
  %6360 = vmatprep.subr.mxu0 0.0
  %6361 = vmatpush2.msra.mxu0 0.0
  %6362 = vmatprep.subr.mxu0 0.0
  %6363 = vmatpush2.msra.mxu0 0.0
  %6364 = vmatprep.subr.mxu0 0.0
  %6365 = vmatpush2.msra.mxu0 0.0
  %6366 = vmatprep.subr.mxu0 0.0
  %6367 = vmatpush2.msra.mxu0 0.0
  %6368 = vmatprep.subr.mxu0 0.0
  %6369 = vmatpush2.msra.mxu0 0.0
  %6370 = vmatprep.subr.mxu0 0.0
  %6371 = vmatpush2.msra.mxu0 0.0
  %6372 = vmatprep.subr.mxu0 0.0
  %6373 = vmatpush2.msra.mxu0 0.0
  %6374 = vmatprep.subr.mxu0 0.0
  %6375 = vmatpush2.msra.mxu0 0.0
  %6376 = vmatprep.subr.mxu0 0.0
  %6377 = vmatpush2.msra.mxu0 0.0
  %6378 = vmatprep.subr.mxu0 0.0
  %6379 = vmatpush2.msra.mxu0 0.0
  %6380 = vmatprep.subr.mxu0 0.0
  %6381 = vmatpush2.msra.mxu0 0.0
  %6382 = vmatprep.subr.mxu0 0.0
  %6383 = vmatpush2.msra.mxu0 0.0
  %6384 = vmatprep.subr.mxu0 0.0
  %6385 = vmatpush2.msra.mxu0 0.0
  %6386 = vmatprep.mubr.f32.mxu0 0.0
  %6387 = vmatmul.mubr.f32.gmra.mxu0 %v6242
  %v6388 = vpop.f32.mrf.mxu0
  %v6389 = vadd.f32 %v6314, %v6388
  %v6390 = vpop.f32.mrf.mxu0
  %6391 = vmatprep.mubr.f32.mxu0 0.0
  %6392 = vmatmul.mubr.f32.gmra.mxu0 %v6245
  %v6393 = vpop.f32.mrf.mxu0
  %v6394 = vadd.f32 %v6319, %v6393
  %v6395 = vpop.f32.mrf.mxu0
  %6396 = vdwg.mxu0
  %v6397 = vxor.u32 %v6389, 2147483648
  %v6398 = vxor.u32 %v6394, 2147483648
  %v6399 = vmul.f32 %v6397, 1.442695
  %v6400 = vpow.pop %v6399
  %v6401 = vmul.f32 %v6398, 1.442695
  %v6402 = vpow.pop %v6401
  %v6403 = vadd.f32 %v6400, 1.0
  %v6404 = vadd.f32 %v6402, 1.0
  %v6405 = vrcp.pop %v6403
  %v6406 = vmul.f32 1.0, %v6405
  %v6407 = vrcp.pop %v6404
  %v6408 = vmul.f32 1.0, %v6407
  %v6409 = vmul.f32 %v6389, %v6406
  %v6410 = vmul.f32 %v6394, %v6408
  %v6411 = vadd.f32 %v6409, %v6121
  %v6412 = vadd.f32 %v6410, %v6126
  %v6413 = vxor.u32 %v6411, 2147483648
  %v6414 = vxor.u32 %v6412, 2147483648
  %v6415 = vmul.f32 %v6413, 1.442695
  %v6416 = vpow.pop %v6415
  %v6417 = vmul.f32 %v6414, 1.442695
  %v6418 = vpow.pop %v6417
  %v6419 = vadd.f32 %v6416, 1.0
  %v6420 = vadd.f32 %v6418, 1.0
  %v6421 = vrcp.pop %v6419
  %v6422 = vmul.f32 1.0, %v6421
  %v6423 = vrcp.pop %v6420
  %v6424 = vmul.f32 1.0, %v6423
  %v6425 = vmul.f32 %v6411, %v6422
  %v6426 = vmul.f32 %v6412, %v6424
  %6427 = vrot.lane.b32.xlu0 %v6425, 5
  %v6428 = vpop.permute.xlu0 %6427
  %6429 = vrot.lane.b32.xlu0 %v6426, 5
  %v6430 = vpop.permute.xlu0 %6429
  %v6431 = vmul.f32 %v6428, %v404
  %v6432 = vmul.f32 %v6430, %v404
  %6433 = vrot.lane.b32.xlu0 %v6425, 4
  %v6434 = vpop.permute.xlu0 %6433
  %6435 = vrot.lane.b32.xlu0 %v6426, 4
  %v6436 = vpop.permute.xlu0 %6435
  %v6437 = vmul.f32 %v6434, %v406
  %v6438 = vmul.f32 %v6436, %v406
  %6439 = vrot.lane.b32.xlu0 %v6425, 3
  %v6440 = vpop.permute.xlu0 %6439
  %6441 = vrot.lane.b32.xlu0 %v6426, 3
  %v6442 = vpop.permute.xlu0 %6441
  %v6443 = vmul.f32 %v6440, %v410
  %v6444 = vmul.f32 %v6442, %v410
  %6445 = vrot.lane.b32.xlu0 %v6425, 1
  %v6446 = vpop.permute.xlu0 %6445
  %6447 = vrot.lane.b32.xlu0 %v6426, 1
  %v6448 = vpop.permute.xlu0 %6447
  %v6449 = vmul.f32 %v6446, %v412
  %v6450 = vmul.f32 %v6448, %v412
  %6451 = vrot.lane.b32.xlu0 %v6425, 127
  %v6452 = vpop.permute.xlu0 %6451
  %6453 = vrot.lane.b32.xlu0 %v6426, 127
  %v6454 = vpop.permute.xlu0 %6453
  %v6455 = vmul.f32 %v6452, %v414
  %v6456 = vmul.f32 %v6454, %v414
  %6457 = vrot.lane.b32.xlu0 %v6425, 125
  %v6458 = vpop.permute.xlu0 %6457
  %6459 = vrot.lane.b32.xlu0 %v6426, 125
  %v6460 = vpop.permute.xlu0 %6459
  %v6461 = vmul.f32 %v6458, %v418
  %v6462 = vmul.f32 %v6460, %v418
  %6463 = vrot.lane.b32.xlu0 %v6425, 124
  %v6464 = vpop.permute.xlu0 %6463
  %6465 = vrot.lane.b32.xlu0 %v6426, 124
  %v6466 = vpop.permute.xlu0 %6465
  %v6467 = vmul.f32 %v6464, %v420
  %v6468 = vmul.f32 %v6466, %v420
  %6469 = vrot.lane.b32.xlu0 %v6425, 123
  %v6470 = vpop.permute.xlu0 %6469
  %6471 = vrot.lane.b32.xlu0 %v6426, 123
  %v6472 = vpop.permute.xlu0 %6471
  %v6473 = vmul.f32 %v6470, %v423
  %v6474 = vmul.f32 %v6472, %v423
  %v6475 = vld [vmem:[%s73] sm:$0xff]
  %v6476 = vld [vmem:[%s73 + $0x8] sm:$0xff]
  %v6477 = vld [vmem:[%s73 + $0x10] sm:$0xff]
  %v6478 = vld [vmem:[%s73 + $0x18] sm:$0xff]
  %6480 = vset.pattern.permute.xlu0 0
  %6481 = vperm.xlu0 %6480, %v5951
  %v6482 = vpop.permute.xlu0 %6481
  %6485 = vset.pattern.permute.xlu0 0
  %6486 = vperm.xlu0 %6485, %v5952
  %v6487 = vpop.permute.xlu0 %6486
  %v6490 = vsel %vm2189, %v6476, 0
  %v6493 = vsel %vm2189, %v6478, 0
  %6495 = vmatprep.subr.mxu0 0.0
  %6496 = vmatpush1.msra.mxu0 %v6468
  %6497 = vmatprep.subr.mxu0 0.0
  %6498 = vmatpush1.msra.mxu0 %v6467
  %6499 = vmatprep.subr.mxu0 0.0
  %6500 = vmatpush1.msra.mxu0 %v6462
  %6501 = vmatprep.subr.mxu0 0.0
  %6502 = vmatpush1.msra.mxu0 %v6461
  %6503 = vmatprep.subr.mxu0 0.0
  %6504 = vmatpush1.msra.mxu0 %v6456
  %6505 = vmatprep.subr.mxu0 0.0
  %6506 = vmatpush1.msra.mxu0 %v6455
  %6507 = vmatprep.subr.mxu0 0.0
  %6508 = vmatpush1.msra.mxu0 %v6426
  %6509 = vmatprep.subr.mxu0 0.0
  %6510 = vmatpush1.msra.mxu0 %v6425
  %6511 = vmatprep.subr.mxu0 0.0
  %6512 = vmatpush1.msra.mxu0 %v6450
  %6513 = vmatprep.subr.mxu0 0.0
  %6514 = vmatpush1.msra.mxu0 %v6449
  %6515 = vmatprep.subr.mxu0 0.0
  %6516 = vmatpush1.msra.mxu0 %v6444
  %6517 = vmatprep.subr.mxu0 0.0
  %6518 = vmatpush1.msra.mxu0 %v6443
  %6519 = vmatprep.subr.mxu0 0.0
  %6520 = vmatpush1.msra.mxu0 %v6438
  %6521 = vmatprep.subr.mxu0 0.0
  %6522 = vmatpush1.msra.mxu0 %v6437
  %6523 = vmatprep.subr.mxu0 0.0
  %6524 = vmatpush1.msra.mxu0 %v6432
  %6525 = vmatprep.subr.mxu0 0.0
  %6526 = vmatpush1.msra.mxu0 %v6431
  %6527 = vmatprep.subr.mxu0 0.0
  %6528 = vmatpush2.msra.mxu0 0.0
  %6529 = vmatprep.subr.mxu0 0.0
  %6530 = vmatpush2.msra.mxu0 0.0
  %6531 = vmatprep.subr.mxu0 0.0
  %6532 = vmatpush2.msra.mxu0 0.0
  %6533 = vmatprep.subr.mxu0 0.0
  %6534 = vmatpush2.msra.mxu0 0.0
  %6535 = vmatprep.subr.mxu0 0.0
  %6536 = vmatpush2.msra.mxu0 0.0
  %6537 = vmatprep.subr.mxu0 0.0
  %6538 = vmatpush2.msra.mxu0 0.0
  %6539 = vmatprep.subr.mxu0 0.0
  %6540 = vmatpush2.msra.mxu0 0.0
  %6541 = vmatprep.subr.mxu0 0.0
  %6542 = vmatpush2.msra.mxu0 0.0
  %6543 = vmatprep.subr.mxu0 0.0
  %6544 = vmatpush2.msra.mxu0 0.0
  %6545 = vmatprep.subr.mxu0 0.0
  %6546 = vmatpush2.msra.mxu0 0.0
  %6547 = vmatprep.subr.mxu0 0.0
  %6548 = vmatpush2.msra.mxu0 0.0
  %6549 = vmatprep.subr.mxu0 0.0
  %6550 = vmatpush2.msra.mxu0 0.0
  %6551 = vmatprep.subr.mxu0 0.0
  %6552 = vmatpush2.msra.mxu0 0.0
  %6553 = vmatprep.subr.mxu0 0.0
  %6554 = vmatpush2.msra.mxu0 0.0
  %6555 = vmatprep.subr.mxu0 0.0
  %6556 = vmatpush2.msra.mxu0 %v6474
  %6557 = vmatprep.subr.mxu0 0.0
  %6558 = vmatpush2.msra.mxu0 %v6473
  %6559 = vmatprep.mubr.f32.mxu0 %v6490
  %6560 = vmatmul.mubr.f32.gmra.mxu0 %v6475
  %v6561 = vpop.f32.mrf.mxu0
  %v6562 = vadd.f32 %v6482, %v6561
  %v6563 = vpop.f32.mrf.mxu0
  %6564 = vmatprep.mubr.f32.mxu0 %v6493
  %6565 = vmatmul.mubr.f32.gmra.mxu0 %v6477
  %v6566 = vpop.f32.mrf.mxu0
  %v6567 = vadd.f32 %v6487, %v6566
  %v6568 = vpop.f32.mrf.mxu0
  %6569 = vdwg.mxu0
  %6571 = vset.pattern.permute.xlu0 0
  %6572 = vperm.xlu0 %6571, %v5955
  %v6573 = vpop.permute.xlu0 %6572
  %6576 = vset.pattern.permute.xlu0 0
  %6577 = vperm.xlu0 %6576, %v5956
  %v6578 = vpop.permute.xlu0 %6577
  %v6581 = vsel %vm4578, %v5953, 0
  %v6584 = vsel %vm4578, %v5954, 0
  %6586 = vmatprep.subr.mxu0 0.0
  %6587 = vmatpush1.msra.mxu0 0.0
  %6588 = vmatprep.subr.mxu0 0.0
  %6589 = vmatpush1.msra.mxu0 0.0
  %6590 = vmatprep.subr.mxu0 0.0
  %6591 = vmatpush1.msra.mxu0 0.0
  %6592 = vmatprep.subr.mxu0 0.0
  %6593 = vmatpush1.msra.mxu0 0.0
  %6594 = vmatprep.subr.mxu0 0.0
  %6595 = vmatpush1.msra.mxu0 0.0
  %6596 = vmatprep.subr.mxu0 0.0
  %6597 = vmatpush1.msra.mxu0 0.0
  %6598 = vmatprep.subr.mxu0 0.0
  %6599 = vmatpush1.msra.mxu0 0.0
  %6600 = vmatprep.subr.mxu0 0.0
  %6601 = vmatpush1.msra.mxu0 0.0
  %6602 = vmatprep.subr.mxu0 0.0
  %6603 = vmatpush1.msra.mxu0 0.0
  %6604 = vmatprep.subr.mxu0 0.0
  %6605 = vmatpush1.msra.mxu0 0.0
  %6606 = vmatprep.subr.mxu0 0.0
  %6607 = vmatpush1.msra.mxu0 0.0
  %6608 = vmatprep.subr.mxu0 0.0
  %6609 = vmatpush1.msra.mxu0 0.0
  %6610 = vmatprep.subr.mxu0 0.0
  %6611 = vmatpush1.msra.mxu0 %v5942
  %6612 = vmatprep.subr.mxu0 0.0
  %6613 = vmatpush1.msra.mxu0 %v5937
  %6614 = vmatprep.subr.mxu0 0.0
  %6615 = vmatpush1.msra.mxu0 %v5932
  %6616 = vmatprep.subr.mxu0 0.0
  %6617 = vmatpush1.msra.mxu0 %v5927
  %6618 = vmatprep.subr.mxu0 0.0
  %6619 = vmatpush2.msra.mxu0 0.0
  %6620 = vmatprep.subr.mxu0 0.0
  %6621 = vmatpush2.msra.mxu0 0.0
  %6622 = vmatprep.subr.mxu0 0.0
  %6623 = vmatpush2.msra.mxu0 0.0
  %6624 = vmatprep.subr.mxu0 0.0
  %6625 = vmatpush2.msra.mxu0 0.0
  %6626 = vmatprep.subr.mxu0 0.0
  %6627 = vmatpush2.msra.mxu0 0.0
  %6628 = vmatprep.subr.mxu0 0.0
  %6629 = vmatpush2.msra.mxu0 0.0
  %6630 = vmatprep.subr.mxu0 0.0
  %6631 = vmatpush2.msra.mxu0 0.0
  %6632 = vmatprep.subr.mxu0 0.0
  %6633 = vmatpush2.msra.mxu0 0.0
  %6634 = vmatprep.subr.mxu0 0.0
  %6635 = vmatpush2.msra.mxu0 0.0
  %6636 = vmatprep.subr.mxu0 0.0
  %6637 = vmatpush2.msra.mxu0 0.0
  %6638 = vmatprep.subr.mxu0 0.0
  %6639 = vmatpush2.msra.mxu0 0.0
  %6640 = vmatprep.subr.mxu0 0.0
  %6641 = vmatpush2.msra.mxu0 0.0
  %6642 = vmatprep.subr.mxu0 0.0
  %6643 = vmatpush2.msra.mxu0 0.0
  %6644 = vmatprep.subr.mxu0 0.0
  %6645 = vmatpush2.msra.mxu0 0.0
  %6646 = vmatprep.subr.mxu0 0.0
  %6647 = vmatpush2.msra.mxu0 0.0
  %6648 = vmatprep.subr.mxu0 0.0
  %6649 = vmatpush2.msra.mxu0 0.0
  %6650 = vmatprep.mubr.f32.mxu0 0.0
  %6651 = vmatmul.mubr.f32.gmra.mxu0 %v6581
  %v6652 = vpop.f32.mrf.mxu0
  %v6653 = vadd.f32 %v6573, %v6652
  %v6654 = vpop.f32.mrf.mxu0
  %6655 = vmatprep.mubr.f32.mxu0 0.0
  %6656 = vmatmul.mubr.f32.gmra.mxu0 %v6584
  %v6657 = vpop.f32.mrf.mxu0
  %v6658 = vadd.f32 %v6578, %v6657
  %v6659 = vpop.f32.mrf.mxu0
  %6660 = vdwg.mxu0
  %v6661 = vadd.f32 %v6562, %v6653
  %v6662 = vadd.f32 %v6567, %v6658
  %v6663 = vld [vmem:[#allocation3] sm:$0xff]
  %v6664 = vld [vmem:[#allocation3 + $0x8] sm:$0xff]
  %6665 = vmatprep.subr.mxu0 0.0
  %6666 = vmatpush1.msra.mxu0 %v1914
  %6667 = vmatprep.subr.mxu0 0.0
  %6668 = vmatpush1.msra.mxu0 %v1913
  %6669 = vmatprep.subr.mxu0 0.0
  %6670 = vmatpush1.msra.mxu0 %v1912
  %6671 = vmatprep.subr.mxu0 0.0
  %6672 = vmatpush1.msra.mxu0 %v1911
  %6673 = vmatprep.subr.mxu0 0.0
  %6674 = vmatpush1.msra.mxu0 %v1910
  %6675 = vmatprep.subr.mxu0 0.0
  %6676 = vmatpush1.msra.mxu0 %v1909
  %6677 = vmatprep.subr.mxu0 0.0
  %6678 = vmatpush1.msra.mxu0 %v1908
  %6679 = vmatprep.subr.mxu0 0.0
  %6680 = vmatpush1.msra.mxu0 %v1907
  %6681 = vmatprep.subr.mxu0 0.0
  %6682 = vmatpush1.msra.mxu0 %v1906
  %6683 = vmatprep.subr.mxu0 0.0
  %6684 = vmatpush1.msra.mxu0 %v1905
  %6685 = vmatprep.subr.mxu0 0.0
  %6686 = vmatpush1.msra.mxu0 %v1904
  %6687 = vmatprep.subr.mxu0 0.0
  %6688 = vmatpush1.msra.mxu0 %v1903
  %6689 = vmatprep.subr.mxu0 0.0
  %6690 = vmatpush1.msra.mxu0 %v1902
  %6691 = vmatprep.subr.mxu0 0.0
  %6692 = vmatpush1.msra.mxu0 %v1901
  %6693 = vmatprep.subr.mxu0 0.0
  %6694 = vmatpush1.msra.mxu0 %v1900
  %6695 = vmatprep.subr.mxu0 0.0
  %6696 = vmatpush1.msra.mxu0 %v1899
  %6697 = vmatprep.subr.mxu0 0.0
  %6698 = vmatpush2.msra.mxu0 0.0
  %6699 = vmatprep.subr.mxu0 0.0
  %6700 = vmatpush2.msra.mxu0 0.0
  %6701 = vmatprep.subr.mxu0 0.0
  %6702 = vmatpush2.msra.mxu0 0.0
  %6703 = vmatprep.subr.mxu0 0.0
  %6704 = vmatpush2.msra.mxu0 0.0
  %6705 = vmatprep.subr.mxu0 0.0
  %6706 = vmatpush2.msra.mxu0 0.0
  %6707 = vmatprep.subr.mxu0 0.0
  %6708 = vmatpush2.msra.mxu0 0.0
  %6709 = vmatprep.subr.mxu0 0.0
  %6710 = vmatpush2.msra.mxu0 0.0
  %6711 = vmatprep.subr.mxu0 0.0
  %6712 = vmatpush2.msra.mxu0 0.0
  %6713 = vmatprep.subr.mxu0 0.0
  %6714 = vmatpush2.msra.mxu0 0.0
  %6715 = vmatprep.subr.mxu0 0.0
  %6716 = vmatpush2.msra.mxu0 0.0
  %6717 = vmatprep.subr.mxu0 0.0
  %6718 = vmatpush2.msra.mxu0 0.0
  %6719 = vmatprep.subr.mxu0 0.0
  %6720 = vmatpush2.msra.mxu0 0.0
  %6721 = vmatprep.subr.mxu0 0.0
  %6722 = vmatpush2.msra.mxu0 0.0
  %6723 = vmatprep.subr.mxu0 0.0
  %6724 = vmatpush2.msra.mxu0 0.0
  %6725 = vmatprep.subr.mxu0 0.0
  %6726 = vmatpush2.msra.mxu0 0.0
  %6727 = vmatprep.subr.mxu0 0.0
  %6728 = vmatpush2.msra.mxu0 0.0
  %6729 = vmatprep.mubr.f32.mxu0 0.0
  %6730 = vmatmul.mubr.f32.gmra.mxu0 %v6661
  %v6731 = vpop.f32.mrf.mxu0
  %v6732 = vadd.f32 %v6663, %v6731
  %v6733 = vpop.f32.mrf.mxu0
  %6734 = vmatprep.mubr.f32.mxu0 0.0
  %6735 = vmatmul.mubr.f32.gmra.mxu0 %v6662
  %v6736 = vpop.f32.mrf.mxu0
  %v6737 = vadd.f32 %v6664, %v6736
  %v6738 = vpop.f32.mrf.mxu0
  %6739 = vdwg.mxu0
  %v6740 = vld [vmem:[%s81] sm:$0xff]
  %v6741 = vld [vmem:[%s83] sm:$0xff]
  %v6742 = vld [vmem:[%s87] sm:$0xff]
  %v6743 = vld [vmem:[%s91] sm:$0xff]
  %v6744 = vld [vmem:[%s93] sm:$0xff]
  %v6745 = vld [vmem:[%s95] sm:$0xff]
  %6747 = vset.pattern.permute.xlu0 0
  %6748 = vperm.xlu0 %6747, %v6741
  %v6749 = vpop.permute.xlu0 %6748
  %v6752 = vsel %vm2189, %v6740, 0
  %6754 = vmatprep.subr.mxu0 0.0
  %6755 = vmatpush1.msra.mxu0 0.0
  %6756 = vmatprep.subr.mxu0 0.0
  %6757 = vmatpush1.msra.mxu0 0.0
  %6758 = vmatprep.subr.mxu0 0.0
  %6759 = vmatpush1.msra.mxu0 0.0
  %6760 = vmatprep.subr.mxu0 0.0
  %6761 = vmatpush1.msra.mxu0 0.0
  %6762 = vmatprep.subr.mxu0 0.0
  %6763 = vmatpush1.msra.mxu0 0.0
  %6764 = vmatprep.subr.mxu0 0.0
  %6765 = vmatpush1.msra.mxu0 0.0
  %6766 = vmatprep.subr.mxu0 0.0
  %6767 = vmatpush1.msra.mxu0 0.0
  %6768 = vmatprep.subr.mxu0 0.0
  %6769 = vmatpush1.msra.mxu0 0.0
  %6770 = vmatprep.subr.mxu0 0.0
  %6771 = vmatpush1.msra.mxu0 0.0
  %6772 = vmatprep.subr.mxu0 0.0
  %6773 = vmatpush1.msra.mxu0 0.0
  %6774 = vmatprep.subr.mxu0 0.0
  %6775 = vmatpush1.msra.mxu0 0.0
  %6776 = vmatprep.subr.mxu0 0.0
  %6777 = vmatpush1.msra.mxu0 0.0
  %6778 = vmatprep.subr.mxu0 0.0
  %6779 = vmatpush1.msra.mxu0 0.0
  %6780 = vmatprep.subr.mxu0 0.0
  %6781 = vmatpush1.msra.mxu0 0.0
  %6782 = vmatprep.subr.mxu0 0.0
  %6783 = vmatpush1.msra.mxu0 %v234
  %6784 = vmatprep.subr.mxu0 0.0
  %6785 = vmatpush1.msra.mxu0 %v233
  %6786 = vmatprep.subr.mxu0 0.0
  %6787 = vmatpush2.msra.mxu0 0.0
  %6788 = vmatprep.subr.mxu0 0.0
  %6789 = vmatpush2.msra.mxu0 0.0
  %6790 = vmatprep.subr.mxu0 0.0
  %6791 = vmatpush2.msra.mxu0 0.0
  %6792 = vmatprep.subr.mxu0 0.0
  %6793 = vmatpush2.msra.mxu0 0.0
  %6794 = vmatprep.subr.mxu0 0.0
  %6795 = vmatpush2.msra.mxu0 0.0
  %6796 = vmatprep.subr.mxu0 0.0
  %6797 = vmatpush2.msra.mxu0 0.0
  %6798 = vmatprep.subr.mxu0 0.0
  %6799 = vmatpush2.msra.mxu0 0.0
  %6800 = vmatprep.subr.mxu0 0.0
  %6801 = vmatpush2.msra.mxu0 0.0
  %6802 = vmatprep.subr.mxu0 0.0
  %6803 = vmatpush2.msra.mxu0 0.0
  %6804 = vmatprep.subr.mxu0 0.0
  %6805 = vmatpush2.msra.mxu0 0.0
  %6806 = vmatprep.subr.mxu0 0.0
  %6807 = vmatpush2.msra.mxu0 0.0
  %6808 = vmatprep.subr.mxu0 0.0
  %6809 = vmatpush2.msra.mxu0 0.0
  %6810 = vmatprep.subr.mxu0 0.0
  %6811 = vmatpush2.msra.mxu0 0.0
  %6812 = vmatprep.subr.mxu0 0.0
  %6813 = vmatpush2.msra.mxu0 0.0
  %6814 = vmatprep.subr.mxu0 0.0
  %6815 = vmatpush2.msra.mxu0 0.0
  %6816 = vmatprep.subr.mxu0 0.0
  %6817 = vmatpush2.msra.mxu0 0.0
  %6818 = vmatprep.mubr.f32.mxu0 0.0
  %6819 = vmatmul.mubr.f32.gmra.mxu0 %v6752
  %v6820 = vpop.f32.mrf.mxu0
  %v6821 = vadd.f32 %v6749, %v6820
  %v6822 = vpop.f32.mrf.mxu0
  %6823 = vdwg.mxu0
  %v6825 = vsel %vm2263, %v6821, 0
  %6827 = vmatprep.subr.mxu0 0.0
  %6828 = vmatpush1.msra.mxu0 0.0
  %6829 = vmatprep.subr.mxu0 0.0
  %6830 = vmatpush1.msra.mxu0 0.0
  %6831 = vmatprep.subr.mxu0 0.0
  %6832 = vmatpush1.msra.mxu0 0.0
  %6833 = vmatprep.subr.mxu0 0.0
  %6834 = vmatpush1.msra.mxu0 0.0
  %6835 = vmatprep.subr.mxu0 0.0
  %6836 = vmatpush1.msra.mxu0 0.0
  %6837 = vmatprep.subr.mxu0 0.0
  %6838 = vmatpush1.msra.mxu0 0.0
  %6839 = vmatprep.subr.mxu0 0.0
  %6840 = vmatpush1.msra.mxu0 0.0
  %6841 = vmatprep.subr.mxu0 0.0
  %6842 = vmatpush1.msra.mxu0 0.0
  %6843 = vmatprep.subr.mxu0 0.0
  %6844 = vmatpush1.msra.mxu0 0.0
  %6845 = vmatprep.subr.mxu0 0.0
  %6846 = vmatpush1.msra.mxu0 0.0
  %6847 = vmatprep.subr.mxu0 0.0
  %6848 = vmatpush1.msra.mxu0 0.0
  %6849 = vmatprep.subr.mxu0 0.0
  %6850 = vmatpush1.msra.mxu0 0.0
  %6851 = vmatprep.subr.mxu0 0.0
  %6852 = vmatpush1.msra.mxu0 0.0
  %6853 = vmatprep.subr.mxu0 0.0
  %6854 = vmatpush1.msra.mxu0 0.0
  %6855 = vmatprep.subr.mxu0 0.0
  %6856 = vmatpush1.msra.mxu0 0.0
  %6857 = vmatprep.subr.mxu0 0.0
  %6858 = vmatpush1.msra.mxu0 %v3438
  %6859 = vmatprep.subr.mxu0 0.0
  %6860 = vmatpush2.msra.mxu0 0.0
  %6861 = vmatprep.subr.mxu0 0.0
  %6862 = vmatpush2.msra.mxu0 0.0
  %6863 = vmatprep.subr.mxu0 0.0
  %6864 = vmatpush2.msra.mxu0 0.0
  %6865 = vmatprep.subr.mxu0 0.0
  %6866 = vmatpush2.msra.mxu0 0.0
  %6867 = vmatprep.subr.mxu0 0.0
  %6868 = vmatpush2.msra.mxu0 0.0
  %6869 = vmatprep.subr.mxu0 0.0
  %6870 = vmatpush2.msra.mxu0 0.0
  %6871 = vmatprep.subr.mxu0 0.0
  %6872 = vmatpush2.msra.mxu0 0.0
  %6873 = vmatprep.subr.mxu0 0.0
  %6874 = vmatpush2.msra.mxu0 0.0
  %6875 = vmatprep.subr.mxu0 0.0
  %6876 = vmatpush2.msra.mxu0 0.0
  %6877 = vmatprep.subr.mxu0 0.0
  %6878 = vmatpush2.msra.mxu0 0.0
  %6879 = vmatprep.subr.mxu0 0.0
  %6880 = vmatpush2.msra.mxu0 0.0
  %6881 = vmatprep.subr.mxu0 0.0
  %6882 = vmatpush2.msra.mxu0 0.0
  %6883 = vmatprep.subr.mxu0 0.0
  %6884 = vmatpush2.msra.mxu0 0.0
  %6885 = vmatprep.subr.mxu0 0.0
  %6886 = vmatpush2.msra.mxu0 0.0
  %6887 = vmatprep.subr.mxu0 0.0
  %6888 = vmatpush2.msra.mxu0 0.0
  %6889 = vmatprep.subr.mxu0 0.0
  %6890 = vmatpush2.msra.mxu0 0.0
  %6891 = vmatprep.mubr.f32.mxu0 0.0
  %6892 = vmatmul.mubr.f32.gmra.mxu0 %v6825
  %v6893 = vpop.f32.mrf.mxu0
  %v6894 = vadd.f32 0.0, %v6893
  %v6895 = vpop.f32.mrf.mxu0
  %6896 = vdwg.mxu0
  %6897 = vrot.lane.b32.xlu0 %v6732, 9
  %v6898 = vpop.permute.xlu0 %6897
  %6899 = vrot.lane.b32.xlu0 %v6737, 9
  %v6900 = vpop.permute.xlu0 %6899
  %v6901 = vmul.f32 %v6898, %v374
  %v6902 = vmul.f32 %v6900, %v374
  %6903 = vrot.lane.b32.xlu0 %v6732, 8
  %v6904 = vpop.permute.xlu0 %6903
  %6905 = vrot.lane.b32.xlu0 %v6737, 8
  %v6906 = vpop.permute.xlu0 %6905
  %v6907 = vmul.f32 %v6904, %v376
  %v6908 = vmul.f32 %v6906, %v376
  %6909 = vrot.lane.b32.xlu0 %v6732, 7
  %v6910 = vpop.permute.xlu0 %6909
  %6911 = vrot.lane.b32.xlu0 %v6737, 7
  %v6912 = vpop.permute.xlu0 %6911
  %v6913 = vmul.f32 %v6910, %v380
  %v6914 = vmul.f32 %v6912, %v380
  %6915 = vrot.lane.b32.xlu0 %v6732, 1
  %v6916 = vpop.permute.xlu0 %6915
  %6917 = vrot.lane.b32.xlu0 %v6737, 1
  %v6918 = vpop.permute.xlu0 %6917
  %v6919 = vmul.f32 %v6916, %v382
  %v6920 = vmul.f32 %v6918, %v382
  %6921 = vrot.lane.b32.xlu0 %v6732, 127
  %v6922 = vpop.permute.xlu0 %6921
  %6923 = vrot.lane.b32.xlu0 %v6737, 127
  %v6924 = vpop.permute.xlu0 %6923
  %v6925 = vmul.f32 %v6922, %v384
  %v6926 = vmul.f32 %v6924, %v384
  %6927 = vrot.lane.b32.xlu0 %v6732, 121
  %v6928 = vpop.permute.xlu0 %6927
  %6929 = vrot.lane.b32.xlu0 %v6737, 121
  %v6930 = vpop.permute.xlu0 %6929
  %v6931 = vmul.f32 %v6928, %v388
  %v6932 = vmul.f32 %v6930, %v388
  %6933 = vrot.lane.b32.xlu0 %v6732, 120
  %v6934 = vpop.permute.xlu0 %6933
  %6935 = vrot.lane.b32.xlu0 %v6737, 120
  %v6936 = vpop.permute.xlu0 %6935
  %v6937 = vmul.f32 %v6934, %v390
  %v6938 = vmul.f32 %v6936, %v390
  %6939 = vrot.lane.b32.xlu0 %v6732, 119
  %v6940 = vpop.permute.xlu0 %6939
  %6941 = vrot.lane.b32.xlu0 %v6737, 119
  %v6942 = vpop.permute.xlu0 %6941
  %v6943 = vmul.f32 %v6940, %v393
  %v6944 = vmul.f32 %v6942, %v393
  %v6945 = vld [vmem:[%s85] sm:$0xff]
  %v6946 = vld [vmem:[%s85 + $0x8] sm:$0xff]
  %6948 = vset.pattern.permute.xlu0 0
  %6949 = vperm.xlu0 %6948, %v6742
  %v6950 = vpop.permute.xlu0 %6949
  %v6953 = vsel %vm2189, %v6946, 0
  %6955 = vmatprep.subr.mxu0 0.0
  %6956 = vmatpush1.msra.mxu0 %v6938
  %6957 = vmatprep.subr.mxu0 0.0
  %6958 = vmatpush1.msra.mxu0 %v6937
  %6959 = vmatprep.subr.mxu0 0.0
  %6960 = vmatpush1.msra.mxu0 %v6932
  %6961 = vmatprep.subr.mxu0 0.0
  %6962 = vmatpush1.msra.mxu0 %v6931
  %6963 = vmatprep.subr.mxu0 0.0
  %6964 = vmatpush1.msra.mxu0 %v6926
  %6965 = vmatprep.subr.mxu0 0.0
  %6966 = vmatpush1.msra.mxu0 %v6925
  %6967 = vmatprep.subr.mxu0 0.0
  %6968 = vmatpush1.msra.mxu0 %v6737
  %6969 = vmatprep.subr.mxu0 0.0
  %6970 = vmatpush1.msra.mxu0 %v6732
  %6971 = vmatprep.subr.mxu0 0.0
  %6972 = vmatpush1.msra.mxu0 %v6920
  %6973 = vmatprep.subr.mxu0 0.0
  %6974 = vmatpush1.msra.mxu0 %v6919
  %6975 = vmatprep.subr.mxu0 0.0
  %6976 = vmatpush1.msra.mxu0 %v6914
  %6977 = vmatprep.subr.mxu0 0.0
  %6978 = vmatpush1.msra.mxu0 %v6913
  %6979 = vmatprep.subr.mxu0 0.0
  %6980 = vmatpush1.msra.mxu0 %v6908
  %6981 = vmatprep.subr.mxu0 0.0
  %6982 = vmatpush1.msra.mxu0 %v6907
  %6983 = vmatprep.subr.mxu0 0.0
  %6984 = vmatpush1.msra.mxu0 %v6902
  %6985 = vmatprep.subr.mxu0 0.0
  %6986 = vmatpush1.msra.mxu0 %v6901
  %6987 = vmatprep.subr.mxu0 0.0
  %6988 = vmatpush2.msra.mxu0 0.0
  %6989 = vmatprep.subr.mxu0 0.0
  %6990 = vmatpush2.msra.mxu0 0.0
  %6991 = vmatprep.subr.mxu0 0.0
  %6992 = vmatpush2.msra.mxu0 0.0
  %6993 = vmatprep.subr.mxu0 0.0
  %6994 = vmatpush2.msra.mxu0 0.0
  %6995 = vmatprep.subr.mxu0 0.0
  %6996 = vmatpush2.msra.mxu0 0.0
  %6997 = vmatprep.subr.mxu0 0.0
  %6998 = vmatpush2.msra.mxu0 0.0
  %6999 = vmatprep.subr.mxu0 0.0
  %7000 = vmatpush2.msra.mxu0 0.0
  %7001 = vmatprep.subr.mxu0 0.0
  %7002 = vmatpush2.msra.mxu0 0.0
  %7003 = vmatprep.subr.mxu0 0.0
  %7004 = vmatpush2.msra.mxu0 0.0
  %7005 = vmatprep.subr.mxu0 0.0
  %7006 = vmatpush2.msra.mxu0 0.0
  %7007 = vmatprep.subr.mxu0 0.0
  %7008 = vmatpush2.msra.mxu0 0.0
  %7009 = vmatprep.subr.mxu0 0.0
  %7010 = vmatpush2.msra.mxu0 0.0
  %7011 = vmatprep.subr.mxu0 0.0
  %7012 = vmatpush2.msra.mxu0 0.0
  %7013 = vmatprep.subr.mxu0 0.0
  %7014 = vmatpush2.msra.mxu0 0.0
  %7015 = vmatprep.subr.mxu0 0.0
  %7016 = vmatpush2.msra.mxu0 %v6944
  %7017 = vmatprep.subr.mxu0 0.0
  %7018 = vmatpush2.msra.mxu0 %v6943
  %7019 = vmatprep.mubr.f32.mxu0 %v6953
  %7020 = vmatmul.mubr.f32.gmra.mxu0 %v6945
  %v7021 = vpop.f32.mrf.mxu0
  %v7022 = vadd.f32 %v6950, %v7021
  %v7023 = vpop.f32.mrf.mxu0
  %7024 = vdwg.mxu0
  %v7025 = vxor.u32 %v7022, 2147483648
  %v7026 = vmul.f32 %v7025, 1.442695
  %v7027 = vpow.pop %v7026
  %v7028 = vadd.f32 %v7027, 1.0
  %v7029 = vrcp.pop %v7028
  %v7030 = vmul.f32 1.0, %v7029
  %v7031 = vmul.f32 %v7022, %v7030
  %v7032 = vadd.f32 %v7031, %v6894
  %v7033 = vxor.u32 %v7032, 2147483648
  %v7034 = vmul.f32 %v7033, 1.442695
  %v7035 = vpow.pop %v7034
  %v7036 = vadd.f32 %v7035, 1.0
  %v7037 = vrcp.pop %v7036
  %v7038 = vmul.f32 1.0, %v7037
  %v7039 = vmul.f32 %v7032, %v7038
  %7040 = vrot.lane.b32.xlu0 %v7039, 9
  %v7041 = vpop.permute.xlu0 %7040
  %v7042 = vmul.f32 %v7041, %v374
  %7043 = vrot.lane.b32.xlu0 %v7039, 8
  %v7044 = vpop.permute.xlu0 %7043
  %v7045 = vmul.f32 %v7044, %v376
  %7046 = vrot.lane.b32.xlu0 %v7039, 7
  %v7047 = vpop.permute.xlu0 %7046
  %v7048 = vmul.f32 %v7047, %v380
  %7049 = vrot.lane.b32.xlu0 %v7039, 1
  %v7050 = vpop.permute.xlu0 %7049
  %v7051 = vmul.f32 %v7050, %v382
  %7052 = vrot.lane.b32.xlu0 %v7039, 127
  %v7053 = vpop.permute.xlu0 %7052
  %v7054 = vmul.f32 %v7053, %v384
  %7055 = vrot.lane.b32.xlu0 %v7039, 121
  %v7056 = vpop.permute.xlu0 %7055
  %v7057 = vmul.f32 %v7056, %v388
  %7058 = vrot.lane.b32.xlu0 %v7039, 120
  %v7059 = vpop.permute.xlu0 %7058
  %v7060 = vmul.f32 %v7059, %v390
  %7061 = vrot.lane.b32.xlu0 %v7039, 119
  %v7062 = vpop.permute.xlu0 %7061
  %v7063 = vmul.f32 %v7062, %v393
  %v7064 = vld [vmem:[%s89] sm:$0xff]
  %7066 = vset.pattern.permute.xlu0 0
  %7067 = vperm.xlu0 %7066, %v6743
  %v7068 = vpop.permute.xlu0 %7067
  %v7071 = vsel %vm3016, %v7064, 0
  %7073 = vmatprep.subr.mxu0 0.0
  %7074 = vmatpush1.msra.mxu0 0.0
  %7075 = vmatprep.subr.mxu0 0.0
  %7076 = vmatpush1.msra.mxu0 0.0
  %7077 = vmatprep.subr.mxu0 0.0
  %7078 = vmatpush1.msra.mxu0 0.0
  %7079 = vmatprep.subr.mxu0 0.0
  %7080 = vmatpush1.msra.mxu0 0.0
  %7081 = vmatprep.subr.mxu0 0.0
  %7082 = vmatpush1.msra.mxu0 0.0
  %7083 = vmatprep.subr.mxu0 0.0
  %7084 = vmatpush1.msra.mxu0 0.0
  %7085 = vmatprep.subr.mxu0 0.0
  %7086 = vmatpush1.msra.mxu0 0.0
  %7087 = vmatprep.subr.mxu0 0.0
  %7088 = vmatpush1.msra.mxu0 %v7063
  %7089 = vmatprep.subr.mxu0 0.0
  %7090 = vmatpush1.msra.mxu0 %v7060
  %7091 = vmatprep.subr.mxu0 0.0
  %7092 = vmatpush1.msra.mxu0 %v7057
  %7093 = vmatprep.subr.mxu0 0.0
  %7094 = vmatpush1.msra.mxu0 %v7054
  %7095 = vmatprep.subr.mxu0 0.0
  %7096 = vmatpush1.msra.mxu0 %v7039
  %7097 = vmatprep.subr.mxu0 0.0
  %7098 = vmatpush1.msra.mxu0 %v7051
  %7099 = vmatprep.subr.mxu0 0.0
  %7100 = vmatpush1.msra.mxu0 %v7048
  %7101 = vmatprep.subr.mxu0 0.0
  %7102 = vmatpush1.msra.mxu0 %v7045
  %7103 = vmatprep.subr.mxu0 0.0
  %7104 = vmatpush1.msra.mxu0 %v7042
  %7105 = vmatprep.subr.mxu0 0.0
  %7106 = vmatpush2.msra.mxu0 0.0
  %7107 = vmatprep.subr.mxu0 0.0
  %7108 = vmatpush2.msra.mxu0 0.0
  %7109 = vmatprep.subr.mxu0 0.0
  %7110 = vmatpush2.msra.mxu0 0.0
  %7111 = vmatprep.subr.mxu0 0.0
  %7112 = vmatpush2.msra.mxu0 0.0
  %7113 = vmatprep.subr.mxu0 0.0
  %7114 = vmatpush2.msra.mxu0 0.0
  %7115 = vmatprep.subr.mxu0 0.0
  %7116 = vmatpush2.msra.mxu0 0.0
  %7117 = vmatprep.subr.mxu0 0.0
  %7118 = vmatpush2.msra.mxu0 0.0
  %7119 = vmatprep.subr.mxu0 0.0
  %7120 = vmatpush2.msra.mxu0 0.0
  %7121 = vmatprep.subr.mxu0 0.0
  %7122 = vmatpush2.msra.mxu0 0.0
  %7123 = vmatprep.subr.mxu0 0.0
  %7124 = vmatpush2.msra.mxu0 0.0
  %7125 = vmatprep.subr.mxu0 0.0
  %7126 = vmatpush2.msra.mxu0 0.0
  %7127 = vmatprep.subr.mxu0 0.0
  %7128 = vmatpush2.msra.mxu0 0.0
  %7129 = vmatprep.subr.mxu0 0.0
  %7130 = vmatpush2.msra.mxu0 0.0
  %7131 = vmatprep.subr.mxu0 0.0
  %7132 = vmatpush2.msra.mxu0 0.0
  %7133 = vmatprep.subr.mxu0 0.0
  %7134 = vmatpush2.msra.mxu0 0.0
  %7135 = vmatprep.subr.mxu0 0.0
  %7136 = vmatpush2.msra.mxu0 0.0
  %7137 = vmatprep.mubr.f32.mxu0 0.0
  %7138 = vmatmul.mubr.f32.gmra.mxu0 %v7071
  %v7139 = vpop.f32.mrf.mxu0
  %v7140 = vadd.f32 %v7068, %v7139
  %v7141 = vpop.f32.mrf.mxu0
  %7142 = vdwg.mxu0
  %7144 = vset.pattern.permute.xlu0 0
  %7145 = vperm.xlu0 %7144, %v6745
  %v7146 = vpop.permute.xlu0 %7145
  %v7149 = vsel %vm2189, %v6744, 0
  %7151 = vmatprep.subr.mxu0 0.0
  %7152 = vmatpush1.msra.mxu0 0.0
  %7153 = vmatprep.subr.mxu0 0.0
  %7154 = vmatpush1.msra.mxu0 0.0
  %7155 = vmatprep.subr.mxu0 0.0
  %7156 = vmatpush1.msra.mxu0 0.0
  %7157 = vmatprep.subr.mxu0 0.0
  %7158 = vmatpush1.msra.mxu0 0.0
  %7159 = vmatprep.subr.mxu0 0.0
  %7160 = vmatpush1.msra.mxu0 0.0
  %7161 = vmatprep.subr.mxu0 0.0
  %7162 = vmatpush1.msra.mxu0 0.0
  %7163 = vmatprep.subr.mxu0 0.0
  %7164 = vmatpush1.msra.mxu0 0.0
  %7165 = vmatprep.subr.mxu0 0.0
  %7166 = vmatpush1.msra.mxu0 0.0
  %7167 = vmatprep.subr.mxu0 0.0
  %7168 = vmatpush1.msra.mxu0 0.0
  %7169 = vmatprep.subr.mxu0 0.0
  %7170 = vmatpush1.msra.mxu0 0.0
  %7171 = vmatprep.subr.mxu0 0.0
  %7172 = vmatpush1.msra.mxu0 0.0
  %7173 = vmatprep.subr.mxu0 0.0
  %7174 = vmatpush1.msra.mxu0 0.0
  %7175 = vmatprep.subr.mxu0 0.0
  %7176 = vmatpush1.msra.mxu0 0.0
  %7177 = vmatprep.subr.mxu0 0.0
  %7178 = vmatpush1.msra.mxu0 0.0
  %7179 = vmatprep.subr.mxu0 0.0
  %7180 = vmatpush1.msra.mxu0 %v6737
  %7181 = vmatprep.subr.mxu0 0.0
  %7182 = vmatpush1.msra.mxu0 %v6732
  %7183 = vmatprep.subr.mxu0 0.0
  %7184 = vmatpush2.msra.mxu0 0.0
  %7185 = vmatprep.subr.mxu0 0.0
  %7186 = vmatpush2.msra.mxu0 0.0
  %7187 = vmatprep.subr.mxu0 0.0
  %7188 = vmatpush2.msra.mxu0 0.0
  %7189 = vmatprep.subr.mxu0 0.0
  %7190 = vmatpush2.msra.mxu0 0.0
  %7191 = vmatprep.subr.mxu0 0.0
  %7192 = vmatpush2.msra.mxu0 0.0
  %7193 = vmatprep.subr.mxu0 0.0
  %7194 = vmatpush2.msra.mxu0 0.0
  %7195 = vmatprep.subr.mxu0 0.0
  %7196 = vmatpush2.msra.mxu0 0.0
  %7197 = vmatprep.subr.mxu0 0.0
  %7198 = vmatpush2.msra.mxu0 0.0
  %7199 = vmatprep.subr.mxu0 0.0
  %7200 = vmatpush2.msra.mxu0 0.0
  %7201 = vmatprep.subr.mxu0 0.0
  %7202 = vmatpush2.msra.mxu0 0.0
  %7203 = vmatprep.subr.mxu0 0.0
  %7204 = vmatpush2.msra.mxu0 0.0
  %7205 = vmatprep.subr.mxu0 0.0
  %7206 = vmatpush2.msra.mxu0 0.0
  %7207 = vmatprep.subr.mxu0 0.0
  %7208 = vmatpush2.msra.mxu0 0.0
  %7209 = vmatprep.subr.mxu0 0.0
  %7210 = vmatpush2.msra.mxu0 0.0
  %7211 = vmatprep.subr.mxu0 0.0
  %7212 = vmatpush2.msra.mxu0 0.0
  %7213 = vmatprep.subr.mxu0 0.0
  %7214 = vmatpush2.msra.mxu0 0.0
  %7215 = vmatprep.mubr.f32.mxu0 0.0
  %7216 = vmatmul.mubr.f32.gmra.mxu0 %v7149
  %v7217 = vpop.f32.mrf.mxu0
  %v7218 = vadd.f32 %v7146, %v7217
  %v7219 = vpop.f32.mrf.mxu0
  %7220 = vdwg.mxu0
  %v7221 = vadd.f32 %v7140, %v7218
  %v7222 = vld [vmem:[#allocation2] sm:$0xff]
  %v7223 = vld [vmem:[#allocation2 + $0x8] sm:$0xff]
  %v7224 = vld [vmem:[#allocation2 + $0x10] sm:$0xff]
  %v7225 = vld [vmem:[#allocation2 + $0x18] sm:$0xff]
  %7226 = vmatprep.subr.mxu0 %v1633
  %7227 = vmatpush1.msra.mxu0 %v1632
  %7228 = vmatprep.subr.mxu0 %v1629
  %7229 = vmatpush1.msra.mxu0 %v1628
  %7230 = vmatprep.subr.mxu0 %v1625
  %7231 = vmatpush1.msra.mxu0 %v1624
  %7232 = vmatprep.subr.mxu0 %v1621
  %7233 = vmatpush1.msra.mxu0 %v1620
  %7234 = vmatprep.subr.mxu0 %v1617
  %7235 = vmatpush1.msra.mxu0 %v1616
  %7236 = vmatprep.subr.mxu0 %v1613
  %7237 = vmatpush1.msra.mxu0 %v1612
  %7238 = vmatprep.subr.mxu0 %v1609
  %7239 = vmatpush1.msra.mxu0 %v1608
  %7240 = vmatprep.subr.mxu0 %v1605
  %7241 = vmatpush1.msra.mxu0 %v1604
  %7242 = vmatprep.subr.mxu0 %v1601
  %7243 = vmatpush1.msra.mxu0 %v1600
  %7244 = vmatprep.subr.mxu0 %v1597
  %7245 = vmatpush1.msra.mxu0 %v1596
  %7246 = vmatprep.subr.mxu0 %v1593
  %7247 = vmatpush1.msra.mxu0 %v1592
  %7248 = vmatprep.subr.mxu0 %v1589
  %7249 = vmatpush1.msra.mxu0 %v1588
  %7250 = vmatprep.subr.mxu0 %v1585
  %7251 = vmatpush1.msra.mxu0 %v1584
  %7252 = vmatprep.subr.mxu0 %v1581
  %7253 = vmatpush1.msra.mxu0 %v1580
  %7254 = vmatprep.subr.mxu0 %v1577
  %7255 = vmatpush1.msra.mxu0 %v1576
  %7256 = vmatprep.subr.mxu0 %v1573
  %7257 = vmatpush1.msra.mxu0 %v1572
  %7258 = vmatprep.subr.mxu0 0.0
  %7259 = vmatpush2.msra.mxu0 0.0
  %7260 = vmatprep.subr.mxu0 0.0
  %7261 = vmatpush2.msra.mxu0 0.0
  %7262 = vmatprep.subr.mxu0 0.0
  %7263 = vmatpush2.msra.mxu0 0.0
  %7264 = vmatprep.subr.mxu0 0.0
  %7265 = vmatpush2.msra.mxu0 0.0
  %7266 = vmatprep.subr.mxu0 0.0
  %7267 = vmatpush2.msra.mxu0 0.0
  %7268 = vmatprep.subr.mxu0 0.0
  %7269 = vmatpush2.msra.mxu0 0.0
  %7270 = vmatprep.subr.mxu0 0.0
  %7271 = vmatpush2.msra.mxu0 0.0
  %7272 = vmatprep.subr.mxu0 0.0
  %7273 = vmatpush2.msra.mxu0 0.0
  %7274 = vmatprep.subr.mxu0 0.0
  %7275 = vmatpush2.msra.mxu0 0.0
  %7276 = vmatprep.subr.mxu0 0.0
  %7277 = vmatpush2.msra.mxu0 0.0
  %7278 = vmatprep.subr.mxu0 0.0
  %7279 = vmatpush2.msra.mxu0 0.0
  %7280 = vmatprep.subr.mxu0 0.0
  %7281 = vmatpush2.msra.mxu0 0.0
  %7282 = vmatprep.subr.mxu0 0.0
  %7283 = vmatpush2.msra.mxu0 0.0
  %7284 = vmatprep.subr.mxu0 0.0
  %7285 = vmatpush2.msra.mxu0 0.0
  %7286 = vmatprep.subr.mxu0 0.0
  %7287 = vmatpush2.msra.mxu0 0.0
  %7288 = vmatprep.subr.mxu0 0.0
  %7289 = vmatpush2.msra.mxu0 0.0
  %7290 = vmatprep.mubr.f32.mxu0 0.0
  %7291 = vmatmul.mubr.f32.gmra.mxu0 %v7221
  %v7292 = vpop.f32.mrf.mxu0
  %v7293 = vadd.f32 %v7222, %v7292
  %v7294 = vpop.f32.mrf.mxu0
  %v7295 = vadd.f32 %v7223, %v7294
  %7296 = vdwg.mxu0
  %7297 = vmatprep.subr.mxu0 %v1635
  %7298 = vmatpush1.msra.mxu0 %v1634
  %7299 = vmatprep.subr.mxu0 %v1631
  %7300 = vmatpush1.msra.mxu0 %v1630
  %7301 = vmatprep.subr.mxu0 %v1627
  %7302 = vmatpush1.msra.mxu0 %v1626
  %7303 = vmatprep.subr.mxu0 %v1623
  %7304 = vmatpush1.msra.mxu0 %v1622
  %7305 = vmatprep.subr.mxu0 %v1619
  %7306 = vmatpush1.msra.mxu0 %v1618
  %7307 = vmatprep.subr.mxu0 %v1615
  %7308 = vmatpush1.msra.mxu0 %v1614
  %7309 = vmatprep.subr.mxu0 %v1611
  %7310 = vmatpush1.msra.mxu0 %v1610
  %7311 = vmatprep.subr.mxu0 %v1607
  %7312 = vmatpush1.msra.mxu0 %v1606
  %7313 = vmatprep.subr.mxu0 %v1603
  %7314 = vmatpush1.msra.mxu0 %v1602
  %7315 = vmatprep.subr.mxu0 %v1599
  %7316 = vmatpush1.msra.mxu0 %v1598
  %7317 = vmatprep.subr.mxu0 %v1595
  %7318 = vmatpush1.msra.mxu0 %v1594
  %7319 = vmatprep.subr.mxu0 %v1591
  %7320 = vmatpush1.msra.mxu0 %v1590
  %7321 = vmatprep.subr.mxu0 %v1587
  %7322 = vmatpush1.msra.mxu0 %v1586
  %7323 = vmatprep.subr.mxu0 %v1583
  %7324 = vmatpush1.msra.mxu0 %v1582
  %7325 = vmatprep.subr.mxu0 %v1579
  %7326 = vmatpush1.msra.mxu0 %v1578
  %7327 = vmatprep.subr.mxu0 %v1575
  %7328 = vmatpush1.msra.mxu0 %v1574
  %7329 = vmatprep.subr.mxu0 0.0
  %7330 = vmatpush2.msra.mxu0 0.0
  %7331 = vmatprep.subr.mxu0 0.0
  %7332 = vmatpush2.msra.mxu0 0.0
  %7333 = vmatprep.subr.mxu0 0.0
  %7334 = vmatpush2.msra.mxu0 0.0
  %7335 = vmatprep.subr.mxu0 0.0
  %7336 = vmatpush2.msra.mxu0 0.0
  %7337 = vmatprep.subr.mxu0 0.0
  %7338 = vmatpush2.msra.mxu0 0.0
  %7339 = vmatprep.subr.mxu0 0.0
  %7340 = vmatpush2.msra.mxu0 0.0
  %7341 = vmatprep.subr.mxu0 0.0
  %7342 = vmatpush2.msra.mxu0 0.0
  %7343 = vmatprep.subr.mxu0 0.0
  %7344 = vmatpush2.msra.mxu0 0.0
  %7345 = vmatprep.subr.mxu0 0.0
  %7346 = vmatpush2.msra.mxu0 0.0
  %7347 = vmatprep.subr.mxu0 0.0
  %7348 = vmatpush2.msra.mxu0 0.0
  %7349 = vmatprep.subr.mxu0 0.0
  %7350 = vmatpush2.msra.mxu0 0.0
  %7351 = vmatprep.subr.mxu0 0.0
  %7352 = vmatpush2.msra.mxu0 0.0
  %7353 = vmatprep.subr.mxu0 0.0
  %7354 = vmatpush2.msra.mxu0 0.0
  %7355 = vmatprep.subr.mxu0 0.0
  %7356 = vmatpush2.msra.mxu0 0.0
  %7357 = vmatprep.subr.mxu0 0.0
  %7358 = vmatpush2.msra.mxu0 0.0
  %7359 = vmatprep.subr.mxu0 0.0
  %7360 = vmatpush2.msra.mxu0 0.0
  %7361 = vmatprep.mubr.f32.mxu0 0.0
  %7362 = vmatmul.mubr.f32.gmra.mxu0 %v7221
  %v7363 = vpop.f32.mrf.mxu0
  %v7364 = vadd.f32 %v7224, %v7363
  %v7365 = vpop.f32.mrf.mxu0
  %v7366 = vadd.f32 %v7225, %v7365
  %7367 = vdwg.mxu0
  %v7368 = vld [vmem:[%s97] sm:$0xff]
  %v7369 = vld [vmem:[%s99] sm:$0xff]
  %v7370 = vld [vmem:[%s103] sm:$0xff]
  %v7371 = vld [vmem:[%s107] sm:$0xff]
  %7373 = vset.pattern.permute.xlu0 0
  %7374 = vperm.xlu0 %7373, %v7369
  %v7375 = vpop.permute.xlu0 %7374
  %v7378 = vsel %vm2189, %v7368, 0
  %7380 = vmatprep.subr.mxu0 0.0
  %7381 = vmatpush1.msra.mxu0 0.0
  %7382 = vmatprep.subr.mxu0 0.0
  %7383 = vmatpush1.msra.mxu0 0.0
  %7384 = vmatprep.subr.mxu0 0.0
  %7385 = vmatpush1.msra.mxu0 0.0
  %7386 = vmatprep.subr.mxu0 0.0
  %7387 = vmatpush1.msra.mxu0 0.0
  %7388 = vmatprep.subr.mxu0 0.0
  %7389 = vmatpush1.msra.mxu0 0.0
  %7390 = vmatprep.subr.mxu0 0.0
  %7391 = vmatpush1.msra.mxu0 0.0
  %7392 = vmatprep.subr.mxu0 0.0
  %7393 = vmatpush1.msra.mxu0 0.0
  %7394 = vmatprep.subr.mxu0 0.0
  %7395 = vmatpush1.msra.mxu0 0.0
  %7396 = vmatprep.subr.mxu0 0.0
  %7397 = vmatpush1.msra.mxu0 0.0
  %7398 = vmatprep.subr.mxu0 0.0
  %7399 = vmatpush1.msra.mxu0 0.0
  %7400 = vmatprep.subr.mxu0 0.0
  %7401 = vmatpush1.msra.mxu0 0.0
  %7402 = vmatprep.subr.mxu0 0.0
  %7403 = vmatpush1.msra.mxu0 0.0
  %7404 = vmatprep.subr.mxu0 0.0
  %7405 = vmatpush1.msra.mxu0 0.0
  %7406 = vmatprep.subr.mxu0 0.0
  %7407 = vmatpush1.msra.mxu0 0.0
  %7408 = vmatprep.subr.mxu0 0.0
  %7409 = vmatpush1.msra.mxu0 %v234
  %7410 = vmatprep.subr.mxu0 0.0
  %7411 = vmatpush1.msra.mxu0 %v233
  %7412 = vmatprep.subr.mxu0 0.0
  %7413 = vmatpush2.msra.mxu0 0.0
  %7414 = vmatprep.subr.mxu0 0.0
  %7415 = vmatpush2.msra.mxu0 0.0
  %7416 = vmatprep.subr.mxu0 0.0
  %7417 = vmatpush2.msra.mxu0 0.0
  %7418 = vmatprep.subr.mxu0 0.0
  %7419 = vmatpush2.msra.mxu0 0.0
  %7420 = vmatprep.subr.mxu0 0.0
  %7421 = vmatpush2.msra.mxu0 0.0
  %7422 = vmatprep.subr.mxu0 0.0
  %7423 = vmatpush2.msra.mxu0 0.0
  %7424 = vmatprep.subr.mxu0 0.0
  %7425 = vmatpush2.msra.mxu0 0.0
  %7426 = vmatprep.subr.mxu0 0.0
  %7427 = vmatpush2.msra.mxu0 0.0
  %7428 = vmatprep.subr.mxu0 0.0
  %7429 = vmatpush2.msra.mxu0 0.0
  %7430 = vmatprep.subr.mxu0 0.0
  %7431 = vmatpush2.msra.mxu0 0.0
  %7432 = vmatprep.subr.mxu0 0.0
  %7433 = vmatpush2.msra.mxu0 0.0
  %7434 = vmatprep.subr.mxu0 0.0
  %7435 = vmatpush2.msra.mxu0 0.0
  %7436 = vmatprep.subr.mxu0 0.0
  %7437 = vmatpush2.msra.mxu0 0.0
  %7438 = vmatprep.subr.mxu0 0.0
  %7439 = vmatpush2.msra.mxu0 0.0
  %7440 = vmatprep.subr.mxu0 0.0
  %7441 = vmatpush2.msra.mxu0 0.0
  %7442 = vmatprep.subr.mxu0 0.0
  %7443 = vmatpush2.msra.mxu0 0.0
  %7444 = vmatprep.mubr.f32.mxu0 0.0
  %7445 = vmatmul.mubr.f32.gmra.mxu0 %v7378
  %v7446 = vpop.f32.mrf.mxu0
  %v7447 = vadd.f32 %v7375, %v7446
  %v7448 = vpop.f32.mrf.mxu0
  %7449 = vdwg.mxu0
  %v7451 = vsel %vm2263, %v7447, 0
  %7453 = vmatprep.subr.mxu0 0.0
  %7454 = vmatpush1.msra.mxu0 0.0
  %7455 = vmatprep.subr.mxu0 0.0
  %7456 = vmatpush1.msra.mxu0 0.0
  %7457 = vmatprep.subr.mxu0 0.0
  %7458 = vmatpush1.msra.mxu0 0.0
  %7459 = vmatprep.subr.mxu0 0.0
  %7460 = vmatpush1.msra.mxu0 0.0
  %7461 = vmatprep.subr.mxu0 0.0
  %7462 = vmatpush1.msra.mxu0 0.0
  %7463 = vmatprep.subr.mxu0 0.0
  %7464 = vmatpush1.msra.mxu0 0.0
  %7465 = vmatprep.subr.mxu0 0.0
  %7466 = vmatpush1.msra.mxu0 0.0
  %7467 = vmatprep.subr.mxu0 0.0
  %7468 = vmatpush1.msra.mxu0 0.0
  %7469 = vmatprep.subr.mxu0 0.0
  %7470 = vmatpush1.msra.mxu0 0.0
  %7471 = vmatprep.subr.mxu0 0.0
  %7472 = vmatpush1.msra.mxu0 0.0
  %7473 = vmatprep.subr.mxu0 0.0
  %7474 = vmatpush1.msra.mxu0 0.0
  %7475 = vmatprep.subr.mxu0 0.0
  %7476 = vmatpush1.msra.mxu0 0.0
  %7477 = vmatprep.subr.mxu0 0.0
  %7478 = vmatpush1.msra.mxu0 0.0
  %7479 = vmatprep.subr.mxu0 0.0
  %7480 = vmatpush1.msra.mxu0 0.0
  %7481 = vmatprep.subr.mxu0 0.0
  %7482 = vmatpush1.msra.mxu0 0.0
  %7483 = vmatprep.subr.mxu0 %v2272
  %7484 = vmatpush1.msra.mxu0 %v2269
  %7485 = vmatprep.subr.mxu0 0.0
  %7486 = vmatpush2.msra.mxu0 0.0
  %7487 = vmatprep.subr.mxu0 0.0
  %7488 = vmatpush2.msra.mxu0 0.0
  %7489 = vmatprep.subr.mxu0 0.0
  %7490 = vmatpush2.msra.mxu0 0.0
  %7491 = vmatprep.subr.mxu0 0.0
  %7492 = vmatpush2.msra.mxu0 0.0
  %7493 = vmatprep.subr.mxu0 0.0
  %7494 = vmatpush2.msra.mxu0 0.0
  %7495 = vmatprep.subr.mxu0 0.0
  %7496 = vmatpush2.msra.mxu0 0.0
  %7497 = vmatprep.subr.mxu0 0.0
  %7498 = vmatpush2.msra.mxu0 0.0
  %7499 = vmatprep.subr.mxu0 0.0
  %7500 = vmatpush2.msra.mxu0 0.0
  %7501 = vmatprep.subr.mxu0 0.0
  %7502 = vmatpush2.msra.mxu0 0.0
  %7503 = vmatprep.subr.mxu0 0.0
  %7504 = vmatpush2.msra.mxu0 0.0
  %7505 = vmatprep.subr.mxu0 0.0
  %7506 = vmatpush2.msra.mxu0 0.0
  %7507 = vmatprep.subr.mxu0 0.0
  %7508 = vmatpush2.msra.mxu0 0.0
  %7509 = vmatprep.subr.mxu0 0.0
  %7510 = vmatpush2.msra.mxu0 0.0
  %7511 = vmatprep.subr.mxu0 0.0
  %7512 = vmatpush2.msra.mxu0 0.0
  %7513 = vmatprep.subr.mxu0 0.0
  %7514 = vmatpush2.msra.mxu0 0.0
  %7515 = vmatprep.subr.mxu0 0.0
  %7516 = vmatpush2.msra.mxu0 0.0
  %7517 = vmatprep.mubr.f32.mxu0 0.0
  %7518 = vmatmul.mubr.f32.gmra.mxu0 %v7451
  %v7519 = vpop.f32.mrf.mxu0
  %v7520 = vadd.f32 0.0, %v7519
  %v7521 = vpop.f32.mrf.mxu0
  %v7522 = vadd.f32 0.0, %v7521
  %7523 = vdwg.mxu0
  %7524 = vmatprep.subr.mxu0 0.0
  %7525 = vmatpush1.msra.mxu0 0.0
  %7526 = vmatprep.subr.mxu0 0.0
  %7527 = vmatpush1.msra.mxu0 0.0
  %7528 = vmatprep.subr.mxu0 0.0
  %7529 = vmatpush1.msra.mxu0 0.0
  %7530 = vmatprep.subr.mxu0 0.0
  %7531 = vmatpush1.msra.mxu0 0.0
  %7532 = vmatprep.subr.mxu0 0.0
  %7533 = vmatpush1.msra.mxu0 0.0
  %7534 = vmatprep.subr.mxu0 0.0
  %7535 = vmatpush1.msra.mxu0 0.0
  %7536 = vmatprep.subr.mxu0 0.0
  %7537 = vmatpush1.msra.mxu0 0.0
  %7538 = vmatprep.subr.mxu0 0.0
  %7539 = vmatpush1.msra.mxu0 0.0
  %7540 = vmatprep.subr.mxu0 0.0
  %7541 = vmatpush1.msra.mxu0 0.0
  %7542 = vmatprep.subr.mxu0 0.0
  %7543 = vmatpush1.msra.mxu0 0.0
  %7544 = vmatprep.subr.mxu0 0.0
  %7545 = vmatpush1.msra.mxu0 0.0
  %7546 = vmatprep.subr.mxu0 0.0
  %7547 = vmatpush1.msra.mxu0 0.0
  %7548 = vmatprep.subr.mxu0 0.0
  %7549 = vmatpush1.msra.mxu0 0.0
  %7550 = vmatprep.subr.mxu0 0.0
  %7551 = vmatpush1.msra.mxu0 0.0
  %7552 = vmatprep.subr.mxu0 0.0
  %7553 = vmatpush1.msra.mxu0 0.0
  %7554 = vmatprep.subr.mxu0 %v2278
  %7555 = vmatpush1.msra.mxu0 %v2275
  %7556 = vmatprep.subr.mxu0 0.0
  %7557 = vmatpush2.msra.mxu0 0.0
  %7558 = vmatprep.subr.mxu0 0.0
  %7559 = vmatpush2.msra.mxu0 0.0
  %7560 = vmatprep.subr.mxu0 0.0
  %7561 = vmatpush2.msra.mxu0 0.0
  %7562 = vmatprep.subr.mxu0 0.0
  %7563 = vmatpush2.msra.mxu0 0.0
  %7564 = vmatprep.subr.mxu0 0.0
  %7565 = vmatpush2.msra.mxu0 0.0
  %7566 = vmatprep.subr.mxu0 0.0
  %7567 = vmatpush2.msra.mxu0 0.0
  %7568 = vmatprep.subr.mxu0 0.0
  %7569 = vmatpush2.msra.mxu0 0.0
  %7570 = vmatprep.subr.mxu0 0.0
  %7571 = vmatpush2.msra.mxu0 0.0
  %7572 = vmatprep.subr.mxu0 0.0
  %7573 = vmatpush2.msra.mxu0 0.0
  %7574 = vmatprep.subr.mxu0 0.0
  %7575 = vmatpush2.msra.mxu0 0.0
  %7576 = vmatprep.subr.mxu0 0.0
  %7577 = vmatpush2.msra.mxu0 0.0
  %7578 = vmatprep.subr.mxu0 0.0
  %7579 = vmatpush2.msra.mxu0 0.0
  %7580 = vmatprep.subr.mxu0 0.0
  %7581 = vmatpush2.msra.mxu0 0.0
  %7582 = vmatprep.subr.mxu0 0.0
  %7583 = vmatpush2.msra.mxu0 0.0
  %7584 = vmatprep.subr.mxu0 0.0
  %7585 = vmatpush2.msra.mxu0 0.0
  %7586 = vmatprep.subr.mxu0 0.0
  %7587 = vmatpush2.msra.mxu0 0.0
  %7588 = vmatprep.mubr.f32.mxu0 0.0
  %7589 = vmatmul.mubr.f32.gmra.mxu0 %v7451
  %v7590 = vpop.f32.mrf.mxu0
  %v7591 = vadd.f32 0.0, %v7590
  %v7592 = vpop.f32.mrf.mxu0
  %v7593 = vadd.f32 0.0, %v7592
  %7594 = vdwg.mxu0
  %7595 = vrot.lane.b32.xlu0 %v7293, 17
  %v7596 = vpop.permute.xlu0 %7595
  %7597 = vrot.lane.b32.xlu0 %v7295, 17
  %v7598 = vpop.permute.xlu0 %7597
  %7599 = vrot.lane.b32.xlu0 %v7364, 17
  %v7600 = vpop.permute.xlu0 %7599
  %7601 = vrot.lane.b32.xlu0 %v7366, 17
  %v7602 = vpop.permute.xlu0 %7601
  %v7603 = vsel %vm2451, %v7600, %v7602
  %v7604 = vsel %vm2451, %v7598, %v7600
  %v7605 = vsel %vm2451, %v7596, %v7598
  %v7606 = vsel %vm2451, %v7602, %v7596
  %v7607 = vmul.f32 %v7606, %v272
  %v7608 = vmul.f32 %v7605, %v273
  %v7609 = vmul.f32 %v7604, %v274
  %v7610 = vmul.f32 %v7603, %v275
  %7611 = vrot.lane.b32.xlu0 %v7293, 16
  %v7612 = vpop.permute.xlu0 %7611
  %7613 = vrot.lane.b32.xlu0 %v7295, 16
  %v7614 = vpop.permute.xlu0 %7613
  %7615 = vrot.lane.b32.xlu0 %v7364, 16
  %v7616 = vpop.permute.xlu0 %7615
  %7617 = vrot.lane.b32.xlu0 %v7366, 16
  %v7618 = vpop.permute.xlu0 %7617
  %v7619 = vsel %vm2468, %v7616, %v7618
  %v7620 = vsel %vm2468, %v7614, %v7616
  %v7621 = vsel %vm2468, %v7612, %v7614
  %v7622 = vsel %vm2468, %v7618, %v7612
  %v7623 = vmul.f32 %v7622, %v280
  %v7624 = vmul.f32 %v7621, %v281
  %v7625 = vmul.f32 %v7620, %v282
  %v7626 = vmul.f32 %v7619, %v283
  %7627 = vrot.lane.b32.xlu0 %v7293, 15
  %v7628 = vpop.permute.xlu0 %7627
  %7629 = vrot.lane.b32.xlu0 %v7295, 15
  %v7630 = vpop.permute.xlu0 %7629
  %7631 = vrot.lane.b32.xlu0 %v7364, 15
  %v7632 = vpop.permute.xlu0 %7631
  %7633 = vrot.lane.b32.xlu0 %v7366, 15
  %v7634 = vpop.permute.xlu0 %7633
  %v7635 = vsel %vm2485, %v7632, %v7634
  %v7636 = vsel %vm2485, %v7630, %v7632
  %v7637 = vsel %vm2485, %v7628, %v7630
  %v7638 = vsel %vm2485, %v7634, %v7628
  %v7639 = vmul.f32 %v7638, %v296
  %v7640 = vmul.f32 %v7637, %v297
  %v7641 = vmul.f32 %v7636, %v298
  %v7642 = vmul.f32 %v7635, %v299
  %7643 = vrot.lane.b32.xlu0 %v7293, 1
  %v7644 = vpop.permute.xlu0 %7643
  %7645 = vrot.lane.b32.xlu0 %v7295, 1
  %v7646 = vpop.permute.xlu0 %7645
  %7647 = vrot.lane.b32.xlu0 %v7364, 1
  %v7648 = vpop.permute.xlu0 %7647
  %7649 = vrot.lane.b32.xlu0 %v7366, 1
  %v7650 = vpop.permute.xlu0 %7649
  %v7651 = vsel %vm2502, %v7648, %v7650
  %v7652 = vsel %vm2502, %v7646, %v7648
  %v7653 = vsel %vm2502, %v7644, %v7646
  %v7654 = vsel %vm2502, %v7650, %v7644
  %v7655 = vmul.f32 %v7654, %v304
  %v7656 = vmul.f32 %v7653, %v305
  %v7657 = vmul.f32 %v7652, %v306
  %v7658 = vmul.f32 %v7651, %v307
  %7659 = vrot.lane.b32.xlu0 %v7293, 127
  %v7660 = vpop.permute.xlu0 %7659
  %7661 = vrot.lane.b32.xlu0 %v7295, 127
  %v7662 = vpop.permute.xlu0 %7661
  %7663 = vrot.lane.b32.xlu0 %v7364, 127
  %v7664 = vpop.permute.xlu0 %7663
  %7665 = vrot.lane.b32.xlu0 %v7366, 127
  %v7666 = vpop.permute.xlu0 %7665
  %v7667 = vsel %vm2519, %v7664, %v7666
  %v7668 = vsel %vm2519, %v7662, %v7664
  %v7669 = vsel %vm2519, %v7660, %v7662
  %v7670 = vsel %vm2519, %v7666, %v7660
  %v7671 = vmul.f32 %v7669, %v312
  %v7672 = vmul.f32 %v7668, %v313
  %v7673 = vmul.f32 %v7667, %v314
  %v7674 = vmul.f32 %v7670, %v315
  %7675 = vrot.lane.b32.xlu0 %v7293, 113
  %v7676 = vpop.permute.xlu0 %7675
  %7677 = vrot.lane.b32.xlu0 %v7295, 113
  %v7678 = vpop.permute.xlu0 %7677
  %7679 = vrot.lane.b32.xlu0 %v7364, 113
  %v7680 = vpop.permute.xlu0 %7679
  %7681 = vrot.lane.b32.xlu0 %v7366, 113
  %v7682 = vpop.permute.xlu0 %7681
  %v7683 = vsel %vm2536, %v7680, %v7682
  %v7684 = vsel %vm2536, %v7678, %v7680
  %v7685 = vsel %vm2536, %v7676, %v7678
  %v7686 = vsel %vm2536, %v7682, %v7676
  %v7687 = vmul.f32 %v7685, %v328
  %v7688 = vmul.f32 %v7684, %v329
  %v7689 = vmul.f32 %v7683, %v330
  %v7690 = vmul.f32 %v7686, %v331
  %7691 = vrot.lane.b32.xlu0 %v7293, 112
  %v7692 = vpop.permute.xlu0 %7691
  %7693 = vrot.lane.b32.xlu0 %v7295, 112
  %v7694 = vpop.permute.xlu0 %7693
  %7695 = vrot.lane.b32.xlu0 %v7364, 112
  %v7696 = vpop.permute.xlu0 %7695
  %7697 = vrot.lane.b32.xlu0 %v7366, 112
  %v7698 = vpop.permute.xlu0 %7697
  %v7699 = vsel %vm2553, %v7696, %v7698
  %v7700 = vsel %vm2553, %v7694, %v7696
  %v7701 = vsel %vm2553, %v7692, %v7694
  %v7702 = vsel %vm2553, %v7698, %v7692
  %v7703 = vmul.f32 %v7701, %v336
  %v7704 = vmul.f32 %v7700, %v337
  %v7705 = vmul.f32 %v7699, %v338
  %v7706 = vmul.f32 %v7702, %v339
  %7707 = vrot.lane.b32.xlu0 %v7293, 111
  %v7708 = vpop.permute.xlu0 %7707
  %7709 = vrot.lane.b32.xlu0 %v7295, 111
  %v7710 = vpop.permute.xlu0 %7709
  %7711 = vrot.lane.b32.xlu0 %v7364, 111
  %v7712 = vpop.permute.xlu0 %7711
  %7713 = vrot.lane.b32.xlu0 %v7366, 111
  %v7714 = vpop.permute.xlu0 %7713
  %v7715 = vsel %vm2570, %v7712, %v7714
  %v7716 = vsel %vm2570, %v7710, %v7712
  %v7717 = vsel %vm2570, %v7708, %v7710
  %v7718 = vsel %vm2570, %v7714, %v7708
  %v7719 = vmul.f32 %v7717, %v348
  %v7720 = vmul.f32 %v7716, %v349
  %v7721 = vmul.f32 %v7715, %v350
  %v7722 = vmul.f32 %v7718, %v351
  %v7723 = vld [vmem:[%s101] sm:$0xff]
  %7725 = vset.pattern.permute.xlu0 0
  %7726 = vperm.xlu0 %7725, %v7370
  %v7727 = vpop.permute.xlu0 %7726
  %v7730 = vsel %vm3016, %v7723, 0
  %7732 = vmatprep.subr.mxu0 0.0
  %7733 = vmatpush1.msra.mxu0 0.0
  %7734 = vmatprep.subr.mxu0 0.0
  %7735 = vmatpush1.msra.mxu0 0.0
  %7736 = vmatprep.subr.mxu0 0.0
  %7737 = vmatpush1.msra.mxu0 0.0
  %7738 = vmatprep.subr.mxu0 0.0
  %7739 = vmatpush1.msra.mxu0 0.0
  %7740 = vmatprep.subr.mxu0 0.0
  %7741 = vmatpush1.msra.mxu0 0.0
  %7742 = vmatprep.subr.mxu0 0.0
  %7743 = vmatpush1.msra.mxu0 0.0
  %7744 = vmatprep.subr.mxu0 0.0
  %7745 = vmatpush1.msra.mxu0 0.0
  %7746 = vmatprep.subr.mxu0 %v7720
  %7747 = vmatpush1.msra.mxu0 %v7719
  %7748 = vmatprep.subr.mxu0 %v7704
  %7749 = vmatpush1.msra.mxu0 %v7703
  %7750 = vmatprep.subr.mxu0 %v7688
  %7751 = vmatpush1.msra.mxu0 %v7687
  %7752 = vmatprep.subr.mxu0 %v7672
  %7753 = vmatpush1.msra.mxu0 %v7671
  %7754 = vmatprep.subr.mxu0 %v7295
  %7755 = vmatpush1.msra.mxu0 %v7293
  %7756 = vmatprep.subr.mxu0 %v7656
  %7757 = vmatpush1.msra.mxu0 %v7655
  %7758 = vmatprep.subr.mxu0 %v7640
  %7759 = vmatpush1.msra.mxu0 %v7639
  %7760 = vmatprep.subr.mxu0 %v7624
  %7761 = vmatpush1.msra.mxu0 %v7623
  %7762 = vmatprep.subr.mxu0 %v7608
  %7763 = vmatpush1.msra.mxu0 %v7607
  %7764 = vmatprep.subr.mxu0 0.0
  %7765 = vmatpush2.msra.mxu0 0.0
  %7766 = vmatprep.subr.mxu0 0.0
  %7767 = vmatpush2.msra.mxu0 0.0
  %7768 = vmatprep.subr.mxu0 0.0
  %7769 = vmatpush2.msra.mxu0 0.0
  %7770 = vmatprep.subr.mxu0 0.0
  %7771 = vmatpush2.msra.mxu0 0.0
  %7772 = vmatprep.subr.mxu0 0.0
  %7773 = vmatpush2.msra.mxu0 0.0
  %7774 = vmatprep.subr.mxu0 0.0
  %7775 = vmatpush2.msra.mxu0 0.0
  %7776 = vmatprep.subr.mxu0 0.0
  %7777 = vmatpush2.msra.mxu0 0.0
  %7778 = vmatprep.subr.mxu0 0.0
  %7779 = vmatpush2.msra.mxu0 0.0
  %7780 = vmatprep.subr.mxu0 0.0
  %7781 = vmatpush2.msra.mxu0 0.0
  %7782 = vmatprep.subr.mxu0 0.0
  %7783 = vmatpush2.msra.mxu0 0.0
  %7784 = vmatprep.subr.mxu0 0.0
  %7785 = vmatpush2.msra.mxu0 0.0
  %7786 = vmatprep.subr.mxu0 0.0
  %7787 = vmatpush2.msra.mxu0 0.0
  %7788 = vmatprep.subr.mxu0 0.0
  %7789 = vmatpush2.msra.mxu0 0.0
  %7790 = vmatprep.subr.mxu0 0.0
  %7791 = vmatpush2.msra.mxu0 0.0
  %7792 = vmatprep.subr.mxu0 0.0
  %7793 = vmatpush2.msra.mxu0 0.0
  %7794 = vmatprep.subr.mxu0 0.0
  %7795 = vmatpush2.msra.mxu0 0.0
  %7796 = vmatprep.mubr.f32.mxu0 0.0
  %7797 = vmatmul.mubr.f32.gmra.mxu0 %v7730
  %v7798 = vpop.f32.mrf.mxu0
  %v7799 = vadd.f32 %v7727, %v7798
  %v7800 = vpop.f32.mrf.mxu0
  %v7801 = vadd.f32 %v7727, %v7800
  %7802 = vdwg.mxu0
  %7803 = vmatprep.subr.mxu0 0.0
  %7804 = vmatpush1.msra.mxu0 0.0
  %7805 = vmatprep.subr.mxu0 0.0
  %7806 = vmatpush1.msra.mxu0 0.0
  %7807 = vmatprep.subr.mxu0 0.0
  %7808 = vmatpush1.msra.mxu0 0.0
  %7809 = vmatprep.subr.mxu0 0.0
  %7810 = vmatpush1.msra.mxu0 0.0
  %7811 = vmatprep.subr.mxu0 0.0
  %7812 = vmatpush1.msra.mxu0 0.0
  %7813 = vmatprep.subr.mxu0 0.0
  %7814 = vmatpush1.msra.mxu0 0.0
  %7815 = vmatprep.subr.mxu0 0.0
  %7816 = vmatpush1.msra.mxu0 0.0
  %7817 = vmatprep.subr.mxu0 %v7722
  %7818 = vmatpush1.msra.mxu0 %v7721
  %7819 = vmatprep.subr.mxu0 %v7706
  %7820 = vmatpush1.msra.mxu0 %v7705
  %7821 = vmatprep.subr.mxu0 %v7690
  %7822 = vmatpush1.msra.mxu0 %v7689
  %7823 = vmatprep.subr.mxu0 %v7674
  %7824 = vmatpush1.msra.mxu0 %v7673
  %7825 = vmatprep.subr.mxu0 %v7366
  %7826 = vmatpush1.msra.mxu0 %v7364
  %7827 = vmatprep.subr.mxu0 %v7658
  %7828 = vmatpush1.msra.mxu0 %v7657
  %7829 = vmatprep.subr.mxu0 %v7642
  %7830 = vmatpush1.msra.mxu0 %v7641
  %7831 = vmatprep.subr.mxu0 %v7626
  %7832 = vmatpush1.msra.mxu0 %v7625
  %7833 = vmatprep.subr.mxu0 %v7610
  %7834 = vmatpush1.msra.mxu0 %v7609
  %7835 = vmatprep.subr.mxu0 0.0
  %7836 = vmatpush2.msra.mxu0 0.0
  %7837 = vmatprep.subr.mxu0 0.0
  %7838 = vmatpush2.msra.mxu0 0.0
  %7839 = vmatprep.subr.mxu0 0.0
  %7840 = vmatpush2.msra.mxu0 0.0
  %7841 = vmatprep.subr.mxu0 0.0
  %7842 = vmatpush2.msra.mxu0 0.0
  %7843 = vmatprep.subr.mxu0 0.0
  %7844 = vmatpush2.msra.mxu0 0.0
  %7845 = vmatprep.subr.mxu0 0.0
  %7846 = vmatpush2.msra.mxu0 0.0
  %7847 = vmatprep.subr.mxu0 0.0
  %7848 = vmatpush2.msra.mxu0 0.0
  %7849 = vmatprep.subr.mxu0 0.0
  %7850 = vmatpush2.msra.mxu0 0.0
  %7851 = vmatprep.subr.mxu0 0.0
  %7852 = vmatpush2.msra.mxu0 0.0
  %7853 = vmatprep.subr.mxu0 0.0
  %7854 = vmatpush2.msra.mxu0 0.0
  %7855 = vmatprep.subr.mxu0 0.0
  %7856 = vmatpush2.msra.mxu0 0.0
  %7857 = vmatprep.subr.mxu0 0.0
  %7858 = vmatpush2.msra.mxu0 0.0
  %7859 = vmatprep.subr.mxu0 0.0
  %7860 = vmatpush2.msra.mxu0 0.0
  %7861 = vmatprep.subr.mxu0 0.0
  %7862 = vmatpush2.msra.mxu0 0.0
  %7863 = vmatprep.subr.mxu0 0.0
  %7864 = vmatpush2.msra.mxu0 0.0
  %7865 = vmatprep.subr.mxu0 0.0
  %7866 = vmatpush2.msra.mxu0 0.0
  %7867 = vmatprep.mubr.f32.mxu0 0.0
  %7868 = vmatmul.mubr.f32.gmra.mxu0 %v7730
  %v7869 = vpop.f32.mrf.mxu0
  %v7870 = vadd.f32 %v7727, %v7869
  %v7871 = vpop.f32.mrf.mxu0
  %v7872 = vadd.f32 %v7727, %v7871
  %7873 = vdwg.mxu0
  %v7874 = vxor.u32 %v7799, 2147483648
  %v7875 = vxor.u32 %v7801, 2147483648
  %v7876 = vxor.u32 %v7870, 2147483648
  %v7877 = vxor.u32 %v7872, 2147483648
  %v7878 = vmul.f32 %v7874, 1.442695
  %v7879 = vpow.pop %v7878
  %v7880 = vmul.f32 %v7875, 1.442695
  %v7881 = vpow.pop %v7880
  %v7882 = vmul.f32 %v7876, 1.442695
  %v7883 = vpow.pop %v7882
  %v7884 = vmul.f32 %v7877, 1.442695
  %v7885 = vpow.pop %v7884
  %v7886 = vadd.f32 %v7879, 1.0
  %v7887 = vadd.f32 %v7881, 1.0
  %v7888 = vadd.f32 %v7883, 1.0
  %v7889 = vadd.f32 %v7885, 1.0
  %v7890 = vrcp.pop %v7886
  %v7891 = vmul.f32 1.0, %v7890
  %v7892 = vrcp.pop %v7887
  %v7893 = vmul.f32 1.0, %v7892
  %v7894 = vrcp.pop %v7888
  %v7895 = vmul.f32 1.0, %v7894
  %v7896 = vrcp.pop %v7889
  %v7897 = vmul.f32 1.0, %v7896
  %v7898 = vmul.f32 %v7799, %v7891
  %v7899 = vmul.f32 %v7801, %v7893
  %v7900 = vmul.f32 %v7870, %v7895
  %v7901 = vmul.f32 %v7872, %v7897
  %v7902 = vadd.f32 %v7898, %v7520
  %v7903 = vadd.f32 %v7899, %v7522
  %v7904 = vadd.f32 %v7900, %v7591
  %v7905 = vadd.f32 %v7901, %v7593
  %v7906 = vxor.u32 %v7902, 2147483648
  %v7907 = vxor.u32 %v7903, 2147483648
  %v7908 = vxor.u32 %v7904, 2147483648
  %v7909 = vxor.u32 %v7905, 2147483648
  %v7910 = vmul.f32 %v7906, 1.442695
  %v7911 = vpow.pop %v7910
  %v7912 = vmul.f32 %v7907, 1.442695
  %v7913 = vpow.pop %v7912
  %v7914 = vmul.f32 %v7908, 1.442695
  %v7915 = vpow.pop %v7914
  %v7916 = vmul.f32 %v7909, 1.442695
  %v7917 = vpow.pop %v7916
  %v7918 = vadd.f32 %v7911, 1.0
  %v7919 = vadd.f32 %v7913, 1.0
  %v7920 = vadd.f32 %v7915, 1.0
  %v7921 = vadd.f32 %v7917, 1.0
  %v7922 = vrcp.pop %v7918
  %v7923 = vmul.f32 1.0, %v7922
  %v7924 = vrcp.pop %v7919
  %v7925 = vmul.f32 1.0, %v7924
  %v7926 = vrcp.pop %v7920
  %v7927 = vmul.f32 1.0, %v7926
  %v7928 = vrcp.pop %v7921
  %v7929 = vmul.f32 1.0, %v7928
  %v7930 = vmul.f32 %v7902, %v7923
  %v7931 = vmul.f32 %v7903, %v7925
  %v7932 = vmul.f32 %v7904, %v7927
  %v7933 = vmul.f32 %v7905, %v7929
  %7934 = vrot.lane.b32.xlu0 %v7930, 17
  %v7935 = vpop.permute.xlu0 %7934
  %7936 = vrot.lane.b32.xlu0 %v7931, 17
  %v7937 = vpop.permute.xlu0 %7936
  %7938 = vrot.lane.b32.xlu0 %v7932, 17
  %v7939 = vpop.permute.xlu0 %7938
  %7940 = vrot.lane.b32.xlu0 %v7933, 17
  %v7941 = vpop.permute.xlu0 %7940
  %v7942 = vsel %vm2451, %v7939, %v7941
  %v7943 = vsel %vm2451, %v7937, %v7939
  %v7944 = vsel %vm2451, %v7935, %v7937
  %v7945 = vsel %vm2451, %v7941, %v7935
  %v7946 = vmul.f32 %v7945, %v272
  %v7947 = vmul.f32 %v7944, %v273
  %v7948 = vmul.f32 %v7943, %v274
  %v7949 = vmul.f32 %v7942, %v275
  %7950 = vrot.lane.b32.xlu0 %v7930, 16
  %v7951 = vpop.permute.xlu0 %7950
  %7952 = vrot.lane.b32.xlu0 %v7931, 16
  %v7953 = vpop.permute.xlu0 %7952
  %7954 = vrot.lane.b32.xlu0 %v7932, 16
  %v7955 = vpop.permute.xlu0 %7954
  %7956 = vrot.lane.b32.xlu0 %v7933, 16
  %v7957 = vpop.permute.xlu0 %7956
  %v7958 = vsel %vm2468, %v7955, %v7957
  %v7959 = vsel %vm2468, %v7953, %v7955
  %v7960 = vsel %vm2468, %v7951, %v7953
  %v7961 = vsel %vm2468, %v7957, %v7951
  %v7962 = vmul.f32 %v7961, %v280
  %v7963 = vmul.f32 %v7960, %v281
  %v7964 = vmul.f32 %v7959, %v282
  %v7965 = vmul.f32 %v7958, %v283
  %7966 = vrot.lane.b32.xlu0 %v7930, 15
  %v7967 = vpop.permute.xlu0 %7966
  %7968 = vrot.lane.b32.xlu0 %v7931, 15
  %v7969 = vpop.permute.xlu0 %7968
  %7970 = vrot.lane.b32.xlu0 %v7932, 15
  %v7971 = vpop.permute.xlu0 %7970
  %7972 = vrot.lane.b32.xlu0 %v7933, 15
  %v7973 = vpop.permute.xlu0 %7972
  %v7974 = vsel %vm2485, %v7971, %v7973
  %v7975 = vsel %vm2485, %v7969, %v7971
  %v7976 = vsel %vm2485, %v7967, %v7969
  %v7977 = vsel %vm2485, %v7973, %v7967
  %v7978 = vmul.f32 %v7977, %v296
  %v7979 = vmul.f32 %v7976, %v297
  %v7980 = vmul.f32 %v7975, %v298
  %v7981 = vmul.f32 %v7974, %v299
  %7982 = vrot.lane.b32.xlu0 %v7930, 1
  %v7983 = vpop.permute.xlu0 %7982
  %7984 = vrot.lane.b32.xlu0 %v7931, 1
  %v7985 = vpop.permute.xlu0 %7984
  %7986 = vrot.lane.b32.xlu0 %v7932, 1
  %v7987 = vpop.permute.xlu0 %7986
  %7988 = vrot.lane.b32.xlu0 %v7933, 1
  %v7989 = vpop.permute.xlu0 %7988
  %v7990 = vsel %vm2502, %v7987, %v7989
  %v7991 = vsel %vm2502, %v7985, %v7987
  %v7992 = vsel %vm2502, %v7983, %v7985
  %v7993 = vsel %vm2502, %v7989, %v7983
  %v7994 = vmul.f32 %v7993, %v304
  %v7995 = vmul.f32 %v7992, %v305
  %v7996 = vmul.f32 %v7991, %v306
  %v7997 = vmul.f32 %v7990, %v307
  %7998 = vrot.lane.b32.xlu0 %v7930, 127
  %v7999 = vpop.permute.xlu0 %7998
  %8000 = vrot.lane.b32.xlu0 %v7931, 127
  %v8001 = vpop.permute.xlu0 %8000
  %8002 = vrot.lane.b32.xlu0 %v7932, 127
  %v8003 = vpop.permute.xlu0 %8002
  %8004 = vrot.lane.b32.xlu0 %v7933, 127
  %v8005 = vpop.permute.xlu0 %8004
  %v8006 = vsel %vm2519, %v8003, %v8005
  %v8007 = vsel %vm2519, %v8001, %v8003
  %v8008 = vsel %vm2519, %v7999, %v8001
  %v8009 = vsel %vm2519, %v8005, %v7999
  %v8010 = vmul.f32 %v8008, %v312
  %v8011 = vmul.f32 %v8007, %v313
  %v8012 = vmul.f32 %v8006, %v314
  %v8013 = vmul.f32 %v8009, %v315
  %8014 = vrot.lane.b32.xlu0 %v7930, 113
  %v8015 = vpop.permute.xlu0 %8014
  %8016 = vrot.lane.b32.xlu0 %v7931, 113
  %v8017 = vpop.permute.xlu0 %8016
  %8018 = vrot.lane.b32.xlu0 %v7932, 113
  %v8019 = vpop.permute.xlu0 %8018
  %8020 = vrot.lane.b32.xlu0 %v7933, 113
  %v8021 = vpop.permute.xlu0 %8020
  %v8022 = vsel %vm2536, %v8019, %v8021
  %v8023 = vsel %vm2536, %v8017, %v8019
  %v8024 = vsel %vm2536, %v8015, %v8017
  %v8025 = vsel %vm2536, %v8021, %v8015
  %v8026 = vmul.f32 %v8024, %v328
  %v8027 = vmul.f32 %v8023, %v329
  %v8028 = vmul.f32 %v8022, %v330
  %v8029 = vmul.f32 %v8025, %v331
  %8030 = vrot.lane.b32.xlu0 %v7930, 112
  %v8031 = vpop.permute.xlu0 %8030
  %8032 = vrot.lane.b32.xlu0 %v7931, 112
  %v8033 = vpop.permute.xlu0 %8032
  %8034 = vrot.lane.b32.xlu0 %v7932, 112
  %v8035 = vpop.permute.xlu0 %8034
  %8036 = vrot.lane.b32.xlu0 %v7933, 112
  %v8037 = vpop.permute.xlu0 %8036
  %v8038 = vsel %vm2553, %v8035, %v8037
  %v8039 = vsel %vm2553, %v8033, %v8035
  %v8040 = vsel %vm2553, %v8031, %v8033
  %v8041 = vsel %vm2553, %v8037, %v8031
  %v8042 = vmul.f32 %v8040, %v336
  %v8043 = vmul.f32 %v8039, %v337
  %v8044 = vmul.f32 %v8038, %v338
  %v8045 = vmul.f32 %v8041, %v339
  %8046 = vrot.lane.b32.xlu0 %v7930, 111
  %v8047 = vpop.permute.xlu0 %8046
  %8048 = vrot.lane.b32.xlu0 %v7931, 111
  %v8049 = vpop.permute.xlu0 %8048
  %8050 = vrot.lane.b32.xlu0 %v7932, 111
  %v8051 = vpop.permute.xlu0 %8050
  %8052 = vrot.lane.b32.xlu0 %v7933, 111
  %v8053 = vpop.permute.xlu0 %8052
  %v8054 = vsel %vm2570, %v8051, %v8053
  %v8055 = vsel %vm2570, %v8049, %v8051
  %v8056 = vsel %vm2570, %v8047, %v8049
  %v8057 = vsel %vm2570, %v8053, %v8047
  %v8058 = vmul.f32 %v8056, %v348
  %v8059 = vmul.f32 %v8055, %v349
  %v8060 = vmul.f32 %v8054, %v350
  %v8061 = vmul.f32 %v8057, %v351
  %v8062 = vld [vmem:[%s105] sm:$0xff]
  %8064 = vset.pattern.permute.xlu0 0
  %8065 = vperm.xlu0 %8064, %v7371
  %v8066 = vpop.permute.xlu0 %8065
  %v8069 = vsel %vm3016, %v8062, 0
  %8071 = vmatprep.subr.mxu0 0.0
  %8072 = vmatpush1.msra.mxu0 0.0
  %8073 = vmatprep.subr.mxu0 0.0
  %8074 = vmatpush1.msra.mxu0 0.0
  %8075 = vmatprep.subr.mxu0 0.0
  %8076 = vmatpush1.msra.mxu0 0.0
  %8077 = vmatprep.subr.mxu0 0.0
  %8078 = vmatpush1.msra.mxu0 0.0
  %8079 = vmatprep.subr.mxu0 0.0
  %8080 = vmatpush1.msra.mxu0 0.0
  %8081 = vmatprep.subr.mxu0 0.0
  %8082 = vmatpush1.msra.mxu0 0.0
  %8083 = vmatprep.subr.mxu0 0.0
  %8084 = vmatpush1.msra.mxu0 0.0
  %8085 = vmatprep.subr.mxu0 %v8059
  %8086 = vmatpush1.msra.mxu0 %v8058
  %8087 = vmatprep.subr.mxu0 %v8043
  %8088 = vmatpush1.msra.mxu0 %v8042
  %8089 = vmatprep.subr.mxu0 %v8027
  %8090 = vmatpush1.msra.mxu0 %v8026
  %8091 = vmatprep.subr.mxu0 %v8011
  %8092 = vmatpush1.msra.mxu0 %v8010
  %8093 = vmatprep.subr.mxu0 %v7931
  %8094 = vmatpush1.msra.mxu0 %v7930
  %8095 = vmatprep.subr.mxu0 %v7995
  %8096 = vmatpush1.msra.mxu0 %v7994
  %8097 = vmatprep.subr.mxu0 %v7979
  %8098 = vmatpush1.msra.mxu0 %v7978
  %8099 = vmatprep.subr.mxu0 %v7963
  %8100 = vmatpush1.msra.mxu0 %v7962
  %8101 = vmatprep.subr.mxu0 %v7947
  %8102 = vmatpush1.msra.mxu0 %v7946
  %8103 = vmatprep.subr.mxu0 0.0
  %8104 = vmatpush2.msra.mxu0 0.0
  %8105 = vmatprep.subr.mxu0 0.0
  %8106 = vmatpush2.msra.mxu0 0.0
  %8107 = vmatprep.subr.mxu0 0.0
  %8108 = vmatpush2.msra.mxu0 0.0
  %8109 = vmatprep.subr.mxu0 0.0
  %8110 = vmatpush2.msra.mxu0 0.0
  %8111 = vmatprep.subr.mxu0 0.0
  %8112 = vmatpush2.msra.mxu0 0.0
  %8113 = vmatprep.subr.mxu0 0.0
  %8114 = vmatpush2.msra.mxu0 0.0
  %8115 = vmatprep.subr.mxu0 0.0
  %8116 = vmatpush2.msra.mxu0 0.0
  %8117 = vmatprep.subr.mxu0 0.0
  %8118 = vmatpush2.msra.mxu0 0.0
  %8119 = vmatprep.subr.mxu0 0.0
  %8120 = vmatpush2.msra.mxu0 0.0
  %8121 = vmatprep.subr.mxu0 0.0
  %8122 = vmatpush2.msra.mxu0 0.0
  %8123 = vmatprep.subr.mxu0 0.0
  %8124 = vmatpush2.msra.mxu0 0.0
  %8125 = vmatprep.subr.mxu0 0.0
  %8126 = vmatpush2.msra.mxu0 0.0
  %8127 = vmatprep.subr.mxu0 0.0
  %8128 = vmatpush2.msra.mxu0 0.0
  %8129 = vmatprep.subr.mxu0 0.0
  %8130 = vmatpush2.msra.mxu0 0.0
  %8131 = vmatprep.subr.mxu0 0.0
  %8132 = vmatpush2.msra.mxu0 0.0
  %8133 = vmatprep.subr.mxu0 0.0
  %8134 = vmatpush2.msra.mxu0 0.0
  %8135 = vmatprep.mubr.f32.mxu0 0.0
  %8136 = vmatmul.mubr.f32.gmra.mxu0 %v8069
  %v8137 = vpop.f32.mrf.mxu0
  %v8138 = vadd.f32 %v8066, %v8137
  %v8139 = vpop.f32.mrf.mxu0
  %v8140 = vadd.f32 %v8066, %v8139
  %8141 = vdwg.mxu0
  %8142 = vmatprep.subr.mxu0 0.0
  %8143 = vmatpush1.msra.mxu0 0.0
  %8144 = vmatprep.subr.mxu0 0.0
  %8145 = vmatpush1.msra.mxu0 0.0
  %8146 = vmatprep.subr.mxu0 0.0
  %8147 = vmatpush1.msra.mxu0 0.0
  %8148 = vmatprep.subr.mxu0 0.0
  %8149 = vmatpush1.msra.mxu0 0.0
  %8150 = vmatprep.subr.mxu0 0.0
  %8151 = vmatpush1.msra.mxu0 0.0
  %8152 = vmatprep.subr.mxu0 0.0
  %8153 = vmatpush1.msra.mxu0 0.0
  %8154 = vmatprep.subr.mxu0 0.0
  %8155 = vmatpush1.msra.mxu0 0.0
  %8156 = vmatprep.subr.mxu0 %v8061
  %8157 = vmatpush1.msra.mxu0 %v8060
  %8158 = vmatprep.subr.mxu0 %v8045
  %8159 = vmatpush1.msra.mxu0 %v8044
  %8160 = vmatprep.subr.mxu0 %v8029
  %8161 = vmatpush1.msra.mxu0 %v8028
  %8162 = vmatprep.subr.mxu0 %v8013
  %8163 = vmatpush1.msra.mxu0 %v8012
  %8164 = vmatprep.subr.mxu0 %v7933
  %8165 = vmatpush1.msra.mxu0 %v7932
  %8166 = vmatprep.subr.mxu0 %v7997
  %8167 = vmatpush1.msra.mxu0 %v7996
  %8168 = vmatprep.subr.mxu0 %v7981
  %8169 = vmatpush1.msra.mxu0 %v7980
  %8170 = vmatprep.subr.mxu0 %v7965
  %8171 = vmatpush1.msra.mxu0 %v7964
  %8172 = vmatprep.subr.mxu0 %v7949
  %8173 = vmatpush1.msra.mxu0 %v7948
  %8174 = vmatprep.subr.mxu0 0.0
  %8175 = vmatpush2.msra.mxu0 0.0
  %8176 = vmatprep.subr.mxu0 0.0
  %8177 = vmatpush2.msra.mxu0 0.0
  %8178 = vmatprep.subr.mxu0 0.0
  %8179 = vmatpush2.msra.mxu0 0.0
  %8180 = vmatprep.subr.mxu0 0.0
  %8181 = vmatpush2.msra.mxu0 0.0
  %8182 = vmatprep.subr.mxu0 0.0
  %8183 = vmatpush2.msra.mxu0 0.0
  %8184 = vmatprep.subr.mxu0 0.0
  %8185 = vmatpush2.msra.mxu0 0.0
  %8186 = vmatprep.subr.mxu0 0.0
  %8187 = vmatpush2.msra.mxu0 0.0
  %8188 = vmatprep.subr.mxu0 0.0
  %8189 = vmatpush2.msra.mxu0 0.0
  %8190 = vmatprep.subr.mxu0 0.0
  %8191 = vmatpush2.msra.mxu0 0.0
  %8192 = vmatprep.subr.mxu0 0.0
  %8193 = vmatpush2.msra.mxu0 0.0
  %8194 = vmatprep.subr.mxu0 0.0
  %8195 = vmatpush2.msra.mxu0 0.0
  %8196 = vmatprep.subr.mxu0 0.0
  %8197 = vmatpush2.msra.mxu0 0.0
  %8198 = vmatprep.subr.mxu0 0.0
  %8199 = vmatpush2.msra.mxu0 0.0
  %8200 = vmatprep.subr.mxu0 0.0
  %8201 = vmatpush2.msra.mxu0 0.0
  %8202 = vmatprep.subr.mxu0 0.0
  %8203 = vmatpush2.msra.mxu0 0.0
  %8204 = vmatprep.subr.mxu0 0.0
  %8205 = vmatpush2.msra.mxu0 0.0
  %8206 = vmatprep.mubr.f32.mxu0 0.0
  %8207 = vmatmul.mubr.f32.gmra.mxu0 %v8069
  %v8208 = vpop.f32.mrf.mxu0
  %v8209 = vadd.f32 %v8066, %v8208
  %v8210 = vpop.f32.mrf.mxu0
  %v8211 = vadd.f32 %v8066, %v8210
  %8212 = vdwg.mxu0
  %v8213 = vadd.f32 %v8138, %v7293
  %v8214 = vadd.f32 %v8140, %v7295
  %v8215 = vadd.f32 %v8209, %v7364
  %v8216 = vadd.f32 %v8211, %v7366
  %v8217 = vld [vmem:[%s109] sm:$0x1]
  %v8218 = vld [vmem:[#allocation5] sm:$0x1]
  %8220 = vset.pattern.permute.xlu0 0
  %8221 = vperm.xlu0 %8220, %v8218
  %v8222 = vpop.permute.xlu0 %8221
  %v8224 = vlaneseq
  %v8225 = vshrl.u32 %v8224, 7
  %v8226 = vsub.s32 0, %v8225
  %v8227 = vrot.slane %v8222, %v8226
  %v8229 = vsel %vm3815, %v8217, 0
  %8231 = vmatprep.subr.mxu0 0.0
  %8232 = vmatpush1.msra.mxu0 0.0
  %8233 = vmatprep.subr.mxu0 0.0
  %8234 = vmatpush1.msra.mxu0 0.0
  %8235 = vmatprep.subr.mxu0 0.0
  %8236 = vmatpush1.msra.mxu0 0.0
  %8237 = vmatprep.subr.mxu0 0.0
  %8238 = vmatpush1.msra.mxu0 0.0
  %8239 = vmatprep.subr.mxu0 0.0
  %8240 = vmatpush1.msra.mxu0 0.0
  %8241 = vmatprep.subr.mxu0 0.0
  %8242 = vmatpush1.msra.mxu0 0.0
  %8243 = vmatprep.subr.mxu0 0.0
  %8244 = vmatpush1.msra.mxu0 0.0
  %8245 = vmatprep.subr.mxu0 0.0
  %8246 = vmatpush1.msra.mxu0 0.0
  %8247 = vmatprep.subr.mxu0 0.0
  %8248 = vmatpush1.msra.mxu0 0.0
  %8249 = vmatprep.subr.mxu0 0.0
  %8250 = vmatpush1.msra.mxu0 0.0
  %8251 = vmatprep.subr.mxu0 0.0
  %8252 = vmatpush1.msra.mxu0 0.0
  %8253 = vmatprep.subr.mxu0 0.0
  %8254 = vmatpush1.msra.mxu0 0.0
  %8255 = vmatprep.subr.mxu0 0.0
  %8256 = vmatpush1.msra.mxu0 0.0
  %8257 = vmatprep.subr.mxu0 0.0
  %8258 = vmatpush1.msra.mxu0 0.0
  %8259 = vmatprep.subr.mxu0 0.0
  %8260 = vmatpush1.msra.mxu0 0.0
  %8261 = vmatprep.subr.mxu0 %v8214
  %8262 = vmatpush1.msra.mxu0 %v8213
  %8263 = vmatprep.subr.mxu0 0.0
  %8264 = vmatpush2.msra.mxu0 0.0
  %8265 = vmatprep.subr.mxu0 0.0
  %8266 = vmatpush2.msra.mxu0 0.0
  %8267 = vmatprep.subr.mxu0 0.0
  %8268 = vmatpush2.msra.mxu0 0.0
  %8269 = vmatprep.subr.mxu0 0.0
  %8270 = vmatpush2.msra.mxu0 0.0
  %8271 = vmatprep.subr.mxu0 0.0
  %8272 = vmatpush2.msra.mxu0 0.0
  %8273 = vmatprep.subr.mxu0 0.0
  %8274 = vmatpush2.msra.mxu0 0.0
  %8275 = vmatprep.subr.mxu0 0.0
  %8276 = vmatpush2.msra.mxu0 0.0
  %8277 = vmatprep.subr.mxu0 0.0
  %8278 = vmatpush2.msra.mxu0 0.0
  %8279 = vmatprep.subr.mxu0 0.0
  %8280 = vmatpush2.msra.mxu0 0.0
  %8281 = vmatprep.subr.mxu0 0.0
  %8282 = vmatpush2.msra.mxu0 0.0
  %8283 = vmatprep.subr.mxu0 0.0
  %8284 = vmatpush2.msra.mxu0 0.0
  %8285 = vmatprep.subr.mxu0 0.0
  %8286 = vmatpush2.msra.mxu0 0.0
  %8287 = vmatprep.subr.mxu0 0.0
  %8288 = vmatpush2.msra.mxu0 0.0
  %8289 = vmatprep.subr.mxu0 0.0
  %8290 = vmatpush2.msra.mxu0 0.0
  %8291 = vmatprep.subr.mxu0 0.0
  %8292 = vmatpush2.msra.mxu0 0.0
  %8293 = vmatprep.subr.mxu0 0.0
  %8294 = vmatpush2.msra.mxu0 0.0
  %8295 = vmatprep.mubr.f32.mxu0 0.0
  %8296 = vmatmul.mubr.f32.gmra.mxu0 %v8229
  %v8297 = vpop.f32.mrf.mxu0
  %v8298 = vadd.f32 %v8227, %v8297
  %v8299 = vpop.f32.mrf.mxu0
  %v8300 = vadd.f32 %v8227, %v8299
  %8301 = vdwg.mxu0
  %8302 = vmatprep.subr.mxu0 0.0
  %8303 = vmatpush1.msra.mxu0 0.0
  %8304 = vmatprep.subr.mxu0 0.0
  %8305 = vmatpush1.msra.mxu0 0.0
  %8306 = vmatprep.subr.mxu0 0.0
  %8307 = vmatpush1.msra.mxu0 0.0
  %8308 = vmatprep.subr.mxu0 0.0
  %8309 = vmatpush1.msra.mxu0 0.0
  %8310 = vmatprep.subr.mxu0 0.0
  %8311 = vmatpush1.msra.mxu0 0.0
  %8312 = vmatprep.subr.mxu0 0.0
  %8313 = vmatpush1.msra.mxu0 0.0
  %8314 = vmatprep.subr.mxu0 0.0
  %8315 = vmatpush1.msra.mxu0 0.0
  %8316 = vmatprep.subr.mxu0 0.0
  %8317 = vmatpush1.msra.mxu0 0.0
  %8318 = vmatprep.subr.mxu0 0.0
  %8319 = vmatpush1.msra.mxu0 0.0
  %8320 = vmatprep.subr.mxu0 0.0
  %8321 = vmatpush1.msra.mxu0 0.0
  %8322 = vmatprep.subr.mxu0 0.0
  %8323 = vmatpush1.msra.mxu0 0.0
  %8324 = vmatprep.subr.mxu0 0.0
  %8325 = vmatpush1.msra.mxu0 0.0
  %8326 = vmatprep.subr.mxu0 0.0
  %8327 = vmatpush1.msra.mxu0 0.0
  %8328 = vmatprep.subr.mxu0 0.0
  %8329 = vmatpush1.msra.mxu0 0.0
  %8330 = vmatprep.subr.mxu0 0.0
  %8331 = vmatpush1.msra.mxu0 0.0
  %8332 = vmatprep.subr.mxu0 %v8216
  %8333 = vmatpush1.msra.mxu0 %v8215
  %8334 = vmatprep.subr.mxu0 0.0
  %8335 = vmatpush2.msra.mxu0 0.0
  %8336 = vmatprep.subr.mxu0 0.0
  %8337 = vmatpush2.msra.mxu0 0.0
  %8338 = vmatprep.subr.mxu0 0.0
  %8339 = vmatpush2.msra.mxu0 0.0
  %8340 = vmatprep.subr.mxu0 0.0
  %8341 = vmatpush2.msra.mxu0 0.0
  %8342 = vmatprep.subr.mxu0 0.0
  %8343 = vmatpush2.msra.mxu0 0.0
  %8344 = vmatprep.subr.mxu0 0.0
  %8345 = vmatpush2.msra.mxu0 0.0
  %8346 = vmatprep.subr.mxu0 0.0
  %8347 = vmatpush2.msra.mxu0 0.0
  %8348 = vmatprep.subr.mxu0 0.0
  %8349 = vmatpush2.msra.mxu0 0.0
  %8350 = vmatprep.subr.mxu0 0.0
  %8351 = vmatpush2.msra.mxu0 0.0
  %8352 = vmatprep.subr.mxu0 0.0
  %8353 = vmatpush2.msra.mxu0 0.0
  %8354 = vmatprep.subr.mxu0 0.0
  %8355 = vmatpush2.msra.mxu0 0.0
  %8356 = vmatprep.subr.mxu0 0.0
  %8357 = vmatpush2.msra.mxu0 0.0
  %8358 = vmatprep.subr.mxu0 0.0
  %8359 = vmatpush2.msra.mxu0 0.0
  %8360 = vmatprep.subr.mxu0 0.0
  %8361 = vmatpush2.msra.mxu0 0.0
  %8362 = vmatprep.subr.mxu0 0.0
  %8363 = vmatpush2.msra.mxu0 0.0
  %8364 = vmatprep.subr.mxu0 0.0
  %8365 = vmatpush2.msra.mxu0 0.0
  %8366 = vmatprep.mubr.f32.mxu0 0.0
  %8367 = vmatmul.mubr.f32.gmra.mxu0 %v8229
  %v8368 = vpop.f32.mrf.mxu0
  %v8369 = vadd.f32 %v8227, %v8368
  %v8370 = vpop.f32.mrf.mxu0
  %v8371 = vadd.f32 %v8227, %v8370
  %8372 = vdwg.mxu0
  %v8377 = vcombine.low %v8298, %v8300
  %v8378 = vcombine.low %v8369, %v8371
  %v8380 = vunpack.c.l.s4 1966171168
  %v8381 = vunpack.c.0.s8 %v8380
  %v8382 = vlaneseq
  %v8383 = vshrl.u32 %v8382, 7
  %v8384 = vsub.s32 %v8381, %v8383
  %v8385 = vrot.slane %v8377, %v8384
  %v8387 = vunpack.c.l.s4 1966171168
  %v8388 = vunpack.c.0.s8 %v8387
  %v8389 = vlaneseq
  %v8390 = vshrl.u32 %v8389, 7
  %v8391 = vsub.s32 %v8388, %v8390
  %v8392 = vrot.slane %v8378, %v8391
  %v8393 = vcombine.low %v8385, %v8392
  %v8395 = vunpack.c.l.s4 1966171168
  %v8396 = vunpack.c.0.s8 %v8395
  %v8397 = vlaneseq
  %v8398 = vshrl.u32 %v8397, 7
  %v8399 = vsub.s32 %v8396, %v8398
  %v8400 = vrot.slane %v8393, %v8399
  %v8402 = vlaneseq
  %vm8403 = vcmp.ge.s32.totalorder %v8402, 0
  %vm8404 = vcmp.lt.s32.totalorder %v8402, 512
  %vm8405 = vmand %vm8403, %vm8404
  %8406 = vst.msk [vmem:[%s113] sm:$0xf] %vm8405, %v8400
  // Predicated region
  $region226: #{ddpm_forward.1} parent=0 // pred_check
    _
  $region227: #{ddpm_forward.1} parent=0 // pred_check_branch
    %8408 = sbr.rel (0) target = $region229
  $region228: #{ddpm_forward.1} parent=0 // pred_region
    _
  $region229: #{ddpm_forward.1} parent=0 // pred_fallthru
    _
  // Predicated region
  $region230: #{ddpm_forward.1} parent=0 // pred_check
    _
  $region231: #{ddpm_forward.1} parent=0 // pred_check_branch
    %8410 = sbr.rel (0) target = $region233
  $region232: #{ddpm_forward.1} parent=0 // pred_region
    _
  $region233: #{ddpm_forward.1} parent=0 // pred_fallthru
    _

</llo_original>
